<compile_context>
chip_gen: v7x
topology: tpu7x:2x2x1
jax: 0.10.0
libtpu: 0.0.40
codegen_flags: <defaults>
</compile_context>

<pallas_src>
import functools

import jax
import jax.numpy as jnp
import numpy as np
from jax import lax
from jax.experimental import pallas as pl
from jax.experimental.pallas import tpu as pltpu


# Unique depthwise-tap offsets (dy, dx): the dense 7x7 window covers the
# k=3/5/7 dilation-1 branches (and every branch centre, incl. identity & k=1);
# the two dilated 3x3 branches add 8 offsets each.
OFFSETS = [(dy, dx) for dy in range(-3, 4) for dx in range(-3, 4)]
OFFSETS += [(5 * dy, 5 * dx) for dy in (-1, 0, 1) for dx in (-1, 0, 1)
            if (dy, dx) != (0, 0)]
OFFSETS += [(7 * dy, 7 * dx) for dy in (-1, 0, 1) for dx in (-1, 0, 1)
            if (dy, dx) != (0, 0)]
NOFF = len(OFFSETS)                              # 65
OFF_IDX = {o: i for i, o in enumerate(OFFSETS)}
CENTER = OFF_IDX[(0, 0)]


# ---------------------------------------------------------------------------
# Fused kernel: channel attention + dynamic conv + spatial attention
# (one grid step per image; lane-dense (3C, H*W) layout)
# ---------------------------------------------------------------------------
def _cma_kernel(x1_ref, x2_ref, x1b0_ref, x2b0_ref, w1_ref, w2_ref,
                basis_ref, mask_ref, wc1_ref, band_ref, out_ref, *, W, HW):
    f32 = jnp.float32

    # ---------------- channel attention (batch element 0 only) -----------
    # Mirrors `a = ca(out).view(-1)[:8]` in the reference forward.
    b1 = x1b0_ref[...]                                   # (C, HW), resident
    b2 = x2b0_ref[...]
    m1 = jnp.mean(b1, axis=1, keepdims=True)             # (C, 1)
    m2 = jnp.mean(b2, axis=1, keepdims=True)
    pooled = jnp.concatenate(
        [jnp.concatenate([m1, m2, m1 + m2], axis=0),
         jnp.concatenate([jnp.max(b1, axis=1, keepdims=True),
                          jnp.max(b2, axis=1, keepdims=True),
                          jnp.max(b1 + b2, axis=1, keepdims=True)], axis=0)],
        axis=1)                                          # (3C, 2) [avg | max]
    hid = jnp.maximum(
        jnp.dot(w1_ref[...], pooled, preferred_element_type=f32), 0.0)
    logits = jnp.dot(w2_ref[...], hid[:, 0:1] + hid[:, 1:2],
                     preferred_element_type=f32)         # (8, 1)
    a = 1.0 / (1.0 + jnp.exp(-logits))                   # sigmoid

    # ------ fold the 8 attention scalars into per-offset weight columns --
    wc = a[0:1, :] * basis_ref[0]
    for k in range(1, 8):
        wc = wc + a[k:k + 1, :] * basis_ref[k]           # (3C, NOFF)

    # ---------------- depthwise taps, lane-dense (3C, HW) ----------------
    v1 = x1_ref[0]                                       # (C, HW)
    v2 = x2_ref[0]
    xc = jnp.concatenate([v1, v2, v1 + v2], axis=0)      # (3C, HW)

    s = wc[:, CENTER:CENTER + 1] * xc                    # centre tap
    for o, (dy, dx) in enumerate(OFFSETS):
        if dy == 0 and dx == 0:
            continue
        shift = (-(dy * W + dx)) % HW
        rolled = pltpu.roll(xc, shift, axis=1)           # XLU lane rotate
        s = s + (wc[:, o:o + 1] * mask_ref[o:o + 1, :]) * rolled
    s = jnp.maximum(s, 0.0)                              # ReLU

    # ---------------- 1x1 conv: (C,3C) @ (3C,HW) on the MXU --------------
    y = jnp.dot(wc1_ref[...], s, preferred_element_type=f32)   # (C, HW)

    # --------- spatial attention: 7x7 conv as one band matmul ------------
    am = jnp.concatenate([jnp.mean(y, axis=0, keepdims=True),
                          jnp.max(y, axis=0, keepdims=True)], axis=1)  # (1,2HW)
    att = jnp.dot(am, band_ref[...], preferred_element_type=f32)       # (1,HW)
    att = jnp.tanh(att) + 1.0
    out_ref[0] = (att * y).astype(out_ref.dtype)


# ---------------------------------------------------------------------------
# Wrapper-side precompute (all static index math in numpy)
# ---------------------------------------------------------------------------
def _embed_matrix(k, dil):
    """(k*k, NOFF) one-hot map from a branch's (ky,kx) taps to offset cols."""
    e = np.zeros((k * k, NOFF), np.float32)
    r = (k - 1) // 2
    t = 0
    for ky in range(k):
        for kx in range(k):
            e[t, OFF_IDX[((ky - r) * dil, (kx - r) * dil)]] = 1.0
            t += 1
    return jnp.asarray(e)


def _dw_basis(params, c3):
    """(8, 3C, NOFF): per-attention-coefficient depthwise weights per offset."""
    e_id = np.zeros((c3, NOFF), np.float32)
    e_id[:, CENTER] = 1.0
    b_id = jnp.asarray(e_id)                               # identity (a0)
    one_hot_c = jnp.asarray(e_id[0:1, :])                  # (1, NOFF)

    b_k1 = params["dc_k1d1"].reshape(c3, 1) * one_hot_c
    b_k3 = params["dc_k3d1"].reshape(c3, 9) @ _embed_matrix(3, 1)
    b_k5 = params["dc_k5d1"].reshape(c3, 25) @ _embed_matrix(5, 1)
    b_k7 = params["dc_k7d1"].reshape(c3, 49) @ _embed_matrix(7, 1)
    b_d5 = params["dc_k3d5"].reshape(c3, 9) @ _embed_matrix(3, 5)
    b_d7 = params["dc_k3d7"].reshape(c3, 9) @ _embed_matrix(3, 7)
    # a[2] and a[5] both scale convk3d1 (c5 == c2 in the reference forward).
    return jnp.stack([b_id, b_k1, b_k3, b_k5, b_k7, b_k3, b_d5, b_d7], axis=0)


def _offset_masks(H, W):
    """(NOFF, HW) f32 validity masks for the flat lane rolls."""
    hw = H * W
    y, x = np.divmod(np.arange(hw), W)
    m = np.zeros((NOFF, hw), np.float32)
    for o, (dy, dx) in enumerate(OFFSETS):
        m[o] = ((y + dy >= 0) & (y + dy < H)
                & (x + dx >= 0) & (x + dx < W)).astype(np.float32)
    return jnp.asarray(m)


def _sa_band(sa_w, H, W):
    """(2*HW, HW) band matrix: 7x7 conv over {mean,max} maps as one matmul."""
    hw = H * W
    y, x = np.divmod(np.arange(hw), W)
    rows, cols, counts = [], [], []
    for m in range(2):
        for ky in range(7):
            for kx in range(7):
                yy, xx = y + ky - 3, x + kx - 3
                valid = (yy >= 0) & (yy < H) & (xx >= 0) & (xx < W)
                rows.append(m * hw + (yy * W + xx)[valid])
                cols.append(np.arange(hw)[valid])
                counts.append(int(valid.sum()))
    rows = np.concatenate(rows)
    cols = np.concatenate(cols)
    vals = jnp.repeat(sa_w[0].reshape(2 * 7 * 7), np.asarray(counts))
    return jnp.zeros((2 * hw, hw), jnp.float32).at[rows, cols].add(vals)


# ---------------------------------------------------------------------------
# Public entry point (NCHW in / NCHW out, like the PyTorch module)
# ---------------------------------------------------------------------------
def cross_modal_attention_block(x1, x2, params):
    n, c, H, W = x1.shape
    c3, hw = 3 * c, H * W
    x1r = x1.reshape(n, c, hw)          # free reshape: NCHW -> (N, C, H*W)
    x2r = x2.reshape(n, c, hw)

    w1 = params["ca_w1"].reshape(-1, c3)                 # (hidden, 3C)
    w2 = params["ca_w2"].reshape(8, -1)                  # (8, hidden)
    wc1 = params["dc_conv1"].reshape(c, c3)              # (C, 3C)
    basis = _dw_basis(params, c3)                        # (8, 3C, NOFF)
    fmask = _offset_masks(H, W)                          # (NOFF, HW)
    band = _sa_band(params["sa_w"], H, W)                # (2*HW, HW)

    kern = functools.partial(_cma_kernel, W=W, HW=hw)

    def const_spec(a):
        zeros = (0,) * a.ndim
        return pl.BlockSpec(a.shape, lambda nn, _z=zeros: _z)

    flops = n * (3 * hw * c3 * NOFF          # depthwise tap passes
                 + 2 * hw * c3 * c           # 1x1 conv matmul
                 + 2 * hw * 2 * hw           # 7x7 SA band matmul
                 + 6 * hw * c3)              # concat / relu / CA reductions
    bytes_accessed = 4 * (x1r.size + x2r.size + 2 * c * hw
                          + basis.size + fmask.size + band.size
                          + wc1.size + w1.size + w2.size + n * c * hw)
    cost = pl.CostEstimate(flops=int(flops), transcendentals=int(n * (hw + 8)),
                           bytes_accessed=int(bytes_accessed))

    out = pl.pallas_call(
        kern,
        out_shape=jax.ShapeDtypeStruct((n, c, hw), jnp.float32),
        grid=(n,),
        in_specs=[
            pl.BlockSpec((1, c, hw), lambda nn: (nn, 0, 0)),   # x1 (this image)
            pl.BlockSpec((1, c, hw), lambda nn: (nn, 0, 0)),   # x2 (this image)
            const_spec(x1r[0]),                                # x1 batch-0 (CA)
            const_spec(x2r[0]),                                # x2 batch-0 (CA)
            const_spec(w1), const_spec(w2),
            const_spec(basis), const_spec(fmask),
            const_spec(wc1), const_spec(band),
        ],
        out_specs=pl.BlockSpec((1, c, hw), lambda nn: (nn, 0, 0)),
        compiler_params=pltpu.CompilerParams(
            dimension_semantics=("parallel",),
            vmem_limit_bytes=32 * 1024 * 1024),
        cost_estimate=cost,
    )(x1r, x2r, x1r[0], x2r[0], w1, w2, basis, fmask, wc1, band)
    return out.reshape(n, c, H, W)


# ---------------------------------------------------------------------------
# Pure-JAX reference (mirrors the PyTorch forward exactly, NCHW)
# ---------------------------------------------------------------------------
def reference_forward(x1, x2, params):
    out = jnp.concatenate([x1, x2, x1 + x2], axis=1)
    _, cc, _, _ = out.shape
    dn = ("NCHW", "OIHW", "NCHW")

    def conv(x, w, pad=0, dil=1, groups=1):
        return lax.conv_general_dilated(
            x, w, (1, 1), [(pad, pad), (pad, pad)],
            rhs_dilation=(dil, dil), dimension_numbers=dn,
            feature_group_count=groups)

    avg = jnp.mean(out, axis=(2, 3), keepdims=True)
    mx = jnp.max(out, axis=(2, 3), keepdims=True)

    def mlp(v):
        h = jax.nn.relu(conv(v, params["ca_w1"]))
        return conv(h, params["ca_w2"])

    a = jax.nn.sigmoid(mlp(avg) + mlp(mx)).reshape(-1)

    c1 = conv(out, params["dc_k1d1"], 0, 1, cc)
    c2 = conv(out, params["dc_k3d1"], 1, 1, cc)
    c3_ = conv(out, params["dc_k5d1"], 2, 1, cc)
    c4 = conv(out, params["dc_k7d1"], 3, 1, cc)
    c5 = conv(out, params["dc_k3d1"], 1, 1, cc)
    c6 = conv(out, params["dc_k3d5"], 5, 5, cc)
    c7 = conv(out, params["dc_k3d7"], 7, 7, cc)
    o = jax.nn.relu(out * a[0] + c1 * a[1] + c2 * a[2] + c3_ * a[3]
                    + c4 * a[4] + c5 * a[5] + c6 * a[6] + c7 * a[7])
    o = conv(o, params["dc_conv1"])

    s = jnp.concatenate([jnp.mean(o, axis=1, keepdims=True),
                         jnp.max(o, axis=1, keepdims=True)], axis=1)
    s = conv(s, params["sa_w"], 3)
    return (jnp.tanh(s) + 1.0) * o


if __name__ == "__main__":
    N, C, H, W = 2, 16, 16, 16          # per-modality channels = 16
    C3 = 3 * C                          # = 48
    hidden = C3 // 16                   # = 3

    key = jax.random.PRNGKey(0)
    keys = jax.random.split(key, 12)

    def mkw(k, shape, scale=0.1):
        return jax.random.normal(k, shape, dtype=jnp.float32) * scale

    x1 = jax.random.normal(keys[0], (N, C, H, W), dtype=jnp.float32)
    x2 = jax.random.normal(keys[1], (N, C, H, W), dtype=jnp.float32)

    params = {
        "ca_w1": mkw(keys[2], (hidden, C3, 1, 1)),
        "ca_w2": mkw(keys[3], (8, hidden, 1, 1)),
        "dc_k1d1": mkw(keys[4], (C3, 1, 1, 1)),
        "dc_k3d1": mkw(keys[5], (C3, 1, 3, 3)),
        "dc_k5d1": mkw(keys[6], (C3, 1, 5, 5)),
        "dc_k7d1": mkw(keys[7], (C3, 1, 7, 7)),
        # NOTE: the module also defines convk3d3, but forward() never uses it.
        "dc_k3d5": mkw(keys[8], (C3, 1, 3, 3)),
        "dc_k3d7": mkw(keys[9], (C3, 1, 3, 3)),
        "dc_conv1": mkw(keys[10], (C, C3, 1, 1)),
        "sa_w": mkw(keys[11], (1, 2, 7, 7)),
    }

    out = jax.jit(cross_modal_attention_block)(x1, x2, params)
    out = jax.block_until_ready(out)

    ref = reference_forward(x1, x2, params)
    np.testing.assert_allclose(np.asarray(out), np.asarray(ref),
                               rtol=1e-2, atol=1e-2)
    print("KERNEL_OK")
</pallas_src>

<mosaic_0001>
module attributes {stable_mosaic.version = 11 : i64} {
  func.func private @main(%arg0: i32) attributes {dimension_semantics = [#tpu.dimension_semantics<core_parallel>], iteration_bounds = array<i64: 2>, tpu.core_type = #tpu.core_type<sc_scalar_subcore>, window_params = []} {
    return
  }
}

module attributes {stable_mosaic.version = 11 : i64} {
  func.func private @main(%arg0: i32) attributes {dimension_semantics = [#tpu.dimension_semantics<core_parallel>], iteration_bounds = array<i64: 2>, tpu.core_type = #tpu.core_type<sc_scalar_subcore>, window_params = []} {
    return
  }
}

module attributes {stable_mosaic.version = 11 : i64} {
  func.func @_cma_kernel(%arg0: i32, %arg1: memref<1x16x256xf32, #tpu.memory_space<vmem>>, %arg2: memref<1x16x256xf32, #tpu.memory_space<vmem>>, %arg3: memref<16x256xf32, #tpu.memory_space<vmem>>, %arg4: memref<16x256xf32, #tpu.memory_space<vmem>>, %arg5: memref<3x48xf32, #tpu.memory_space<vmem>>, %arg6: memref<8x3xf32, #tpu.memory_space<vmem>>, %arg7: memref<8x48x65xf32, #tpu.memory_space<vmem>>, %arg8: memref<65x256xf32, #tpu.memory_space<vmem>>, %arg9: memref<16x48xf32, #tpu.memory_space<vmem>>, %arg10: memref<512x256xf32, #tpu.memory_space<vmem>>, %arg11: memref<1x16x256xf32, #tpu.memory_space<vmem>>) attributes {dimension_semantics = [#tpu.dimension_semantics<parallel>], iteration_bounds = array<i64: 2>, scalar_prefetch = 0 : i64, scratch_operands = 0 : i64, tpu.core_type = #tpu.core_type<tc>, window_params = [{transform_indices = @transform_0, window_bounds = array<i64: 1, 16, 256>}, {transform_indices = @transform_1, window_bounds = array<i64: 1, 16, 256>}, {pipeline_mode = #tpu.pipeline_mode<synchronous>, transform_indices = @transform_2, window_bounds = array<i64: 16, 256>}, {pipeline_mode = #tpu.pipeline_mode<synchronous>, transform_indices = @transform_3, window_bounds = array<i64: 16, 256>}, {pipeline_mode = #tpu.pipeline_mode<synchronous>, transform_indices = @transform_4, window_bounds = array<i64: 3, 48>}, {pipeline_mode = #tpu.pipeline_mode<synchronous>, transform_indices = @transform_5, window_bounds = array<i64: 8, 3>}, {pipeline_mode = #tpu.pipeline_mode<synchronous>, transform_indices = @transform_6, window_bounds = array<i64: 8, 48, 65>}, {pipeline_mode = #tpu.pipeline_mode<synchronous>, transform_indices = @transform_7, window_bounds = array<i64: 65, 256>}, {pipeline_mode = #tpu.pipeline_mode<synchronous>, transform_indices = @transform_8, window_bounds = array<i64: 16, 48>}, {pipeline_mode = #tpu.pipeline_mode<synchronous>, transform_indices = @transform_9, window_bounds = array<i64: 512, 256>}, {transform_indices = @transform_10, window_bounds = array<i64: 1, 16, 256>}]} {
    %c0 = arith.constant 0 : index
    %c0_0 = arith.constant 0 : index
    %0 = vector.load %arg3[%c0, %c0_0] : memref<16x256xf32, #tpu.memory_space<vmem>>, vector<16x256xf32>
    %c0_1 = arith.constant 0 : index
    %c0_2 = arith.constant 0 : index
    %1 = vector.load %arg4[%c0_1, %c0_2] : memref<16x256xf32, #tpu.memory_space<vmem>>, vector<16x256xf32>
    %cst = arith.constant dense<0.000000e+00> : vector<16xf32>
    %2 = vector.multi_reduction <add>, %0, %cst [1] : vector<16x256xf32> to vector<16xf32>
    %3 = vector.shape_cast %2 : vector<16xf32> to vector<16x1xf32>
    %cst_3 = arith.constant 2.560000e+02 : f32
    %4 = vector.broadcast %cst_3 : f32 to vector<16x1xf32>
    %5 = arith.divf %3, %4 : vector<16x1xf32>
    %cst_4 = arith.constant dense<0.000000e+00> : vector<16xf32>
    %6 = vector.multi_reduction <add>, %1, %cst_4 [1] : vector<16x256xf32> to vector<16xf32>
    %7 = vector.shape_cast %6 : vector<16xf32> to vector<16x1xf32>
    %cst_5 = arith.constant 2.560000e+02 : f32
    %8 = vector.broadcast %cst_5 : f32 to vector<16x1xf32>
    %9 = arith.divf %7, %8 : vector<16x1xf32>
    %10 = arith.addf %5, %9 : vector<16x1xf32>
    %11 = tpu.concatenate %5, %9, %10 in 0 : vector<16x1xf32>, vector<16x1xf32>, vector<16x1xf32> -> vector<48x1xf32>
    %cst_6 = arith.constant dense<0xFF800000> : vector<16xf32>
    %12 = vector.multi_reduction <maximumf>, %0, %cst_6 [1] : vector<16x256xf32> to vector<16xf32>
    %13 = vector.shape_cast %12 : vector<16xf32> to vector<16x1xf32>
    %cst_7 = arith.constant dense<0xFF800000> : vector<16xf32>
    %14 = vector.multi_reduction <maximumf>, %1, %cst_7 [1] : vector<16x256xf32> to vector<16xf32>
    %15 = vector.shape_cast %14 : vector<16xf32> to vector<16x1xf32>
    %16 = arith.addf %0, %1 : vector<16x256xf32>
    %cst_8 = arith.constant dense<0xFF800000> : vector<16xf32>
    %17 = vector.multi_reduction <maximumf>, %16, %cst_8 [1] : vector<16x256xf32> to vector<16xf32>
    %18 = vector.shape_cast %17 : vector<16xf32> to vector<16x1xf32>
    %19 = tpu.concatenate %13, %15, %18 in 0 : vector<16x1xf32>, vector<16x1xf32>, vector<16x1xf32> -> vector<48x1xf32>
    %20 = tpu.concatenate %11, %19 in 1 : vector<48x1xf32>, vector<48x1xf32> -> vector<48x2xf32>
    %c0_9 = arith.constant 0 : index
    %c0_10 = arith.constant 0 : index
    %21 = vector.load %arg5[%c0_9, %c0_10] : memref<3x48xf32, #tpu.memory_space<vmem>>, vector<3x48xf32>
    %cst_11 = arith.constant dense<0.000000e+00> : vector<3x2xf32>
    %22 = tpu.matmul %21, %20, %cst_11 {dimension_numbers = #tpu.dot_dimension_numbers<[1], [0], [0], [1], [0, 0, 1, 1], [], []>} : vector<3x48xf32>, vector<48x2xf32>, vector<3x2xf32> -> vector<3x2xf32>
    %cst_12 = arith.constant 0.000000e+00 : f32
    %23 = vector.broadcast %cst_12 : f32 to vector<3x2xf32>
    %24 = arith.maximumf %22, %23 : vector<3x2xf32>
    %c0_13 = arith.constant 0 : index
    %c0_14 = arith.constant 0 : index
    %25 = vector.load %arg6[%c0_13, %c0_14] : memref<8x3xf32, #tpu.memory_space<vmem>>, vector<8x3xf32>
    %26 = vector.extract_strided_slice %24 {offsets = [0, 0], sizes = [3, 1], strides = [1, 1]} : vector<3x2xf32> to vector<3x1xf32>
    %27 = vector.extract_strided_slice %24 {offsets = [0, 1], sizes = [3, 1], strides = [1, 1]} : vector<3x2xf32> to vector<3x1xf32>
    %28 = arith.addf %26, %27 : vector<3x1xf32>
    %cst_15 = arith.constant dense<0.000000e+00> : vector<8x1xf32>
    %29 = tpu.matmul %25, %28, %cst_15 {dimension_numbers = #tpu.dot_dimension_numbers<[1], [0], [0], [1], [0, 0, 1, 1], [], []>} : vector<8x3xf32>, vector<3x1xf32>, vector<8x1xf32> -> vector<8x1xf32>
    %cst_16 = arith.constant 0.000000e+00 : f32
    %30 = vector.broadcast %cst_16 : f32 to vector<8x1xf32>
    %31 = arith.subf %30, %29 : vector<8x1xf32>
    %32 = math.exp %31 : vector<8x1xf32>
    %cst_17 = arith.constant 1.000000e+00 : f32
    %33 = vector.broadcast %cst_17 : f32 to vector<8x1xf32>
    %34 = arith.addf %33, %32 : vector<8x1xf32>
    %cst_18 = arith.constant 1.000000e+00 : f32
    %35 = vector.broadcast %cst_18 : f32 to vector<8x1xf32>
    %36 = arith.divf %35, %34 : vector<8x1xf32>
    %37 = vector.extract_strided_slice %36 {offsets = [0, 0], sizes = [1, 1], strides = [1, 1]} : vector<8x1xf32> to vector<1x1xf32>
    %c0_19 = arith.constant 0 : index
    %c0_20 = arith.constant 0 : index
    %c0_21 = arith.constant 0 : index
    %38 = vector.load %arg7[%c0_19, %c0_20, %c0_21] : memref<8x48x65xf32, #tpu.memory_space<vmem>>, vector<1x48x65xf32>
    %39 = vector.shape_cast %38 : vector<1x48x65xf32> to vector<48x65xf32>
    %40 = vector.broadcast %37 : vector<1x1xf32> to vector<48x65xf32>
    %41 = arith.mulf %40, %39 : vector<48x65xf32>
    %42 = vector.extract_strided_slice %36 {offsets = [1, 0], sizes = [1, 1], strides = [1, 1]} : vector<8x1xf32> to vector<1x1xf32>
    %c1 = arith.constant 1 : index
    %c0_22 = arith.constant 0 : index
    %c0_23 = arith.constant 0 : index
    %43 = vector.load %arg7[%c1, %c0_22, %c0_23] : memref<8x48x65xf32, #tpu.memory_space<vmem>>, vector<1x48x65xf32>
    %44 = vector.shape_cast %43 : vector<1x48x65xf32> to vector<48x65xf32>
    %45 = vector.broadcast %42 : vector<1x1xf32> to vector<48x65xf32>
    %46 = arith.mulf %45, %44 : vector<48x65xf32>
    %47 = arith.addf %41, %46 : vector<48x65xf32>
    %48 = vector.extract_strided_slice %36 {offsets = [2, 0], sizes = [1, 1], strides = [1, 1]} : vector<8x1xf32> to vector<1x1xf32>
    %c2 = arith.constant 2 : index
    %c0_24 = arith.constant 0 : index
    %c0_25 = arith.constant 0 : index
    %49 = vector.load %arg7[%c2, %c0_24, %c0_25] : memref<8x48x65xf32, #tpu.memory_space<vmem>>, vector<1x48x65xf32>
    %50 = vector.shape_cast %49 : vector<1x48x65xf32> to vector<48x65xf32>
    %51 = vector.broadcast %48 : vector<1x1xf32> to vector<48x65xf32>
    %52 = arith.mulf %51, %50 : vector<48x65xf32>
    %53 = arith.addf %47, %52 : vector<48x65xf32>
    %54 = vector.extract_strided_slice %36 {offsets = [3, 0], sizes = [1, 1], strides = [1, 1]} : vector<8x1xf32> to vector<1x1xf32>
    %c3 = arith.constant 3 : index
    %c0_26 = arith.constant 0 : index
    %c0_27 = arith.constant 0 : index
    %55 = vector.load %arg7[%c3, %c0_26, %c0_27] : memref<8x48x65xf32, #tpu.memory_space<vmem>>, vector<1x48x65xf32>
    %56 = vector.shape_cast %55 : vector<1x48x65xf32> to vector<48x65xf32>
    %57 = vector.broadcast %54 : vector<1x1xf32> to vector<48x65xf32>
    %58 = arith.mulf %57, %56 : vector<48x65xf32>
    %59 = arith.addf %53, %58 : vector<48x65xf32>
    %60 = vector.extract_strided_slice %36 {offsets = [4, 0], sizes = [1, 1], strides = [1, 1]} : vector<8x1xf32> to vector<1x1xf32>
    %c4 = arith.constant 4 : index
    %c0_28 = arith.constant 0 : index
    %c0_29 = arith.constant 0 : index
    %61 = vector.load %arg7[%c4, %c0_28, %c0_29] : memref<8x48x65xf32, #tpu.memory_space<vmem>>, vector<1x48x65xf32>
    %62 = vector.shape_cast %61 : vector<1x48x65xf32> to vector<48x65xf32>
    %63 = vector.broadcast %60 : vector<1x1xf32> to vector<48x65xf32>
    %64 = arith.mulf %63, %62 : vector<48x65xf32>
    %65 = arith.addf %59, %64 : vector<48x65xf32>
    %66 = vector.extract_strided_slice %36 {offsets = [5, 0], sizes = [1, 1], strides = [1, 1]} : vector<8x1xf32> to vector<1x1xf32>
    %c5 = arith.constant 5 : index
    %c0_30 = arith.constant 0 : index
    %c0_31 = arith.constant 0 : index
    %67 = vector.load %arg7[%c5, %c0_30, %c0_31] : memref<8x48x65xf32, #tpu.memory_space<vmem>>, vector<1x48x65xf32>
    %68 = vector.shape_cast %67 : vector<1x48x65xf32> to vector<48x65xf32>
    %69 = vector.broadcast %66 : vector<1x1xf32> to vector<48x65xf32>
    %70 = arith.mulf %69, %68 : vector<48x65xf32>
    %71 = arith.addf %65, %70 : vector<48x65xf32>
    %72 = vector.extract_strided_slice %36 {offsets = [6, 0], sizes = [1, 1], strides = [1, 1]} : vector<8x1xf32> to vector<1x1xf32>
    %c6 = arith.constant 6 : index
    %c0_32 = arith.constant 0 : index
    %c0_33 = arith.constant 0 : index
    %73 = vector.load %arg7[%c6, %c0_32, %c0_33] : memref<8x48x65xf32, #tpu.memory_space<vmem>>, vector<1x48x65xf32>
    %74 = vector.shape_cast %73 : vector<1x48x65xf32> to vector<48x65xf32>
    %75 = vector.broadcast %72 : vector<1x1xf32> to vector<48x65xf32>
    %76 = arith.mulf %75, %74 : vector<48x65xf32>
    %77 = arith.addf %71, %76 : vector<48x65xf32>
    %78 = vector.extract_strided_slice %36 {offsets = [7, 0], sizes = [1, 1], strides = [1, 1]} : vector<8x1xf32> to vector<1x1xf32>
    %c7 = arith.constant 7 : index
    %c0_34 = arith.constant 0 : index
    %c0_35 = arith.constant 0 : index
    %79 = vector.load %arg7[%c7, %c0_34, %c0_35] : memref<8x48x65xf32, #tpu.memory_space<vmem>>, vector<1x48x65xf32>
    %80 = vector.shape_cast %79 : vector<1x48x65xf32> to vector<48x65xf32>
    %81 = vector.broadcast %78 : vector<1x1xf32> to vector<48x65xf32>
    %82 = arith.mulf %81, %80 : vector<48x65xf32>
    %83 = arith.addf %77, %82 : vector<48x65xf32>
    %c0_36 = arith.constant 0 : index
    %c0_37 = arith.constant 0 : index
    %c0_38 = arith.constant 0 : index
    %84 = vector.load %arg1[%c0_36, %c0_37, %c0_38] : memref<1x16x256xf32, #tpu.memory_space<vmem>>, vector<1x16x256xf32>
    %85 = vector.shape_cast %84 : vector<1x16x256xf32> to vector<16x256xf32>
    %c0_39 = arith.constant 0 : index
    %c0_40 = arith.constant 0 : index
    %c0_41 = arith.constant 0 : index
    %86 = vector.load %arg2[%c0_39, %c0_40, %c0_41] : memref<1x16x256xf32, #tpu.memory_space<vmem>>, vector<1x16x256xf32>
    %87 = vector.shape_cast %86 : vector<1x16x256xf32> to vector<16x256xf32>
    %88 = arith.addf %85, %87 : vector<16x256xf32>
    %89 = tpu.concatenate %85, %87, %88 in 0 : vector<16x256xf32>, vector<16x256xf32>, vector<16x256xf32> -> vector<48x256xf32>
    %90 = vector.extract_strided_slice %83 {offsets = [0, 24], sizes = [48, 1], strides = [1, 1]} : vector<48x65xf32> to vector<48x1xf32>
    %91 = vector.broadcast %90 : vector<48x1xf32> to vector<48x256xf32>
    %92 = arith.mulf %91, %89 : vector<48x256xf32>
    %c51_i32 = arith.constant 51 : i32
    %93 = tpu.dynamic_rotate %89 by %c51_i32 dim 1 : vector<48x256xf32>, i32 -> vector<48x256xf32>
    %94 = vector.extract_strided_slice %83 {offsets = [0, 0], sizes = [48, 1], strides = [1, 1]} : vector<48x65xf32> to vector<48x1xf32>
    %c0_42 = arith.constant 0 : index
    %c0_43 = arith.constant 0 : index
    %95 = vector.load %arg8[%c0_42, %c0_43] : memref<65x256xf32, #tpu.memory_space<vmem>>, vector<1x256xf32>
    %96 = vector.broadcast %94 : vector<48x1xf32> to vector<48x256xf32>
    %97 = vector.broadcast %95 : vector<1x256xf32> to vector<48x256xf32>
    %98 = arith.mulf %96, %97 : vector<48x256xf32>
    %99 = arith.mulf %98, %93 : vector<48x256xf32>
    %100 = arith.addf %92, %99 : vector<48x256xf32>
    %c50_i32 = arith.constant 50 : i32
    %101 = tpu.dynamic_rotate %89 by %c50_i32 dim 1 : vector<48x256xf32>, i32 -> vector<48x256xf32>
    %102 = vector.extract_strided_slice %83 {offsets = [0, 1], sizes = [48, 1], strides = [1, 1]} : vector<48x65xf32> to vector<48x1xf32>
    %c1_44 = arith.constant 1 : index
    %c0_45 = arith.constant 0 : index
    %103 = vector.load %arg8[%c1_44, %c0_45] : memref<65x256xf32, #tpu.memory_space<vmem>>, vector<1x256xf32>
    %104 = vector.broadcast %102 : vector<48x1xf32> to vector<48x256xf32>
    %105 = vector.broadcast %103 : vector<1x256xf32> to vector<48x256xf32>
    %106 = arith.mulf %104, %105 : vector<48x256xf32>
    %107 = arith.mulf %106, %101 : vector<48x256xf32>
    %108 = arith.addf %100, %107 : vector<48x256xf32>
    %c49_i32 = arith.constant 49 : i32
    %109 = tpu.dynamic_rotate %89 by %c49_i32 dim 1 : vector<48x256xf32>, i32 -> vector<48x256xf32>
    %110 = vector.extract_strided_slice %83 {offsets = [0, 2], sizes = [48, 1], strides = [1, 1]} : vector<48x65xf32> to vector<48x1xf32>
    %c2_46 = arith.constant 2 : index
    %c0_47 = arith.constant 0 : index
    %111 = vector.load %arg8[%c2_46, %c0_47] : memref<65x256xf32, #tpu.memory_space<vmem>>, vector<1x256xf32>
    %112 = vector.broadcast %110 : vector<48x1xf32> to vector<48x256xf32>
    %113 = vector.broadcast %111 : vector<1x256xf32> to vector<48x256xf32>
    %114 = arith.mulf %112, %113 : vector<48x256xf32>
    %115 = arith.mulf %114, %109 : vector<48x256xf32>
    %116 = arith.addf %108, %115 : vector<48x256xf32>
    %c48_i32 = arith.constant 48 : i32
    %117 = tpu.dynamic_rotate %89 by %c48_i32 dim 1 : vector<48x256xf32>, i32 -> vector<48x256xf32>
    %118 = vector.extract_strided_slice %83 {offsets = [0, 3], sizes = [48, 1], strides = [1, 1]} : vector<48x65xf32> to vector<48x1xf32>
    %c3_48 = arith.constant 3 : index
    %c0_49 = arith.constant 0 : index
    %119 = vector.load %arg8[%c3_48, %c0_49] : memref<65x256xf32, #tpu.memory_space<vmem>>, vector<1x256xf32>
    %120 = vector.broadcast %118 : vector<48x1xf32> to vector<48x256xf32>
    %121 = vector.broadcast %119 : vector<1x256xf32> to vector<48x256xf32>
    %122 = arith.mulf %120, %121 : vector<48x256xf32>
    %123 = arith.mulf %122, %117 : vector<48x256xf32>
    %124 = arith.addf %116, %123 : vector<48x256xf32>
    %c47_i32 = arith.constant 47 : i32
    %125 = tpu.dynamic_rotate %89 by %c47_i32 dim 1 : vector<48x256xf32>, i32 -> vector<48x256xf32>
    %126 = vector.extract_strided_slice %83 {offsets = [0, 4], sizes = [48, 1], strides = [1, 1]} : vector<48x65xf32> to vector<48x1xf32>
    %c4_50 = arith.constant 4 : index
    %c0_51 = arith.constant 0 : index
    %127 = vector.load %arg8[%c4_50, %c0_51] : memref<65x256xf32, #tpu.memory_space<vmem>>, vector<1x256xf32>
    %128 = vector.broadcast %126 : vector<48x1xf32> to vector<48x256xf32>
    %129 = vector.broadcast %127 : vector<1x256xf32> to vector<48x256xf32>
    %130 = arith.mulf %128, %129 : vector<48x256xf32>
    %131 = arith.mulf %130, %125 : vector<48x256xf32>
    %132 = arith.addf %124, %131 : vector<48x256xf32>
    %c46_i32 = arith.constant 46 : i32
    %133 = tpu.dynamic_rotate %89 by %c46_i32 dim 1 : vector<48x256xf32>, i32 -> vector<48x256xf32>
    %134 = vector.extract_strided_slice %83 {offsets = [0, 5], sizes = [48, 1], strides = [1, 1]} : vector<48x65xf32> to vector<48x1xf32>
    %c5_52 = arith.constant 5 : index
    %c0_53 = arith.constant 0 : index
    %135 = vector.load %arg8[%c5_52, %c0_53] : memref<65x256xf32, #tpu.memory_space<vmem>>, vector<1x256xf32>
    %136 = vector.broadcast %134 : vector<48x1xf32> to vector<48x256xf32>
    %137 = vector.broadcast %135 : vector<1x256xf32> to vector<48x256xf32>
    %138 = arith.mulf %136, %137 : vector<48x256xf32>
    %139 = arith.mulf %138, %133 : vector<48x256xf32>
    %140 = arith.addf %132, %139 : vector<48x256xf32>
    %c45_i32 = arith.constant 45 : i32
    %141 = tpu.dynamic_rotate %89 by %c45_i32 dim 1 : vector<48x256xf32>, i32 -> vector<48x256xf32>
    %142 = vector.extract_strided_slice %83 {offsets = [0, 6], sizes = [48, 1], strides = [1, 1]} : vector<48x65xf32> to vector<48x1xf32>
    %c6_54 = arith.constant 6 : index
    %c0_55 = arith.constant 0 : index
    %143 = vector.load %arg8[%c6_54, %c0_55] : memref<65x256xf32, #tpu.memory_space<vmem>>, vector<1x256xf32>
    %144 = vector.broadcast %142 : vector<48x1xf32> to vector<48x256xf32>
    %145 = vector.broadcast %143 : vector<1x256xf32> to vector<48x256xf32>
    %146 = arith.mulf %144, %145 : vector<48x256xf32>
    %147 = arith.mulf %146, %141 : vector<48x256xf32>
    %148 = arith.addf %140, %147 : vector<48x256xf32>
    %c35_i32 = arith.constant 35 : i32
    %149 = tpu.dynamic_rotate %89 by %c35_i32 dim 1 : vector<48x256xf32>, i32 -> vector<48x256xf32>
    %150 = vector.extract_strided_slice %83 {offsets = [0, 7], sizes = [48, 1], strides = [1, 1]} : vector<48x65xf32> to vector<48x1xf32>
    %c7_56 = arith.constant 7 : index
    %c0_57 = arith.constant 0 : index
    %151 = vector.load %arg8[%c7_56, %c0_57] : memref<65x256xf32, #tpu.memory_space<vmem>>, vector<1x256xf32>
    %152 = vector.broadcast %150 : vector<48x1xf32> to vector<48x256xf32>
    %153 = vector.broadcast %151 : vector<1x256xf32> to vector<48x256xf32>
    %154 = arith.mulf %152, %153 : vector<48x256xf32>
    %155 = arith.mulf %154, %149 : vector<48x256xf32>
    %156 = arith.addf %148, %155 : vector<48x256xf32>
    %c34_i32 = arith.constant 34 : i32
    %157 = tpu.dynamic_rotate %89 by %c34_i32 dim 1 : vector<48x256xf32>, i32 -> vector<48x256xf32>
    %158 = vector.extract_strided_slice %83 {offsets = [0, 8], sizes = [48, 1], strides = [1, 1]} : vector<48x65xf32> to vector<48x1xf32>
    %c8 = arith.constant 8 : index
    %c0_58 = arith.constant 0 : index
    %159 = vector.load %arg8[%c8, %c0_58] : memref<65x256xf32, #tpu.memory_space<vmem>>, vector<1x256xf32>
    %160 = vector.broadcast %158 : vector<48x1xf32> to vector<48x256xf32>
    %161 = vector.broadcast %159 : vector<1x256xf32> to vector<48x256xf32>
    %162 = arith.mulf %160, %161 : vector<48x256xf32>
    %163 = arith.mulf %162, %157 : vector<48x256xf32>
    %164 = arith.addf %156, %163 : vector<48x256xf32>
    %c33_i32 = arith.constant 33 : i32
    %165 = tpu.dynamic_rotate %89 by %c33_i32 dim 1 : vector<48x256xf32>, i32 -> vector<48x256xf32>
    %166 = vector.extract_strided_slice %83 {offsets = [0, 9], sizes = [48, 1], strides = [1, 1]} : vector<48x65xf32> to vector<48x1xf32>
    %c9 = arith.constant 9 : index
    %c0_59 = arith.constant 0 : index
    %167 = vector.load %arg8[%c9, %c0_59] : memref<65x256xf32, #tpu.memory_space<vmem>>, vector<1x256xf32>
    %168 = vector.broadcast %166 : vector<48x1xf32> to vector<48x256xf32>
    %169 = vector.broadcast %167 : vector<1x256xf32> to vector<48x256xf32>
    %170 = arith.mulf %168, %169 : vector<48x256xf32>
    %171 = arith.mulf %170, %165 : vector<48x256xf32>
    %172 = arith.addf %164, %171 : vector<48x256xf32>
    %c32_i32 = arith.constant 32 : i32
    %173 = tpu.dynamic_rotate %89 by %c32_i32 dim 1 : vector<48x256xf32>, i32 -> vector<48x256xf32>
    %174 = vector.extract_strided_slice %83 {offsets = [0, 10], sizes = [48, 1], strides = [1, 1]} : vector<48x65xf32> to vector<48x1xf32>
    %c10 = arith.constant 10 : index
    %c0_60 = arith.constant 0 : index
    %175 = vector.load %arg8[%c10, %c0_60] : memref<65x256xf32, #tpu.memory_space<vmem>>, vector<1x256xf32>
    %176 = vector.broadcast %174 : vector<48x1xf32> to vector<48x256xf32>
    %177 = vector.broadcast %175 : vector<1x256xf32> to vector<48x256xf32>
    %178 = arith.mulf %176, %177 : vector<48x256xf32>
    %179 = arith.mulf %178, %173 : vector<48x256xf32>
    %180 = arith.addf %172, %179 : vector<48x256xf32>
    %c31_i32 = arith.constant 31 : i32
    %181 = tpu.dynamic_rotate %89 by %c31_i32 dim 1 : vector<48x256xf32>, i32 -> vector<48x256xf32>
    %182 = vector.extract_strided_slice %83 {offsets = [0, 11], sizes = [48, 1], strides = [1, 1]} : vector<48x65xf32> to vector<48x1xf32>
    %c11 = arith.constant 11 : index
    %c0_61 = arith.constant 0 : index
    %183 = vector.load %arg8[%c11, %c0_61] : memref<65x256xf32, #tpu.memory_space<vmem>>, vector<1x256xf32>
    %184 = vector.broadcast %182 : vector<48x1xf32> to vector<48x256xf32>
    %185 = vector.broadcast %183 : vector<1x256xf32> to vector<48x256xf32>
    %186 = arith.mulf %184, %185 : vector<48x256xf32>
    %187 = arith.mulf %186, %181 : vector<48x256xf32>
    %188 = arith.addf %180, %187 : vector<48x256xf32>
    %c30_i32 = arith.constant 30 : i32
    %189 = tpu.dynamic_rotate %89 by %c30_i32 dim 1 : vector<48x256xf32>, i32 -> vector<48x256xf32>
    %190 = vector.extract_strided_slice %83 {offsets = [0, 12], sizes = [48, 1], strides = [1, 1]} : vector<48x65xf32> to vector<48x1xf32>
    %c12 = arith.constant 12 : index
    %c0_62 = arith.constant 0 : index
    %191 = vector.load %arg8[%c12, %c0_62] : memref<65x256xf32, #tpu.memory_space<vmem>>, vector<1x256xf32>
    %192 = vector.broadcast %190 : vector<48x1xf32> to vector<48x256xf32>
    %193 = vector.broadcast %191 : vector<1x256xf32> to vector<48x256xf32>
    %194 = arith.mulf %192, %193 : vector<48x256xf32>
    %195 = arith.mulf %194, %189 : vector<48x256xf32>
    %196 = arith.addf %188, %195 : vector<48x256xf32>
    %c29_i32 = arith.constant 29 : i32
    %197 = tpu.dynamic_rotate %89 by %c29_i32 dim 1 : vector<48x256xf32>, i32 -> vector<48x256xf32>
    %198 = vector.extract_strided_slice %83 {offsets = [0, 13], sizes = [48, 1], strides = [1, 1]} : vector<48x65xf32> to vector<48x1xf32>
    %c13 = arith.constant 13 : index
    %c0_63 = arith.constant 0 : index
    %199 = vector.load %arg8[%c13, %c0_63] : memref<65x256xf32, #tpu.memory_space<vmem>>, vector<1x256xf32>
    %200 = vector.broadcast %198 : vector<48x1xf32> to vector<48x256xf32>
    %201 = vector.broadcast %199 : vector<1x256xf32> to vector<48x256xf32>
    %202 = arith.mulf %200, %201 : vector<48x256xf32>
    %203 = arith.mulf %202, %197 : vector<48x256xf32>
    %204 = arith.addf %196, %203 : vector<48x256xf32>
    %c19_i32 = arith.constant 19 : i32
    %205 = tpu.dynamic_rotate %89 by %c19_i32 dim 1 : vector<48x256xf32>, i32 -> vector<48x256xf32>
    %206 = vector.extract_strided_slice %83 {offsets = [0, 14], sizes = [48, 1], strides = [1, 1]} : vector<48x65xf32> to vector<48x1xf32>
    %c14 = arith.constant 14 : index
    %c0_64 = arith.constant 0 : index
    %207 = vector.load %arg8[%c14, %c0_64] : memref<65x256xf32, #tpu.memory_space<vmem>>, vector<1x256xf32>
    %208 = vector.broadcast %206 : vector<48x1xf32> to vector<48x256xf32>
    %209 = vector.broadcast %207 : vector<1x256xf32> to vector<48x256xf32>
    %210 = arith.mulf %208, %209 : vector<48x256xf32>
    %211 = arith.mulf %210, %205 : vector<48x256xf32>
    %212 = arith.addf %204, %211 : vector<48x256xf32>
    %c18_i32 = arith.constant 18 : i32
    %213 = tpu.dynamic_rotate %89 by %c18_i32 dim 1 : vector<48x256xf32>, i32 -> vector<48x256xf32>
    %214 = vector.extract_strided_slice %83 {offsets = [0, 15], sizes = [48, 1], strides = [1, 1]} : vector<48x65xf32> to vector<48x1xf32>
    %c15 = arith.constant 15 : index
    %c0_65 = arith.constant 0 : index
    %215 = vector.load %arg8[%c15, %c0_65] : memref<65x256xf32, #tpu.memory_space<vmem>>, vector<1x256xf32>
    %216 = vector.broadcast %214 : vector<48x1xf32> to vector<48x256xf32>
    %217 = vector.broadcast %215 : vector<1x256xf32> to vector<48x256xf32>
    %218 = arith.mulf %216, %217 : vector<48x256xf32>
    %219 = arith.mulf %218, %213 : vector<48x256xf32>
    %220 = arith.addf %212, %219 : vector<48x256xf32>
    %c17_i32 = arith.constant 17 : i32
    %221 = tpu.dynamic_rotate %89 by %c17_i32 dim 1 : vector<48x256xf32>, i32 -> vector<48x256xf32>
    %222 = vector.extract_strided_slice %83 {offsets = [0, 16], sizes = [48, 1], strides = [1, 1]} : vector<48x65xf32> to vector<48x1xf32>
    %c16 = arith.constant 16 : index
    %c0_66 = arith.constant 0 : index
    %223 = vector.load %arg8[%c16, %c0_66] : memref<65x256xf32, #tpu.memory_space<vmem>>, vector<1x256xf32>
    %224 = vector.broadcast %222 : vector<48x1xf32> to vector<48x256xf32>
    %225 = vector.broadcast %223 : vector<1x256xf32> to vector<48x256xf32>
    %226 = arith.mulf %224, %225 : vector<48x256xf32>
    %227 = arith.mulf %226, %221 : vector<48x256xf32>
    %228 = arith.addf %220, %227 : vector<48x256xf32>
    %c16_i32 = arith.constant 16 : i32
    %229 = tpu.dynamic_rotate %89 by %c16_i32 dim 1 : vector<48x256xf32>, i32 -> vector<48x256xf32>
    %230 = vector.extract_strided_slice %83 {offsets = [0, 17], sizes = [48, 1], strides = [1, 1]} : vector<48x65xf32> to vector<48x1xf32>
    %c17 = arith.constant 17 : index
    %c0_67 = arith.constant 0 : index
    %231 = vector.load %arg8[%c17, %c0_67] : memref<65x256xf32, #tpu.memory_space<vmem>>, vector<1x256xf32>
    %232 = vector.broadcast %230 : vector<48x1xf32> to vector<48x256xf32>
    %233 = vector.broadcast %231 : vector<1x256xf32> to vector<48x256xf32>
    %234 = arith.mulf %232, %233 : vector<48x256xf32>
    %235 = arith.mulf %234, %229 : vector<48x256xf32>
    %236 = arith.addf %228, %235 : vector<48x256xf32>
    %c15_i32 = arith.constant 15 : i32
    %237 = tpu.dynamic_rotate %89 by %c15_i32 dim 1 : vector<48x256xf32>, i32 -> vector<48x256xf32>
    %238 = vector.extract_strided_slice %83 {offsets = [0, 18], sizes = [48, 1], strides = [1, 1]} : vector<48x65xf32> to vector<48x1xf32>
    %c18 = arith.constant 18 : index
    %c0_68 = arith.constant 0 : index
    %239 = vector.load %arg8[%c18, %c0_68] : memref<65x256xf32, #tpu.memory_space<vmem>>, vector<1x256xf32>
    %240 = vector.broadcast %238 : vector<48x1xf32> to vector<48x256xf32>
    %241 = vector.broadcast %239 : vector<1x256xf32> to vector<48x256xf32>
    %242 = arith.mulf %240, %241 : vector<48x256xf32>
    %243 = arith.mulf %242, %237 : vector<48x256xf32>
    %244 = arith.addf %236, %243 : vector<48x256xf32>
    %c14_i32 = arith.constant 14 : i32
    %245 = tpu.dynamic_rotate %89 by %c14_i32 dim 1 : vector<48x256xf32>, i32 -> vector<48x256xf32>
    %246 = vector.extract_strided_slice %83 {offsets = [0, 19], sizes = [48, 1], strides = [1, 1]} : vector<48x65xf32> to vector<48x1xf32>
    %c19 = arith.constant 19 : index
    %c0_69 = arith.constant 0 : index
    %247 = vector.load %arg8[%c19, %c0_69] : memref<65x256xf32, #tpu.memory_space<vmem>>, vector<1x256xf32>
    %248 = vector.broadcast %246 : vector<48x1xf32> to vector<48x256xf32>
    %249 = vector.broadcast %247 : vector<1x256xf32> to vector<48x256xf32>
    %250 = arith.mulf %248, %249 : vector<48x256xf32>
    %251 = arith.mulf %250, %245 : vector<48x256xf32>
    %252 = arith.addf %244, %251 : vector<48x256xf32>
    %c13_i32 = arith.constant 13 : i32
    %253 = tpu.dynamic_rotate %89 by %c13_i32 dim 1 : vector<48x256xf32>, i32 -> vector<48x256xf32>
    %254 = vector.extract_strided_slice %83 {offsets = [0, 20], sizes = [48, 1], strides = [1, 1]} : vector<48x65xf32> to vector<48x1xf32>
    %c20 = arith.constant 20 : index
    %c0_70 = arith.constant 0 : index
    %255 = vector.load %arg8[%c20, %c0_70] : memref<65x256xf32, #tpu.memory_space<vmem>>, vector<1x256xf32>
    %256 = vector.broadcast %254 : vector<48x1xf32> to vector<48x256xf32>
    %257 = vector.broadcast %255 : vector<1x256xf32> to vector<48x256xf32>
    %258 = arith.mulf %256, %257 : vector<48x256xf32>
    %259 = arith.mulf %258, %253 : vector<48x256xf32>
    %260 = arith.addf %252, %259 : vector<48x256xf32>
    %c3_i32 = arith.constant 3 : i32
    %261 = tpu.dynamic_rotate %89 by %c3_i32 dim 1 : vector<48x256xf32>, i32 -> vector<48x256xf32>
    %262 = vector.extract_strided_slice %83 {offsets = [0, 21], sizes = [48, 1], strides = [1, 1]} : vector<48x65xf32> to vector<48x1xf32>
    %c21 = arith.constant 21 : index
    %c0_71 = arith.constant 0 : index
    %263 = vector.load %arg8[%c21, %c0_71] : memref<65x256xf32, #tpu.memory_space<vmem>>, vector<1x256xf32>
    %264 = vector.broadcast %262 : vector<48x1xf32> to vector<48x256xf32>
    %265 = vector.broadcast %263 : vector<1x256xf32> to vector<48x256xf32>
    %266 = arith.mulf %264, %265 : vector<48x256xf32>
    %267 = arith.mulf %266, %261 : vector<48x256xf32>
    %268 = arith.addf %260, %267 : vector<48x256xf32>
    %c2_i32 = arith.constant 2 : i32
    %269 = tpu.dynamic_rotate %89 by %c2_i32 dim 1 : vector<48x256xf32>, i32 -> vector<48x256xf32>
    %270 = vector.extract_strided_slice %83 {offsets = [0, 22], sizes = [48, 1], strides = [1, 1]} : vector<48x65xf32> to vector<48x1xf32>
    %c22 = arith.constant 22 : index
    %c0_72 = arith.constant 0 : index
    %271 = vector.load %arg8[%c22, %c0_72] : memref<65x256xf32, #tpu.memory_space<vmem>>, vector<1x256xf32>
    %272 = vector.broadcast %270 : vector<48x1xf32> to vector<48x256xf32>
    %273 = vector.broadcast %271 : vector<1x256xf32> to vector<48x256xf32>
    %274 = arith.mulf %272, %273 : vector<48x256xf32>
    %275 = arith.mulf %274, %269 : vector<48x256xf32>
    %276 = arith.addf %268, %275 : vector<48x256xf32>
    %c1_i32 = arith.constant 1 : i32
    %277 = tpu.dynamic_rotate %89 by %c1_i32 dim 1 : vector<48x256xf32>, i32 -> vector<48x256xf32>
    %278 = vector.extract_strided_slice %83 {offsets = [0, 23], sizes = [48, 1], strides = [1, 1]} : vector<48x65xf32> to vector<48x1xf32>
    %c23 = arith.constant 23 : index
    %c0_73 = arith.constant 0 : index
    %279 = vector.load %arg8[%c23, %c0_73] : memref<65x256xf32, #tpu.memory_space<vmem>>, vector<1x256xf32>
    %280 = vector.broadcast %278 : vector<48x1xf32> to vector<48x256xf32>
    %281 = vector.broadcast %279 : vector<1x256xf32> to vector<48x256xf32>
    %282 = arith.mulf %280, %281 : vector<48x256xf32>
    %283 = arith.mulf %282, %277 : vector<48x256xf32>
    %284 = arith.addf %276, %283 : vector<48x256xf32>
    %c255_i32 = arith.constant 255 : i32
    %285 = tpu.dynamic_rotate %89 by %c255_i32 dim 1 : vector<48x256xf32>, i32 -> vector<48x256xf32>
    %286 = vector.extract_strided_slice %83 {offsets = [0, 25], sizes = [48, 1], strides = [1, 1]} : vector<48x65xf32> to vector<48x1xf32>
    %c25 = arith.constant 25 : index
    %c0_74 = arith.constant 0 : index
    %287 = vector.load %arg8[%c25, %c0_74] : memref<65x256xf32, #tpu.memory_space<vmem>>, vector<1x256xf32>
    %288 = vector.broadcast %286 : vector<48x1xf32> to vector<48x256xf32>
    %289 = vector.broadcast %287 : vector<1x256xf32> to vector<48x256xf32>
    %290 = arith.mulf %288, %289 : vector<48x256xf32>
    %291 = arith.mulf %290, %285 : vector<48x256xf32>
    %292 = arith.addf %284, %291 : vector<48x256xf32>
    %c254_i32 = arith.constant 254 : i32
    %293 = tpu.dynamic_rotate %89 by %c254_i32 dim 1 : vector<48x256xf32>, i32 -> vector<48x256xf32>
    %294 = vector.extract_strided_slice %83 {offsets = [0, 26], sizes = [48, 1], strides = [1, 1]} : vector<48x65xf32> to vector<48x1xf32>
    %c26 = arith.constant 26 : index
    %c0_75 = arith.constant 0 : index
    %295 = vector.load %arg8[%c26, %c0_75] : memref<65x256xf32, #tpu.memory_space<vmem>>, vector<1x256xf32>
    %296 = vector.broadcast %294 : vector<48x1xf32> to vector<48x256xf32>
    %297 = vector.broadcast %295 : vector<1x256xf32> to vector<48x256xf32>
    %298 = arith.mulf %296, %297 : vector<48x256xf32>
    %299 = arith.mulf %298, %293 : vector<48x256xf32>
    %300 = arith.addf %292, %299 : vector<48x256xf32>
    %c253_i32 = arith.constant 253 : i32
    %301 = tpu.dynamic_rotate %89 by %c253_i32 dim 1 : vector<48x256xf32>, i32 -> vector<48x256xf32>
    %302 = vector.extract_strided_slice %83 {offsets = [0, 27], sizes = [48, 1], strides = [1, 1]} : vector<48x65xf32> to vector<48x1xf32>
    %c27 = arith.constant 27 : index
    %c0_76 = arith.constant 0 : index
    %303 = vector.load %arg8[%c27, %c0_76] : memref<65x256xf32, #tpu.memory_space<vmem>>, vector<1x256xf32>
    %304 = vector.broadcast %302 : vector<48x1xf32> to vector<48x256xf32>
    %305 = vector.broadcast %303 : vector<1x256xf32> to vector<48x256xf32>
    %306 = arith.mulf %304, %305 : vector<48x256xf32>
    %307 = arith.mulf %306, %301 : vector<48x256xf32>
    %308 = arith.addf %300, %307 : vector<48x256xf32>
    %c243_i32 = arith.constant 243 : i32
    %309 = tpu.dynamic_rotate %89 by %c243_i32 dim 1 : vector<48x256xf32>, i32 -> vector<48x256xf32>
    %310 = vector.extract_strided_slice %83 {offsets = [0, 28], sizes = [48, 1], strides = [1, 1]} : vector<48x65xf32> to vector<48x1xf32>
    %c28 = arith.constant 28 : index
    %c0_77 = arith.constant 0 : index
    %311 = vector.load %arg8[%c28, %c0_77] : memref<65x256xf32, #tpu.memory_space<vmem>>, vector<1x256xf32>
    %312 = vector.broadcast %310 : vector<48x1xf32> to vector<48x256xf32>
    %313 = vector.broadcast %311 : vector<1x256xf32> to vector<48x256xf32>
    %314 = arith.mulf %312, %313 : vector<48x256xf32>
    %315 = arith.mulf %314, %309 : vector<48x256xf32>
    %316 = arith.addf %308, %315 : vector<48x256xf32>
    %c242_i32 = arith.constant 242 : i32
    %317 = tpu.dynamic_rotate %89 by %c242_i32 dim 1 : vector<48x256xf32>, i32 -> vector<48x256xf32>
    %318 = vector.extract_strided_slice %83 {offsets = [0, 29], sizes = [48, 1], strides = [1, 1]} : vector<48x65xf32> to vector<48x1xf32>
    %c29 = arith.constant 29 : index
    %c0_78 = arith.constant 0 : index
    %319 = vector.load %arg8[%c29, %c0_78] : memref<65x256xf32, #tpu.memory_space<vmem>>, vector<1x256xf32>
    %320 = vector.broadcast %318 : vector<48x1xf32> to vector<48x256xf32>
    %321 = vector.broadcast %319 : vector<1x256xf32> to vector<48x256xf32>
    %322 = arith.mulf %320, %321 : vector<48x256xf32>
    %323 = arith.mulf %322, %317 : vector<48x256xf32>
    %324 = arith.addf %316, %323 : vector<48x256xf32>
    %c241_i32 = arith.constant 241 : i32
    %325 = tpu.dynamic_rotate %89 by %c241_i32 dim 1 : vector<48x256xf32>, i32 -> vector<48x256xf32>
    %326 = vector.extract_strided_slice %83 {offsets = [0, 30], sizes = [48, 1], strides = [1, 1]} : vector<48x65xf32> to vector<48x1xf32>
    %c30 = arith.constant 30 : index
    %c0_79 = arith.constant 0 : index
    %327 = vector.load %arg8[%c30, %c0_79] : memref<65x256xf32, #tpu.memory_space<vmem>>, vector<1x256xf32>
    %328 = vector.broadcast %326 : vector<48x1xf32> to vector<48x256xf32>
    %329 = vector.broadcast %327 : vector<1x256xf32> to vector<48x256xf32>
    %330 = arith.mulf %328, %329 : vector<48x256xf32>
    %331 = arith.mulf %330, %325 : vector<48x256xf32>
    %332 = arith.addf %324, %331 : vector<48x256xf32>
    %c240_i32 = arith.constant 240 : i32
    %333 = tpu.dynamic_rotate %89 by %c240_i32 dim 1 : vector<48x256xf32>, i32 -> vector<48x256xf32>
    %334 = vector.extract_strided_slice %83 {offsets = [0, 31], sizes = [48, 1], strides = [1, 1]} : vector<48x65xf32> to vector<48x1xf32>
    %c31 = arith.constant 31 : index
    %c0_80 = arith.constant 0 : index
    %335 = vector.load %arg8[%c31, %c0_80] : memref<65x256xf32, #tpu.memory_space<vmem>>, vector<1x256xf32>
    %336 = vector.broadcast %334 : vector<48x1xf32> to vector<48x256xf32>
    %337 = vector.broadcast %335 : vector<1x256xf32> to vector<48x256xf32>
    %338 = arith.mulf %336, %337 : vector<48x256xf32>
    %339 = arith.mulf %338, %333 : vector<48x256xf32>
    %340 = arith.addf %332, %339 : vector<48x256xf32>
    %c239_i32 = arith.constant 239 : i32
    %341 = tpu.dynamic_rotate %89 by %c239_i32 dim 1 : vector<48x256xf32>, i32 -> vector<48x256xf32>
    %342 = vector.extract_strided_slice %83 {offsets = [0, 32], sizes = [48, 1], strides = [1, 1]} : vector<48x65xf32> to vector<48x1xf32>
    %c32 = arith.constant 32 : index
    %c0_81 = arith.constant 0 : index
    %343 = vector.load %arg8[%c32, %c0_81] : memref<65x256xf32, #tpu.memory_space<vmem>>, vector<1x256xf32>
    %344 = vector.broadcast %342 : vector<48x1xf32> to vector<48x256xf32>
    %345 = vector.broadcast %343 : vector<1x256xf32> to vector<48x256xf32>
    %346 = arith.mulf %344, %345 : vector<48x256xf32>
    %347 = arith.mulf %346, %341 : vector<48x256xf32>
    %348 = arith.addf %340, %347 : vector<48x256xf32>
    %c238_i32 = arith.constant 238 : i32
    %349 = tpu.dynamic_rotate %89 by %c238_i32 dim 1 : vector<48x256xf32>, i32 -> vector<48x256xf32>
    %350 = vector.extract_strided_slice %83 {offsets = [0, 33], sizes = [48, 1], strides = [1, 1]} : vector<48x65xf32> to vector<48x1xf32>
    %c33 = arith.constant 33 : index
    %c0_82 = arith.constant 0 : index
    %351 = vector.load %arg8[%c33, %c0_82] : memref<65x256xf32, #tpu.memory_space<vmem>>, vector<1x256xf32>
    %352 = vector.broadcast %350 : vector<48x1xf32> to vector<48x256xf32>
    %353 = vector.broadcast %351 : vector<1x256xf32> to vector<48x256xf32>
    %354 = arith.mulf %352, %353 : vector<48x256xf32>
    %355 = arith.mulf %354, %349 : vector<48x256xf32>
    %356 = arith.addf %348, %355 : vector<48x256xf32>
    %c237_i32 = arith.constant 237 : i32
    %357 = tpu.dynamic_rotate %89 by %c237_i32 dim 1 : vector<48x256xf32>, i32 -> vector<48x256xf32>
    %358 = vector.extract_strided_slice %83 {offsets = [0, 34], sizes = [48, 1], strides = [1, 1]} : vector<48x65xf32> to vector<48x1xf32>
    %c34 = arith.constant 34 : index
    %c0_83 = arith.constant 0 : index
    %359 = vector.load %arg8[%c34, %c0_83] : memref<65x256xf32, #tpu.memory_space<vmem>>, vector<1x256xf32>
    %360 = vector.broadcast %358 : vector<48x1xf32> to vector<48x256xf32>
    %361 = vector.broadcast %359 : vector<1x256xf32> to vector<48x256xf32>
    %362 = arith.mulf %360, %361 : vector<48x256xf32>
    %363 = arith.mulf %362, %357 : vector<48x256xf32>
    %364 = arith.addf %356, %363 : vector<48x256xf32>
    %c227_i32 = arith.constant 227 : i32
    %365 = tpu.dynamic_rotate %89 by %c227_i32 dim 1 : vector<48x256xf32>, i32 -> vector<48x256xf32>
    %366 = vector.extract_strided_slice %83 {offsets = [0, 35], sizes = [48, 1], strides = [1, 1]} : vector<48x65xf32> to vector<48x1xf32>
    %c35 = arith.constant 35 : index
    %c0_84 = arith.constant 0 : index
    %367 = vector.load %arg8[%c35, %c0_84] : memref<65x256xf32, #tpu.memory_space<vmem>>, vector<1x256xf32>
    %368 = vector.broadcast %366 : vector<48x1xf32> to vector<48x256xf32>
    %369 = vector.broadcast %367 : vector<1x256xf32> to vector<48x256xf32>
    %370 = arith.mulf %368, %369 : vector<48x256xf32>
    %371 = arith.mulf %370, %365 : vector<48x256xf32>
    %372 = arith.addf %364, %371 : vector<48x256xf32>
    %c226_i32 = arith.constant 226 : i32
    %373 = tpu.dynamic_rotate %89 by %c226_i32 dim 1 : vector<48x256xf32>, i32 -> vector<48x256xf32>
    %374 = vector.extract_strided_slice %83 {offsets = [0, 36], sizes = [48, 1], strides = [1, 1]} : vector<48x65xf32> to vector<48x1xf32>
    %c36 = arith.constant 36 : index
    %c0_85 = arith.constant 0 : index
    %375 = vector.load %arg8[%c36, %c0_85] : memref<65x256xf32, #tpu.memory_space<vmem>>, vector<1x256xf32>
    %376 = vector.broadcast %374 : vector<48x1xf32> to vector<48x256xf32>
    %377 = vector.broadcast %375 : vector<1x256xf32> to vector<48x256xf32>
    %378 = arith.mulf %376, %377 : vector<48x256xf32>
    %379 = arith.mulf %378, %373 : vector<48x256xf32>
    %380 = arith.addf %372, %379 : vector<48x256xf32>
    %c225_i32 = arith.constant 225 : i32
    %381 = tpu.dynamic_rotate %89 by %c225_i32 dim 1 : vector<48x256xf32>, i32 -> vector<48x256xf32>
    %382 = vector.extract_strided_slice %83 {offsets = [0, 37], sizes = [48, 1], strides = [1, 1]} : vector<48x65xf32> to vector<48x1xf32>
    %c37 = arith.constant 37 : index
    %c0_86 = arith.constant 0 : index
    %383 = vector.load %arg8[%c37, %c0_86] : memref<65x256xf32, #tpu.memory_space<vmem>>, vector<1x256xf32>
    %384 = vector.broadcast %382 : vector<48x1xf32> to vector<48x256xf32>
    %385 = vector.broadcast %383 : vector<1x256xf32> to vector<48x256xf32>
    %386 = arith.mulf %384, %385 : vector<48x256xf32>
    %387 = arith.mulf %386, %381 : vector<48x256xf32>
    %388 = arith.addf %380, %387 : vector<48x256xf32>
    %c224_i32 = arith.constant 224 : i32
    %389 = tpu.dynamic_rotate %89 by %c224_i32 dim 1 : vector<48x256xf32>, i32 -> vector<48x256xf32>
    %390 = vector.extract_strided_slice %83 {offsets = [0, 38], sizes = [48, 1], strides = [1, 1]} : vector<48x65xf32> to vector<48x1xf32>
    %c38 = arith.constant 38 : index
    %c0_87 = arith.constant 0 : index
    %391 = vector.load %arg8[%c38, %c0_87] : memref<65x256xf32, #tpu.memory_space<vmem>>, vector<1x256xf32>
    %392 = vector.broadcast %390 : vector<48x1xf32> to vector<48x256xf32>
    %393 = vector.broadcast %391 : vector<1x256xf32> to vector<48x256xf32>
    %394 = arith.mulf %392, %393 : vector<48x256xf32>
    %395 = arith.mulf %394, %389 : vector<48x256xf32>
    %396 = arith.addf %388, %395 : vector<48x256xf32>
    %c223_i32 = arith.constant 223 : i32
    %397 = tpu.dynamic_rotate %89 by %c223_i32 dim 1 : vector<48x256xf32>, i32 -> vector<48x256xf32>
    %398 = vector.extract_strided_slice %83 {offsets = [0, 39], sizes = [48, 1], strides = [1, 1]} : vector<48x65xf32> to vector<48x1xf32>
    %c39 = arith.constant 39 : index
    %c0_88 = arith.constant 0 : index
    %399 = vector.load %arg8[%c39, %c0_88] : memref<65x256xf32, #tpu.memory_space<vmem>>, vector<1x256xf32>
    %400 = vector.broadcast %398 : vector<48x1xf32> to vector<48x256xf32>
    %401 = vector.broadcast %399 : vector<1x256xf32> to vector<48x256xf32>
    %402 = arith.mulf %400, %401 : vector<48x256xf32>
    %403 = arith.mulf %402, %397 : vector<48x256xf32>
    %404 = arith.addf %396, %403 : vector<48x256xf32>
    %c222_i32 = arith.constant 222 : i32
    %405 = tpu.dynamic_rotate %89 by %c222_i32 dim 1 : vector<48x256xf32>, i32 -> vector<48x256xf32>
    %406 = vector.extract_strided_slice %83 {offsets = [0, 40], sizes = [48, 1], strides = [1, 1]} : vector<48x65xf32> to vector<48x1xf32>
    %c40 = arith.constant 40 : index
    %c0_89 = arith.constant 0 : index
    %407 = vector.load %arg8[%c40, %c0_89] : memref<65x256xf32, #tpu.memory_space<vmem>>, vector<1x256xf32>
    %408 = vector.broadcast %406 : vector<48x1xf32> to vector<48x256xf32>
    %409 = vector.broadcast %407 : vector<1x256xf32> to vector<48x256xf32>
    %410 = arith.mulf %408, %409 : vector<48x256xf32>
    %411 = arith.mulf %410, %405 : vector<48x256xf32>
    %412 = arith.addf %404, %411 : vector<48x256xf32>
    %c221_i32 = arith.constant 221 : i32
    %413 = tpu.dynamic_rotate %89 by %c221_i32 dim 1 : vector<48x256xf32>, i32 -> vector<48x256xf32>
    %414 = vector.extract_strided_slice %83 {offsets = [0, 41], sizes = [48, 1], strides = [1, 1]} : vector<48x65xf32> to vector<48x1xf32>
    %c41 = arith.constant 41 : index
    %c0_90 = arith.constant 0 : index
    %415 = vector.load %arg8[%c41, %c0_90] : memref<65x256xf32, #tpu.memory_space<vmem>>, vector<1x256xf32>
    %416 = vector.broadcast %414 : vector<48x1xf32> to vector<48x256xf32>
    %417 = vector.broadcast %415 : vector<1x256xf32> to vector<48x256xf32>
    %418 = arith.mulf %416, %417 : vector<48x256xf32>
    %419 = arith.mulf %418, %413 : vector<48x256xf32>
    %420 = arith.addf %412, %419 : vector<48x256xf32>
    %c211_i32 = arith.constant 211 : i32
    %421 = tpu.dynamic_rotate %89 by %c211_i32 dim 1 : vector<48x256xf32>, i32 -> vector<48x256xf32>
    %422 = vector.extract_strided_slice %83 {offsets = [0, 42], sizes = [48, 1], strides = [1, 1]} : vector<48x65xf32> to vector<48x1xf32>
    %c42 = arith.constant 42 : index
    %c0_91 = arith.constant 0 : index
    %423 = vector.load %arg8[%c42, %c0_91] : memref<65x256xf32, #tpu.memory_space<vmem>>, vector<1x256xf32>
    %424 = vector.broadcast %422 : vector<48x1xf32> to vector<48x256xf32>
    %425 = vector.broadcast %423 : vector<1x256xf32> to vector<48x256xf32>
    %426 = arith.mulf %424, %425 : vector<48x256xf32>
    %427 = arith.mulf %426, %421 : vector<48x256xf32>
    %428 = arith.addf %420, %427 : vector<48x256xf32>
    %c210_i32 = arith.constant 210 : i32
    %429 = tpu.dynamic_rotate %89 by %c210_i32 dim 1 : vector<48x256xf32>, i32 -> vector<48x256xf32>
    %430 = vector.extract_strided_slice %83 {offsets = [0, 43], sizes = [48, 1], strides = [1, 1]} : vector<48x65xf32> to vector<48x1xf32>
    %c43 = arith.constant 43 : index
    %c0_92 = arith.constant 0 : index
    %431 = vector.load %arg8[%c43, %c0_92] : memref<65x256xf32, #tpu.memory_space<vmem>>, vector<1x256xf32>
    %432 = vector.broadcast %430 : vector<48x1xf32> to vector<48x256xf32>
    %433 = vector.broadcast %431 : vector<1x256xf32> to vector<48x256xf32>
    %434 = arith.mulf %432, %433 : vector<48x256xf32>
    %435 = arith.mulf %434, %429 : vector<48x256xf32>
    %436 = arith.addf %428, %435 : vector<48x256xf32>
    %c209_i32 = arith.constant 209 : i32
    %437 = tpu.dynamic_rotate %89 by %c209_i32 dim 1 : vector<48x256xf32>, i32 -> vector<48x256xf32>
    %438 = vector.extract_strided_slice %83 {offsets = [0, 44], sizes = [48, 1], strides = [1, 1]} : vector<48x65xf32> to vector<48x1xf32>
    %c44 = arith.constant 44 : index
    %c0_93 = arith.constant 0 : index
    %439 = vector.load %arg8[%c44, %c0_93] : memref<65x256xf32, #tpu.memory_space<vmem>>, vector<1x256xf32>
    %440 = vector.broadcast %438 : vector<48x1xf32> to vector<48x256xf32>
    %441 = vector.broadcast %439 : vector<1x256xf32> to vector<48x256xf32>
    %442 = arith.mulf %440, %441 : vector<48x256xf32>
    %443 = arith.mulf %442, %437 : vector<48x256xf32>
    %444 = arith.addf %436, %443 : vector<48x256xf32>
    %c208_i32 = arith.constant 208 : i32
    %445 = tpu.dynamic_rotate %89 by %c208_i32 dim 1 : vector<48x256xf32>, i32 -> vector<48x256xf32>
    %446 = vector.extract_strided_slice %83 {offsets = [0, 45], sizes = [48, 1], strides = [1, 1]} : vector<48x65xf32> to vector<48x1xf32>
    %c45 = arith.constant 45 : index
    %c0_94 = arith.constant 0 : index
    %447 = vector.load %arg8[%c45, %c0_94] : memref<65x256xf32, #tpu.memory_space<vmem>>, vector<1x256xf32>
    %448 = vector.broadcast %446 : vector<48x1xf32> to vector<48x256xf32>
    %449 = vector.broadcast %447 : vector<1x256xf32> to vector<48x256xf32>
    %450 = arith.mulf %448, %449 : vector<48x256xf32>
    %451 = arith.mulf %450, %445 : vector<48x256xf32>
    %452 = arith.addf %444, %451 : vector<48x256xf32>
    %c207_i32 = arith.constant 207 : i32
    %453 = tpu.dynamic_rotate %89 by %c207_i32 dim 1 : vector<48x256xf32>, i32 -> vector<48x256xf32>
    %454 = vector.extract_strided_slice %83 {offsets = [0, 46], sizes = [48, 1], strides = [1, 1]} : vector<48x65xf32> to vector<48x1xf32>
    %c46 = arith.constant 46 : index
    %c0_95 = arith.constant 0 : index
    %455 = vector.load %arg8[%c46, %c0_95] : memref<65x256xf32, #tpu.memory_space<vmem>>, vector<1x256xf32>
    %456 = vector.broadcast %454 : vector<48x1xf32> to vector<48x256xf32>
    %457 = vector.broadcast %455 : vector<1x256xf32> to vector<48x256xf32>
    %458 = arith.mulf %456, %457 : vector<48x256xf32>
    %459 = arith.mulf %458, %453 : vector<48x256xf32>
    %460 = arith.addf %452, %459 : vector<48x256xf32>
    %c206_i32 = arith.constant 206 : i32
    %461 = tpu.dynamic_rotate %89 by %c206_i32 dim 1 : vector<48x256xf32>, i32 -> vector<48x256xf32>
    %462 = vector.extract_strided_slice %83 {offsets = [0, 47], sizes = [48, 1], strides = [1, 1]} : vector<48x65xf32> to vector<48x1xf32>
    %c47 = arith.constant 47 : index
    %c0_96 = arith.constant 0 : index
    %463 = vector.load %arg8[%c47, %c0_96] : memref<65x256xf32, #tpu.memory_space<vmem>>, vector<1x256xf32>
    %464 = vector.broadcast %462 : vector<48x1xf32> to vector<48x256xf32>
    %465 = vector.broadcast %463 : vector<1x256xf32> to vector<48x256xf32>
    %466 = arith.mulf %464, %465 : vector<48x256xf32>
    %467 = arith.mulf %466, %461 : vector<48x256xf32>
    %468 = arith.addf %460, %467 : vector<48x256xf32>
    %c205_i32 = arith.constant 205 : i32
    %469 = tpu.dynamic_rotate %89 by %c205_i32 dim 1 : vector<48x256xf32>, i32 -> vector<48x256xf32>
    %470 = vector.extract_strided_slice %83 {offsets = [0, 48], sizes = [48, 1], strides = [1, 1]} : vector<48x65xf32> to vector<48x1xf32>
    %c48 = arith.constant 48 : index
    %c0_97 = arith.constant 0 : index
    %471 = vector.load %arg8[%c48, %c0_97] : memref<65x256xf32, #tpu.memory_space<vmem>>, vector<1x256xf32>
    %472 = vector.broadcast %470 : vector<48x1xf32> to vector<48x256xf32>
    %473 = vector.broadcast %471 : vector<1x256xf32> to vector<48x256xf32>
    %474 = arith.mulf %472, %473 : vector<48x256xf32>
    %475 = arith.mulf %474, %469 : vector<48x256xf32>
    %476 = arith.addf %468, %475 : vector<48x256xf32>
    %c85_i32 = arith.constant 85 : i32
    %477 = tpu.dynamic_rotate %89 by %c85_i32 dim 1 : vector<48x256xf32>, i32 -> vector<48x256xf32>
    %478 = vector.extract_strided_slice %83 {offsets = [0, 49], sizes = [48, 1], strides = [1, 1]} : vector<48x65xf32> to vector<48x1xf32>
    %c49 = arith.constant 49 : index
    %c0_98 = arith.constant 0 : index
    %479 = vector.load %arg8[%c49, %c0_98] : memref<65x256xf32, #tpu.memory_space<vmem>>, vector<1x256xf32>
    %480 = vector.broadcast %478 : vector<48x1xf32> to vector<48x256xf32>
    %481 = vector.broadcast %479 : vector<1x256xf32> to vector<48x256xf32>
    %482 = arith.mulf %480, %481 : vector<48x256xf32>
    %483 = arith.mulf %482, %477 : vector<48x256xf32>
    %484 = arith.addf %476, %483 : vector<48x256xf32>
    %c80_i32 = arith.constant 80 : i32
    %485 = tpu.dynamic_rotate %89 by %c80_i32 dim 1 : vector<48x256xf32>, i32 -> vector<48x256xf32>
    %486 = vector.extract_strided_slice %83 {offsets = [0, 50], sizes = [48, 1], strides = [1, 1]} : vector<48x65xf32> to vector<48x1xf32>
    %c50 = arith.constant 50 : index
    %c0_99 = arith.constant 0 : index
    %487 = vector.load %arg8[%c50, %c0_99] : memref<65x256xf32, #tpu.memory_space<vmem>>, vector<1x256xf32>
    %488 = vector.broadcast %486 : vector<48x1xf32> to vector<48x256xf32>
    %489 = vector.broadcast %487 : vector<1x256xf32> to vector<48x256xf32>
    %490 = arith.mulf %488, %489 : vector<48x256xf32>
    %491 = arith.mulf %490, %485 : vector<48x256xf32>
    %492 = arith.addf %484, %491 : vector<48x256xf32>
    %c75_i32 = arith.constant 75 : i32
    %493 = tpu.dynamic_rotate %89 by %c75_i32 dim 1 : vector<48x256xf32>, i32 -> vector<48x256xf32>
    %494 = vector.extract_strided_slice %83 {offsets = [0, 51], sizes = [48, 1], strides = [1, 1]} : vector<48x65xf32> to vector<48x1xf32>
    %c51 = arith.constant 51 : index
    %c0_100 = arith.constant 0 : index
    %495 = vector.load %arg8[%c51, %c0_100] : memref<65x256xf32, #tpu.memory_space<vmem>>, vector<1x256xf32>
    %496 = vector.broadcast %494 : vector<48x1xf32> to vector<48x256xf32>
    %497 = vector.broadcast %495 : vector<1x256xf32> to vector<48x256xf32>
    %498 = arith.mulf %496, %497 : vector<48x256xf32>
    %499 = arith.mulf %498, %493 : vector<48x256xf32>
    %500 = arith.addf %492, %499 : vector<48x256xf32>
    %c5_i32 = arith.constant 5 : i32
    %501 = tpu.dynamic_rotate %89 by %c5_i32 dim 1 : vector<48x256xf32>, i32 -> vector<48x256xf32>
    %502 = vector.extract_strided_slice %83 {offsets = [0, 52], sizes = [48, 1], strides = [1, 1]} : vector<48x65xf32> to vector<48x1xf32>
    %c52 = arith.constant 52 : index
    %c0_101 = arith.constant 0 : index
    %503 = vector.load %arg8[%c52, %c0_101] : memref<65x256xf32, #tpu.memory_space<vmem>>, vector<1x256xf32>
    %504 = vector.broadcast %502 : vector<48x1xf32> to vector<48x256xf32>
    %505 = vector.broadcast %503 : vector<1x256xf32> to vector<48x256xf32>
    %506 = arith.mulf %504, %505 : vector<48x256xf32>
    %507 = arith.mulf %506, %501 : vector<48x256xf32>
    %508 = arith.addf %500, %507 : vector<48x256xf32>
    %c251_i32 = arith.constant 251 : i32
    %509 = tpu.dynamic_rotate %89 by %c251_i32 dim 1 : vector<48x256xf32>, i32 -> vector<48x256xf32>
    %510 = vector.extract_strided_slice %83 {offsets = [0, 53], sizes = [48, 1], strides = [1, 1]} : vector<48x65xf32> to vector<48x1xf32>
    %c53 = arith.constant 53 : index
    %c0_102 = arith.constant 0 : index
    %511 = vector.load %arg8[%c53, %c0_102] : memref<65x256xf32, #tpu.memory_space<vmem>>, vector<1x256xf32>
    %512 = vector.broadcast %510 : vector<48x1xf32> to vector<48x256xf32>
    %513 = vector.broadcast %511 : vector<1x256xf32> to vector<48x256xf32>
    %514 = arith.mulf %512, %513 : vector<48x256xf32>
    %515 = arith.mulf %514, %509 : vector<48x256xf32>
    %516 = arith.addf %508, %515 : vector<48x256xf32>
    %c181_i32 = arith.constant 181 : i32
    %517 = tpu.dynamic_rotate %89 by %c181_i32 dim 1 : vector<48x256xf32>, i32 -> vector<48x256xf32>
    %518 = vector.extract_strided_slice %83 {offsets = [0, 54], sizes = [48, 1], strides = [1, 1]} : vector<48x65xf32> to vector<48x1xf32>
    %c54 = arith.constant 54 : index
    %c0_103 = arith.constant 0 : index
    %519 = vector.load %arg8[%c54, %c0_103] : memref<65x256xf32, #tpu.memory_space<vmem>>, vector<1x256xf32>
    %520 = vector.broadcast %518 : vector<48x1xf32> to vector<48x256xf32>
    %521 = vector.broadcast %519 : vector<1x256xf32> to vector<48x256xf32>
    %522 = arith.mulf %520, %521 : vector<48x256xf32>
    %523 = arith.mulf %522, %517 : vector<48x256xf32>
    %524 = arith.addf %516, %523 : vector<48x256xf32>
    %c176_i32 = arith.constant 176 : i32
    %525 = tpu.dynamic_rotate %89 by %c176_i32 dim 1 : vector<48x256xf32>, i32 -> vector<48x256xf32>
    %526 = vector.extract_strided_slice %83 {offsets = [0, 55], sizes = [48, 1], strides = [1, 1]} : vector<48x65xf32> to vector<48x1xf32>
    %c55 = arith.constant 55 : index
    %c0_104 = arith.constant 0 : index
    %527 = vector.load %arg8[%c55, %c0_104] : memref<65x256xf32, #tpu.memory_space<vmem>>, vector<1x256xf32>
    %528 = vector.broadcast %526 : vector<48x1xf32> to vector<48x256xf32>
    %529 = vector.broadcast %527 : vector<1x256xf32> to vector<48x256xf32>
    %530 = arith.mulf %528, %529 : vector<48x256xf32>
    %531 = arith.mulf %530, %525 : vector<48x256xf32>
    %532 = arith.addf %524, %531 : vector<48x256xf32>
    %c171_i32 = arith.constant 171 : i32
    %533 = tpu.dynamic_rotate %89 by %c171_i32 dim 1 : vector<48x256xf32>, i32 -> vector<48x256xf32>
    %534 = vector.extract_strided_slice %83 {offsets = [0, 56], sizes = [48, 1], strides = [1, 1]} : vector<48x65xf32> to vector<48x1xf32>
    %c56 = arith.constant 56 : index
    %c0_105 = arith.constant 0 : index
    %535 = vector.load %arg8[%c56, %c0_105] : memref<65x256xf32, #tpu.memory_space<vmem>>, vector<1x256xf32>
    %536 = vector.broadcast %534 : vector<48x1xf32> to vector<48x256xf32>
    %537 = vector.broadcast %535 : vector<1x256xf32> to vector<48x256xf32>
    %538 = arith.mulf %536, %537 : vector<48x256xf32>
    %539 = arith.mulf %538, %533 : vector<48x256xf32>
    %540 = arith.addf %532, %539 : vector<48x256xf32>
    %c119_i32 = arith.constant 119 : i32
    %541 = tpu.dynamic_rotate %89 by %c119_i32 dim 1 : vector<48x256xf32>, i32 -> vector<48x256xf32>
    %542 = vector.extract_strided_slice %83 {offsets = [0, 57], sizes = [48, 1], strides = [1, 1]} : vector<48x65xf32> to vector<48x1xf32>
    %c57 = arith.constant 57 : index
    %c0_106 = arith.constant 0 : index
    %543 = vector.load %arg8[%c57, %c0_106] : memref<65x256xf32, #tpu.memory_space<vmem>>, vector<1x256xf32>
    %544 = vector.broadcast %542 : vector<48x1xf32> to vector<48x256xf32>
    %545 = vector.broadcast %543 : vector<1x256xf32> to vector<48x256xf32>
    %546 = arith.mulf %544, %545 : vector<48x256xf32>
    %547 = arith.mulf %546, %541 : vector<48x256xf32>
    %548 = arith.addf %540, %547 : vector<48x256xf32>
    %c112_i32 = arith.constant 112 : i32
    %549 = tpu.dynamic_rotate %89 by %c112_i32 dim 1 : vector<48x256xf32>, i32 -> vector<48x256xf32>
    %550 = vector.extract_strided_slice %83 {offsets = [0, 58], sizes = [48, 1], strides = [1, 1]} : vector<48x65xf32> to vector<48x1xf32>
    %c58 = arith.constant 58 : index
    %c0_107 = arith.constant 0 : index
    %551 = vector.load %arg8[%c58, %c0_107] : memref<65x256xf32, #tpu.memory_space<vmem>>, vector<1x256xf32>
    %552 = vector.broadcast %550 : vector<48x1xf32> to vector<48x256xf32>
    %553 = vector.broadcast %551 : vector<1x256xf32> to vector<48x256xf32>
    %554 = arith.mulf %552, %553 : vector<48x256xf32>
    %555 = arith.mulf %554, %549 : vector<48x256xf32>
    %556 = arith.addf %548, %555 : vector<48x256xf32>
    %c105_i32 = arith.constant 105 : i32
    %557 = tpu.dynamic_rotate %89 by %c105_i32 dim 1 : vector<48x256xf32>, i32 -> vector<48x256xf32>
    %558 = vector.extract_strided_slice %83 {offsets = [0, 59], sizes = [48, 1], strides = [1, 1]} : vector<48x65xf32> to vector<48x1xf32>
    %c59 = arith.constant 59 : index
    %c0_108 = arith.constant 0 : index
    %559 = vector.load %arg8[%c59, %c0_108] : memref<65x256xf32, #tpu.memory_space<vmem>>, vector<1x256xf32>
    %560 = vector.broadcast %558 : vector<48x1xf32> to vector<48x256xf32>
    %561 = vector.broadcast %559 : vector<1x256xf32> to vector<48x256xf32>
    %562 = arith.mulf %560, %561 : vector<48x256xf32>
    %563 = arith.mulf %562, %557 : vector<48x256xf32>
    %564 = arith.addf %556, %563 : vector<48x256xf32>
    %c7_i32 = arith.constant 7 : i32
    %565 = tpu.dynamic_rotate %89 by %c7_i32 dim 1 : vector<48x256xf32>, i32 -> vector<48x256xf32>
    %566 = vector.extract_strided_slice %83 {offsets = [0, 60], sizes = [48, 1], strides = [1, 1]} : vector<48x65xf32> to vector<48x1xf32>
    %c60 = arith.constant 60 : index
    %c0_109 = arith.constant 0 : index
    %567 = vector.load %arg8[%c60, %c0_109] : memref<65x256xf32, #tpu.memory_space<vmem>>, vector<1x256xf32>
    %568 = vector.broadcast %566 : vector<48x1xf32> to vector<48x256xf32>
    %569 = vector.broadcast %567 : vector<1x256xf32> to vector<48x256xf32>
    %570 = arith.mulf %568, %569 : vector<48x256xf32>
    %571 = arith.mulf %570, %565 : vector<48x256xf32>
    %572 = arith.addf %564, %571 : vector<48x256xf32>
    %c249_i32 = arith.constant 249 : i32
    %573 = tpu.dynamic_rotate %89 by %c249_i32 dim 1 : vector<48x256xf32>, i32 -> vector<48x256xf32>
    %574 = vector.extract_strided_slice %83 {offsets = [0, 61], sizes = [48, 1], strides = [1, 1]} : vector<48x65xf32> to vector<48x1xf32>
    %c61 = arith.constant 61 : index
    %c0_110 = arith.constant 0 : index
    %575 = vector.load %arg8[%c61, %c0_110] : memref<65x256xf32, #tpu.memory_space<vmem>>, vector<1x256xf32>
    %576 = vector.broadcast %574 : vector<48x1xf32> to vector<48x256xf32>
    %577 = vector.broadcast %575 : vector<1x256xf32> to vector<48x256xf32>
    %578 = arith.mulf %576, %577 : vector<48x256xf32>
    %579 = arith.mulf %578, %573 : vector<48x256xf32>
    %580 = arith.addf %572, %579 : vector<48x256xf32>
    %c151_i32 = arith.constant 151 : i32
    %581 = tpu.dynamic_rotate %89 by %c151_i32 dim 1 : vector<48x256xf32>, i32 -> vector<48x256xf32>
    %582 = vector.extract_strided_slice %83 {offsets = [0, 62], sizes = [48, 1], strides = [1, 1]} : vector<48x65xf32> to vector<48x1xf32>
    %c62 = arith.constant 62 : index
    %c0_111 = arith.constant 0 : index
    %583 = vector.load %arg8[%c62, %c0_111] : memref<65x256xf32, #tpu.memory_space<vmem>>, vector<1x256xf32>
    %584 = vector.broadcast %582 : vector<48x1xf32> to vector<48x256xf32>
    %585 = vector.broadcast %583 : vector<1x256xf32> to vector<48x256xf32>
    %586 = arith.mulf %584, %585 : vector<48x256xf32>
    %587 = arith.mulf %586, %581 : vector<48x256xf32>
    %588 = arith.addf %580, %587 : vector<48x256xf32>
    %c144_i32 = arith.constant 144 : i32
    %589 = tpu.dynamic_rotate %89 by %c144_i32 dim 1 : vector<48x256xf32>, i32 -> vector<48x256xf32>
    %590 = vector.extract_strided_slice %83 {offsets = [0, 63], sizes = [48, 1], strides = [1, 1]} : vector<48x65xf32> to vector<48x1xf32>
    %c63 = arith.constant 63 : index
    %c0_112 = arith.constant 0 : index
    %591 = vector.load %arg8[%c63, %c0_112] : memref<65x256xf32, #tpu.memory_space<vmem>>, vector<1x256xf32>
    %592 = vector.broadcast %590 : vector<48x1xf32> to vector<48x256xf32>
    %593 = vector.broadcast %591 : vector<1x256xf32> to vector<48x256xf32>
    %594 = arith.mulf %592, %593 : vector<48x256xf32>
    %595 = arith.mulf %594, %589 : vector<48x256xf32>
    %596 = arith.addf %588, %595 : vector<48x256xf32>
    %c137_i32 = arith.constant 137 : i32
    %597 = tpu.dynamic_rotate %89 by %c137_i32 dim 1 : vector<48x256xf32>, i32 -> vector<48x256xf32>
    %598 = vector.extract_strided_slice %83 {offsets = [0, 64], sizes = [48, 1], strides = [1, 1]} : vector<48x65xf32> to vector<48x1xf32>
    %c64 = arith.constant 64 : index
    %c0_113 = arith.constant 0 : index
    %599 = vector.load %arg8[%c64, %c0_113] : memref<65x256xf32, #tpu.memory_space<vmem>>, vector<1x256xf32>
    %600 = vector.broadcast %598 : vector<48x1xf32> to vector<48x256xf32>
    %601 = vector.broadcast %599 : vector<1x256xf32> to vector<48x256xf32>
    %602 = arith.mulf %600, %601 : vector<48x256xf32>
    %603 = arith.mulf %602, %597 : vector<48x256xf32>
    %604 = arith.addf %596, %603 : vector<48x256xf32>
    %cst_114 = arith.constant 0.000000e+00 : f32
    %605 = vector.broadcast %cst_114 : f32 to vector<48x256xf32>
    %606 = arith.maximumf %604, %605 : vector<48x256xf32>
    %c0_115 = arith.constant 0 : index
    %c0_116 = arith.constant 0 : index
    %607 = vector.load %arg9[%c0_115, %c0_116] : memref<16x48xf32, #tpu.memory_space<vmem>>, vector<16x48xf32>
    %cst_117 = arith.constant dense<0.000000e+00> : vector<16x256xf32>
    %608 = tpu.matmul %607, %606, %cst_117 {dimension_numbers = #tpu.dot_dimension_numbers<[1], [0], [0], [1], [0, 0, 1, 1], [], []>} : vector<16x48xf32>, vector<48x256xf32>, vector<16x256xf32> -> vector<16x256xf32>
    %cst_118 = arith.constant dense<0.000000e+00> : vector<256xf32>
    %609 = vector.multi_reduction <add>, %608, %cst_118 [0] : vector<16x256xf32> to vector<256xf32>
    %610 = vector.shape_cast %609 : vector<256xf32> to vector<1x256xf32>
    %cst_119 = arith.constant 1.600000e+01 : f32
    %611 = vector.broadcast %cst_119 : f32 to vector<1x256xf32>
    %612 = arith.divf %610, %611 : vector<1x256xf32>
    %cst_120 = arith.constant dense<0xFF800000> : vector<256xf32>
    %613 = vector.multi_reduction <maximumf>, %608, %cst_120 [0] : vector<16x256xf32> to vector<256xf32>
    %614 = vector.shape_cast %613 : vector<256xf32> to vector<1x256xf32>
    %615 = tpu.concatenate %612, %614 in 1 : vector<1x256xf32>, vector<1x256xf32> -> vector<1x512xf32>
    %c0_121 = arith.constant 0 : index
    %c0_122 = arith.constant 0 : index
    %616 = vector.load %arg10[%c0_121, %c0_122] : memref<512x256xf32, #tpu.memory_space<vmem>>, vector<512x256xf32>
    %cst_123 = arith.constant dense<0.000000e+00> : vector<1x256xf32>
    %617 = tpu.matmul %615, %616, %cst_123 {dimension_numbers = #tpu.dot_dimension_numbers<[1], [0], [0], [1], [0, 0, 1, 1], [], []>} : vector<1x512xf32>, vector<512x256xf32>, vector<1x256xf32> -> vector<1x256xf32>
    %618 = math.tanh %617 : vector<1x256xf32>
    %cst_124 = arith.constant 1.000000e+00 : f32
    %619 = vector.broadcast %cst_124 : f32 to vector<1x256xf32>
    %620 = arith.addf %618, %619 : vector<1x256xf32>
    %621 = vector.broadcast %620 : vector<1x256xf32> to vector<16x256xf32>
    %622 = arith.mulf %621, %608 : vector<16x256xf32>
    %c0_125 = arith.constant 0 : index
    %c0_126 = arith.constant 0 : index
    %c0_127 = arith.constant 0 : index
    %623 = vector.load %arg11[%c0_125, %c0_126, %c0_127] : memref<1x16x256xf32, #tpu.memory_space<vmem>>, vector<1x16x256xf32>
    %624 = vector.shape_cast %623 : vector<1x16x256xf32> to vector<16x256xf32>
    %625 = vector.shape_cast %622 : vector<16x256xf32> to vector<1x16x256xf32>
    tpu.vector_store %arg11[%c0_125, %c0_126, %c0_127], %625 {strides = array<i32>} : memref<1x16x256xf32, #tpu.memory_space<vmem>>, vector<1x16x256xf32>,
    return
  }
  func.func @transform_0(%arg0: i32) -> (i32, i32, i32) {
    %c0_i32 = arith.constant 0 : i32
    %c0_i32_0 = arith.constant 0 : i32
    %c0_i32_1 = arith.constant 0 : i32
    return %arg0, %c0_i32, %c0_i32_0 : i32, i32, i32
  }
  func.func @transform_1(%arg0: i32) -> (i32, i32, i32) {
    %c0_i32 = arith.constant 0 : i32
    %c0_i32_0 = arith.constant 0 : i32
    %c0_i32_1 = arith.constant 0 : i32
    return %arg0, %c0_i32, %c0_i32_0 : i32, i32, i32
  }
  func.func @transform_2(%arg0: i32) -> (i32, i32) {
    %c0_i32 = arith.constant 0 : i32
    %c0_i32_0 = arith.constant 0 : i32
    %c0_i32_1 = arith.constant 0 : i32
    return %c0_i32, %c0_i32_0 : i32, i32
  }
  func.func @transform_3(%arg0: i32) -> (i32, i32) {
    %c0_i32 = arith.constant 0 : i32
    %c0_i32_0 = arith.constant 0 : i32
    %c0_i32_1 = arith.constant 0 : i32
    return %c0_i32, %c0_i32_0 : i32, i32
  }
  func.func @transform_4(%arg0: i32) -> (i32, i32) {
    %c0_i32 = arith.constant 0 : i32
    %c0_i32_0 = arith.constant 0 : i32
    %c0_i32_1 = arith.constant 0 : i32
    return %c0_i32, %c0_i32_0 : i32, i32
  }
  func.func @transform_5(%arg0: i32) -> (i32, i32) {
    %c0_i32 = arith.constant 0 : i32
    %c0_i32_0 = arith.constant 0 : i32
    %c0_i32_1 = arith.constant 0 : i32
    return %c0_i32, %c0_i32_0 : i32, i32
  }
  func.func @transform_6(%arg0: i32) -> (i32, i32, i32) {
    %c0_i32 = arith.constant 0 : i32
    %c0_i32_0 = arith.constant 0 : i32
    %c0_i32_1 = arith.constant 0 : i32
    %c0_i32_2 = arith.constant 0 : i32
    return %c0_i32, %c0_i32_0, %c0_i32_1 : i32, i32, i32
  }
  func.func @transform_7(%arg0: i32) -> (i32, i32) {
    %c0_i32 = arith.constant 0 : i32
    %c0_i32_0 = arith.constant 0 : i32
    %c0_i32_1 = arith.constant 0 : i32
    return %c0_i32, %c0_i32_0 : i32, i32
  }
  func.func @transform_8(%arg0: i32) -> (i32, i32) {
    %c0_i32 = arith.constant 0 : i32
    %c0_i32_0 = arith.constant 0 : i32
    %c0_i32_1 = arith.constant 0 : i32
    return %c0_i32, %c0_i32_0 : i32, i32
  }
  func.func @transform_9(%arg0: i32) -> (i32, i32) {
    %c0_i32 = arith.constant 0 : i32
    %c0_i32_0 = arith.constant 0 : i32
    %c0_i32_1 = arith.constant 0 : i32
    return %c0_i32, %c0_i32_0 : i32, i32
  }
  func.func @transform_10(%arg0: i32) -> (i32, i32, i32) {
    %c0_i32 = arith.constant 0 : i32
    %c0_i32_0 = arith.constant 0 : i32
    %c0_i32_1 = arith.constant 0 : i32
    return %arg0, %c0_i32, %c0_i32_0 : i32, i32, i32
  }
}

</mosaic_0001>

<llo_original>
// kernel: squeeze.3
$region0: #{squeeze.3}
  %s0 = inlined_call_operand.vmem [shape: f32[1,2,7,7], index: 0, kind: input, shape index: {}]
  %s1 = inlined_call_operand.vmem [shape: f32[98], index: 1, kind: output, shape index: {}]
  $region1: #{squeeze.3} parent=0
    #allocation0 [shape = 'u8[4096]{0}', space=vmem, size = 0x1000, scoped, tag = 'scoped mem for output reshape']
    %v2 = vld [vmem:[%s0] sm:$0x1]
    %vm3 = vcmask 56320
    %4 = vst.msk [vmem:[#allocation0] sm:$0x1] %vm3, %v2
    %s5 = scalar_lea.vmem %s0, 14
    %v6 = vld [vmem:[%s5] sm:$0x1]
    %7 = vrot.lane.b32.xlu0 %v6, 91
    %v8 = vpop.permute.xlu0 %7
    %vm9 = vcmask 802520
    %10 = vst.msk [vmem:[#allocation0] sm:$0x1] %vm9, %v8
    %s11 = scalar_lea.vmem %s0, 13
    %v12 = vld [vmem:[%s11] sm:$0x1]
    %13 = vrot.lane.b32.xlu0 %v12, 84
    %v14 = vpop.permute.xlu0 %13
    %vm15 = vcmask 745120
    %16 = vst.msk [vmem:[#allocation0] sm:$0x1] %vm15, %v14
    %s17 = scalar_lea.vmem %s0, 12
    %v18 = vld [vmem:[%s17] sm:$0x1]
    %19 = vrot.lane.b32.xlu0 %v18, 77
    %v20 = vpop.permute.xlu0 %19
    %vm21 = vcmask 687720
    %22 = vst.msk [vmem:[#allocation0] sm:$0x1] %vm21, %v20
    %s23 = scalar_lea.vmem %s0, 11
    %v24 = vld [vmem:[%s23] sm:$0x1]
    %25 = vrot.lane.b32.xlu0 %v24, 70
    %v26 = vpop.permute.xlu0 %25
    %vm27 = vcmask 630320
    %28 = vst.msk [vmem:[#allocation0] sm:$0x1] %vm27, %v26
    %s29 = scalar_lea.vmem %s0, 10
    %v30 = vld [vmem:[%s29] sm:$0x1]
    %31 = vrot.lane.b32.xlu0 %v30, 63
    %v32 = vpop.permute.xlu0 %31
    %vm33 = vcmask 572920
    %34 = vst.msk [vmem:[#allocation0] sm:$0x1] %vm33, %v32
    %s35 = scalar_lea.vmem %s0, 9
    %v36 = vld [vmem:[%s35] sm:$0x1]
    %37 = vrot.lane.b32.xlu0 %v36, 56
    %v38 = vpop.permute.xlu0 %37
    %vm39 = vcmask 515520
    %40 = vst.msk [vmem:[#allocation0] sm:$0x1] %vm39, %v38
    %s41 = scalar_lea.vmem %s0, 8
    %v42 = vld [vmem:[%s41] sm:$0x1]
    %43 = vrot.lane.b32.xlu0 %v42, 49
    %v44 = vpop.permute.xlu0 %43
    %vm45 = vcmask 458120
    %46 = vst.msk [vmem:[#allocation0] sm:$0x1] %vm45, %v44
    %s47 = scalar_lea.vmem %s0, 6
    %v48 = vld [vmem:[%s47] sm:$0x1]
    %49 = vrot.lane.b32.xlu0 %v48, 42
    %v50 = vpop.permute.xlu0 %49
    %vm51 = vcmask 400720
    %52 = vst.msk [vmem:[#allocation0] sm:$0x1] %vm51, %v50
    %s53 = scalar_lea.vmem %s0, 5
    %v54 = vld [vmem:[%s53] sm:$0x1]
    %55 = vrot.lane.b32.xlu0 %v54, 35
    %v56 = vpop.permute.xlu0 %55
    %vm57 = vcmask 343320
    %58 = vst.msk [vmem:[#allocation0] sm:$0x1] %vm57, %v56
    %s59 = scalar_lea.vmem %s0, 4
    %v60 = vld [vmem:[%s59] sm:$0x1]
    %61 = vrot.lane.b32.xlu0 %v60, 28
    %v62 = vpop.permute.xlu0 %61
    %vm63 = vcmask 285920
    %64 = vst.msk [vmem:[#allocation0] sm:$0x1] %vm63, %v62
    %s65 = scalar_lea.vmem %s0, 3
    %v66 = vld [vmem:[%s65] sm:$0x1]
    %67 = vrot.lane.b32.xlu0 %v66, 21
    %v68 = vpop.permute.xlu0 %67
    %vm69 = vcmask 228520
    %70 = vst.msk [vmem:[#allocation0] sm:$0x1] %vm69, %v68
    %s71 = scalar_lea.vmem %s0, 2
    %v72 = vld [vmem:[%s71] sm:$0x1]
    %73 = vrot.lane.b32.xlu0 %v72, 14
    %v74 = vpop.permute.xlu0 %73
    %vm75 = vcmask 171120
    %76 = vst.msk [vmem:[#allocation0] sm:$0x1] %vm75, %v74
    %s77 = scalar_lea.vmem %s0, 1
    %v78 = vld [vmem:[%s77] sm:$0x1]
    %79 = vrot.lane.b32.xlu0 %v78, 7
    %v80 = vpop.permute.xlu0 %79
    %vm81 = vcmask 113720
    %82 = vst.msk [vmem:[#allocation0] sm:$0x1] %vm81, %v80
    %s84 = sshllo.u32 0, 1
    %v86 = vld [vmem:[#allocation0] sm:%s84]
    %s87 = sshllo.u32 0, 1
    %88 = vst [vmem:[%s1] sm:%s87] %v86

// kernel: squeeze.4
$region0: #{squeeze.4}
  %s0 = inlined_call_operand.vmem [shape: f32[1,16,16,16], index: 0, kind: input, shape index: {}]
  %s1 = inlined_call_operand.vmem [shape: f32[16,256], index: 1, kind: output, shape index: {}]
  %v2 = vld [vmem:[%s0] ss:$8 sm:$0xf]
  %v3 = vld [vmem:[%s0] ss:$8 sm:$0xf0]
  %vm4 = vcmask 1047556
  %v5 = vsel %vm4, %v3, %v2
  %vm6 = vcmask 130048
  %7 = vst.msk [vmem:[%s1] ss:$8 sm:$0x3] %vm6, %v5
  %s8 = scalar_lea.vmem %s1, 4294967281
  %9 = vst.msk [vmem:[%s8] ss:$8 sm:$0xc] %vm6, %v5
  %s10 = scalar_lea.vmem %s1, 4294967266
  %11 = vst.msk [vmem:[%s10] ss:$8 sm:$0x30] %vm6, %v5
  %s12 = scalar_lea.vmem %s1, 4294967251
  %13 = vst.msk [vmem:[%s12] ss:$8 sm:$0xc0] %vm6, %v5
  %s14 = scalar_lea.vmem %s0, 64
  %v15 = vld [vmem:[%s14] ss:$8 sm:$0xf]
  %s16 = scalar_lea.vmem %s0, 64
  %v17 = vld [vmem:[%s16] ss:$8 sm:$0xf0]
  %vm18 = vcmask 1047556
  %v19 = vsel %vm18, %v17, %v15
  %vm20 = vcmask 130048
  %s21 = scalar_lea.vmem %s1, 4
  %22 = vst.msk [vmem:[%s21] ss:$8 sm:$0x3] %vm20, %v19
  %s23 = scalar_lea.vmem %s1, 4294967285
  %24 = vst.msk [vmem:[%s23] ss:$8 sm:$0xc] %vm20, %v19
  %s25 = scalar_lea.vmem %s1, 4294967270
  %26 = vst.msk [vmem:[%s25] ss:$8 sm:$0x30] %vm20, %v19
  %s27 = scalar_lea.vmem %s1, 4294967255
  %28 = vst.msk [vmem:[%s27] ss:$8 sm:$0xc0] %vm20, %v19
  %s29 = scalar_lea.vmem %s0, 128
  %v30 = vld [vmem:[%s29] ss:$8 sm:$0xf]
  %s31 = scalar_lea.vmem %s0, 128
  %v32 = vld [vmem:[%s31] ss:$8 sm:$0xf0]
  %vm33 = vcmask 1047556
  %v34 = vsel %vm33, %v32, %v30
  %vm35 = vcmask 130048
  %s36 = scalar_lea.vmem %s1, 16
  %37 = vst.msk [vmem:[%s36] ss:$8 sm:$0x3] %vm35, %v34
  %s38 = scalar_lea.vmem %s1, 1
  %39 = vst.msk [vmem:[%s38] ss:$8 sm:$0xc] %vm35, %v34
  %s40 = scalar_lea.vmem %s1, 4294967282
  %41 = vst.msk [vmem:[%s40] ss:$8 sm:$0x30] %vm35, %v34
  %s42 = scalar_lea.vmem %s1, 4294967267
  %43 = vst.msk [vmem:[%s42] ss:$8 sm:$0xc0] %vm35, %v34
  %s44 = scalar_lea.vmem %s0, 192
  %v45 = vld [vmem:[%s44] ss:$8 sm:$0xf]
  %s46 = scalar_lea.vmem %s0, 192
  %v47 = vld [vmem:[%s46] ss:$8 sm:$0xf0]
  %vm48 = vcmask 1047556
  %v49 = vsel %vm48, %v47, %v45
  %vm50 = vcmask 130048
  %s51 = scalar_lea.vmem %s1, 20
  %52 = vst.msk [vmem:[%s51] ss:$8 sm:$0x3] %vm50, %v49
  %s53 = scalar_lea.vmem %s1, 5
  %54 = vst.msk [vmem:[%s53] ss:$8 sm:$0xc] %vm50, %v49
  %s55 = scalar_lea.vmem %s1, 4294967286
  %56 = vst.msk [vmem:[%s55] ss:$8 sm:$0x30] %vm50, %v49
  %s57 = scalar_lea.vmem %s1, 4294967271
  %58 = vst.msk [vmem:[%s57] ss:$8 sm:$0xc0] %vm50, %v49
  %s59 = scalar_lea.vmem %s0, 7
  %s60 = smov 3
  %v61 = vld [vmem:[%s59] ss:$16 sm:%s60]
  %s62 = scalar_lea.vmem %s0, 7
  %s63 = smov 12
  %v64 = vld [vmem:[%s62] ss:$16 sm:%s63]
  %vm65 = vcmask 1043458
  %v66 = vsel %vm65, %v64, %v61
  %s67 = scalar_lea.vmem %s0, 7
  %s68 = smov 48
  %v69 = vld [vmem:[%s67] ss:$16 sm:%s68]
  %vm70 = vcmask 1045508
  %v71 = vsel %vm70, %v69, %v66
  %s72 = scalar_lea.vmem %s0, 7
  %s73 = smov 192
  %v74 = vld [vmem:[%s72] ss:$16 sm:%s73]
  %vm75 = vcmask 1047558
  %v76 = vsel %vm75, %v74, %v71
  %77 = vrot.lane.b32.xlu0 %v76, 112
  %v78 = vpop.permute.xlu0 %77
  %vm79 = vcmask 1048448
  %80 = vst.msk [vmem:[%s1] sm:$0xff] %vm79, %v78
  %s81 = scalar_lea.vmem %s0, 15
  %s82 = smov 3
  %v83 = vld [vmem:[%s81] ss:$16 sm:%s82]
  %s84 = scalar_lea.vmem %s0, 15
  %s85 = smov 12
  %v86 = vld [vmem:[%s84] ss:$16 sm:%s85]
  %vm87 = vcmask 1043458
  %v88 = vsel %vm87, %v86, %v83
  %s89 = scalar_lea.vmem %s0, 15
  %s90 = smov 48
  %v91 = vld [vmem:[%s89] ss:$16 sm:%s90]
  %vm92 = vcmask 1045508
  %v93 = vsel %vm92, %v91, %v88
  %s94 = scalar_lea.vmem %s0, 15
  %s95 = smov 192
  %v96 = vld [vmem:[%s94] ss:$16 sm:%s95]
  %vm97 = vcmask 1047558
  %v98 = vsel %vm97, %v96, %v93
  %99 = vrot.lane.b32.xlu0 %v98, 112
  %v100 = vpop.permute.xlu0 %99
  %vm101 = vcmask 1048448
  %s102 = scalar_lea.vmem %s1, 8
  %103 = vst.msk [vmem:[%s102] sm:$0xff] %vm101, %v100
  %s104 = scalar_lea.vmem %s0, 135
  %s105 = smov 3
  %v106 = vld [vmem:[%s104] ss:$16 sm:%s105]
  %s107 = scalar_lea.vmem %s0, 135
  %s108 = smov 12
  %v109 = vld [vmem:[%s107] ss:$16 sm:%s108]
  %vm110 = vcmask 1043458
  %v111 = vsel %vm110, %v109, %v106
  %s112 = scalar_lea.vmem %s0, 135
  %s113 = smov 48
  %v114 = vld [vmem:[%s112] ss:$16 sm:%s113]
  %vm115 = vcmask 1045508
  %v116 = vsel %vm115, %v114, %v111
  %s117 = scalar_lea.vmem %s0, 135
  %s118 = smov 192
  %v119 = vld [vmem:[%s117] ss:$16 sm:%s118]
  %vm120 = vcmask 1047558
  %v121 = vsel %vm120, %v119, %v116
  %122 = vrot.lane.b32.xlu0 %v121, 112
  %v123 = vpop.permute.xlu0 %122
  %vm124 = vcmask 1048448
  %s125 = scalar_lea.vmem %s1, 16
  %126 = vst.msk [vmem:[%s125] sm:$0xff] %vm124, %v123
  %s127 = scalar_lea.vmem %s0, 143
  %s128 = smov 3
  %v129 = vld [vmem:[%s127] ss:$16 sm:%s128]
  %s130 = scalar_lea.vmem %s0, 143
  %s131 = smov 12
  %v132 = vld [vmem:[%s130] ss:$16 sm:%s131]
  %vm133 = vcmask 1043458
  %v134 = vsel %vm133, %v132, %v129
  %s135 = scalar_lea.vmem %s0, 143
  %s136 = smov 48
  %v137 = vld [vmem:[%s135] ss:$16 sm:%s136]
  %vm138 = vcmask 1045508
  %v139 = vsel %vm138, %v137, %v134
  %s140 = scalar_lea.vmem %s0, 143
  %s141 = smov 192
  %v142 = vld [vmem:[%s140] ss:$16 sm:%s141]
  %vm143 = vcmask 1047558
  %v144 = vsel %vm143, %v142, %v139
  %145 = vrot.lane.b32.xlu0 %v144, 112
  %v146 = vpop.permute.xlu0 %145
  %vm147 = vcmask 1048448
  %s148 = scalar_lea.vmem %s1, 24
  %149 = vst.msk [vmem:[%s148] sm:$0xff] %vm147, %v146
  %s150 = scalar_lea.vmem %s0, 6
  %s151 = smov 3
  %v152 = vld [vmem:[%s150] ss:$16 sm:%s151]
  %s153 = scalar_lea.vmem %s0, 6
  %s154 = smov 12
  %v155 = vld [vmem:[%s153] ss:$16 sm:%s154]
  %vm156 = vcmask 1043458
  %v157 = vsel %vm156, %v155, %v152
  %s158 = scalar_lea.vmem %s0, 6
  %s159 = smov 48
  %v160 = vld [vmem:[%s158] ss:$16 sm:%s159]
  %vm161 = vcmask 1045508
  %v162 = vsel %vm161, %v160, %v157
  %s163 = scalar_lea.vmem %s0, 6
  %s164 = smov 192
  %v165 = vld [vmem:[%s163] ss:$16 sm:%s164]
  %vm166 = vcmask 1047558
  %v167 = vsel %vm166, %v165, %v162
  %168 = vrot.lane.b32.xlu0 %v167, 96
  %v169 = vpop.permute.xlu0 %168
  %vm170 = vcmask 917248
  %171 = vst.msk [vmem:[%s1] sm:$0xff] %vm170, %v169
  %s172 = scalar_lea.vmem %s0, 14
  %s173 = smov 3
  %v174 = vld [vmem:[%s172] ss:$16 sm:%s173]
  %s175 = scalar_lea.vmem %s0, 14
  %s176 = smov 12
  %v177 = vld [vmem:[%s175] ss:$16 sm:%s176]
  %vm178 = vcmask 1043458
  %v179 = vsel %vm178, %v177, %v174
  %s180 = scalar_lea.vmem %s0, 14
  %s181 = smov 48
  %v182 = vld [vmem:[%s180] ss:$16 sm:%s181]
  %vm183 = vcmask 1045508
  %v184 = vsel %vm183, %v182, %v179
  %s185 = scalar_lea.vmem %s0, 14
  %s186 = smov 192
  %v187 = vld [vmem:[%s185] ss:$16 sm:%s186]
  %vm188 = vcmask 1047558
  %v189 = vsel %vm188, %v187, %v184
  %190 = vrot.lane.b32.xlu0 %v189, 96
  %v191 = vpop.permute.xlu0 %190
  %vm192 = vcmask 917248
  %s193 = scalar_lea.vmem %s1, 8
  %194 = vst.msk [vmem:[%s193] sm:$0xff] %vm192, %v191
  %s195 = scalar_lea.vmem %s0, 134
  %s196 = smov 3
  %v197 = vld [vmem:[%s195] ss:$16 sm:%s196]
  %s198 = scalar_lea.vmem %s0, 134
  %s199 = smov 12
  %v200 = vld [vmem:[%s198] ss:$16 sm:%s199]
  %vm201 = vcmask 1043458
  %v202 = vsel %vm201, %v200, %v197
  %s203 = scalar_lea.vmem %s0, 134
  %s204 = smov 48
  %v205 = vld [vmem:[%s203] ss:$16 sm:%s204]
  %vm206 = vcmask 1045508
  %v207 = vsel %vm206, %v205, %v202
  %s208 = scalar_lea.vmem %s0, 134
  %s209 = smov 192
  %v210 = vld [vmem:[%s208] ss:$16 sm:%s209]
  %vm211 = vcmask 1047558
  %v212 = vsel %vm211, %v210, %v207
  %213 = vrot.lane.b32.xlu0 %v212, 96
  %v214 = vpop.permute.xlu0 %213
  %vm215 = vcmask 917248
  %s216 = scalar_lea.vmem %s1, 16
  %217 = vst.msk [vmem:[%s216] sm:$0xff] %vm215, %v214
  %s218 = scalar_lea.vmem %s0, 142
  %s219 = smov 3
  %v220 = vld [vmem:[%s218] ss:$16 sm:%s219]
  %s221 = scalar_lea.vmem %s0, 142
  %s222 = smov 12
  %v223 = vld [vmem:[%s221] ss:$16 sm:%s222]
  %vm224 = vcmask 1043458
  %v225 = vsel %vm224, %v223, %v220
  %s226 = scalar_lea.vmem %s0, 142
  %s227 = smov 48
  %v228 = vld [vmem:[%s226] ss:$16 sm:%s227]
  %vm229 = vcmask 1045508
  %v230 = vsel %vm229, %v228, %v225
  %s231 = scalar_lea.vmem %s0, 142
  %s232 = smov 192
  %v233 = vld [vmem:[%s231] ss:$16 sm:%s232]
  %vm234 = vcmask 1047558
  %v235 = vsel %vm234, %v233, %v230
  %236 = vrot.lane.b32.xlu0 %v235, 96
  %v237 = vpop.permute.xlu0 %236
  %vm238 = vcmask 917248
  %s239 = scalar_lea.vmem %s1, 24
  %240 = vst.msk [vmem:[%s239] sm:$0xff] %vm238, %v237
  %s241 = scalar_lea.vmem %s0, 5
  %s242 = smov 3
  %v243 = vld [vmem:[%s241] ss:$16 sm:%s242]
  %s244 = scalar_lea.vmem %s0, 5
  %s245 = smov 12
  %v246 = vld [vmem:[%s244] ss:$16 sm:%s245]
  %vm247 = vcmask 1043458
  %v248 = vsel %vm247, %v246, %v243
  %s249 = scalar_lea.vmem %s0, 5
  %s250 = smov 48
  %v251 = vld [vmem:[%s249] ss:$16 sm:%s250]
  %vm252 = vcmask 1045508
  %v253 = vsel %vm252, %v251, %v248
  %s254 = scalar_lea.vmem %s0, 5
  %s255 = smov 192
  %v256 = vld [vmem:[%s254] ss:$16 sm:%s255]
  %vm257 = vcmask 1047558
  %v258 = vsel %vm257, %v256, %v253
  %259 = vrot.lane.b32.xlu0 %v258, 80
  %v260 = vpop.permute.xlu0 %259
  %vm261 = vcmask 786048
  %262 = vst.msk [vmem:[%s1] sm:$0xff] %vm261, %v260
  %s263 = scalar_lea.vmem %s0, 13
  %s264 = smov 3
  %v265 = vld [vmem:[%s263] ss:$16 sm:%s264]
  %s266 = scalar_lea.vmem %s0, 13
  %s267 = smov 12
  %v268 = vld [vmem:[%s266] ss:$16 sm:%s267]
  %vm269 = vcmask 1043458
  %v270 = vsel %vm269, %v268, %v265
  %s271 = scalar_lea.vmem %s0, 13
  %s272 = smov 48
  %v273 = vld [vmem:[%s271] ss:$16 sm:%s272]
  %vm274 = vcmask 1045508
  %v275 = vsel %vm274, %v273, %v270
  %s276 = scalar_lea.vmem %s0, 13
  %s277 = smov 192
  %v278 = vld [vmem:[%s276] ss:$16 sm:%s277]
  %vm279 = vcmask 1047558
  %v280 = vsel %vm279, %v278, %v275
  %281 = vrot.lane.b32.xlu0 %v280, 80
  %v282 = vpop.permute.xlu0 %281
  %vm283 = vcmask 786048
  %s284 = scalar_lea.vmem %s1, 8
  %285 = vst.msk [vmem:[%s284] sm:$0xff] %vm283, %v282
  %s286 = scalar_lea.vmem %s0, 133
  %s287 = smov 3
  %v288 = vld [vmem:[%s286] ss:$16 sm:%s287]
  %s289 = scalar_lea.vmem %s0, 133
  %s290 = smov 12
  %v291 = vld [vmem:[%s289] ss:$16 sm:%s290]
  %vm292 = vcmask 1043458
  %v293 = vsel %vm292, %v291, %v288
  %s294 = scalar_lea.vmem %s0, 133
  %s295 = smov 48
  %v296 = vld [vmem:[%s294] ss:$16 sm:%s295]
  %vm297 = vcmask 1045508
  %v298 = vsel %vm297, %v296, %v293
  %s299 = scalar_lea.vmem %s0, 133
  %s300 = smov 192
  %v301 = vld [vmem:[%s299] ss:$16 sm:%s300]
  %vm302 = vcmask 1047558
  %v303 = vsel %vm302, %v301, %v298
  %304 = vrot.lane.b32.xlu0 %v303, 80
  %v305 = vpop.permute.xlu0 %304
  %vm306 = vcmask 786048
  %s307 = scalar_lea.vmem %s1, 16
  %308 = vst.msk [vmem:[%s307] sm:$0xff] %vm306, %v305
  %s309 = scalar_lea.vmem %s0, 141
  %s310 = smov 3
  %v311 = vld [vmem:[%s309] ss:$16 sm:%s310]
  %s312 = scalar_lea.vmem %s0, 141
  %s313 = smov 12
  %v314 = vld [vmem:[%s312] ss:$16 sm:%s313]
  %vm315 = vcmask 1043458
  %v316 = vsel %vm315, %v314, %v311
  %s317 = scalar_lea.vmem %s0, 141
  %s318 = smov 48
  %v319 = vld [vmem:[%s317] ss:$16 sm:%s318]
  %vm320 = vcmask 1045508
  %v321 = vsel %vm320, %v319, %v316
  %s322 = scalar_lea.vmem %s0, 141
  %s323 = smov 192
  %v324 = vld [vmem:[%s322] ss:$16 sm:%s323]
  %vm325 = vcmask 1047558
  %v326 = vsel %vm325, %v324, %v321
  %327 = vrot.lane.b32.xlu0 %v326, 80
  %v328 = vpop.permute.xlu0 %327
  %vm329 = vcmask 786048
  %s330 = scalar_lea.vmem %s1, 24
  %331 = vst.msk [vmem:[%s330] sm:$0xff] %vm329, %v328
  %s332 = scalar_lea.vmem %s0, 4
  %s333 = smov 3
  %v334 = vld [vmem:[%s332] ss:$16 sm:%s333]
  %s335 = scalar_lea.vmem %s0, 4
  %s336 = smov 12
  %v337 = vld [vmem:[%s335] ss:$16 sm:%s336]
  %vm338 = vcmask 1043458
  %v339 = vsel %vm338, %v337, %v334
  %s340 = scalar_lea.vmem %s0, 4
  %s341 = smov 48
  %v342 = vld [vmem:[%s340] ss:$16 sm:%s341]
  %vm343 = vcmask 1045508
  %v344 = vsel %vm343, %v342, %v339
  %s345 = scalar_lea.vmem %s0, 4
  %s346 = smov 192
  %v347 = vld [vmem:[%s345] ss:$16 sm:%s346]
  %vm348 = vcmask 1047558
  %v349 = vsel %vm348, %v347, %v344
  %350 = vrot.lane.b32.xlu0 %v349, 64
  %v351 = vpop.permute.xlu0 %350
  %vm352 = vcmask 654848
  %353 = vst.msk [vmem:[%s1] sm:$0xff] %vm352, %v351
  %s354 = scalar_lea.vmem %s0, 12
  %s355 = smov 3
  %v356 = vld [vmem:[%s354] ss:$16 sm:%s355]
  %s357 = scalar_lea.vmem %s0, 12
  %s358 = smov 12
  %v359 = vld [vmem:[%s357] ss:$16 sm:%s358]
  %vm360 = vcmask 1043458
  %v361 = vsel %vm360, %v359, %v356
  %s362 = scalar_lea.vmem %s0, 12
  %s363 = smov 48
  %v364 = vld [vmem:[%s362] ss:$16 sm:%s363]
  %vm365 = vcmask 1045508
  %v366 = vsel %vm365, %v364, %v361
  %s367 = scalar_lea.vmem %s0, 12
  %s368 = smov 192
  %v369 = vld [vmem:[%s367] ss:$16 sm:%s368]
  %vm370 = vcmask 1047558
  %v371 = vsel %vm370, %v369, %v366
  %372 = vrot.lane.b32.xlu0 %v371, 64
  %v373 = vpop.permute.xlu0 %372
  %vm374 = vcmask 654848
  %s375 = scalar_lea.vmem %s1, 8
  %376 = vst.msk [vmem:[%s375] sm:$0xff] %vm374, %v373
  %s377 = scalar_lea.vmem %s0, 132
  %s378 = smov 3
  %v379 = vld [vmem:[%s377] ss:$16 sm:%s378]
  %s380 = scalar_lea.vmem %s0, 132
  %s381 = smov 12
  %v382 = vld [vmem:[%s380] ss:$16 sm:%s381]
  %vm383 = vcmask 1043458
  %v384 = vsel %vm383, %v382, %v379
  %s385 = scalar_lea.vmem %s0, 132
  %s386 = smov 48
  %v387 = vld [vmem:[%s385] ss:$16 sm:%s386]
  %vm388 = vcmask 1045508
  %v389 = vsel %vm388, %v387, %v384
  %s390 = scalar_lea.vmem %s0, 132
  %s391 = smov 192
  %v392 = vld [vmem:[%s390] ss:$16 sm:%s391]
  %vm393 = vcmask 1047558
  %v394 = vsel %vm393, %v392, %v389
  %395 = vrot.lane.b32.xlu0 %v394, 64
  %v396 = vpop.permute.xlu0 %395
  %vm397 = vcmask 654848
  %s398 = scalar_lea.vmem %s1, 16
  %399 = vst.msk [vmem:[%s398] sm:$0xff] %vm397, %v396
  %s400 = scalar_lea.vmem %s0, 140
  %s401 = smov 3
  %v402 = vld [vmem:[%s400] ss:$16 sm:%s401]
  %s403 = scalar_lea.vmem %s0, 140
  %s404 = smov 12
  %v405 = vld [vmem:[%s403] ss:$16 sm:%s404]
  %vm406 = vcmask 1043458
  %v407 = vsel %vm406, %v405, %v402
  %s408 = scalar_lea.vmem %s0, 140
  %s409 = smov 48
  %v410 = vld [vmem:[%s408] ss:$16 sm:%s409]
  %vm411 = vcmask 1045508
  %v412 = vsel %vm411, %v410, %v407
  %s413 = scalar_lea.vmem %s0, 140
  %s414 = smov 192
  %v415 = vld [vmem:[%s413] ss:$16 sm:%s414]
  %vm416 = vcmask 1047558
  %v417 = vsel %vm416, %v415, %v412
  %418 = vrot.lane.b32.xlu0 %v417, 64
  %v419 = vpop.permute.xlu0 %418
  %vm420 = vcmask 654848
  %s421 = scalar_lea.vmem %s1, 24
  %422 = vst.msk [vmem:[%s421] sm:$0xff] %vm420, %v419
  %s423 = scalar_lea.vmem %s0, 3
  %s424 = smov 3
  %v425 = vld [vmem:[%s423] ss:$16 sm:%s424]
  %s426 = scalar_lea.vmem %s0, 3
  %s427 = smov 12
  %v428 = vld [vmem:[%s426] ss:$16 sm:%s427]
  %vm429 = vcmask 1043458
  %v430 = vsel %vm429, %v428, %v425
  %s431 = scalar_lea.vmem %s0, 3
  %s432 = smov 48
  %v433 = vld [vmem:[%s431] ss:$16 sm:%s432]
  %vm434 = vcmask 1045508
  %v435 = vsel %vm434, %v433, %v430
  %s436 = scalar_lea.vmem %s0, 3
  %s437 = smov 192
  %v438 = vld [vmem:[%s436] ss:$16 sm:%s437]
  %vm439 = vcmask 1047558
  %v440 = vsel %vm439, %v438, %v435
  %441 = vrot.lane.b32.xlu0 %v440, 48
  %v442 = vpop.permute.xlu0 %441
  %vm443 = vcmask 523648
  %444 = vst.msk [vmem:[%s1] sm:$0xff] %vm443, %v442
  %s445 = scalar_lea.vmem %s0, 11
  %s446 = smov 3
  %v447 = vld [vmem:[%s445] ss:$16 sm:%s446]
  %s448 = scalar_lea.vmem %s0, 11
  %s449 = smov 12
  %v450 = vld [vmem:[%s448] ss:$16 sm:%s449]
  %vm451 = vcmask 1043458
  %v452 = vsel %vm451, %v450, %v447
  %s453 = scalar_lea.vmem %s0, 11
  %s454 = smov 48
  %v455 = vld [vmem:[%s453] ss:$16 sm:%s454]
  %vm456 = vcmask 1045508
  %v457 = vsel %vm456, %v455, %v452
  %s458 = scalar_lea.vmem %s0, 11
  %s459 = smov 192
  %v460 = vld [vmem:[%s458] ss:$16 sm:%s459]
  %vm461 = vcmask 1047558
  %v462 = vsel %vm461, %v460, %v457
  %463 = vrot.lane.b32.xlu0 %v462, 48
  %v464 = vpop.permute.xlu0 %463
  %vm465 = vcmask 523648
  %s466 = scalar_lea.vmem %s1, 8
  %467 = vst.msk [vmem:[%s466] sm:$0xff] %vm465, %v464
  %s468 = scalar_lea.vmem %s0, 131
  %s469 = smov 3
  %v470 = vld [vmem:[%s468] ss:$16 sm:%s469]
  %s471 = scalar_lea.vmem %s0, 131
  %s472 = smov 12
  %v473 = vld [vmem:[%s471] ss:$16 sm:%s472]
  %vm474 = vcmask 1043458
  %v475 = vsel %vm474, %v473, %v470
  %s476 = scalar_lea.vmem %s0, 131
  %s477 = smov 48
  %v478 = vld [vmem:[%s476] ss:$16 sm:%s477]
  %vm479 = vcmask 1045508
  %v480 = vsel %vm479, %v478, %v475
  %s481 = scalar_lea.vmem %s0, 131
  %s482 = smov 192
  %v483 = vld [vmem:[%s481] ss:$16 sm:%s482]
  %vm484 = vcmask 1047558
  %v485 = vsel %vm484, %v483, %v480
  %486 = vrot.lane.b32.xlu0 %v485, 48
  %v487 = vpop.permute.xlu0 %486
  %vm488 = vcmask 523648
  %s489 = scalar_lea.vmem %s1, 16
  %490 = vst.msk [vmem:[%s489] sm:$0xff] %vm488, %v487
  %s491 = scalar_lea.vmem %s0, 139
  %s492 = smov 3
  %v493 = vld [vmem:[%s491] ss:$16 sm:%s492]
  %s494 = scalar_lea.vmem %s0, 139
  %s495 = smov 12
  %v496 = vld [vmem:[%s494] ss:$16 sm:%s495]
  %vm497 = vcmask 1043458
  %v498 = vsel %vm497, %v496, %v493
  %s499 = scalar_lea.vmem %s0, 139
  %s500 = smov 48
  %v501 = vld [vmem:[%s499] ss:$16 sm:%s500]
  %vm502 = vcmask 1045508
  %v503 = vsel %vm502, %v501, %v498
  %s504 = scalar_lea.vmem %s0, 139
  %s505 = smov 192
  %v506 = vld [vmem:[%s504] ss:$16 sm:%s505]
  %vm507 = vcmask 1047558
  %v508 = vsel %vm507, %v506, %v503
  %509 = vrot.lane.b32.xlu0 %v508, 48
  %v510 = vpop.permute.xlu0 %509
  %vm511 = vcmask 523648
  %s512 = scalar_lea.vmem %s1, 24
  %513 = vst.msk [vmem:[%s512] sm:$0xff] %vm511, %v510
  %s514 = scalar_lea.vmem %s0, 2
  %s515 = smov 3
  %v516 = vld [vmem:[%s514] ss:$16 sm:%s515]
  %s517 = scalar_lea.vmem %s0, 2
  %s518 = smov 12
  %v519 = vld [vmem:[%s517] ss:$16 sm:%s518]
  %vm520 = vcmask 1043458
  %v521 = vsel %vm520, %v519, %v516
  %s522 = scalar_lea.vmem %s0, 2
  %s523 = smov 48
  %v524 = vld [vmem:[%s522] ss:$16 sm:%s523]
  %vm525 = vcmask 1045508
  %v526 = vsel %vm525, %v524, %v521
  %s527 = scalar_lea.vmem %s0, 2
  %s528 = smov 192
  %v529 = vld [vmem:[%s527] ss:$16 sm:%s528]
  %vm530 = vcmask 1047558
  %v531 = vsel %vm530, %v529, %v526
  %532 = vrot.lane.b32.xlu0 %v531, 32
  %v533 = vpop.permute.xlu0 %532
  %vm534 = vcmask 392448
  %535 = vst.msk [vmem:[%s1] sm:$0xff] %vm534, %v533
  %s536 = scalar_lea.vmem %s0, 10
  %s537 = smov 3
  %v538 = vld [vmem:[%s536] ss:$16 sm:%s537]
  %s539 = scalar_lea.vmem %s0, 10
  %s540 = smov 12
  %v541 = vld [vmem:[%s539] ss:$16 sm:%s540]
  %vm542 = vcmask 1043458
  %v543 = vsel %vm542, %v541, %v538
  %s544 = scalar_lea.vmem %s0, 10
  %s545 = smov 48
  %v546 = vld [vmem:[%s544] ss:$16 sm:%s545]
  %vm547 = vcmask 1045508
  %v548 = vsel %vm547, %v546, %v543
  %s549 = scalar_lea.vmem %s0, 10
  %s550 = smov 192
  %v551 = vld [vmem:[%s549] ss:$16 sm:%s550]
  %vm552 = vcmask 1047558
  %v553 = vsel %vm552, %v551, %v548
  %554 = vrot.lane.b32.xlu0 %v553, 32
  %v555 = vpop.permute.xlu0 %554
  %vm556 = vcmask 392448
  %s557 = scalar_lea.vmem %s1, 8
  %558 = vst.msk [vmem:[%s557] sm:$0xff] %vm556, %v555
  %s559 = scalar_lea.vmem %s0, 130
  %s560 = smov 3
  %v561 = vld [vmem:[%s559] ss:$16 sm:%s560]
  %s562 = scalar_lea.vmem %s0, 130
  %s563 = smov 12
  %v564 = vld [vmem:[%s562] ss:$16 sm:%s563]
  %vm565 = vcmask 1043458
  %v566 = vsel %vm565, %v564, %v561
  %s567 = scalar_lea.vmem %s0, 130
  %s568 = smov 48
  %v569 = vld [vmem:[%s567] ss:$16 sm:%s568]
  %vm570 = vcmask 1045508
  %v571 = vsel %vm570, %v569, %v566
  %s572 = scalar_lea.vmem %s0, 130
  %s573 = smov 192
  %v574 = vld [vmem:[%s572] ss:$16 sm:%s573]
  %vm575 = vcmask 1047558
  %v576 = vsel %vm575, %v574, %v571
  %577 = vrot.lane.b32.xlu0 %v576, 32
  %v578 = vpop.permute.xlu0 %577
  %vm579 = vcmask 392448
  %s580 = scalar_lea.vmem %s1, 16
  %581 = vst.msk [vmem:[%s580] sm:$0xff] %vm579, %v578
  %s582 = scalar_lea.vmem %s0, 138
  %s583 = smov 3
  %v584 = vld [vmem:[%s582] ss:$16 sm:%s583]
  %s585 = scalar_lea.vmem %s0, 138
  %s586 = smov 12
  %v587 = vld [vmem:[%s585] ss:$16 sm:%s586]
  %vm588 = vcmask 1043458
  %v589 = vsel %vm588, %v587, %v584
  %s590 = scalar_lea.vmem %s0, 138
  %s591 = smov 48
  %v592 = vld [vmem:[%s590] ss:$16 sm:%s591]
  %vm593 = vcmask 1045508
  %v594 = vsel %vm593, %v592, %v589
  %s595 = scalar_lea.vmem %s0, 138
  %s596 = smov 192
  %v597 = vld [vmem:[%s595] ss:$16 sm:%s596]
  %vm598 = vcmask 1047558
  %v599 = vsel %vm598, %v597, %v594
  %600 = vrot.lane.b32.xlu0 %v599, 32
  %v601 = vpop.permute.xlu0 %600
  %vm602 = vcmask 392448
  %s603 = scalar_lea.vmem %s1, 24
  %604 = vst.msk [vmem:[%s603] sm:$0xff] %vm602, %v601
  %s605 = scalar_lea.vmem %s0, 1
  %s606 = smov 3
  %v607 = vld [vmem:[%s605] ss:$16 sm:%s606]
  %s608 = scalar_lea.vmem %s0, 1
  %s609 = smov 12
  %v610 = vld [vmem:[%s608] ss:$16 sm:%s609]
  %vm611 = vcmask 1043458
  %v612 = vsel %vm611, %v610, %v607
  %s613 = scalar_lea.vmem %s0, 1
  %s614 = smov 48
  %v615 = vld [vmem:[%s613] ss:$16 sm:%s614]
  %vm616 = vcmask 1045508
  %v617 = vsel %vm616, %v615, %v612
  %s618 = scalar_lea.vmem %s0, 1
  %s619 = smov 192
  %v620 = vld [vmem:[%s618] ss:$16 sm:%s619]
  %vm621 = vcmask 1047558
  %v622 = vsel %vm621, %v620, %v617
  %623 = vrot.lane.b32.xlu0 %v622, 16
  %v624 = vpop.permute.xlu0 %623
  %vm625 = vcmask 261248
  %626 = vst.msk [vmem:[%s1] sm:$0xff] %vm625, %v624
  %s627 = scalar_lea.vmem %s0, 9
  %s628 = smov 3
  %v629 = vld [vmem:[%s627] ss:$16 sm:%s628]
  %s630 = scalar_lea.vmem %s0, 9
  %s631 = smov 12
  %v632 = vld [vmem:[%s630] ss:$16 sm:%s631]
  %vm633 = vcmask 1043458
  %v634 = vsel %vm633, %v632, %v629
  %s635 = scalar_lea.vmem %s0, 9
  %s636 = smov 48
  %v637 = vld [vmem:[%s635] ss:$16 sm:%s636]
  %vm638 = vcmask 1045508
  %v639 = vsel %vm638, %v637, %v634
  %s640 = scalar_lea.vmem %s0, 9
  %s641 = smov 192
  %v642 = vld [vmem:[%s640] ss:$16 sm:%s641]
  %vm643 = vcmask 1047558
  %v644 = vsel %vm643, %v642, %v639
  %645 = vrot.lane.b32.xlu0 %v644, 16
  %v646 = vpop.permute.xlu0 %645
  %vm647 = vcmask 261248
  %s648 = scalar_lea.vmem %s1, 8
  %649 = vst.msk [vmem:[%s648] sm:$0xff] %vm647, %v646
  %s650 = scalar_lea.vmem %s0, 129
  %s651 = smov 3
  %v652 = vld [vmem:[%s650] ss:$16 sm:%s651]
  %s653 = scalar_lea.vmem %s0, 129
  %s654 = smov 12
  %v655 = vld [vmem:[%s653] ss:$16 sm:%s654]
  %vm656 = vcmask 1043458
  %v657 = vsel %vm656, %v655, %v652
  %s658 = scalar_lea.vmem %s0, 129
  %s659 = smov 48
  %v660 = vld [vmem:[%s658] ss:$16 sm:%s659]
  %vm661 = vcmask 1045508
  %v662 = vsel %vm661, %v660, %v657
  %s663 = scalar_lea.vmem %s0, 129
  %s664 = smov 192
  %v665 = vld [vmem:[%s663] ss:$16 sm:%s664]
  %vm666 = vcmask 1047558
  %v667 = vsel %vm666, %v665, %v662
  %668 = vrot.lane.b32.xlu0 %v667, 16
  %v669 = vpop.permute.xlu0 %668
  %vm670 = vcmask 261248
  %s671 = scalar_lea.vmem %s1, 16
  %672 = vst.msk [vmem:[%s671] sm:$0xff] %vm670, %v669
  %s673 = scalar_lea.vmem %s0, 137
  %s674 = smov 3
  %v675 = vld [vmem:[%s673] ss:$16 sm:%s674]
  %s676 = scalar_lea.vmem %s0, 137
  %s677 = smov 12
  %v678 = vld [vmem:[%s676] ss:$16 sm:%s677]
  %vm679 = vcmask 1043458
  %v680 = vsel %vm679, %v678, %v675
  %s681 = scalar_lea.vmem %s0, 137
  %s682 = smov 48
  %v683 = vld [vmem:[%s681] ss:$16 sm:%s682]
  %vm684 = vcmask 1045508
  %v685 = vsel %vm684, %v683, %v680
  %s686 = scalar_lea.vmem %s0, 137
  %s687 = smov 192
  %v688 = vld [vmem:[%s686] ss:$16 sm:%s687]
  %vm689 = vcmask 1047558
  %v690 = vsel %vm689, %v688, %v685
  %691 = vrot.lane.b32.xlu0 %v690, 16
  %v692 = vpop.permute.xlu0 %691
  %vm693 = vcmask 261248
  %s694 = scalar_lea.vmem %s1, 24
  %695 = vst.msk [vmem:[%s694] sm:$0xff] %vm693, %v692

// kernel: cross_modal_attention_block.1
$region0: #{cross_modal_attention_block.1}
  #allocation0 [shape = 'u32[]', space=smem, size = 0x4, offset = 0x4, fixed_abs, tag = 'smem constant byte address 0x4 - core index']
  #allocation1 [shape = 'u32[144,128]{1,0:T(1,128)}', space=vmem, size = 0x12000, scoped, tag = 'internal scratch']
  %s0 = inlined_call_operand.vmem [shape: f32[2,16,256], index: 0, kind: input, shape index: {}]
  %s1 = inlined_call_operand.vmem [shape: f32[2,16,256], index: 1, kind: input, shape index: {}]
  %s2 = inlined_call_operand.vmem [shape: f32[16,256], index: 2, kind: input, shape index: {}]
  %s3 = inlined_call_operand.vmem [shape: f32[16,256], index: 3, kind: input, shape index: {}]
  %s4 = inlined_call_operand.vmem [shape: f32[3,48], index: 4, kind: input, shape index: {}]
  %s5 = inlined_call_operand.vmem [shape: f32[8,3], index: 5, kind: input, shape index: {}]
  %s6 = inlined_call_operand.vmem [shape: f32[8,48,65], index: 6, kind: input, shape index: {}]
  %s7 = inlined_call_operand.vmem [shape: f32[65,256], index: 7, kind: input, shape index: {}]
  %s8 = inlined_call_operand.vmem [shape: f32[16,48], index: 8, kind: input, shape index: {}]
  %s9 = inlined_call_operand.vmem [shape: f32[512,256], index: 9, kind: input, shape index: {}]
  %s10 = inlined_call_operand.vmem [shape: f32[2,16,256], index: 10, kind: output, shape index: {}]
  %s11 = sld [smem:[#allocation0]]
  $region73: #{cross_modal_attention_block.1} parent=0
    _
  %s13 = ssub.s32 1, %s11
  %s14 = scalar_select 0, %s13, %s11
  loop: start=0, step=1, limit=4
  $region2: #{cross_modal_attention_block.1} parent=0 // loop_pre_header
    _
  $region3: #{cross_modal_attention_block.1} parent=0 // loop_header
    %s16 = sphi 0, %s20
    %p17 = scmp.ge.s32.totalorder %s16, 4
    %s26 = sphi 0, %s28
    %s29 = sphi 0, %s26
    %s30 = sphi 0, %s29
    %s46 = sphi 0, %s30
    %s52 = sphi 0, %s54
    %s55 = sphi 0, %s52
    %s56 = sphi 0, %s55
    %s72 = sphi 0, %s56
    %s76 = sphi 0, %s76
    %s78 = sphi 0, %s76
    %s79 = sphi 0, %s78
    %s93 = sphi 0, %s79
    %s97 = sphi 0, %s97
    %s99 = sphi 0, %s97
    %s100 = sphi 0, %s99
    %s114 = sphi 0, %s100
    %s118 = sphi 0, %s118
    %s120 = sphi 0, %s118
    %s121 = sphi 0, %s120
    %s135 = sphi 0, %s121
    %s139 = sphi 0, %s139
    %s141 = sphi 0, %s139
    %s142 = sphi 0, %s141
    %s156 = sphi 0, %s142
    %s160 = sphi 0, %s160
    %s162 = sphi 0, %s160
    %s163 = sphi 0, %s162
    %s177 = sphi 0, %s163
    %s181 = sphi 0, %s181
    %s183 = sphi 0, %s181
    %s184 = sphi 0, %s183
    %s198 = sphi 0, %s184
    %s202 = sphi 0, %s202
    %s204 = sphi 0, %s202
    %s205 = sphi 0, %s204
    %s219 = sphi 0, %s205
    %s223 = sphi 0, %s223
    %s225 = sphi 0, %s223
    %s226 = sphi 0, %s225
    %s240 = sphi 0, %s226
    %s246 = sphi 0, %s248
    %s249 = sphi 0, %s246
    %s250 = sphi 0, %s249
    %s266 = sphi 0, %s250
  $region4: #{cross_modal_attention_block.1} parent=0 // loop_header_branch
    %19 = sbr.rel (%p17) target = $region8
  $region5: #{cross_modal_attention_block.1} parent=0 // loop_body
    %s21 = ssub.s32 %s16, 1
    %s22 = ssub.s32 %s16, 2
    %s23 = sadd.s32 %s16, 1
    %s24 = ssub.s32 %s16, %s23
    %p25 = scmp.eq.s32.totalorder %s24, 0
    %s27 = sadd.s32 %s26, 1
    %s28 = scalar_select %p25, %s26, %s27
    %p31 = pneg %p25
    %p32 = scmp.eq.s32.totalorder %s16, 1
    %p33 = por %p31, %p32
    %p34 = scmp.ne.s32.totalorder %s26, %s29
    %p35 = scmp.eq.s32.totalorder %s16, 0
    %p36 = por %p34, %p35
    %p37 = scmp.ne.s32.totalorder %s26, %s29
    %p38 = scmp.eq.s32.totalorder %s21, 1
    %p39 = por %p37, %p38
    %p40 = scmp.ne.s32.totalorder %s29, %s30
    %p41 = scmp.eq.s32.totalorder %s21, 0
    %p42 = por %p40, %p41
    %p43 = scmp.ne.s32.totalorder %s29, %s30
    %p44 = scmp.eq.s32.totalorder %s22, 1
    %p45 = por %p43, %p44
    %p47 = scmp.ne.s32.totalorder %s30, %s46
    %p48 = scmp.eq.s32.totalorder %s22, 0
    %p49 = por %p47, %p48
    %s50 = ssub.s32 %s16, %s23
    %p51 = scmp.eq.s32.totalorder %s50, 0
    %s53 = sadd.s32 %s52, 1
    %s54 = scalar_select %p51, %s52, %s53
    %p57 = pneg %p51
    %p58 = scmp.eq.s32.totalorder %s16, 1
    %p59 = por %p57, %p58
    %p60 = scmp.ne.s32.totalorder %s52, %s55
    %p61 = scmp.eq.s32.totalorder %s16, 0
    %p62 = por %p60, %p61
    %p63 = scmp.ne.s32.totalorder %s52, %s55
    %p64 = scmp.eq.s32.totalorder %s21, 1
    %p65 = por %p63, %p64
    %p66 = scmp.ne.s32.totalorder %s55, %s56
    %p67 = scmp.eq.s32.totalorder %s21, 0
    %p68 = por %p66, %p67
    %p69 = scmp.ne.s32.totalorder %s55, %s56
    %p70 = scmp.eq.s32.totalorder %s22, 1
    %p71 = por %p69, %p70
    %p73 = scmp.ne.s32.totalorder %s56, %s72
    %p74 = scmp.eq.s32.totalorder %s22, 0
    %p75 = por %p73, %p74
    %s77 = sadd.s32 %s76, 1
    %p80 = scmp.eq.s32.totalorder %s16, 1
    %p81 = scmp.ne.s32.totalorder %s76, %s78
    %p82 = scmp.eq.s32.totalorder %s16, 0
    %p83 = por %p81, %p82
    %p84 = scmp.ne.s32.totalorder %s76, %s78
    %p85 = scmp.eq.s32.totalorder %s21, 1
    %p86 = por %p84, %p85
    %p87 = scmp.ne.s32.totalorder %s78, %s79
    %p88 = scmp.eq.s32.totalorder %s21, 0
    %p89 = por %p87, %p88
    %p90 = scmp.ne.s32.totalorder %s78, %s79
    %p91 = scmp.eq.s32.totalorder %s22, 1
    %p92 = por %p90, %p91
    %p94 = scmp.ne.s32.totalorder %s79, %s93
    %p95 = scmp.eq.s32.totalorder %s22, 0
    %p96 = por %p94, %p95
    %s98 = sadd.s32 %s97, 1
    %p101 = scmp.eq.s32.totalorder %s16, 1
    %p102 = scmp.ne.s32.totalorder %s97, %s99
    %p103 = scmp.eq.s32.totalorder %s16, 0
    %p104 = por %p102, %p103
    %p105 = scmp.ne.s32.totalorder %s97, %s99
    %p106 = scmp.eq.s32.totalorder %s21, 1
    %p107 = por %p105, %p106
    %p108 = scmp.ne.s32.totalorder %s99, %s100
    %p109 = scmp.eq.s32.totalorder %s21, 0
    %p110 = por %p108, %p109
    %p111 = scmp.ne.s32.totalorder %s99, %s100
    %p112 = scmp.eq.s32.totalorder %s22, 1
    %p113 = por %p111, %p112
    %p115 = scmp.ne.s32.totalorder %s100, %s114
    %p116 = scmp.eq.s32.totalorder %s22, 0
    %p117 = por %p115, %p116
    %s119 = sadd.s32 %s118, 1
    %p122 = scmp.eq.s32.totalorder %s16, 1
    %p123 = scmp.ne.s32.totalorder %s118, %s120
    %p124 = scmp.eq.s32.totalorder %s16, 0
    %p125 = por %p123, %p124
    %p126 = scmp.ne.s32.totalorder %s118, %s120
    %p127 = scmp.eq.s32.totalorder %s21, 1
    %p128 = por %p126, %p127
    %p129 = scmp.ne.s32.totalorder %s120, %s121
    %p130 = scmp.eq.s32.totalorder %s21, 0
    %p131 = por %p129, %p130
    %p132 = scmp.ne.s32.totalorder %s120, %s121
    %p133 = scmp.eq.s32.totalorder %s22, 1
    %p134 = por %p132, %p133
    %p136 = scmp.ne.s32.totalorder %s121, %s135
    %p137 = scmp.eq.s32.totalorder %s22, 0
    %p138 = por %p136, %p137
    %s140 = sadd.s32 %s139, 1
    %p143 = scmp.eq.s32.totalorder %s16, 1
    %p144 = scmp.ne.s32.totalorder %s139, %s141
    %p145 = scmp.eq.s32.totalorder %s16, 0
    %p146 = por %p144, %p145
    %p147 = scmp.ne.s32.totalorder %s139, %s141
    %p148 = scmp.eq.s32.totalorder %s21, 1
    %p149 = por %p147, %p148
    %p150 = scmp.ne.s32.totalorder %s141, %s142
    %p151 = scmp.eq.s32.totalorder %s21, 0
    %p152 = por %p150, %p151
    %p153 = scmp.ne.s32.totalorder %s141, %s142
    %p154 = scmp.eq.s32.totalorder %s22, 1
    %p155 = por %p153, %p154
    %p157 = scmp.ne.s32.totalorder %s142, %s156
    %p158 = scmp.eq.s32.totalorder %s22, 0
    %p159 = por %p157, %p158
    %s161 = sadd.s32 %s160, 1
    %p164 = scmp.eq.s32.totalorder %s16, 1
    %p165 = scmp.ne.s32.totalorder %s160, %s162
    %p166 = scmp.eq.s32.totalorder %s16, 0
    %p167 = por %p165, %p166
    %p168 = scmp.ne.s32.totalorder %s160, %s162
    %p169 = scmp.eq.s32.totalorder %s21, 1
    %p170 = por %p168, %p169
    %p171 = scmp.ne.s32.totalorder %s162, %s163
    %p172 = scmp.eq.s32.totalorder %s21, 0
    %p173 = por %p171, %p172
    %p174 = scmp.ne.s32.totalorder %s162, %s163
    %p175 = scmp.eq.s32.totalorder %s22, 1
    %p176 = por %p174, %p175
    %p178 = scmp.ne.s32.totalorder %s163, %s177
    %p179 = scmp.eq.s32.totalorder %s22, 0
    %p180 = por %p178, %p179
    %s182 = sadd.s32 %s181, 1
    %p185 = scmp.eq.s32.totalorder %s16, 1
    %p186 = scmp.ne.s32.totalorder %s181, %s183
    %p187 = scmp.eq.s32.totalorder %s16, 0
    %p188 = por %p186, %p187
    %p189 = scmp.ne.s32.totalorder %s181, %s183
    %p190 = scmp.eq.s32.totalorder %s21, 1
    %p191 = por %p189, %p190
    %p192 = scmp.ne.s32.totalorder %s183, %s184
    %p193 = scmp.eq.s32.totalorder %s21, 0
    %p194 = por %p192, %p193
    %p195 = scmp.ne.s32.totalorder %s183, %s184
    %p196 = scmp.eq.s32.totalorder %s22, 1
    %p197 = por %p195, %p196
    %p199 = scmp.ne.s32.totalorder %s184, %s198
    %p200 = scmp.eq.s32.totalorder %s22, 0
    %p201 = por %p199, %p200
    %s203 = sadd.s32 %s202, 1
    %p206 = scmp.eq.s32.totalorder %s16, 1
    %p207 = scmp.ne.s32.totalorder %s202, %s204
    %p208 = scmp.eq.s32.totalorder %s16, 0
    %p209 = por %p207, %p208
    %p210 = scmp.ne.s32.totalorder %s202, %s204
    %p211 = scmp.eq.s32.totalorder %s21, 1
    %p212 = por %p210, %p211
    %p213 = scmp.ne.s32.totalorder %s204, %s205
    %p214 = scmp.eq.s32.totalorder %s21, 0
    %p215 = por %p213, %p214
    %p216 = scmp.ne.s32.totalorder %s204, %s205
    %p217 = scmp.eq.s32.totalorder %s22, 1
    %p218 = por %p216, %p217
    %p220 = scmp.ne.s32.totalorder %s205, %s219
    %p221 = scmp.eq.s32.totalorder %s22, 0
    %p222 = por %p220, %p221
    %s224 = sadd.s32 %s223, 1
    %p227 = scmp.eq.s32.totalorder %s16, 1
    %p228 = scmp.ne.s32.totalorder %s223, %s225
    %p229 = scmp.eq.s32.totalorder %s16, 0
    %p230 = por %p228, %p229
    %p231 = scmp.ne.s32.totalorder %s223, %s225
    %p232 = scmp.eq.s32.totalorder %s21, 1
    %p233 = por %p231, %p232
    %p234 = scmp.ne.s32.totalorder %s225, %s226
    %p235 = scmp.eq.s32.totalorder %s21, 0
    %p236 = por %p234, %p235
    %p237 = scmp.ne.s32.totalorder %s225, %s226
    %p238 = scmp.eq.s32.totalorder %s22, 1
    %p239 = por %p237, %p238
    %p241 = scmp.ne.s32.totalorder %s226, %s240
    %p242 = scmp.eq.s32.totalorder %s22, 0
    %p243 = por %p241, %p242
    %s244 = ssub.s32 %s16, %s23
    %p245 = scmp.eq.s32.totalorder %s244, 0
    %s247 = sadd.s32 %s246, 1
    %s248 = scalar_select %p245, %s246, %s247
    %p251 = pneg %p245
    %p252 = scmp.eq.s32.totalorder %s16, 1
    %p253 = por %p251, %p252
    %p254 = scmp.ne.s32.totalorder %s246, %s249
    %p255 = scmp.eq.s32.totalorder %s16, 0
    %p256 = por %p254, %p255
    %p257 = scmp.ne.s32.totalorder %s246, %s249
    %p258 = scmp.eq.s32.totalorder %s21, 1
    %p259 = por %p257, %p258
    %p260 = scmp.ne.s32.totalorder %s249, %s250
    %p261 = scmp.eq.s32.totalorder %s21, 0
    %p262 = por %p260, %p261
    %p263 = scmp.ne.s32.totalorder %s249, %s250
    %p264 = scmp.eq.s32.totalorder %s22, 1
    %p265 = por %p263, %p264
    %p267 = scmp.ne.s32.totalorder %s250, %s266
    %p268 = scmp.eq.s32.totalorder %s22, 0
    %p269 = por %p267, %p268
    %p270 = scmp.le.s32.totalorder 1, %s16
    %p271 = scmp.lt.s32.totalorder %s16, 3
    %p272 = pnand %p270, %p271
    %p273 = pneg %p272
    // Predicated region
    $region9: #{cross_modal_attention_block.1} parent=5 // pred_check
      _
    $region10: #{cross_modal_attention_block.1} parent=5 // pred_check_branch
      %275 = sbr.rel (%p272) target = $region12
    $region11: #{cross_modal_attention_block.1} parent=5 // pred_region
      %s276 = ssub.s32 %s16, 1
      // Predicated region
      $region13: #{cross_modal_attention_block.1} parent=11 // pred_check
        %p277 = pneg %p89
      $region14: #{cross_modal_attention_block.1} parent=11 // pred_check_branch
        %279 = sbr.rel (%p277) target = $region16
      $region15: #{cross_modal_attention_block.1} parent=11 // pred_region
        _
      $region16: #{cross_modal_attention_block.1} parent=11 // pred_fallthru
        _
      // Predicated region
      $region17: #{cross_modal_attention_block.1} parent=11 // pred_check
        %p280 = pneg %p110
      $region18: #{cross_modal_attention_block.1} parent=11 // pred_check_branch
        %282 = sbr.rel (%p280) target = $region20
      $region19: #{cross_modal_attention_block.1} parent=11 // pred_region
        _
      $region20: #{cross_modal_attention_block.1} parent=11 // pred_fallthru
        _
      // Predicated region
      $region21: #{cross_modal_attention_block.1} parent=11 // pred_check
        %p283 = pneg %p131
      $region22: #{cross_modal_attention_block.1} parent=11 // pred_check_branch
        %285 = sbr.rel (%p283) target = $region24
      $region23: #{cross_modal_attention_block.1} parent=11 // pred_region
        _
      $region24: #{cross_modal_attention_block.1} parent=11 // pred_fallthru
        _
      // Predicated region
      $region25: #{cross_modal_attention_block.1} parent=11 // pred_check
        %p286 = pneg %p152
      $region26: #{cross_modal_attention_block.1} parent=11 // pred_check_branch
        %288 = sbr.rel (%p286) target = $region28
      $region27: #{cross_modal_attention_block.1} parent=11 // pred_region
        _
      $region28: #{cross_modal_attention_block.1} parent=11 // pred_fallthru
        _
      // Predicated region
      $region29: #{cross_modal_attention_block.1} parent=11 // pred_check
        %p289 = pneg %p173
      $region30: #{cross_modal_attention_block.1} parent=11 // pred_check_branch
        %291 = sbr.rel (%p289) target = $region32
      $region31: #{cross_modal_attention_block.1} parent=11 // pred_region
        _
      $region32: #{cross_modal_attention_block.1} parent=11 // pred_fallthru
        _
      // Predicated region
      $region33: #{cross_modal_attention_block.1} parent=11 // pred_check
        %p292 = pneg %p194
      $region34: #{cross_modal_attention_block.1} parent=11 // pred_check_branch
        %294 = sbr.rel (%p292) target = $region36
      $region35: #{cross_modal_attention_block.1} parent=11 // pred_region
        _
      $region36: #{cross_modal_attention_block.1} parent=11 // pred_fallthru
        _
      // Predicated region
      $region37: #{cross_modal_attention_block.1} parent=11 // pred_check
        %p295 = pneg %p215
      $region38: #{cross_modal_attention_block.1} parent=11 // pred_check_branch
        %297 = sbr.rel (%p295) target = $region40
      $region39: #{cross_modal_attention_block.1} parent=11 // pred_region
        _
      $region40: #{cross_modal_attention_block.1} parent=11 // pred_fallthru
        _
      // Predicated region
      $region41: #{cross_modal_attention_block.1} parent=11 // pred_check
        %p298 = pneg %p236
      $region42: #{cross_modal_attention_block.1} parent=11 // pred_check_branch
        %300 = sbr.rel (%p298) target = $region44
      $region43: #{cross_modal_attention_block.1} parent=11 // pred_region
        _
      $region44: #{cross_modal_attention_block.1} parent=11 // pred_fallthru
        _
    $region12: #{cross_modal_attention_block.1} parent=5 // pred_fallthru
      _
    %p301 = scmp.lt.s32.totalorder %s16, 2
    // Predicated region
    $region45: #{cross_modal_attention_block.1} parent=5 // pred_check
      %p302 = pneg %p301
    $region46: #{cross_modal_attention_block.1} parent=5 // pred_check_branch
      %304 = sbr.rel (%p302) target = $region48
    $region47: #{cross_modal_attention_block.1} parent=5 // pred_region
      // Predicated region
      $region49: #{cross_modal_attention_block.1} parent=47 // pred_check
        %p305 = pneg %p36
      $region50: #{cross_modal_attention_block.1} parent=47 // pred_check_branch
        %307 = sbr.rel (%p305) target = $region52
      $region51: #{cross_modal_attention_block.1} parent=47 // pred_region
        %p308 = scmp.lt.s32.totalorder %s16, 1
        %s309 = scalar_select %p308, %s16, 1
        %s310 = smul.addr %s309, 4
        %s311 = smul.addr %s310, 8
        %s312 = scalar_lea.vmem %s0, %s311
      $region52: #{cross_modal_attention_block.1} parent=47 // pred_fallthru
        _
      // Predicated region
      $region53: #{cross_modal_attention_block.1} parent=47 // pred_check
        %p313 = pneg %p62
      $region54: #{cross_modal_attention_block.1} parent=47 // pred_check_branch
        %315 = sbr.rel (%p313) target = $region56
      $region55: #{cross_modal_attention_block.1} parent=47 // pred_region
        %p316 = scmp.lt.s32.totalorder %s16, 1
        %s317 = scalar_select %p316, %s16, 1
        %s318 = smul.addr %s317, 4
        %s319 = smul.addr %s318, 8
        %s320 = scalar_lea.vmem %s1, %s319
      $region56: #{cross_modal_attention_block.1} parent=47 // pred_fallthru
        _
    $region48: #{cross_modal_attention_block.1} parent=5 // pred_fallthru
      _
    %p321 = scmp.le.s32.totalorder 1, %s16
    %p322 = scmp.lt.s32.totalorder %s16, 3
    %p323 = pnand %p321, %p322
    %p324 = pneg %p323
    // Predicated region
    $region57: #{cross_modal_attention_block.1} parent=5 // pred_check
      _
    $region58: #{cross_modal_attention_block.1} parent=5 // pred_check_branch
      %326 = sbr.rel (%p323) target = $region60
    $region59: #{cross_modal_attention_block.1} parent=5 // pred_region
      %s327 = ssub.s32 %s16, 1
      %p328 = scmp.lt.s32.totalorder %s21, 1
      %s329 = scalar_select %p328, %s21, 1
      %s330 = smul.addr %s329, 4
      %s331 = smul.addr %s330, 8
      %s332 = scalar_lea.vmem %s0, %s331
      %p333 = pneg %p42
      %p334 = pneg %p39
      %p335 = scmp.lt.s32.totalorder %s21, 1
      %s336 = scalar_select %p335, %s21, 1
      %s337 = smul.addr %s336, 4
      %s338 = smul.addr %s337, 8
      %s339 = scalar_lea.vmem %s1, %s338
      %p340 = pneg %p68
      %p341 = pneg %p65
      %p342 = pneg %p89
      %p343 = pneg %p86
      %p344 = pneg %p110
      %p345 = pneg %p107
      %p346 = pneg %p131
      %p347 = pneg %p128
      %p348 = pneg %p152
      %p349 = pneg %p149
      %p350 = pneg %p173
      %p351 = pneg %p170
      %p352 = pneg %p194
      %p353 = pneg %p191
      %p354 = pneg %p215
      %p355 = pneg %p212
      %p356 = pneg %p236
      %p357 = pneg %p233
      %p358 = pneg %p262
      %p359 = pneg %p259
      %p360 = scmp.lt.s32.totalorder %s21, 1
      %s361 = scalar_select %p360, %s21, 1
      %s362 = smul.addr %s361, 4
      %s363 = smul.addr %s362, 8
      %s364 = scalar_lea.vmem %s10, %s363
      %p365 = scmp.lt.s32.totalorder %s21, 1
      %s366 = scalar_select %p365, %s21, 1
      %s367 = smul.addr %s366, 4
      %s368 = smul.addr %s367, 8
      %s369 = scalar_lea.vmem %s0, %s368
      %p370 = scmp.lt.s32.totalorder %s21, 1
      %s371 = scalar_select %p370, %s21, 1
      %s372 = smul.addr %s371, 4
      %s373 = smul.addr %s372, 8
      %s374 = scalar_lea.vmem %s1, %s373
      %p375 = scmp.lt.s32.totalorder %s21, 1
      %s376 = scalar_select %p375, %s21, 1
      %s377 = smul.addr %s376, 4
      %s378 = smul.addr %s377, 8
      %s379 = scalar_lea.vmem %s10, %s378
      %v380 = vld [vmem:[%s2] sm:$0xff]
      %v381 = vld [vmem:[%s2 + $0x8] sm:$0xff]
      %v382 = vld [vmem:[%s2 + $0x10] sm:$0xff]
      %v383 = vld [vmem:[%s2 + $0x18] sm:$0xff]
      %v384 = vld [vmem:[%s3] sm:$0xff]
      %v385 = vld [vmem:[%s3 + $0x8] sm:$0xff]
      %v386 = vld [vmem:[%s3 + $0x10] sm:$0xff]
      %v387 = vld [vmem:[%s3 + $0x18] sm:$0xff]
      %v388 = vadd.f32 %v380, %v381
      %389 = vadd.xlane.f32.xlu0 %v388
      %v390 = vpop.xlane.xlu0 %389
      %v391 = vadd.f32 %v382, %v383
      %392 = vadd.xlane.f32.xlu0 %v391
      %v393 = vpop.xlane.xlu0 %392
      %v394 = vrcp.pop 256.0
      %v395 = vmul.f32 %v390, %v394
      %v396 = vmul.f32 %v393, %v394
      %v397 = vadd.f32 %v384, %v385
      %398 = vadd.xlane.f32.xlu0 %v397
      %v399 = vpop.xlane.xlu0 %398
      %v400 = vadd.f32 %v386, %v387
      %401 = vadd.xlane.f32.xlu0 %v400
      %v402 = vpop.xlane.xlu0 %401
      %v403 = vmul.f32 %v399, %v394
      %v404 = vmul.f32 %v402, %v394
      %v405 = vadd.f32 %v395, %v403
      %v406 = vadd.f32 %v396, %v404
      %v407 = vmax.f32 %v380, %v381
      %408 = vmax.xlane.f32.xlu0 %v407
      %v409 = vpop.xlane.xlu0 %408
      %v410 = vmax.f32 %v382, %v383
      %411 = vmax.xlane.f32.xlu0 %v410
      %v412 = vpop.xlane.xlu0 %411
      %v413 = vmax.f32 %v384, %v385
      %414 = vmax.xlane.f32.xlu0 %v413
      %v415 = vpop.xlane.xlu0 %414
      %v416 = vmax.f32 %v386, %v387
      %417 = vmax.xlane.f32.xlu0 %v416
      %v418 = vpop.xlane.xlu0 %417
      %v419 = vadd.f32 %v380, %v384
      %v420 = vadd.f32 %v381, %v385
      %v421 = vadd.f32 %v382, %v386
      %v422 = vadd.f32 %v383, %v387
      %v423 = vmax.f32 %v419, %v420
      %424 = vmax.xlane.f32.xlu0 %v423
      %v425 = vpop.xlane.xlu0 %424
      %v426 = vmax.f32 %v421, %v422
      %427 = vmax.xlane.f32.xlu0 %v426
      %v428 = vpop.xlane.xlu0 %427
      %435 = vrot.lane.b32.xlu0 %v409, 1
      %v436 = vpop.permute.xlu0 %435
      %437 = vrot.lane.b32.xlu0 %v412, 1
      %v438 = vpop.permute.xlu0 %437
      %439 = vrot.lane.b32.xlu0 %v415, 1
      %v440 = vpop.permute.xlu0 %439
      %441 = vrot.lane.b32.xlu0 %v418, 1
      %v442 = vpop.permute.xlu0 %441
      %443 = vrot.lane.b32.xlu0 %v425, 1
      %v444 = vpop.permute.xlu0 %443
      %445 = vrot.lane.b32.xlu0 %v428, 1
      %v446 = vpop.permute.xlu0 %445
      %vm453 = vcmask 7168
      %v454 = vsel %vm453, %v395, %v436
      %v455 = vsel %vm453, %v396, %v438
      %v456 = vsel %vm453, %v403, %v440
      %v457 = vsel %vm453, %v404, %v442
      %v458 = vsel %vm453, %v405, %v444
      %v459 = vsel %vm453, %v406, %v446
      %v460 = vld [vmem:[%s4] sm:$0x7]
      %vm461 = vcmask 392192
      %v463 = vsel %vm461, %v460, 0
      %465 = vmatprep.subr.mxu0 0.0
      %466 = vmatpush1.msra.mxu0 %v454
      %467 = vmatprep.subr.mxu0 0.0
      %468 = vmatpush1.msra.mxu0 %v455
      %469 = vmatprep.subr.mxu0 0.0
      %470 = vmatpush1.msra.mxu0 %v456
      %471 = vmatprep.subr.mxu0 0.0
      %472 = vmatpush1.msra.mxu0 %v457
      %473 = vmatprep.subr.mxu0 0.0
      %474 = vmatpush1.msra.mxu0 %v458
      %475 = vmatprep.subr.mxu0 0.0
      %476 = vmatpush1.msra.mxu0 %v459
      %477 = vmatprep.subr.mxu0 0.0
      %478 = vmatpush1.msra.mxu0 0.0
      %479 = vmatprep.subr.mxu0 0.0
      %480 = vmatpush1.msra.mxu0 0.0
      %481 = vmatprep.subr.mxu0 0.0
      %482 = vmatpush1.msra.mxu0 0.0
      %483 = vmatprep.subr.mxu0 0.0
      %484 = vmatpush1.msra.mxu0 0.0
      %485 = vmatprep.subr.mxu0 0.0
      %486 = vmatpush1.msra.mxu0 0.0
      %487 = vmatprep.subr.mxu0 0.0
      %488 = vmatpush1.msra.mxu0 0.0
      %489 = vmatprep.subr.mxu0 0.0
      %490 = vmatpush1.msra.mxu0 0.0
      %491 = vmatprep.subr.mxu0 0.0
      %492 = vmatpush1.msra.mxu0 0.0
      %493 = vmatprep.subr.mxu0 0.0
      %494 = vmatpush1.msra.mxu0 0.0
      %495 = vmatprep.subr.mxu0 0.0
      %496 = vmatpush1.msra.mxu0 0.0
      %497 = vmatprep.subr.mxu0 0.0
      %498 = vmatpush1.msra.mxu0 0.0
      %499 = vmatprep.subr.mxu0 0.0
      %500 = vmatpush1.msra.mxu0 0.0
      %501 = vmatprep.subr.mxu0 0.0
      %502 = vmatpush1.msra.mxu0 0.0
      %503 = vmatprep.subr.mxu0 0.0
      %504 = vmatpush1.msra.mxu0 0.0
      %505 = vmatprep.subr.mxu0 0.0
      %506 = vmatpush1.msra.mxu0 0.0
      %507 = vmatprep.subr.mxu0 0.0
      %508 = vmatpush1.msra.mxu0 0.0
      %509 = vmatprep.subr.mxu0 0.0
      %510 = vmatpush1.msra.mxu0 0.0
      %511 = vmatprep.subr.mxu0 0.0
      %512 = vmatpush1.msra.mxu0 0.0
      %513 = vmatprep.subr.mxu0 0.0
      %514 = vmatpush1.msra.mxu0 0.0
      %515 = vmatprep.subr.mxu0 0.0
      %516 = vmatpush1.msra.mxu0 0.0
      %517 = vmatprep.subr.mxu0 0.0
      %518 = vmatpush1.msra.mxu0 0.0
      %519 = vmatprep.subr.mxu0 0.0
      %520 = vmatpush1.msra.mxu0 0.0
      %521 = vmatprep.subr.mxu0 0.0
      %522 = vmatpush1.msra.mxu0 0.0
      %523 = vmatprep.subr.mxu0 0.0
      %524 = vmatpush1.msra.mxu0 0.0
      %525 = vmatprep.subr.mxu0 0.0
      %526 = vmatpush1.msra.mxu0 0.0
      %527 = vmatprep.subr.mxu0 0.0
      %528 = vmatpush1.msra.mxu0 0.0
      %529 = vmatprep.mubr.f32.mxu0 0.0
      %530 = vmatmul.mubr.f32.gmra.mrb[0].mxu0 %v463
      %v531 = vpop.f32.mrb[0].mxu0
      %v532 = vadd.f32 0.0, %v531
      %v533 = vpop.f32.mrb[0].mxu0
      %534 = vdwg.mxu0
      %v535 = vmax.f32 %v532, 0.0
      %v536 = vld [vmem:[%s5] sm:$0xff]
      %538 = vrot.lane.b32.xlu0 %v535, 127
      %v539 = vpop.permute.xlu0 %538
      %v541 = vadd.f32 %v535, %v539
      %vm542 = vcmask 23552
      %v544 = vsel %vm542, %v536, 0
      %vm546 = vcmask 1042432
      %v548 = vsel %vm546, %v541, 0
      %550 = vmatprep.subr.mxu0 0.0
      %551 = vmatpush1.msra.mxu0 %v548
      %552 = vmatprep.subr.mxu0 0.0
      %553 = vmatpush1.msra.mxu0 0.0
      %554 = vmatprep.subr.mxu0 0.0
      %555 = vmatpush1.msra.mxu0 0.0
      %556 = vmatprep.subr.mxu0 0.0
      %557 = vmatpush1.msra.mxu0 0.0
      %558 = vmatprep.subr.mxu0 0.0
      %559 = vmatpush1.msra.mxu0 0.0
      %560 = vmatprep.subr.mxu0 0.0
      %561 = vmatpush1.msra.mxu0 0.0
      %562 = vmatprep.subr.mxu0 0.0
      %563 = vmatpush1.msra.mxu0 0.0
      %564 = vmatprep.subr.mxu0 0.0
      %565 = vmatpush1.msra.mxu0 0.0
      %566 = vmatprep.subr.mxu0 0.0
      %567 = vmatpush1.msra.mxu0 0.0
      %568 = vmatprep.subr.mxu0 0.0
      %569 = vmatpush1.msra.mxu0 0.0
      %570 = vmatprep.subr.mxu0 0.0
      %571 = vmatpush1.msra.mxu0 0.0
      %572 = vmatprep.subr.mxu0 0.0
      %573 = vmatpush1.msra.mxu0 0.0
      %574 = vmatprep.subr.mxu0 0.0
      %575 = vmatpush1.msra.mxu0 0.0
      %576 = vmatprep.subr.mxu0 0.0
      %577 = vmatpush1.msra.mxu0 0.0
      %578 = vmatprep.subr.mxu0 0.0
      %579 = vmatpush1.msra.mxu0 0.0
      %580 = vmatprep.subr.mxu0 0.0
      %581 = vmatpush1.msra.mxu0 0.0
      %582 = vmatprep.subr.mxu0 0.0
      %583 = vmatpush1.msra.mxu0 0.0
      %584 = vmatprep.subr.mxu0 0.0
      %585 = vmatpush1.msra.mxu0 0.0
      %586 = vmatprep.subr.mxu0 0.0
      %587 = vmatpush1.msra.mxu0 0.0
      %588 = vmatprep.subr.mxu0 0.0
      %589 = vmatpush1.msra.mxu0 0.0
      %590 = vmatprep.subr.mxu0 0.0
      %591 = vmatpush1.msra.mxu0 0.0
      %592 = vmatprep.subr.mxu0 0.0
      %593 = vmatpush1.msra.mxu0 0.0
      %594 = vmatprep.subr.mxu0 0.0
      %595 = vmatpush1.msra.mxu0 0.0
      %596 = vmatprep.subr.mxu0 0.0
      %597 = vmatpush1.msra.mxu0 0.0
      %598 = vmatprep.subr.mxu0 0.0
      %599 = vmatpush1.msra.mxu0 0.0
      %600 = vmatprep.subr.mxu0 0.0
      %601 = vmatpush1.msra.mxu0 0.0
      %602 = vmatprep.subr.mxu0 0.0
      %603 = vmatpush1.msra.mxu0 0.0
      %604 = vmatprep.subr.mxu0 0.0
      %605 = vmatpush1.msra.mxu0 0.0
      %606 = vmatprep.subr.mxu0 0.0
      %607 = vmatpush1.msra.mxu0 0.0
      %608 = vmatprep.subr.mxu0 0.0
      %609 = vmatpush1.msra.mxu0 0.0
      %610 = vmatprep.subr.mxu0 0.0
      %611 = vmatpush1.msra.mxu0 0.0
      %612 = vmatprep.subr.mxu0 0.0
      %613 = vmatpush1.msra.mxu0 0.0
      %614 = vmatprep.mubr.f32.mxu0 0.0
      %615 = vmatmul.mubr.f32.gmra.mrb[0].mxu0 %v544
      %v616 = vpop.f32.mrb[0].mxu0
      %v617 = vadd.f32 0.0, %v616
      %v618 = vpop.f32.mrb[0].mxu0
      %619 = vdwg.mxu0
      %v620 = vsub.f32 0.0, %v617
      %v621 = vmul.f32 %v620, 1.442695
      %v622 = vpow.pop %v621
      %v623 = vadd.f32 %v622, 1.0
      %v624 = vrcp.pop %v623
      %v625 = vmul.f32 1.0, %v624
      %v626 = vld [vmem:[%s6] sm:$0xff]
      %v627 = vld [vmem:[%s6 + $0x8] sm:$0xff]
      %v628 = vld [vmem:[%s6 + $0x10] sm:$0xff]
      %v629 = vld [vmem:[%s6 + $0x18] sm:$0xff]
      %v630 = vld [vmem:[%s6 + $0x20] sm:$0xff]
      %v631 = vld [vmem:[%s6 + $0x28] sm:$0xff]
      %s633 = vtos %v625
      %v634 = vstv %s633
      %v636 = vmul.f32 %v634, %v626
      %v637 = vmul.f32 %v634, %v627
      %v638 = vmul.f32 %v634, %v628
      %v639 = vmul.f32 %v634, %v629
      %v640 = vmul.f32 %v634, %v630
      %v641 = vmul.f32 %v634, %v631
      %s642 = scalar_lea.vmem %s6, 48
      %v643 = vld [vmem:[%s642] sm:$0xff]
      %v644 = vld [vmem:[%s642 + $0x8] sm:$0xff]
      %v645 = vld [vmem:[%s642 + $0x10] sm:$0xff]
      %v646 = vld [vmem:[%s642 + $0x18] sm:$0xff]
      %v647 = vld [vmem:[%s642 + $0x20] sm:$0xff]
      %v648 = vld [vmem:[%s642 + $0x28] sm:$0xff]
      %v649 = vrot.slane %v625, 1
      %s650 = vtos %v649
      %v651 = vstv %s650
      %v653 = vmul.f32 %v651, %v643
      %v654 = vmul.f32 %v651, %v644
      %v655 = vmul.f32 %v651, %v645
      %v656 = vmul.f32 %v651, %v646
      %v657 = vmul.f32 %v651, %v647
      %v658 = vmul.f32 %v651, %v648
      %v659 = vadd.f32 %v636, %v653
      %v660 = vadd.f32 %v637, %v654
      %v661 = vadd.f32 %v638, %v655
      %v662 = vadd.f32 %v639, %v656
      %v663 = vadd.f32 %v640, %v657
      %v664 = vadd.f32 %v641, %v658
      %s665 = scalar_lea.vmem %s6, 96
      %v666 = vld [vmem:[%s665] sm:$0xff]
      %v667 = vld [vmem:[%s665 + $0x8] sm:$0xff]
      %v668 = vld [vmem:[%s665 + $0x10] sm:$0xff]
      %v669 = vld [vmem:[%s665 + $0x18] sm:$0xff]
      %v670 = vld [vmem:[%s665 + $0x20] sm:$0xff]
      %v671 = vld [vmem:[%s665 + $0x28] sm:$0xff]
      %v672 = vrot.slane %v625, 2
      %s673 = vtos %v672
      %v674 = vstv %s673
      %v676 = vmul.f32 %v674, %v666
      %v677 = vmul.f32 %v674, %v667
      %v678 = vmul.f32 %v674, %v668
      %v679 = vmul.f32 %v674, %v669
      %v680 = vmul.f32 %v674, %v670
      %v681 = vmul.f32 %v674, %v671
      %v682 = vadd.f32 %v659, %v676
      %v683 = vadd.f32 %v660, %v677
      %v684 = vadd.f32 %v661, %v678
      %v685 = vadd.f32 %v662, %v679
      %v686 = vadd.f32 %v663, %v680
      %v687 = vadd.f32 %v664, %v681
      %s688 = scalar_lea.vmem %s6, 144
      %v689 = vld [vmem:[%s688] sm:$0xff]
      %v690 = vld [vmem:[%s688 + $0x8] sm:$0xff]
      %v691 = vld [vmem:[%s688 + $0x10] sm:$0xff]
      %v692 = vld [vmem:[%s688 + $0x18] sm:$0xff]
      %v693 = vld [vmem:[%s688 + $0x20] sm:$0xff]
      %v694 = vld [vmem:[%s688 + $0x28] sm:$0xff]
      %v695 = vrot.slane %v625, 3
      %s696 = vtos %v695
      %v697 = vstv %s696
      %v699 = vmul.f32 %v697, %v689
      %v700 = vmul.f32 %v697, %v690
      %v701 = vmul.f32 %v697, %v691
      %v702 = vmul.f32 %v697, %v692
      %v703 = vmul.f32 %v697, %v693
      %v704 = vmul.f32 %v697, %v694
      %v705 = vadd.f32 %v682, %v699
      %v706 = vadd.f32 %v683, %v700
      %v707 = vadd.f32 %v684, %v701
      %v708 = vadd.f32 %v685, %v702
      %v709 = vadd.f32 %v686, %v703
      %v710 = vadd.f32 %v687, %v704
      %s711 = scalar_lea.vmem %s6, 192
      %v712 = vld [vmem:[%s711] sm:$0xff]
      %v713 = vld [vmem:[%s711 + $0x8] sm:$0xff]
      %v714 = vld [vmem:[%s711 + $0x10] sm:$0xff]
      %v715 = vld [vmem:[%s711 + $0x18] sm:$0xff]
      %v716 = vld [vmem:[%s711 + $0x20] sm:$0xff]
      %v717 = vld [vmem:[%s711 + $0x28] sm:$0xff]
      %v718 = vrot.slane %v625, 4
      %s719 = vtos %v718
      %v720 = vstv %s719
      %v722 = vmul.f32 %v720, %v712
      %v723 = vmul.f32 %v720, %v713
      %v724 = vmul.f32 %v720, %v714
      %v725 = vmul.f32 %v720, %v715
      %v726 = vmul.f32 %v720, %v716
      %v727 = vmul.f32 %v720, %v717
      %v728 = vadd.f32 %v705, %v722
      %v729 = vadd.f32 %v706, %v723
      %v730 = vadd.f32 %v707, %v724
      %v731 = vadd.f32 %v708, %v725
      %v732 = vadd.f32 %v709, %v726
      %v733 = vadd.f32 %v710, %v727
      %s734 = scalar_lea.vmem %s6, 240
      %v735 = vld [vmem:[%s734] sm:$0xff]
      %v736 = vld [vmem:[%s734 + $0x8] sm:$0xff]
      %v737 = vld [vmem:[%s734 + $0x10] sm:$0xff]
      %v738 = vld [vmem:[%s734 + $0x18] sm:$0xff]
      %v739 = vld [vmem:[%s734 + $0x20] sm:$0xff]
      %v740 = vld [vmem:[%s734 + $0x28] sm:$0xff]
      %v741 = vrot.slane %v625, 5
      %s742 = vtos %v741
      %v743 = vstv %s742
      %v745 = vmul.f32 %v743, %v735
      %v746 = vmul.f32 %v743, %v736
      %v747 = vmul.f32 %v743, %v737
      %v748 = vmul.f32 %v743, %v738
      %v749 = vmul.f32 %v743, %v739
      %v750 = vmul.f32 %v743, %v740
      %v751 = vadd.f32 %v728, %v745
      %v752 = vadd.f32 %v729, %v746
      %v753 = vadd.f32 %v730, %v747
      %v754 = vadd.f32 %v731, %v748
      %v755 = vadd.f32 %v732, %v749
      %v756 = vadd.f32 %v733, %v750
      %s757 = scalar_lea.vmem %s6, 288
      %v758 = vld [vmem:[%s757] sm:$0xff]
      %v759 = vld [vmem:[%s757 + $0x8] sm:$0xff]
      %v760 = vld [vmem:[%s757 + $0x10] sm:$0xff]
      %v761 = vld [vmem:[%s757 + $0x18] sm:$0xff]
      %v762 = vld [vmem:[%s757 + $0x20] sm:$0xff]
      %v763 = vld [vmem:[%s757 + $0x28] sm:$0xff]
      %v764 = vrot.slane %v625, 6
      %s765 = vtos %v764
      %v766 = vstv %s765
      %v768 = vmul.f32 %v766, %v758
      %v769 = vmul.f32 %v766, %v759
      %v770 = vmul.f32 %v766, %v760
      %v771 = vmul.f32 %v766, %v761
      %v772 = vmul.f32 %v766, %v762
      %v773 = vmul.f32 %v766, %v763
      %v774 = vadd.f32 %v751, %v768
      %v775 = vadd.f32 %v752, %v769
      %v776 = vadd.f32 %v753, %v770
      %v777 = vadd.f32 %v754, %v771
      %v778 = vadd.f32 %v755, %v772
      %v779 = vadd.f32 %v756, %v773
      %s780 = scalar_lea.vmem %s6, 336
      %v781 = vld [vmem:[%s780] sm:$0xff]
      %v782 = vld [vmem:[%s780 + $0x8] sm:$0xff]
      %v783 = vld [vmem:[%s780 + $0x10] sm:$0xff]
      %v784 = vld [vmem:[%s780 + $0x18] sm:$0xff]
      %v785 = vld [vmem:[%s780 + $0x20] sm:$0xff]
      %v786 = vld [vmem:[%s780 + $0x28] sm:$0xff]
      %v787 = vrot.slane %v625, 7
      %s788 = vtos %v787
      %v789 = vstv %s788
      %v791 = vmul.f32 %v789, %v781
      %v792 = vmul.f32 %v789, %v782
      %v793 = vmul.f32 %v789, %v783
      %v794 = vmul.f32 %v789, %v784
      %v795 = vmul.f32 %v789, %v785
      %v796 = vmul.f32 %v789, %v786
      %v797 = vadd.f32 %v774, %v791
      %v798 = vadd.f32 %v775, %v792
      %v799 = vadd.f32 %v776, %v793
      %v800 = vadd.f32 %v777, %v794
      %v801 = vadd.f32 %v778, %v795
      %v802 = vadd.f32 %v779, %v796
      %v803 = vld [vmem:[%s369] sm:$0xff]
      %v804 = vld [vmem:[%s369 + $0x8] sm:$0xff]
      %v805 = vld [vmem:[%s369 + $0x10] sm:$0xff]
      %v806 = vld [vmem:[%s369 + $0x18] sm:$0xff]
      %v807 = vld [vmem:[%s374] sm:$0xff]
      %v808 = vld [vmem:[%s374 + $0x8] sm:$0xff]
      %v809 = vld [vmem:[%s374 + $0x10] sm:$0xff]
      %v810 = vld [vmem:[%s374 + $0x18] sm:$0xff]
      %v811 = vadd.f32 %v803, %v807
      %v812 = vadd.f32 %v804, %v808
      %v813 = vadd.f32 %v805, %v809
      %v814 = vadd.f32 %v806, %v810
      %816 = vset.pattern.permute.xlu0 24
      %817 = vperm.xlu0 %816, %v797
      %v818 = vpop.permute.xlu0 %817
      %821 = vset.pattern.permute.xlu0 24
      %822 = vperm.xlu0 %821, %v798
      %v823 = vpop.permute.xlu0 %822
      %826 = vset.pattern.permute.xlu0 24
      %827 = vperm.xlu0 %826, %v799
      %v828 = vpop.permute.xlu0 %827
      %831 = vset.pattern.permute.xlu0 24
      %832 = vperm.xlu0 %831, %v800
      %v833 = vpop.permute.xlu0 %832
      %836 = vset.pattern.permute.xlu0 24
      %837 = vperm.xlu0 %836, %v801
      %v838 = vpop.permute.xlu0 %837
      %841 = vset.pattern.permute.xlu0 24
      %842 = vperm.xlu0 %841, %v802
      %v843 = vpop.permute.xlu0 %842
      %v845 = vmul.f32 %v818, %v803
      %v846 = vmul.f32 %v818, %v804
      %v847 = vmul.f32 %v823, %v805
      %v848 = vmul.f32 %v823, %v806
      %v849 = vmul.f32 %v828, %v807
      %v850 = vmul.f32 %v828, %v808
      %v851 = vmul.f32 %v833, %v809
      %v852 = vmul.f32 %v833, %v810
      %v853 = vmul.f32 %v838, %v811
      %v854 = vmul.f32 %v838, %v812
      %v855 = vmul.f32 %v843, %v813
      %v856 = vmul.f32 %v843, %v814
      %857 = vrot.lane.b32.xlu0 %v803, 51
      %v858 = vpop.permute.xlu0 %857
      %859 = vrot.lane.b32.xlu0 %v805, 51
      %v860 = vpop.permute.xlu0 %859
      %861 = vrot.lane.b32.xlu0 %v807, 51
      %v862 = vpop.permute.xlu0 %861
      %863 = vrot.lane.b32.xlu0 %v809, 51
      %v864 = vpop.permute.xlu0 %863
      %865 = vrot.lane.b32.xlu0 %v811, 51
      %v866 = vpop.permute.xlu0 %865
      %867 = vrot.lane.b32.xlu0 %v813, 51
      %v868 = vpop.permute.xlu0 %867
      %869 = vrot.lane.b32.xlu0 %v804, 51
      %v870 = vpop.permute.xlu0 %869
      %871 = vrot.lane.b32.xlu0 %v806, 51
      %v872 = vpop.permute.xlu0 %871
      %873 = vrot.lane.b32.xlu0 %v808, 51
      %v874 = vpop.permute.xlu0 %873
      %875 = vrot.lane.b32.xlu0 %v810, 51
      %v876 = vpop.permute.xlu0 %875
      %877 = vrot.lane.b32.xlu0 %v812, 51
      %v878 = vpop.permute.xlu0 %877
      %879 = vrot.lane.b32.xlu0 %v814, 51
      %v880 = vpop.permute.xlu0 %879
      %v881 = vlaneseq
      %v882 = vand.u32 %v881, 127
      %vm883 = vcmp.lt.s32.totalorder %v882, 51
      %v884 = vsel %vm883, %v858, %v870
      %v885 = vsel %vm883, %v860, %v872
      %v886 = vsel %vm883, %v862, %v874
      %v887 = vsel %vm883, %v864, %v876
      %v888 = vsel %vm883, %v866, %v878
      %v889 = vsel %vm883, %v868, %v880
      %v890 = vsel %vm883, %v870, %v858
      %v891 = vsel %vm883, %v872, %v860
      %v892 = vsel %vm883, %v874, %v862
      %v893 = vsel %vm883, %v876, %v864
      %v894 = vsel %vm883, %v878, %v866
      %v895 = vsel %vm883, %v880, %v868
      %v896 = vld [vmem:[%s7] ss:$8 sm:$0x3]
      %897 = vset.pattern.permute.xlu0 0
      %898 = vperm.xlu0 %897, %v797
      %v899 = vpop.permute.xlu0 %898
      %901 = vset.pattern.permute.xlu0 0
      %902 = vperm.xlu0 %901, %v798
      %v903 = vpop.permute.xlu0 %902
      %905 = vset.pattern.permute.xlu0 0
      %906 = vperm.xlu0 %905, %v799
      %v907 = vpop.permute.xlu0 %906
      %909 = vset.pattern.permute.xlu0 0
      %910 = vperm.xlu0 %909, %v800
      %v911 = vpop.permute.xlu0 %910
      %913 = vset.pattern.permute.xlu0 0
      %914 = vperm.xlu0 %913, %v801
      %v915 = vpop.permute.xlu0 %914
      %917 = vset.pattern.permute.xlu0 0
      %918 = vperm.xlu0 %917, %v802
      %v919 = vpop.permute.xlu0 %918
      %v922 = vlaneseq
      %v923 = vshrl.u32 %v922, 7
      %v924 = vsub.s32 0, %v923
      %v925 = vrot.slane %v896, %v924
      %v926 = vlaneseq
      %v927 = vshrl.u32 %v926, 7
      %v928 = vsub.s32 1, %v927
      %v929 = vrot.slane %v896, %v928
      %v932 = vmul.f32 %v899, %v925
      %v933 = vmul.f32 %v899, %v929
      %v934 = vmul.f32 %v903, %v925
      %v935 = vmul.f32 %v903, %v929
      %v936 = vmul.f32 %v907, %v925
      %v937 = vmul.f32 %v907, %v929
      %v938 = vmul.f32 %v911, %v925
      %v939 = vmul.f32 %v911, %v929
      %v940 = vmul.f32 %v915, %v925
      %v941 = vmul.f32 %v915, %v929
      %v942 = vmul.f32 %v919, %v925
      %v943 = vmul.f32 %v919, %v929
      %v944 = vmul.f32 %v932, %v890
      %v945 = vmul.f32 %v933, %v884
      %v946 = vmul.f32 %v934, %v891
      %v947 = vmul.f32 %v935, %v885
      %v948 = vmul.f32 %v936, %v892
      %v949 = vmul.f32 %v937, %v886
      %v950 = vmul.f32 %v938, %v893
      %v951 = vmul.f32 %v939, %v887
      %v952 = vmul.f32 %v940, %v894
      %v953 = vmul.f32 %v941, %v888
      %v954 = vmul.f32 %v942, %v895
      %v955 = vmul.f32 %v943, %v889
      %v956 = vadd.f32 %v845, %v944
      %v957 = vadd.f32 %v846, %v945
      %v958 = vadd.f32 %v847, %v946
      %v959 = vadd.f32 %v848, %v947
      %v960 = vadd.f32 %v849, %v948
      %v961 = vadd.f32 %v850, %v949
      %v962 = vadd.f32 %v851, %v950
      %v963 = vadd.f32 %v852, %v951
      %v964 = vadd.f32 %v853, %v952
      %v965 = vadd.f32 %v854, %v953
      %v966 = vadd.f32 %v855, %v954
      %v967 = vadd.f32 %v856, %v955
      %968 = vrot.lane.b32.xlu0 %v803, 50
      %v969 = vpop.permute.xlu0 %968
      %970 = vrot.lane.b32.xlu0 %v805, 50
      %v971 = vpop.permute.xlu0 %970
      %972 = vrot.lane.b32.xlu0 %v807, 50
      %v973 = vpop.permute.xlu0 %972
      %974 = vrot.lane.b32.xlu0 %v809, 50
      %v975 = vpop.permute.xlu0 %974
      %976 = vrot.lane.b32.xlu0 %v811, 50
      %v977 = vpop.permute.xlu0 %976
      %978 = vrot.lane.b32.xlu0 %v813, 50
      %v979 = vpop.permute.xlu0 %978
      %980 = vrot.lane.b32.xlu0 %v804, 50
      %v981 = vpop.permute.xlu0 %980
      %982 = vrot.lane.b32.xlu0 %v806, 50
      %v983 = vpop.permute.xlu0 %982
      %984 = vrot.lane.b32.xlu0 %v808, 50
      %v985 = vpop.permute.xlu0 %984
      %986 = vrot.lane.b32.xlu0 %v810, 50
      %v987 = vpop.permute.xlu0 %986
      %988 = vrot.lane.b32.xlu0 %v812, 50
      %v989 = vpop.permute.xlu0 %988
      %990 = vrot.lane.b32.xlu0 %v814, 50
      %v991 = vpop.permute.xlu0 %990
      %vm992 = vcmp.lt.s32.totalorder %v882, 50
      %v993 = vsel %vm992, %v969, %v981
      %v994 = vsel %vm992, %v971, %v983
      %v995 = vsel %vm992, %v973, %v985
      %v996 = vsel %vm992, %v975, %v987
      %v997 = vsel %vm992, %v977, %v989
      %v998 = vsel %vm992, %v979, %v991
      %v999 = vsel %vm992, %v981, %v969
      %v1000 = vsel %vm992, %v983, %v971
      %v1001 = vsel %vm992, %v985, %v973
      %v1002 = vsel %vm992, %v987, %v975
      %v1003 = vsel %vm992, %v989, %v977
      %v1004 = vsel %vm992, %v991, %v979
      %s1005 = scalar_lea.vmem %s7, 1
      %v1006 = vld [vmem:[%s1005] ss:$8 sm:$0x3]
      %1007 = vset.pattern.permute.xlu0 1
      %1008 = vperm.xlu0 %1007, %v797
      %v1009 = vpop.permute.xlu0 %1008
      %1011 = vset.pattern.permute.xlu0 1
      %1012 = vperm.xlu0 %1011, %v798
      %v1013 = vpop.permute.xlu0 %1012
      %1015 = vset.pattern.permute.xlu0 1
      %1016 = vperm.xlu0 %1015, %v799
      %v1017 = vpop.permute.xlu0 %1016
      %1019 = vset.pattern.permute.xlu0 1
      %1020 = vperm.xlu0 %1019, %v800
      %v1021 = vpop.permute.xlu0 %1020
      %1023 = vset.pattern.permute.xlu0 1
      %1024 = vperm.xlu0 %1023, %v801
      %v1025 = vpop.permute.xlu0 %1024
      %1027 = vset.pattern.permute.xlu0 1
      %1028 = vperm.xlu0 %1027, %v802
      %v1029 = vpop.permute.xlu0 %1028
      %v1032 = vlaneseq
      %v1033 = vshrl.u32 %v1032, 7
      %v1034 = vsub.s32 0, %v1033
      %v1035 = vrot.slane %v1006, %v1034
      %v1036 = vlaneseq
      %v1037 = vshrl.u32 %v1036, 7
      %v1038 = vsub.s32 1, %v1037
      %v1039 = vrot.slane %v1006, %v1038
      %v1042 = vmul.f32 %v1009, %v1035
      %v1043 = vmul.f32 %v1009, %v1039
      %v1044 = vmul.f32 %v1013, %v1035
      %v1045 = vmul.f32 %v1013, %v1039
      %v1046 = vmul.f32 %v1017, %v1035
      %v1047 = vmul.f32 %v1017, %v1039
      %v1048 = vmul.f32 %v1021, %v1035
      %v1049 = vmul.f32 %v1021, %v1039
      %v1050 = vmul.f32 %v1025, %v1035
      %v1051 = vmul.f32 %v1025, %v1039
      %v1052 = vmul.f32 %v1029, %v1035
      %v1053 = vmul.f32 %v1029, %v1039
      %v1054 = vmul.f32 %v1042, %v999
      %v1055 = vmul.f32 %v1043, %v993
      %v1056 = vmul.f32 %v1044, %v1000
      %v1057 = vmul.f32 %v1045, %v994
      %v1058 = vmul.f32 %v1046, %v1001
      %v1059 = vmul.f32 %v1047, %v995
      %v1060 = vmul.f32 %v1048, %v1002
      %v1061 = vmul.f32 %v1049, %v996
      %v1062 = vmul.f32 %v1050, %v1003
      %v1063 = vmul.f32 %v1051, %v997
      %v1064 = vmul.f32 %v1052, %v1004
      %v1065 = vmul.f32 %v1053, %v998
      %v1066 = vadd.f32 %v956, %v1054
      %v1067 = vadd.f32 %v957, %v1055
      %v1068 = vadd.f32 %v958, %v1056
      %v1069 = vadd.f32 %v959, %v1057
      %v1070 = vadd.f32 %v960, %v1058
      %v1071 = vadd.f32 %v961, %v1059
      %v1072 = vadd.f32 %v962, %v1060
      %v1073 = vadd.f32 %v963, %v1061
      %v1074 = vadd.f32 %v964, %v1062
      %v1075 = vadd.f32 %v965, %v1063
      %v1076 = vadd.f32 %v966, %v1064
      %v1077 = vadd.f32 %v967, %v1065
      %1078 = vrot.lane.b32.xlu0 %v803, 49
      %v1079 = vpop.permute.xlu0 %1078
      %1080 = vrot.lane.b32.xlu0 %v805, 49
      %v1081 = vpop.permute.xlu0 %1080
      %1082 = vrot.lane.b32.xlu0 %v807, 49
      %v1083 = vpop.permute.xlu0 %1082
      %1084 = vrot.lane.b32.xlu0 %v809, 49
      %v1085 = vpop.permute.xlu0 %1084
      %1086 = vrot.lane.b32.xlu0 %v811, 49
      %v1087 = vpop.permute.xlu0 %1086
      %1088 = vrot.lane.b32.xlu0 %v813, 49
      %v1089 = vpop.permute.xlu0 %1088
      %1090 = vrot.lane.b32.xlu0 %v804, 49
      %v1091 = vpop.permute.xlu0 %1090
      %1092 = vrot.lane.b32.xlu0 %v806, 49
      %v1093 = vpop.permute.xlu0 %1092
      %1094 = vrot.lane.b32.xlu0 %v808, 49
      %v1095 = vpop.permute.xlu0 %1094
      %1096 = vrot.lane.b32.xlu0 %v810, 49
      %v1097 = vpop.permute.xlu0 %1096
      %1098 = vrot.lane.b32.xlu0 %v812, 49
      %v1099 = vpop.permute.xlu0 %1098
      %1100 = vrot.lane.b32.xlu0 %v814, 49
      %v1101 = vpop.permute.xlu0 %1100
      %vm1102 = vcmp.lt.s32.totalorder %v882, 49
      %v1103 = vsel %vm1102, %v1079, %v1091
      %v1104 = vsel %vm1102, %v1081, %v1093
      %v1105 = vsel %vm1102, %v1083, %v1095
      %v1106 = vsel %vm1102, %v1085, %v1097
      %v1107 = vsel %vm1102, %v1087, %v1099
      %v1108 = vsel %vm1102, %v1089, %v1101
      %v1109 = vsel %vm1102, %v1091, %v1079
      %v1110 = vsel %vm1102, %v1093, %v1081
      %v1111 = vsel %vm1102, %v1095, %v1083
      %v1112 = vsel %vm1102, %v1097, %v1085
      %v1113 = vsel %vm1102, %v1099, %v1087
      %v1114 = vsel %vm1102, %v1101, %v1089
      %s1115 = scalar_lea.vmem %s7, 2
      %v1116 = vld [vmem:[%s1115] ss:$8 sm:$0x3]
      %1117 = vset.pattern.permute.xlu0 2
      %1118 = vperm.xlu0 %1117, %v797
      %v1119 = vpop.permute.xlu0 %1118
      %1121 = vset.pattern.permute.xlu0 2
      %1122 = vperm.xlu0 %1121, %v798
      %v1123 = vpop.permute.xlu0 %1122
      %1125 = vset.pattern.permute.xlu0 2
      %1126 = vperm.xlu0 %1125, %v799
      %v1127 = vpop.permute.xlu0 %1126
      %1129 = vset.pattern.permute.xlu0 2
      %1130 = vperm.xlu0 %1129, %v800
      %v1131 = vpop.permute.xlu0 %1130
      %1133 = vset.pattern.permute.xlu0 2
      %1134 = vperm.xlu0 %1133, %v801
      %v1135 = vpop.permute.xlu0 %1134
      %1137 = vset.pattern.permute.xlu0 2
      %1138 = vperm.xlu0 %1137, %v802
      %v1139 = vpop.permute.xlu0 %1138
      %v1142 = vlaneseq
      %v1143 = vshrl.u32 %v1142, 7
      %v1144 = vsub.s32 0, %v1143
      %v1145 = vrot.slane %v1116, %v1144
      %v1146 = vlaneseq
      %v1147 = vshrl.u32 %v1146, 7
      %v1148 = vsub.s32 1, %v1147
      %v1149 = vrot.slane %v1116, %v1148
      %v1152 = vmul.f32 %v1119, %v1145
      %v1153 = vmul.f32 %v1119, %v1149
      %v1154 = vmul.f32 %v1123, %v1145
      %v1155 = vmul.f32 %v1123, %v1149
      %v1156 = vmul.f32 %v1127, %v1145
      %v1157 = vmul.f32 %v1127, %v1149
      %v1158 = vmul.f32 %v1131, %v1145
      %v1159 = vmul.f32 %v1131, %v1149
      %v1160 = vmul.f32 %v1135, %v1145
      %v1161 = vmul.f32 %v1135, %v1149
      %v1162 = vmul.f32 %v1139, %v1145
      %v1163 = vmul.f32 %v1139, %v1149
      %v1164 = vmul.f32 %v1152, %v1109
      %v1165 = vmul.f32 %v1153, %v1103
      %v1166 = vmul.f32 %v1154, %v1110
      %v1167 = vmul.f32 %v1155, %v1104
      %v1168 = vmul.f32 %v1156, %v1111
      %v1169 = vmul.f32 %v1157, %v1105
      %v1170 = vmul.f32 %v1158, %v1112
      %v1171 = vmul.f32 %v1159, %v1106
      %v1172 = vmul.f32 %v1160, %v1113
      %v1173 = vmul.f32 %v1161, %v1107
      %v1174 = vmul.f32 %v1162, %v1114
      %v1175 = vmul.f32 %v1163, %v1108
      %v1176 = vadd.f32 %v1066, %v1164
      %v1177 = vadd.f32 %v1067, %v1165
      %v1178 = vadd.f32 %v1068, %v1166
      %v1179 = vadd.f32 %v1069, %v1167
      %v1180 = vadd.f32 %v1070, %v1168
      %v1181 = vadd.f32 %v1071, %v1169
      %v1182 = vadd.f32 %v1072, %v1170
      %v1183 = vadd.f32 %v1073, %v1171
      %v1184 = vadd.f32 %v1074, %v1172
      %v1185 = vadd.f32 %v1075, %v1173
      %v1186 = vadd.f32 %v1076, %v1174
      %v1187 = vadd.f32 %v1077, %v1175
      %1188 = vrot.lane.b32.xlu0 %v803, 48
      %v1189 = vpop.permute.xlu0 %1188
      %1190 = vrot.lane.b32.xlu0 %v805, 48
      %v1191 = vpop.permute.xlu0 %1190
      %1192 = vrot.lane.b32.xlu0 %v807, 48
      %v1193 = vpop.permute.xlu0 %1192
      %1194 = vrot.lane.b32.xlu0 %v809, 48
      %v1195 = vpop.permute.xlu0 %1194
      %1196 = vrot.lane.b32.xlu0 %v811, 48
      %v1197 = vpop.permute.xlu0 %1196
      %1198 = vrot.lane.b32.xlu0 %v813, 48
      %v1199 = vpop.permute.xlu0 %1198
      %1200 = vrot.lane.b32.xlu0 %v804, 48
      %v1201 = vpop.permute.xlu0 %1200
      %1202 = vrot.lane.b32.xlu0 %v806, 48
      %v1203 = vpop.permute.xlu0 %1202
      %1204 = vrot.lane.b32.xlu0 %v808, 48
      %v1205 = vpop.permute.xlu0 %1204
      %1206 = vrot.lane.b32.xlu0 %v810, 48
      %v1207 = vpop.permute.xlu0 %1206
      %1208 = vrot.lane.b32.xlu0 %v812, 48
      %v1209 = vpop.permute.xlu0 %1208
      %1210 = vrot.lane.b32.xlu0 %v814, 48
      %v1211 = vpop.permute.xlu0 %1210
      %vm1212 = vcmp.lt.s32.totalorder %v882, 48
      %v1213 = vsel %vm1212, %v1189, %v1201
      %v1214 = vsel %vm1212, %v1191, %v1203
      %v1215 = vsel %vm1212, %v1193, %v1205
      %v1216 = vsel %vm1212, %v1195, %v1207
      %v1217 = vsel %vm1212, %v1197, %v1209
      %v1218 = vsel %vm1212, %v1199, %v1211
      %v1219 = vsel %vm1212, %v1201, %v1189
      %v1220 = vsel %vm1212, %v1203, %v1191
      %v1221 = vsel %vm1212, %v1205, %v1193
      %v1222 = vsel %vm1212, %v1207, %v1195
      %v1223 = vsel %vm1212, %v1209, %v1197
      %v1224 = vsel %vm1212, %v1211, %v1199
      %s1225 = scalar_lea.vmem %s7, 3
      %v1226 = vld [vmem:[%s1225] ss:$8 sm:$0x3]
      %1227 = vset.pattern.permute.xlu0 3
      %1228 = vperm.xlu0 %1227, %v797
      %v1229 = vpop.permute.xlu0 %1228
      %1231 = vset.pattern.permute.xlu0 3
      %1232 = vperm.xlu0 %1231, %v798
      %v1233 = vpop.permute.xlu0 %1232
      %1235 = vset.pattern.permute.xlu0 3
      %1236 = vperm.xlu0 %1235, %v799
      %v1237 = vpop.permute.xlu0 %1236
      %1239 = vset.pattern.permute.xlu0 3
      %1240 = vperm.xlu0 %1239, %v800
      %v1241 = vpop.permute.xlu0 %1240
      %1243 = vset.pattern.permute.xlu0 3
      %1244 = vperm.xlu0 %1243, %v801
      %v1245 = vpop.permute.xlu0 %1244
      %1247 = vset.pattern.permute.xlu0 3
      %1248 = vperm.xlu0 %1247, %v802
      %v1249 = vpop.permute.xlu0 %1248
      %v1252 = vlaneseq
      %v1253 = vshrl.u32 %v1252, 7
      %v1254 = vsub.s32 0, %v1253
      %v1255 = vrot.slane %v1226, %v1254
      %v1256 = vlaneseq
      %v1257 = vshrl.u32 %v1256, 7
      %v1258 = vsub.s32 1, %v1257
      %v1259 = vrot.slane %v1226, %v1258
      %v1262 = vmul.f32 %v1229, %v1255
      %v1263 = vmul.f32 %v1229, %v1259
      %v1264 = vmul.f32 %v1233, %v1255
      %v1265 = vmul.f32 %v1233, %v1259
      %v1266 = vmul.f32 %v1237, %v1255
      %v1267 = vmul.f32 %v1237, %v1259
      %v1268 = vmul.f32 %v1241, %v1255
      %v1269 = vmul.f32 %v1241, %v1259
      %v1270 = vmul.f32 %v1245, %v1255
      %v1271 = vmul.f32 %v1245, %v1259
      %v1272 = vmul.f32 %v1249, %v1255
      %v1273 = vmul.f32 %v1249, %v1259
      %v1274 = vmul.f32 %v1262, %v1219
      %v1275 = vmul.f32 %v1263, %v1213
      %v1276 = vmul.f32 %v1264, %v1220
      %v1277 = vmul.f32 %v1265, %v1214
      %v1278 = vmul.f32 %v1266, %v1221
      %v1279 = vmul.f32 %v1267, %v1215
      %v1280 = vmul.f32 %v1268, %v1222
      %v1281 = vmul.f32 %v1269, %v1216
      %v1282 = vmul.f32 %v1270, %v1223
      %v1283 = vmul.f32 %v1271, %v1217
      %v1284 = vmul.f32 %v1272, %v1224
      %v1285 = vmul.f32 %v1273, %v1218
      %v1286 = vadd.f32 %v1176, %v1274
      %v1287 = vadd.f32 %v1177, %v1275
      %v1288 = vadd.f32 %v1178, %v1276
      %v1289 = vadd.f32 %v1179, %v1277
      %v1290 = vadd.f32 %v1180, %v1278
      %v1291 = vadd.f32 %v1181, %v1279
      %v1292 = vadd.f32 %v1182, %v1280
      %v1293 = vadd.f32 %v1183, %v1281
      %v1294 = vadd.f32 %v1184, %v1282
      %v1295 = vadd.f32 %v1185, %v1283
      %v1296 = vadd.f32 %v1186, %v1284
      %v1297 = vadd.f32 %v1187, %v1285
      %1298 = vrot.lane.b32.xlu0 %v803, 47
      %v1299 = vpop.permute.xlu0 %1298
      %1300 = vrot.lane.b32.xlu0 %v805, 47
      %v1301 = vpop.permute.xlu0 %1300
      %1302 = vrot.lane.b32.xlu0 %v807, 47
      %v1303 = vpop.permute.xlu0 %1302
      %1304 = vrot.lane.b32.xlu0 %v809, 47
      %v1305 = vpop.permute.xlu0 %1304
      %1306 = vrot.lane.b32.xlu0 %v811, 47
      %v1307 = vpop.permute.xlu0 %1306
      %1308 = vrot.lane.b32.xlu0 %v813, 47
      %v1309 = vpop.permute.xlu0 %1308
      %1310 = vrot.lane.b32.xlu0 %v804, 47
      %v1311 = vpop.permute.xlu0 %1310
      %1312 = vrot.lane.b32.xlu0 %v806, 47
      %v1313 = vpop.permute.xlu0 %1312
      %1314 = vrot.lane.b32.xlu0 %v808, 47
      %v1315 = vpop.permute.xlu0 %1314
      %1316 = vrot.lane.b32.xlu0 %v810, 47
      %v1317 = vpop.permute.xlu0 %1316
      %1318 = vrot.lane.b32.xlu0 %v812, 47
      %v1319 = vpop.permute.xlu0 %1318
      %1320 = vrot.lane.b32.xlu0 %v814, 47
      %v1321 = vpop.permute.xlu0 %1320
      %vm1322 = vcmp.lt.s32.totalorder %v882, 47
      %v1323 = vsel %vm1322, %v1299, %v1311
      %v1324 = vsel %vm1322, %v1301, %v1313
      %v1325 = vsel %vm1322, %v1303, %v1315
      %v1326 = vsel %vm1322, %v1305, %v1317
      %v1327 = vsel %vm1322, %v1307, %v1319
      %v1328 = vsel %vm1322, %v1309, %v1321
      %v1329 = vsel %vm1322, %v1311, %v1299
      %v1330 = vsel %vm1322, %v1313, %v1301
      %v1331 = vsel %vm1322, %v1315, %v1303
      %v1332 = vsel %vm1322, %v1317, %v1305
      %v1333 = vsel %vm1322, %v1319, %v1307
      %v1334 = vsel %vm1322, %v1321, %v1309
      %s1335 = scalar_lea.vmem %s7, 4
      %v1336 = vld [vmem:[%s1335] ss:$8 sm:$0x3]
      %1337 = vset.pattern.permute.xlu0 4
      %1338 = vperm.xlu0 %1337, %v797
      %v1339 = vpop.permute.xlu0 %1338
      %1341 = vset.pattern.permute.xlu0 4
      %1342 = vperm.xlu0 %1341, %v798
      %v1343 = vpop.permute.xlu0 %1342
      %1345 = vset.pattern.permute.xlu0 4
      %1346 = vperm.xlu0 %1345, %v799
      %v1347 = vpop.permute.xlu0 %1346
      %1349 = vset.pattern.permute.xlu0 4
      %1350 = vperm.xlu0 %1349, %v800
      %v1351 = vpop.permute.xlu0 %1350
      %1353 = vset.pattern.permute.xlu0 4
      %1354 = vperm.xlu0 %1353, %v801
      %v1355 = vpop.permute.xlu0 %1354
      %1357 = vset.pattern.permute.xlu0 4
      %1358 = vperm.xlu0 %1357, %v802
      %v1359 = vpop.permute.xlu0 %1358
      %v1362 = vlaneseq
      %v1363 = vshrl.u32 %v1362, 7
      %v1364 = vsub.s32 0, %v1363
      %v1365 = vrot.slane %v1336, %v1364
      %v1366 = vlaneseq
      %v1367 = vshrl.u32 %v1366, 7
      %v1368 = vsub.s32 1, %v1367
      %v1369 = vrot.slane %v1336, %v1368
      %v1372 = vmul.f32 %v1339, %v1365
      %v1373 = vmul.f32 %v1339, %v1369
      %v1374 = vmul.f32 %v1343, %v1365
      %v1375 = vmul.f32 %v1343, %v1369
      %v1376 = vmul.f32 %v1347, %v1365
      %v1377 = vmul.f32 %v1347, %v1369
      %v1378 = vmul.f32 %v1351, %v1365
      %v1379 = vmul.f32 %v1351, %v1369
      %v1380 = vmul.f32 %v1355, %v1365
      %v1381 = vmul.f32 %v1355, %v1369
      %v1382 = vmul.f32 %v1359, %v1365
      %v1383 = vmul.f32 %v1359, %v1369
      %v1384 = vmul.f32 %v1372, %v1329
      %v1385 = vmul.f32 %v1373, %v1323
      %v1386 = vmul.f32 %v1374, %v1330
      %v1387 = vmul.f32 %v1375, %v1324
      %v1388 = vmul.f32 %v1376, %v1331
      %v1389 = vmul.f32 %v1377, %v1325
      %v1390 = vmul.f32 %v1378, %v1332
      %v1391 = vmul.f32 %v1379, %v1326
      %v1392 = vmul.f32 %v1380, %v1333
      %v1393 = vmul.f32 %v1381, %v1327
      %v1394 = vmul.f32 %v1382, %v1334
      %v1395 = vmul.f32 %v1383, %v1328
      %v1396 = vadd.f32 %v1286, %v1384
      %v1397 = vadd.f32 %v1287, %v1385
      %v1398 = vadd.f32 %v1288, %v1386
      %v1399 = vadd.f32 %v1289, %v1387
      %v1400 = vadd.f32 %v1290, %v1388
      %v1401 = vadd.f32 %v1291, %v1389
      %v1402 = vadd.f32 %v1292, %v1390
      %v1403 = vadd.f32 %v1293, %v1391
      %v1404 = vadd.f32 %v1294, %v1392
      %v1405 = vadd.f32 %v1295, %v1393
      %v1406 = vadd.f32 %v1296, %v1394
      %v1407 = vadd.f32 %v1297, %v1395
      %1408 = vrot.lane.b32.xlu0 %v803, 46
      %v1409 = vpop.permute.xlu0 %1408
      %1410 = vrot.lane.b32.xlu0 %v805, 46
      %v1411 = vpop.permute.xlu0 %1410
      %1412 = vrot.lane.b32.xlu0 %v807, 46
      %v1413 = vpop.permute.xlu0 %1412
      %1414 = vrot.lane.b32.xlu0 %v809, 46
      %v1415 = vpop.permute.xlu0 %1414
      %1416 = vrot.lane.b32.xlu0 %v811, 46
      %v1417 = vpop.permute.xlu0 %1416
      %1418 = vrot.lane.b32.xlu0 %v813, 46
      %v1419 = vpop.permute.xlu0 %1418
      %1420 = vrot.lane.b32.xlu0 %v804, 46
      %v1421 = vpop.permute.xlu0 %1420
      %1422 = vrot.lane.b32.xlu0 %v806, 46
      %v1423 = vpop.permute.xlu0 %1422
      %1424 = vrot.lane.b32.xlu0 %v808, 46
      %v1425 = vpop.permute.xlu0 %1424
      %1426 = vrot.lane.b32.xlu0 %v810, 46
      %v1427 = vpop.permute.xlu0 %1426
      %1428 = vrot.lane.b32.xlu0 %v812, 46
      %v1429 = vpop.permute.xlu0 %1428
      %1430 = vrot.lane.b32.xlu0 %v814, 46
      %v1431 = vpop.permute.xlu0 %1430
      %vm1432 = vcmp.lt.s32.totalorder %v882, 46
      %v1433 = vsel %vm1432, %v1409, %v1421
      %v1434 = vsel %vm1432, %v1411, %v1423
      %v1435 = vsel %vm1432, %v1413, %v1425
      %v1436 = vsel %vm1432, %v1415, %v1427
      %v1437 = vsel %vm1432, %v1417, %v1429
      %v1438 = vsel %vm1432, %v1419, %v1431
      %v1439 = vsel %vm1432, %v1421, %v1409
      %v1440 = vsel %vm1432, %v1423, %v1411
      %v1441 = vsel %vm1432, %v1425, %v1413
      %v1442 = vsel %vm1432, %v1427, %v1415
      %v1443 = vsel %vm1432, %v1429, %v1417
      %v1444 = vsel %vm1432, %v1431, %v1419
      %s1445 = scalar_lea.vmem %s7, 5
      %v1446 = vld [vmem:[%s1445] ss:$8 sm:$0x3]
      %1447 = vset.pattern.permute.xlu0 5
      %1448 = vperm.xlu0 %1447, %v797
      %v1449 = vpop.permute.xlu0 %1448
      %1451 = vset.pattern.permute.xlu0 5
      %1452 = vperm.xlu0 %1451, %v798
      %v1453 = vpop.permute.xlu0 %1452
      %1455 = vset.pattern.permute.xlu0 5
      %1456 = vperm.xlu0 %1455, %v799
      %v1457 = vpop.permute.xlu0 %1456
      %1459 = vset.pattern.permute.xlu0 5
      %1460 = vperm.xlu0 %1459, %v800
      %v1461 = vpop.permute.xlu0 %1460
      %1463 = vset.pattern.permute.xlu0 5
      %1464 = vperm.xlu0 %1463, %v801
      %v1465 = vpop.permute.xlu0 %1464
      %1467 = vset.pattern.permute.xlu0 5
      %1468 = vperm.xlu0 %1467, %v802
      %v1469 = vpop.permute.xlu0 %1468
      %v1472 = vlaneseq
      %v1473 = vshrl.u32 %v1472, 7
      %v1474 = vsub.s32 0, %v1473
      %v1475 = vrot.slane %v1446, %v1474
      %v1476 = vlaneseq
      %v1477 = vshrl.u32 %v1476, 7
      %v1478 = vsub.s32 1, %v1477
      %v1479 = vrot.slane %v1446, %v1478
      %v1482 = vmul.f32 %v1449, %v1475
      %v1483 = vmul.f32 %v1449, %v1479
      %v1484 = vmul.f32 %v1453, %v1475
      %v1485 = vmul.f32 %v1453, %v1479
      %v1486 = vmul.f32 %v1457, %v1475
      %v1487 = vmul.f32 %v1457, %v1479
      %v1488 = vmul.f32 %v1461, %v1475
      %v1489 = vmul.f32 %v1461, %v1479
      %v1490 = vmul.f32 %v1465, %v1475
      %v1491 = vmul.f32 %v1465, %v1479
      %v1492 = vmul.f32 %v1469, %v1475
      %v1493 = vmul.f32 %v1469, %v1479
      %v1494 = vmul.f32 %v1482, %v1439
      %v1495 = vmul.f32 %v1483, %v1433
      %v1496 = vmul.f32 %v1484, %v1440
      %v1497 = vmul.f32 %v1485, %v1434
      %v1498 = vmul.f32 %v1486, %v1441
      %v1499 = vmul.f32 %v1487, %v1435
      %v1500 = vmul.f32 %v1488, %v1442
      %v1501 = vmul.f32 %v1489, %v1436
      %v1502 = vmul.f32 %v1490, %v1443
      %v1503 = vmul.f32 %v1491, %v1437
      %v1504 = vmul.f32 %v1492, %v1444
      %v1505 = vmul.f32 %v1493, %v1438
      %v1506 = vadd.f32 %v1396, %v1494
      %v1507 = vadd.f32 %v1397, %v1495
      %v1508 = vadd.f32 %v1398, %v1496
      %v1509 = vadd.f32 %v1399, %v1497
      %v1510 = vadd.f32 %v1400, %v1498
      %v1511 = vadd.f32 %v1401, %v1499
      %v1512 = vadd.f32 %v1402, %v1500
      %v1513 = vadd.f32 %v1403, %v1501
      %v1514 = vadd.f32 %v1404, %v1502
      %v1515 = vadd.f32 %v1405, %v1503
      %v1516 = vadd.f32 %v1406, %v1504
      %v1517 = vadd.f32 %v1407, %v1505
      %1518 = vrot.lane.b32.xlu0 %v803, 45
      %v1519 = vpop.permute.xlu0 %1518
      %1520 = vrot.lane.b32.xlu0 %v805, 45
      %v1521 = vpop.permute.xlu0 %1520
      %1522 = vrot.lane.b32.xlu0 %v807, 45
      %v1523 = vpop.permute.xlu0 %1522
      %1524 = vrot.lane.b32.xlu0 %v809, 45
      %v1525 = vpop.permute.xlu0 %1524
      %1526 = vrot.lane.b32.xlu0 %v811, 45
      %v1527 = vpop.permute.xlu0 %1526
      %1528 = vrot.lane.b32.xlu0 %v813, 45
      %v1529 = vpop.permute.xlu0 %1528
      %1530 = vrot.lane.b32.xlu0 %v804, 45
      %v1531 = vpop.permute.xlu0 %1530
      %1532 = vrot.lane.b32.xlu0 %v806, 45
      %v1533 = vpop.permute.xlu0 %1532
      %1534 = vrot.lane.b32.xlu0 %v808, 45
      %v1535 = vpop.permute.xlu0 %1534
      %1536 = vrot.lane.b32.xlu0 %v810, 45
      %v1537 = vpop.permute.xlu0 %1536
      %1538 = vrot.lane.b32.xlu0 %v812, 45
      %v1539 = vpop.permute.xlu0 %1538
      %1540 = vrot.lane.b32.xlu0 %v814, 45
      %v1541 = vpop.permute.xlu0 %1540
      %vm1542 = vcmp.lt.s32.totalorder %v882, 45
      %v1543 = vsel %vm1542, %v1519, %v1531
      %v1544 = vsel %vm1542, %v1521, %v1533
      %v1545 = vsel %vm1542, %v1523, %v1535
      %v1546 = vsel %vm1542, %v1525, %v1537
      %v1547 = vsel %vm1542, %v1527, %v1539
      %v1548 = vsel %vm1542, %v1529, %v1541
      %v1549 = vsel %vm1542, %v1531, %v1519
      %v1550 = vsel %vm1542, %v1533, %v1521
      %v1551 = vsel %vm1542, %v1535, %v1523
      %v1552 = vsel %vm1542, %v1537, %v1525
      %v1553 = vsel %vm1542, %v1539, %v1527
      %v1554 = vsel %vm1542, %v1541, %v1529
      %s1555 = scalar_lea.vmem %s7, 6
      %v1556 = vld [vmem:[%s1555] ss:$8 sm:$0x3]
      %1557 = vset.pattern.permute.xlu0 6
      %1558 = vperm.xlu0 %1557, %v797
      %v1559 = vpop.permute.xlu0 %1558
      %1561 = vset.pattern.permute.xlu0 6
      %1562 = vperm.xlu0 %1561, %v798
      %v1563 = vpop.permute.xlu0 %1562
      %1565 = vset.pattern.permute.xlu0 6
      %1566 = vperm.xlu0 %1565, %v799
      %v1567 = vpop.permute.xlu0 %1566
      %1569 = vset.pattern.permute.xlu0 6
      %1570 = vperm.xlu0 %1569, %v800
      %v1571 = vpop.permute.xlu0 %1570
      %1573 = vset.pattern.permute.xlu0 6
      %1574 = vperm.xlu0 %1573, %v801
      %v1575 = vpop.permute.xlu0 %1574
      %1577 = vset.pattern.permute.xlu0 6
      %1578 = vperm.xlu0 %1577, %v802
      %v1579 = vpop.permute.xlu0 %1578
      %v1582 = vlaneseq
      %v1583 = vshrl.u32 %v1582, 7
      %v1584 = vsub.s32 0, %v1583
      %v1585 = vrot.slane %v1556, %v1584
      %v1586 = vlaneseq
      %v1587 = vshrl.u32 %v1586, 7
      %v1588 = vsub.s32 1, %v1587
      %v1589 = vrot.slane %v1556, %v1588
      %v1592 = vmul.f32 %v1559, %v1585
      %v1593 = vmul.f32 %v1559, %v1589
      %v1594 = vmul.f32 %v1563, %v1585
      %v1595 = vmul.f32 %v1563, %v1589
      %v1596 = vmul.f32 %v1567, %v1585
      %v1597 = vmul.f32 %v1567, %v1589
      %v1598 = vmul.f32 %v1571, %v1585
      %v1599 = vmul.f32 %v1571, %v1589
      %v1600 = vmul.f32 %v1575, %v1585
      %v1601 = vmul.f32 %v1575, %v1589
      %v1602 = vmul.f32 %v1579, %v1585
      %v1603 = vmul.f32 %v1579, %v1589
      %v1604 = vmul.f32 %v1592, %v1549
      %v1605 = vmul.f32 %v1593, %v1543
      %v1606 = vmul.f32 %v1594, %v1550
      %v1607 = vmul.f32 %v1595, %v1544
      %v1608 = vmul.f32 %v1596, %v1551
      %v1609 = vmul.f32 %v1597, %v1545
      %v1610 = vmul.f32 %v1598, %v1552
      %v1611 = vmul.f32 %v1599, %v1546
      %v1612 = vmul.f32 %v1600, %v1553
      %v1613 = vmul.f32 %v1601, %v1547
      %v1614 = vmul.f32 %v1602, %v1554
      %v1615 = vmul.f32 %v1603, %v1548
      %v1616 = vadd.f32 %v1506, %v1604
      %v1617 = vadd.f32 %v1507, %v1605
      %v1618 = vadd.f32 %v1508, %v1606
      %v1619 = vadd.f32 %v1509, %v1607
      %v1620 = vadd.f32 %v1510, %v1608
      %v1621 = vadd.f32 %v1511, %v1609
      %v1622 = vadd.f32 %v1512, %v1610
      %v1623 = vadd.f32 %v1513, %v1611
      %v1624 = vadd.f32 %v1514, %v1612
      %v1625 = vadd.f32 %v1515, %v1613
      %v1626 = vadd.f32 %v1516, %v1614
      %v1627 = vadd.f32 %v1517, %v1615
      %1628 = vrot.lane.b32.xlu0 %v803, 35
      %v1629 = vpop.permute.xlu0 %1628
      %1630 = vrot.lane.b32.xlu0 %v805, 35
      %v1631 = vpop.permute.xlu0 %1630
      %1632 = vrot.lane.b32.xlu0 %v807, 35
      %v1633 = vpop.permute.xlu0 %1632
      %1634 = vrot.lane.b32.xlu0 %v809, 35
      %v1635 = vpop.permute.xlu0 %1634
      %1636 = vrot.lane.b32.xlu0 %v811, 35
      %v1637 = vpop.permute.xlu0 %1636
      %1638 = vrot.lane.b32.xlu0 %v813, 35
      %v1639 = vpop.permute.xlu0 %1638
      %1640 = vrot.lane.b32.xlu0 %v804, 35
      %v1641 = vpop.permute.xlu0 %1640
      %1642 = vrot.lane.b32.xlu0 %v806, 35
      %v1643 = vpop.permute.xlu0 %1642
      %1644 = vrot.lane.b32.xlu0 %v808, 35
      %v1645 = vpop.permute.xlu0 %1644
      %1646 = vrot.lane.b32.xlu0 %v810, 35
      %v1647 = vpop.permute.xlu0 %1646
      %1648 = vrot.lane.b32.xlu0 %v812, 35
      %v1649 = vpop.permute.xlu0 %1648
      %1650 = vrot.lane.b32.xlu0 %v814, 35
      %v1651 = vpop.permute.xlu0 %1650
      %vm1652 = vcmp.lt.s32.totalorder %v882, 35
      %v1653 = vsel %vm1652, %v1629, %v1641
      %v1654 = vsel %vm1652, %v1631, %v1643
      %v1655 = vsel %vm1652, %v1633, %v1645
      %v1656 = vsel %vm1652, %v1635, %v1647
      %v1657 = vsel %vm1652, %v1637, %v1649
      %v1658 = vsel %vm1652, %v1639, %v1651
      %v1659 = vsel %vm1652, %v1641, %v1629
      %v1660 = vsel %vm1652, %v1643, %v1631
      %v1661 = vsel %vm1652, %v1645, %v1633
      %v1662 = vsel %vm1652, %v1647, %v1635
      %v1663 = vsel %vm1652, %v1649, %v1637
      %v1664 = vsel %vm1652, %v1651, %v1639
      %s1665 = scalar_lea.vmem %s7, 7
      %v1666 = vld [vmem:[%s1665] ss:$8 sm:$0x3]
      %1667 = vset.pattern.permute.xlu0 7
      %1668 = vperm.xlu0 %1667, %v797
      %v1669 = vpop.permute.xlu0 %1668
      %1671 = vset.pattern.permute.xlu0 7
      %1672 = vperm.xlu0 %1671, %v798
      %v1673 = vpop.permute.xlu0 %1672
      %1675 = vset.pattern.permute.xlu0 7
      %1676 = vperm.xlu0 %1675, %v799
      %v1677 = vpop.permute.xlu0 %1676
      %1679 = vset.pattern.permute.xlu0 7
      %1680 = vperm.xlu0 %1679, %v800
      %v1681 = vpop.permute.xlu0 %1680
      %1683 = vset.pattern.permute.xlu0 7
      %1684 = vperm.xlu0 %1683, %v801
      %v1685 = vpop.permute.xlu0 %1684
      %1687 = vset.pattern.permute.xlu0 7
      %1688 = vperm.xlu0 %1687, %v802
      %v1689 = vpop.permute.xlu0 %1688
      %v1692 = vlaneseq
      %v1693 = vshrl.u32 %v1692, 7
      %v1694 = vsub.s32 0, %v1693
      %v1695 = vrot.slane %v1666, %v1694
      %v1696 = vlaneseq
      %v1697 = vshrl.u32 %v1696, 7
      %v1698 = vsub.s32 1, %v1697
      %v1699 = vrot.slane %v1666, %v1698
      %v1702 = vmul.f32 %v1669, %v1695
      %v1703 = vmul.f32 %v1669, %v1699
      %v1704 = vmul.f32 %v1673, %v1695
      %v1705 = vmul.f32 %v1673, %v1699
      %v1706 = vmul.f32 %v1677, %v1695
      %v1707 = vmul.f32 %v1677, %v1699
      %v1708 = vmul.f32 %v1681, %v1695
      %v1709 = vmul.f32 %v1681, %v1699
      %v1710 = vmul.f32 %v1685, %v1695
      %v1711 = vmul.f32 %v1685, %v1699
      %v1712 = vmul.f32 %v1689, %v1695
      %v1713 = vmul.f32 %v1689, %v1699
      %v1714 = vmul.f32 %v1702, %v1659
      %v1715 = vmul.f32 %v1703, %v1653
      %v1716 = vmul.f32 %v1704, %v1660
      %v1717 = vmul.f32 %v1705, %v1654
      %v1718 = vmul.f32 %v1706, %v1661
      %v1719 = vmul.f32 %v1707, %v1655
      %v1720 = vmul.f32 %v1708, %v1662
      %v1721 = vmul.f32 %v1709, %v1656
      %v1722 = vmul.f32 %v1710, %v1663
      %v1723 = vmul.f32 %v1711, %v1657
      %v1724 = vmul.f32 %v1712, %v1664
      %v1725 = vmul.f32 %v1713, %v1658
      %v1726 = vadd.f32 %v1616, %v1714
      %v1727 = vadd.f32 %v1617, %v1715
      %v1728 = vadd.f32 %v1618, %v1716
      %v1729 = vadd.f32 %v1619, %v1717
      %v1730 = vadd.f32 %v1620, %v1718
      %v1731 = vadd.f32 %v1621, %v1719
      %v1732 = vadd.f32 %v1622, %v1720
      %v1733 = vadd.f32 %v1623, %v1721
      %v1734 = vadd.f32 %v1624, %v1722
      %v1735 = vadd.f32 %v1625, %v1723
      %v1736 = vadd.f32 %v1626, %v1724
      %v1737 = vadd.f32 %v1627, %v1725
      %1738 = vrot.lane.b32.xlu0 %v803, 34
      %v1739 = vpop.permute.xlu0 %1738
      %1740 = vrot.lane.b32.xlu0 %v805, 34
      %v1741 = vpop.permute.xlu0 %1740
      %1742 = vrot.lane.b32.xlu0 %v807, 34
      %v1743 = vpop.permute.xlu0 %1742
      %1744 = vrot.lane.b32.xlu0 %v809, 34
      %v1745 = vpop.permute.xlu0 %1744
      %1746 = vrot.lane.b32.xlu0 %v811, 34
      %v1747 = vpop.permute.xlu0 %1746
      %1748 = vrot.lane.b32.xlu0 %v813, 34
      %v1749 = vpop.permute.xlu0 %1748
      %1750 = vrot.lane.b32.xlu0 %v804, 34
      %v1751 = vpop.permute.xlu0 %1750
      %1752 = vrot.lane.b32.xlu0 %v806, 34
      %v1753 = vpop.permute.xlu0 %1752
      %1754 = vrot.lane.b32.xlu0 %v808, 34
      %v1755 = vpop.permute.xlu0 %1754
      %1756 = vrot.lane.b32.xlu0 %v810, 34
      %v1757 = vpop.permute.xlu0 %1756
      %1758 = vrot.lane.b32.xlu0 %v812, 34
      %v1759 = vpop.permute.xlu0 %1758
      %1760 = vrot.lane.b32.xlu0 %v814, 34
      %v1761 = vpop.permute.xlu0 %1760
      %vm1762 = vcmp.lt.s32.totalorder %v882, 34
      %v1763 = vsel %vm1762, %v1739, %v1751
      %v1764 = vsel %vm1762, %v1741, %v1753
      %v1765 = vsel %vm1762, %v1743, %v1755
      %v1766 = vsel %vm1762, %v1745, %v1757
      %v1767 = vsel %vm1762, %v1747, %v1759
      %v1768 = vsel %vm1762, %v1749, %v1761
      %v1769 = vsel %vm1762, %v1751, %v1739
      %v1770 = vsel %vm1762, %v1753, %v1741
      %v1771 = vsel %vm1762, %v1755, %v1743
      %v1772 = vsel %vm1762, %v1757, %v1745
      %v1773 = vsel %vm1762, %v1759, %v1747
      %v1774 = vsel %vm1762, %v1761, %v1749
      %s1775 = scalar_lea.vmem %s7, 16
      %v1776 = vld [vmem:[%s1775] ss:$8 sm:$0x3]
      %1777 = vset.pattern.permute.xlu0 8
      %1778 = vperm.xlu0 %1777, %v797
      %v1779 = vpop.permute.xlu0 %1778
      %1781 = vset.pattern.permute.xlu0 8
      %1782 = vperm.xlu0 %1781, %v798
      %v1783 = vpop.permute.xlu0 %1782
      %1785 = vset.pattern.permute.xlu0 8
      %1786 = vperm.xlu0 %1785, %v799
      %v1787 = vpop.permute.xlu0 %1786
      %1789 = vset.pattern.permute.xlu0 8
      %1790 = vperm.xlu0 %1789, %v800
      %v1791 = vpop.permute.xlu0 %1790
      %1793 = vset.pattern.permute.xlu0 8
      %1794 = vperm.xlu0 %1793, %v801
      %v1795 = vpop.permute.xlu0 %1794
      %1797 = vset.pattern.permute.xlu0 8
      %1798 = vperm.xlu0 %1797, %v802
      %v1799 = vpop.permute.xlu0 %1798
      %v1802 = vlaneseq
      %v1803 = vshrl.u32 %v1802, 7
      %v1804 = vsub.s32 0, %v1803
      %v1805 = vrot.slane %v1776, %v1804
      %v1806 = vlaneseq
      %v1807 = vshrl.u32 %v1806, 7
      %v1808 = vsub.s32 1, %v1807
      %v1809 = vrot.slane %v1776, %v1808
      %v1812 = vmul.f32 %v1779, %v1805
      %v1813 = vmul.f32 %v1779, %v1809
      %v1814 = vmul.f32 %v1783, %v1805
      %v1815 = vmul.f32 %v1783, %v1809
      %v1816 = vmul.f32 %v1787, %v1805
      %v1817 = vmul.f32 %v1787, %v1809
      %v1818 = vmul.f32 %v1791, %v1805
      %v1819 = vmul.f32 %v1791, %v1809
      %v1820 = vmul.f32 %v1795, %v1805
      %v1821 = vmul.f32 %v1795, %v1809
      %v1822 = vmul.f32 %v1799, %v1805
      %v1823 = vmul.f32 %v1799, %v1809
      %v1824 = vmul.f32 %v1812, %v1769
      %v1825 = vmul.f32 %v1813, %v1763
      %v1826 = vmul.f32 %v1814, %v1770
      %v1827 = vmul.f32 %v1815, %v1764
      %v1828 = vmul.f32 %v1816, %v1771
      %v1829 = vmul.f32 %v1817, %v1765
      %v1830 = vmul.f32 %v1818, %v1772
      %v1831 = vmul.f32 %v1819, %v1766
      %v1832 = vmul.f32 %v1820, %v1773
      %v1833 = vmul.f32 %v1821, %v1767
      %v1834 = vmul.f32 %v1822, %v1774
      %v1835 = vmul.f32 %v1823, %v1768
      %v1836 = vadd.f32 %v1726, %v1824
      %v1837 = vadd.f32 %v1727, %v1825
      %v1838 = vadd.f32 %v1728, %v1826
      %v1839 = vadd.f32 %v1729, %v1827
      %v1840 = vadd.f32 %v1730, %v1828
      %v1841 = vadd.f32 %v1731, %v1829
      %v1842 = vadd.f32 %v1732, %v1830
      %v1843 = vadd.f32 %v1733, %v1831
      %v1844 = vadd.f32 %v1734, %v1832
      %v1845 = vadd.f32 %v1735, %v1833
      %v1846 = vadd.f32 %v1736, %v1834
      %v1847 = vadd.f32 %v1737, %v1835
      %1848 = vrot.lane.b32.xlu0 %v803, 33
      %v1849 = vpop.permute.xlu0 %1848
      %1850 = vrot.lane.b32.xlu0 %v805, 33
      %v1851 = vpop.permute.xlu0 %1850
      %1852 = vrot.lane.b32.xlu0 %v807, 33
      %v1853 = vpop.permute.xlu0 %1852
      %1854 = vrot.lane.b32.xlu0 %v809, 33
      %v1855 = vpop.permute.xlu0 %1854
      %1856 = vrot.lane.b32.xlu0 %v811, 33
      %v1857 = vpop.permute.xlu0 %1856
      %1858 = vrot.lane.b32.xlu0 %v813, 33
      %v1859 = vpop.permute.xlu0 %1858
      %1860 = vrot.lane.b32.xlu0 %v804, 33
      %v1861 = vpop.permute.xlu0 %1860
      %1862 = vrot.lane.b32.xlu0 %v806, 33
      %v1863 = vpop.permute.xlu0 %1862
      %1864 = vrot.lane.b32.xlu0 %v808, 33
      %v1865 = vpop.permute.xlu0 %1864
      %1866 = vrot.lane.b32.xlu0 %v810, 33
      %v1867 = vpop.permute.xlu0 %1866
      %1868 = vrot.lane.b32.xlu0 %v812, 33
      %v1869 = vpop.permute.xlu0 %1868
      %1870 = vrot.lane.b32.xlu0 %v814, 33
      %v1871 = vpop.permute.xlu0 %1870
      %vm1872 = vcmp.lt.s32.totalorder %v882, 33
      %v1873 = vsel %vm1872, %v1849, %v1861
      %v1874 = vsel %vm1872, %v1851, %v1863
      %v1875 = vsel %vm1872, %v1853, %v1865
      %v1876 = vsel %vm1872, %v1855, %v1867
      %v1877 = vsel %vm1872, %v1857, %v1869
      %v1878 = vsel %vm1872, %v1859, %v1871
      %v1879 = vsel %vm1872, %v1861, %v1849
      %v1880 = vsel %vm1872, %v1863, %v1851
      %v1881 = vsel %vm1872, %v1865, %v1853
      %v1882 = vsel %vm1872, %v1867, %v1855
      %v1883 = vsel %vm1872, %v1869, %v1857
      %v1884 = vsel %vm1872, %v1871, %v1859
      %s1885 = scalar_lea.vmem %s7, 17
      %v1886 = vld [vmem:[%s1885] ss:$8 sm:$0x3]
      %1887 = vset.pattern.permute.xlu0 9
      %1888 = vperm.xlu0 %1887, %v797
      %v1889 = vpop.permute.xlu0 %1888
      %1891 = vset.pattern.permute.xlu0 9
      %1892 = vperm.xlu0 %1891, %v798
      %v1893 = vpop.permute.xlu0 %1892
      %1895 = vset.pattern.permute.xlu0 9
      %1896 = vperm.xlu0 %1895, %v799
      %v1897 = vpop.permute.xlu0 %1896
      %1899 = vset.pattern.permute.xlu0 9
      %1900 = vperm.xlu0 %1899, %v800
      %v1901 = vpop.permute.xlu0 %1900
      %1903 = vset.pattern.permute.xlu0 9
      %1904 = vperm.xlu0 %1903, %v801
      %v1905 = vpop.permute.xlu0 %1904
      %1907 = vset.pattern.permute.xlu0 9
      %1908 = vperm.xlu0 %1907, %v802
      %v1909 = vpop.permute.xlu0 %1908
      %v1912 = vlaneseq
      %v1913 = vshrl.u32 %v1912, 7
      %v1914 = vsub.s32 0, %v1913
      %v1915 = vrot.slane %v1886, %v1914
      %v1916 = vlaneseq
      %v1917 = vshrl.u32 %v1916, 7
      %v1918 = vsub.s32 1, %v1917
      %v1919 = vrot.slane %v1886, %v1918
      %v1922 = vmul.f32 %v1889, %v1915
      %v1923 = vmul.f32 %v1889, %v1919
      %v1924 = vmul.f32 %v1893, %v1915
      %v1925 = vmul.f32 %v1893, %v1919
      %v1926 = vmul.f32 %v1897, %v1915
      %v1927 = vmul.f32 %v1897, %v1919
      %v1928 = vmul.f32 %v1901, %v1915
      %v1929 = vmul.f32 %v1901, %v1919
      %v1930 = vmul.f32 %v1905, %v1915
      %v1931 = vmul.f32 %v1905, %v1919
      %v1932 = vmul.f32 %v1909, %v1915
      %v1933 = vmul.f32 %v1909, %v1919
      %v1934 = vmul.f32 %v1922, %v1879
      %v1935 = vmul.f32 %v1923, %v1873
      %v1936 = vmul.f32 %v1924, %v1880
      %v1937 = vmul.f32 %v1925, %v1874
      %v1938 = vmul.f32 %v1926, %v1881
      %v1939 = vmul.f32 %v1927, %v1875
      %v1940 = vmul.f32 %v1928, %v1882
      %v1941 = vmul.f32 %v1929, %v1876
      %v1942 = vmul.f32 %v1930, %v1883
      %v1943 = vmul.f32 %v1931, %v1877
      %v1944 = vmul.f32 %v1932, %v1884
      %v1945 = vmul.f32 %v1933, %v1878
      %v1946 = vadd.f32 %v1836, %v1934
      %v1947 = vadd.f32 %v1837, %v1935
      %v1948 = vadd.f32 %v1838, %v1936
      %v1949 = vadd.f32 %v1839, %v1937
      %v1950 = vadd.f32 %v1840, %v1938
      %v1951 = vadd.f32 %v1841, %v1939
      %v1952 = vadd.f32 %v1842, %v1940
      %v1953 = vadd.f32 %v1843, %v1941
      %v1954 = vadd.f32 %v1844, %v1942
      %v1955 = vadd.f32 %v1845, %v1943
      %v1956 = vadd.f32 %v1846, %v1944
      %v1957 = vadd.f32 %v1847, %v1945
      %1958 = vrot.lane.b32.xlu0 %v803, 32
      %v1959 = vpop.permute.xlu0 %1958
      %1960 = vrot.lane.b32.xlu0 %v805, 32
      %v1961 = vpop.permute.xlu0 %1960
      %1962 = vrot.lane.b32.xlu0 %v807, 32
      %v1963 = vpop.permute.xlu0 %1962
      %1964 = vrot.lane.b32.xlu0 %v809, 32
      %v1965 = vpop.permute.xlu0 %1964
      %1966 = vrot.lane.b32.xlu0 %v811, 32
      %v1967 = vpop.permute.xlu0 %1966
      %1968 = vrot.lane.b32.xlu0 %v813, 32
      %v1969 = vpop.permute.xlu0 %1968
      %1970 = vrot.lane.b32.xlu0 %v804, 32
      %v1971 = vpop.permute.xlu0 %1970
      %1972 = vrot.lane.b32.xlu0 %v806, 32
      %v1973 = vpop.permute.xlu0 %1972
      %1974 = vrot.lane.b32.xlu0 %v808, 32
      %v1975 = vpop.permute.xlu0 %1974
      %1976 = vrot.lane.b32.xlu0 %v810, 32
      %v1977 = vpop.permute.xlu0 %1976
      %1978 = vrot.lane.b32.xlu0 %v812, 32
      %v1979 = vpop.permute.xlu0 %1978
      %1980 = vrot.lane.b32.xlu0 %v814, 32
      %v1981 = vpop.permute.xlu0 %1980
      %vm1982 = vcmp.lt.s32.totalorder %v882, 32
      %v1983 = vsel %vm1982, %v1959, %v1971
      %v1984 = vsel %vm1982, %v1961, %v1973
      %v1985 = vsel %vm1982, %v1963, %v1975
      %v1986 = vsel %vm1982, %v1965, %v1977
      %v1987 = vsel %vm1982, %v1967, %v1979
      %v1988 = vsel %vm1982, %v1969, %v1981
      %v1989 = vsel %vm1982, %v1971, %v1959
      %v1990 = vsel %vm1982, %v1973, %v1961
      %v1991 = vsel %vm1982, %v1975, %v1963
      %v1992 = vsel %vm1982, %v1977, %v1965
      %v1993 = vsel %vm1982, %v1979, %v1967
      %v1994 = vsel %vm1982, %v1981, %v1969
      %s1995 = scalar_lea.vmem %s7, 18
      %v1996 = vld [vmem:[%s1995] ss:$8 sm:$0x3]
      %1997 = vset.pattern.permute.xlu0 10
      %1998 = vperm.xlu0 %1997, %v797
      %v1999 = vpop.permute.xlu0 %1998
      %2001 = vset.pattern.permute.xlu0 10
      %2002 = vperm.xlu0 %2001, %v798
      %v2003 = vpop.permute.xlu0 %2002
      %2005 = vset.pattern.permute.xlu0 10
      %2006 = vperm.xlu0 %2005, %v799
      %v2007 = vpop.permute.xlu0 %2006
      %2009 = vset.pattern.permute.xlu0 10
      %2010 = vperm.xlu0 %2009, %v800
      %v2011 = vpop.permute.xlu0 %2010
      %2013 = vset.pattern.permute.xlu0 10
      %2014 = vperm.xlu0 %2013, %v801
      %v2015 = vpop.permute.xlu0 %2014
      %2017 = vset.pattern.permute.xlu0 10
      %2018 = vperm.xlu0 %2017, %v802
      %v2019 = vpop.permute.xlu0 %2018
      %v2022 = vlaneseq
      %v2023 = vshrl.u32 %v2022, 7
      %v2024 = vsub.s32 0, %v2023
      %v2025 = vrot.slane %v1996, %v2024
      %v2026 = vlaneseq
      %v2027 = vshrl.u32 %v2026, 7
      %v2028 = vsub.s32 1, %v2027
      %v2029 = vrot.slane %v1996, %v2028
      %v2032 = vmul.f32 %v1999, %v2025
      %v2033 = vmul.f32 %v1999, %v2029
      %v2034 = vmul.f32 %v2003, %v2025
      %v2035 = vmul.f32 %v2003, %v2029
      %v2036 = vmul.f32 %v2007, %v2025
      %v2037 = vmul.f32 %v2007, %v2029
      %v2038 = vmul.f32 %v2011, %v2025
      %v2039 = vmul.f32 %v2011, %v2029
      %v2040 = vmul.f32 %v2015, %v2025
      %v2041 = vmul.f32 %v2015, %v2029
      %v2042 = vmul.f32 %v2019, %v2025
      %v2043 = vmul.f32 %v2019, %v2029
      %v2044 = vmul.f32 %v2032, %v1989
      %v2045 = vmul.f32 %v2033, %v1983
      %v2046 = vmul.f32 %v2034, %v1990
      %v2047 = vmul.f32 %v2035, %v1984
      %v2048 = vmul.f32 %v2036, %v1991
      %v2049 = vmul.f32 %v2037, %v1985
      %v2050 = vmul.f32 %v2038, %v1992
      %v2051 = vmul.f32 %v2039, %v1986
      %v2052 = vmul.f32 %v2040, %v1993
      %v2053 = vmul.f32 %v2041, %v1987
      %v2054 = vmul.f32 %v2042, %v1994
      %v2055 = vmul.f32 %v2043, %v1988
      %v2056 = vadd.f32 %v1946, %v2044
      %v2057 = vadd.f32 %v1947, %v2045
      %v2058 = vadd.f32 %v1948, %v2046
      %v2059 = vadd.f32 %v1949, %v2047
      %v2060 = vadd.f32 %v1950, %v2048
      %v2061 = vadd.f32 %v1951, %v2049
      %v2062 = vadd.f32 %v1952, %v2050
      %v2063 = vadd.f32 %v1953, %v2051
      %v2064 = vadd.f32 %v1954, %v2052
      %v2065 = vadd.f32 %v1955, %v2053
      %v2066 = vadd.f32 %v1956, %v2054
      %v2067 = vadd.f32 %v1957, %v2055
      %2068 = vrot.lane.b32.xlu0 %v803, 31
      %v2069 = vpop.permute.xlu0 %2068
      %2070 = vrot.lane.b32.xlu0 %v805, 31
      %v2071 = vpop.permute.xlu0 %2070
      %2072 = vrot.lane.b32.xlu0 %v807, 31
      %v2073 = vpop.permute.xlu0 %2072
      %2074 = vrot.lane.b32.xlu0 %v809, 31
      %v2075 = vpop.permute.xlu0 %2074
      %2076 = vrot.lane.b32.xlu0 %v811, 31
      %v2077 = vpop.permute.xlu0 %2076
      %2078 = vrot.lane.b32.xlu0 %v813, 31
      %v2079 = vpop.permute.xlu0 %2078
      %2080 = vrot.lane.b32.xlu0 %v804, 31
      %v2081 = vpop.permute.xlu0 %2080
      %2082 = vrot.lane.b32.xlu0 %v806, 31
      %v2083 = vpop.permute.xlu0 %2082
      %2084 = vrot.lane.b32.xlu0 %v808, 31
      %v2085 = vpop.permute.xlu0 %2084
      %2086 = vrot.lane.b32.xlu0 %v810, 31
      %v2087 = vpop.permute.xlu0 %2086
      %2088 = vrot.lane.b32.xlu0 %v812, 31
      %v2089 = vpop.permute.xlu0 %2088
      %2090 = vrot.lane.b32.xlu0 %v814, 31
      %v2091 = vpop.permute.xlu0 %2090
      %vm2092 = vcmp.lt.s32.totalorder %v882, 31
      %v2093 = vsel %vm2092, %v2069, %v2081
      %v2094 = vsel %vm2092, %v2071, %v2083
      %v2095 = vsel %vm2092, %v2073, %v2085
      %v2096 = vsel %vm2092, %v2075, %v2087
      %v2097 = vsel %vm2092, %v2077, %v2089
      %v2098 = vsel %vm2092, %v2079, %v2091
      %v2099 = vsel %vm2092, %v2081, %v2069
      %v2100 = vsel %vm2092, %v2083, %v2071
      %v2101 = vsel %vm2092, %v2085, %v2073
      %v2102 = vsel %vm2092, %v2087, %v2075
      %v2103 = vsel %vm2092, %v2089, %v2077
      %v2104 = vsel %vm2092, %v2091, %v2079
      %s2105 = scalar_lea.vmem %s7, 19
      %v2106 = vld [vmem:[%s2105] ss:$8 sm:$0x3]
      %2107 = vset.pattern.permute.xlu0 11
      %2108 = vperm.xlu0 %2107, %v797
      %v2109 = vpop.permute.xlu0 %2108
      %2111 = vset.pattern.permute.xlu0 11
      %2112 = vperm.xlu0 %2111, %v798
      %v2113 = vpop.permute.xlu0 %2112
      %2115 = vset.pattern.permute.xlu0 11
      %2116 = vperm.xlu0 %2115, %v799
      %v2117 = vpop.permute.xlu0 %2116
      %2119 = vset.pattern.permute.xlu0 11
      %2120 = vperm.xlu0 %2119, %v800
      %v2121 = vpop.permute.xlu0 %2120
      %2123 = vset.pattern.permute.xlu0 11
      %2124 = vperm.xlu0 %2123, %v801
      %v2125 = vpop.permute.xlu0 %2124
      %2127 = vset.pattern.permute.xlu0 11
      %2128 = vperm.xlu0 %2127, %v802
      %v2129 = vpop.permute.xlu0 %2128
      %v2132 = vlaneseq
      %v2133 = vshrl.u32 %v2132, 7
      %v2134 = vsub.s32 0, %v2133
      %v2135 = vrot.slane %v2106, %v2134
      %v2136 = vlaneseq
      %v2137 = vshrl.u32 %v2136, 7
      %v2138 = vsub.s32 1, %v2137
      %v2139 = vrot.slane %v2106, %v2138
      %v2142 = vmul.f32 %v2109, %v2135
      %v2143 = vmul.f32 %v2109, %v2139
      %v2144 = vmul.f32 %v2113, %v2135
      %v2145 = vmul.f32 %v2113, %v2139
      %v2146 = vmul.f32 %v2117, %v2135
      %v2147 = vmul.f32 %v2117, %v2139
      %v2148 = vmul.f32 %v2121, %v2135
      %v2149 = vmul.f32 %v2121, %v2139
      %v2150 = vmul.f32 %v2125, %v2135
      %v2151 = vmul.f32 %v2125, %v2139
      %v2152 = vmul.f32 %v2129, %v2135
      %v2153 = vmul.f32 %v2129, %v2139
      %v2154 = vmul.f32 %v2142, %v2099
      %v2155 = vmul.f32 %v2143, %v2093
      %v2156 = vmul.f32 %v2144, %v2100
      %v2157 = vmul.f32 %v2145, %v2094
      %v2158 = vmul.f32 %v2146, %v2101
      %v2159 = vmul.f32 %v2147, %v2095
      %v2160 = vmul.f32 %v2148, %v2102
      %v2161 = vmul.f32 %v2149, %v2096
      %v2162 = vmul.f32 %v2150, %v2103
      %v2163 = vmul.f32 %v2151, %v2097
      %v2164 = vmul.f32 %v2152, %v2104
      %v2165 = vmul.f32 %v2153, %v2098
      %v2166 = vadd.f32 %v2056, %v2154
      %v2167 = vadd.f32 %v2057, %v2155
      %v2168 = vadd.f32 %v2058, %v2156
      %v2169 = vadd.f32 %v2059, %v2157
      %v2170 = vadd.f32 %v2060, %v2158
      %v2171 = vadd.f32 %v2061, %v2159
      %v2172 = vadd.f32 %v2062, %v2160
      %v2173 = vadd.f32 %v2063, %v2161
      %v2174 = vadd.f32 %v2064, %v2162
      %v2175 = vadd.f32 %v2065, %v2163
      %v2176 = vadd.f32 %v2066, %v2164
      %v2177 = vadd.f32 %v2067, %v2165
      %2178 = vrot.lane.b32.xlu0 %v803, 30
      %v2179 = vpop.permute.xlu0 %2178
      %2180 = vrot.lane.b32.xlu0 %v805, 30
      %v2181 = vpop.permute.xlu0 %2180
      %2182 = vrot.lane.b32.xlu0 %v807, 30
      %v2183 = vpop.permute.xlu0 %2182
      %2184 = vrot.lane.b32.xlu0 %v809, 30
      %v2185 = vpop.permute.xlu0 %2184
      %2186 = vrot.lane.b32.xlu0 %v811, 30
      %v2187 = vpop.permute.xlu0 %2186
      %2188 = vrot.lane.b32.xlu0 %v813, 30
      %v2189 = vpop.permute.xlu0 %2188
      %2190 = vrot.lane.b32.xlu0 %v804, 30
      %v2191 = vpop.permute.xlu0 %2190
      %2192 = vrot.lane.b32.xlu0 %v806, 30
      %v2193 = vpop.permute.xlu0 %2192
      %2194 = vrot.lane.b32.xlu0 %v808, 30
      %v2195 = vpop.permute.xlu0 %2194
      %2196 = vrot.lane.b32.xlu0 %v810, 30
      %v2197 = vpop.permute.xlu0 %2196
      %2198 = vrot.lane.b32.xlu0 %v812, 30
      %v2199 = vpop.permute.xlu0 %2198
      %2200 = vrot.lane.b32.xlu0 %v814, 30
      %v2201 = vpop.permute.xlu0 %2200
      %vm2202 = vcmp.lt.s32.totalorder %v882, 30
      %v2203 = vsel %vm2202, %v2179, %v2191
      %v2204 = vsel %vm2202, %v2181, %v2193
      %v2205 = vsel %vm2202, %v2183, %v2195
      %v2206 = vsel %vm2202, %v2185, %v2197
      %v2207 = vsel %vm2202, %v2187, %v2199
      %v2208 = vsel %vm2202, %v2189, %v2201
      %v2209 = vsel %vm2202, %v2191, %v2179
      %v2210 = vsel %vm2202, %v2193, %v2181
      %v2211 = vsel %vm2202, %v2195, %v2183
      %v2212 = vsel %vm2202, %v2197, %v2185
      %v2213 = vsel %vm2202, %v2199, %v2187
      %v2214 = vsel %vm2202, %v2201, %v2189
      %s2215 = scalar_lea.vmem %s7, 20
      %v2216 = vld [vmem:[%s2215] ss:$8 sm:$0x3]
      %2217 = vset.pattern.permute.xlu0 12
      %2218 = vperm.xlu0 %2217, %v797
      %v2219 = vpop.permute.xlu0 %2218
      %2221 = vset.pattern.permute.xlu0 12
      %2222 = vperm.xlu0 %2221, %v798
      %v2223 = vpop.permute.xlu0 %2222
      %2225 = vset.pattern.permute.xlu0 12
      %2226 = vperm.xlu0 %2225, %v799
      %v2227 = vpop.permute.xlu0 %2226
      %2229 = vset.pattern.permute.xlu0 12
      %2230 = vperm.xlu0 %2229, %v800
      %v2231 = vpop.permute.xlu0 %2230
      %2233 = vset.pattern.permute.xlu0 12
      %2234 = vperm.xlu0 %2233, %v801
      %v2235 = vpop.permute.xlu0 %2234
      %2237 = vset.pattern.permute.xlu0 12
      %2238 = vperm.xlu0 %2237, %v802
      %v2239 = vpop.permute.xlu0 %2238
      %v2242 = vlaneseq
      %v2243 = vshrl.u32 %v2242, 7
      %v2244 = vsub.s32 0, %v2243
      %v2245 = vrot.slane %v2216, %v2244
      %v2246 = vlaneseq
      %v2247 = vshrl.u32 %v2246, 7
      %v2248 = vsub.s32 1, %v2247
      %v2249 = vrot.slane %v2216, %v2248
      %v2252 = vmul.f32 %v2219, %v2245
      %v2253 = vmul.f32 %v2219, %v2249
      %v2254 = vmul.f32 %v2223, %v2245
      %v2255 = vmul.f32 %v2223, %v2249
      %v2256 = vmul.f32 %v2227, %v2245
      %v2257 = vmul.f32 %v2227, %v2249
      %v2258 = vmul.f32 %v2231, %v2245
      %v2259 = vmul.f32 %v2231, %v2249
      %v2260 = vmul.f32 %v2235, %v2245
      %v2261 = vmul.f32 %v2235, %v2249
      %v2262 = vmul.f32 %v2239, %v2245
      %v2263 = vmul.f32 %v2239, %v2249
      %v2264 = vmul.f32 %v2252, %v2209
      %v2265 = vmul.f32 %v2253, %v2203
      %v2266 = vmul.f32 %v2254, %v2210
      %v2267 = vmul.f32 %v2255, %v2204
      %v2268 = vmul.f32 %v2256, %v2211
      %v2269 = vmul.f32 %v2257, %v2205
      %v2270 = vmul.f32 %v2258, %v2212
      %v2271 = vmul.f32 %v2259, %v2206
      %v2272 = vmul.f32 %v2260, %v2213
      %v2273 = vmul.f32 %v2261, %v2207
      %v2274 = vmul.f32 %v2262, %v2214
      %v2275 = vmul.f32 %v2263, %v2208
      %v2276 = vadd.f32 %v2166, %v2264
      %v2277 = vadd.f32 %v2167, %v2265
      %v2278 = vadd.f32 %v2168, %v2266
      %v2279 = vadd.f32 %v2169, %v2267
      %v2280 = vadd.f32 %v2170, %v2268
      %v2281 = vadd.f32 %v2171, %v2269
      %v2282 = vadd.f32 %v2172, %v2270
      %v2283 = vadd.f32 %v2173, %v2271
      %v2284 = vadd.f32 %v2174, %v2272
      %v2285 = vadd.f32 %v2175, %v2273
      %v2286 = vadd.f32 %v2176, %v2274
      %v2287 = vadd.f32 %v2177, %v2275
      %2288 = vrot.lane.b32.xlu0 %v803, 29
      %v2289 = vpop.permute.xlu0 %2288
      %2290 = vrot.lane.b32.xlu0 %v805, 29
      %v2291 = vpop.permute.xlu0 %2290
      %2292 = vrot.lane.b32.xlu0 %v807, 29
      %v2293 = vpop.permute.xlu0 %2292
      %2294 = vrot.lane.b32.xlu0 %v809, 29
      %v2295 = vpop.permute.xlu0 %2294
      %2296 = vrot.lane.b32.xlu0 %v811, 29
      %v2297 = vpop.permute.xlu0 %2296
      %2298 = vrot.lane.b32.xlu0 %v813, 29
      %v2299 = vpop.permute.xlu0 %2298
      %2300 = vrot.lane.b32.xlu0 %v804, 29
      %v2301 = vpop.permute.xlu0 %2300
      %2302 = vrot.lane.b32.xlu0 %v806, 29
      %v2303 = vpop.permute.xlu0 %2302
      %2304 = vrot.lane.b32.xlu0 %v808, 29
      %v2305 = vpop.permute.xlu0 %2304
      %2306 = vrot.lane.b32.xlu0 %v810, 29
      %v2307 = vpop.permute.xlu0 %2306
      %2308 = vrot.lane.b32.xlu0 %v812, 29
      %v2309 = vpop.permute.xlu0 %2308
      %2310 = vrot.lane.b32.xlu0 %v814, 29
      %v2311 = vpop.permute.xlu0 %2310
      %vm2312 = vcmp.lt.s32.totalorder %v882, 29
      %v2313 = vsel %vm2312, %v2289, %v2301
      %v2314 = vsel %vm2312, %v2291, %v2303
      %v2315 = vsel %vm2312, %v2293, %v2305
      %v2316 = vsel %vm2312, %v2295, %v2307
      %v2317 = vsel %vm2312, %v2297, %v2309
      %v2318 = vsel %vm2312, %v2299, %v2311
      %v2319 = vsel %vm2312, %v2301, %v2289
      %v2320 = vsel %vm2312, %v2303, %v2291
      %v2321 = vsel %vm2312, %v2305, %v2293
      %v2322 = vsel %vm2312, %v2307, %v2295
      %v2323 = vsel %vm2312, %v2309, %v2297
      %v2324 = vsel %vm2312, %v2311, %v2299
      %s2325 = scalar_lea.vmem %s7, 21
      %v2326 = vld [vmem:[%s2325] ss:$8 sm:$0x3]
      %2327 = vset.pattern.permute.xlu0 13
      %2328 = vperm.xlu0 %2327, %v797
      %v2329 = vpop.permute.xlu0 %2328
      %2331 = vset.pattern.permute.xlu0 13
      %2332 = vperm.xlu0 %2331, %v798
      %v2333 = vpop.permute.xlu0 %2332
      %2335 = vset.pattern.permute.xlu0 13
      %2336 = vperm.xlu0 %2335, %v799
      %v2337 = vpop.permute.xlu0 %2336
      %2339 = vset.pattern.permute.xlu0 13
      %2340 = vperm.xlu0 %2339, %v800
      %v2341 = vpop.permute.xlu0 %2340
      %2343 = vset.pattern.permute.xlu0 13
      %2344 = vperm.xlu0 %2343, %v801
      %v2345 = vpop.permute.xlu0 %2344
      %2347 = vset.pattern.permute.xlu0 13
      %2348 = vperm.xlu0 %2347, %v802
      %v2349 = vpop.permute.xlu0 %2348
      %v2352 = vlaneseq
      %v2353 = vshrl.u32 %v2352, 7
      %v2354 = vsub.s32 0, %v2353
      %v2355 = vrot.slane %v2326, %v2354
      %v2356 = vlaneseq
      %v2357 = vshrl.u32 %v2356, 7
      %v2358 = vsub.s32 1, %v2357
      %v2359 = vrot.slane %v2326, %v2358
      %v2362 = vmul.f32 %v2329, %v2355
      %v2363 = vmul.f32 %v2329, %v2359
      %v2364 = vmul.f32 %v2333, %v2355
      %v2365 = vmul.f32 %v2333, %v2359
      %v2366 = vmul.f32 %v2337, %v2355
      %v2367 = vmul.f32 %v2337, %v2359
      %v2368 = vmul.f32 %v2341, %v2355
      %v2369 = vmul.f32 %v2341, %v2359
      %v2370 = vmul.f32 %v2345, %v2355
      %v2371 = vmul.f32 %v2345, %v2359
      %v2372 = vmul.f32 %v2349, %v2355
      %v2373 = vmul.f32 %v2349, %v2359
      %v2374 = vmul.f32 %v2362, %v2319
      %v2375 = vmul.f32 %v2363, %v2313
      %v2376 = vmul.f32 %v2364, %v2320
      %v2377 = vmul.f32 %v2365, %v2314
      %v2378 = vmul.f32 %v2366, %v2321
      %v2379 = vmul.f32 %v2367, %v2315
      %v2380 = vmul.f32 %v2368, %v2322
      %v2381 = vmul.f32 %v2369, %v2316
      %v2382 = vmul.f32 %v2370, %v2323
      %v2383 = vmul.f32 %v2371, %v2317
      %v2384 = vmul.f32 %v2372, %v2324
      %v2385 = vmul.f32 %v2373, %v2318
      %v2386 = vadd.f32 %v2276, %v2374
      %v2387 = vadd.f32 %v2277, %v2375
      %v2388 = vadd.f32 %v2278, %v2376
      %v2389 = vadd.f32 %v2279, %v2377
      %v2390 = vadd.f32 %v2280, %v2378
      %v2391 = vadd.f32 %v2281, %v2379
      %v2392 = vadd.f32 %v2282, %v2380
      %v2393 = vadd.f32 %v2283, %v2381
      %v2394 = vadd.f32 %v2284, %v2382
      %v2395 = vadd.f32 %v2285, %v2383
      %v2396 = vadd.f32 %v2286, %v2384
      %v2397 = vadd.f32 %v2287, %v2385
      %2398 = vrot.lane.b32.xlu0 %v803, 19
      %v2399 = vpop.permute.xlu0 %2398
      %2400 = vrot.lane.b32.xlu0 %v805, 19
      %v2401 = vpop.permute.xlu0 %2400
      %2402 = vrot.lane.b32.xlu0 %v807, 19
      %v2403 = vpop.permute.xlu0 %2402
      %2404 = vrot.lane.b32.xlu0 %v809, 19
      %v2405 = vpop.permute.xlu0 %2404
      %2406 = vrot.lane.b32.xlu0 %v811, 19
      %v2407 = vpop.permute.xlu0 %2406
      %2408 = vrot.lane.b32.xlu0 %v813, 19
      %v2409 = vpop.permute.xlu0 %2408
      %2410 = vrot.lane.b32.xlu0 %v804, 19
      %v2411 = vpop.permute.xlu0 %2410
      %2412 = vrot.lane.b32.xlu0 %v806, 19
      %v2413 = vpop.permute.xlu0 %2412
      %2414 = vrot.lane.b32.xlu0 %v808, 19
      %v2415 = vpop.permute.xlu0 %2414
      %2416 = vrot.lane.b32.xlu0 %v810, 19
      %v2417 = vpop.permute.xlu0 %2416
      %2418 = vrot.lane.b32.xlu0 %v812, 19
      %v2419 = vpop.permute.xlu0 %2418
      %2420 = vrot.lane.b32.xlu0 %v814, 19
      %v2421 = vpop.permute.xlu0 %2420
      %vm2422 = vcmp.lt.s32.totalorder %v882, 19
      %v2423 = vsel %vm2422, %v2399, %v2411
      %v2424 = vsel %vm2422, %v2401, %v2413
      %v2425 = vsel %vm2422, %v2403, %v2415
      %v2426 = vsel %vm2422, %v2405, %v2417
      %v2427 = vsel %vm2422, %v2407, %v2419
      %v2428 = vsel %vm2422, %v2409, %v2421
      %v2429 = vsel %vm2422, %v2411, %v2399
      %v2430 = vsel %vm2422, %v2413, %v2401
      %v2431 = vsel %vm2422, %v2415, %v2403
      %v2432 = vsel %vm2422, %v2417, %v2405
      %v2433 = vsel %vm2422, %v2419, %v2407
      %v2434 = vsel %vm2422, %v2421, %v2409
      %s2435 = scalar_lea.vmem %s7, 22
      %v2436 = vld [vmem:[%s2435] ss:$8 sm:$0x3]
      %2437 = vset.pattern.permute.xlu0 14
      %2438 = vperm.xlu0 %2437, %v797
      %v2439 = vpop.permute.xlu0 %2438
      %2441 = vset.pattern.permute.xlu0 14
      %2442 = vperm.xlu0 %2441, %v798
      %v2443 = vpop.permute.xlu0 %2442
      %2445 = vset.pattern.permute.xlu0 14
      %2446 = vperm.xlu0 %2445, %v799
      %v2447 = vpop.permute.xlu0 %2446
      %2449 = vset.pattern.permute.xlu0 14
      %2450 = vperm.xlu0 %2449, %v800
      %v2451 = vpop.permute.xlu0 %2450
      %2453 = vset.pattern.permute.xlu0 14
      %2454 = vperm.xlu0 %2453, %v801
      %v2455 = vpop.permute.xlu0 %2454
      %2457 = vset.pattern.permute.xlu0 14
      %2458 = vperm.xlu0 %2457, %v802
      %v2459 = vpop.permute.xlu0 %2458
      %v2462 = vlaneseq
      %v2463 = vshrl.u32 %v2462, 7
      %v2464 = vsub.s32 0, %v2463
      %v2465 = vrot.slane %v2436, %v2464
      %v2466 = vlaneseq
      %v2467 = vshrl.u32 %v2466, 7
      %v2468 = vsub.s32 1, %v2467
      %v2469 = vrot.slane %v2436, %v2468
      %v2472 = vmul.f32 %v2439, %v2465
      %v2473 = vmul.f32 %v2439, %v2469
      %v2474 = vmul.f32 %v2443, %v2465
      %v2475 = vmul.f32 %v2443, %v2469
      %v2476 = vmul.f32 %v2447, %v2465
      %v2477 = vmul.f32 %v2447, %v2469
      %v2478 = vmul.f32 %v2451, %v2465
      %v2479 = vmul.f32 %v2451, %v2469
      %v2480 = vmul.f32 %v2455, %v2465
      %v2481 = vmul.f32 %v2455, %v2469
      %v2482 = vmul.f32 %v2459, %v2465
      %v2483 = vmul.f32 %v2459, %v2469
      %v2484 = vmul.f32 %v2472, %v2429
      %v2485 = vmul.f32 %v2473, %v2423
      %v2486 = vmul.f32 %v2474, %v2430
      %v2487 = vmul.f32 %v2475, %v2424
      %v2488 = vmul.f32 %v2476, %v2431
      %v2489 = vmul.f32 %v2477, %v2425
      %v2490 = vmul.f32 %v2478, %v2432
      %v2491 = vmul.f32 %v2479, %v2426
      %v2492 = vmul.f32 %v2480, %v2433
      %v2493 = vmul.f32 %v2481, %v2427
      %v2494 = vmul.f32 %v2482, %v2434
      %v2495 = vmul.f32 %v2483, %v2428
      %v2496 = vadd.f32 %v2386, %v2484
      %v2497 = vadd.f32 %v2387, %v2485
      %v2498 = vadd.f32 %v2388, %v2486
      %v2499 = vadd.f32 %v2389, %v2487
      %v2500 = vadd.f32 %v2390, %v2488
      %v2501 = vadd.f32 %v2391, %v2489
      %v2502 = vadd.f32 %v2392, %v2490
      %v2503 = vadd.f32 %v2393, %v2491
      %v2504 = vadd.f32 %v2394, %v2492
      %v2505 = vadd.f32 %v2395, %v2493
      %v2506 = vadd.f32 %v2396, %v2494
      %v2507 = vadd.f32 %v2397, %v2495
      %2508 = vrot.lane.b32.xlu0 %v803, 18
      %v2509 = vpop.permute.xlu0 %2508
      %2510 = vrot.lane.b32.xlu0 %v805, 18
      %v2511 = vpop.permute.xlu0 %2510
      %2512 = vrot.lane.b32.xlu0 %v807, 18
      %v2513 = vpop.permute.xlu0 %2512
      %2514 = vrot.lane.b32.xlu0 %v809, 18
      %v2515 = vpop.permute.xlu0 %2514
      %2516 = vrot.lane.b32.xlu0 %v811, 18
      %v2517 = vpop.permute.xlu0 %2516
      %2518 = vrot.lane.b32.xlu0 %v813, 18
      %v2519 = vpop.permute.xlu0 %2518
      %2520 = vrot.lane.b32.xlu0 %v804, 18
      %v2521 = vpop.permute.xlu0 %2520
      %2522 = vrot.lane.b32.xlu0 %v806, 18
      %v2523 = vpop.permute.xlu0 %2522
      %2524 = vrot.lane.b32.xlu0 %v808, 18
      %v2525 = vpop.permute.xlu0 %2524
      %2526 = vrot.lane.b32.xlu0 %v810, 18
      %v2527 = vpop.permute.xlu0 %2526
      %2528 = vrot.lane.b32.xlu0 %v812, 18
      %v2529 = vpop.permute.xlu0 %2528
      %2530 = vrot.lane.b32.xlu0 %v814, 18
      %v2531 = vpop.permute.xlu0 %2530
      %vm2532 = vcmp.lt.s32.totalorder %v882, 18
      %v2533 = vsel %vm2532, %v2509, %v2521
      %v2534 = vsel %vm2532, %v2511, %v2523
      %v2535 = vsel %vm2532, %v2513, %v2525
      %v2536 = vsel %vm2532, %v2515, %v2527
      %v2537 = vsel %vm2532, %v2517, %v2529
      %v2538 = vsel %vm2532, %v2519, %v2531
      %v2539 = vsel %vm2532, %v2521, %v2509
      %v2540 = vsel %vm2532, %v2523, %v2511
      %v2541 = vsel %vm2532, %v2525, %v2513
      %v2542 = vsel %vm2532, %v2527, %v2515
      %v2543 = vsel %vm2532, %v2529, %v2517
      %v2544 = vsel %vm2532, %v2531, %v2519
      %s2545 = scalar_lea.vmem %s7, 23
      %v2546 = vld [vmem:[%s2545] ss:$8 sm:$0x3]
      %2547 = vset.pattern.permute.xlu0 15
      %2548 = vperm.xlu0 %2547, %v797
      %v2549 = vpop.permute.xlu0 %2548
      %2551 = vset.pattern.permute.xlu0 15
      %2552 = vperm.xlu0 %2551, %v798
      %v2553 = vpop.permute.xlu0 %2552
      %2555 = vset.pattern.permute.xlu0 15
      %2556 = vperm.xlu0 %2555, %v799
      %v2557 = vpop.permute.xlu0 %2556
      %2559 = vset.pattern.permute.xlu0 15
      %2560 = vperm.xlu0 %2559, %v800
      %v2561 = vpop.permute.xlu0 %2560
      %2563 = vset.pattern.permute.xlu0 15
      %2564 = vperm.xlu0 %2563, %v801
      %v2565 = vpop.permute.xlu0 %2564
      %2567 = vset.pattern.permute.xlu0 15
      %2568 = vperm.xlu0 %2567, %v802
      %v2569 = vpop.permute.xlu0 %2568
      %v2572 = vlaneseq
      %v2573 = vshrl.u32 %v2572, 7
      %v2574 = vsub.s32 0, %v2573
      %v2575 = vrot.slane %v2546, %v2574
      %v2576 = vlaneseq
      %v2577 = vshrl.u32 %v2576, 7
      %v2578 = vsub.s32 1, %v2577
      %v2579 = vrot.slane %v2546, %v2578
      %v2582 = vmul.f32 %v2549, %v2575
      %v2583 = vmul.f32 %v2549, %v2579
      %v2584 = vmul.f32 %v2553, %v2575
      %v2585 = vmul.f32 %v2553, %v2579
      %v2586 = vmul.f32 %v2557, %v2575
      %v2587 = vmul.f32 %v2557, %v2579
      %v2588 = vmul.f32 %v2561, %v2575
      %v2589 = vmul.f32 %v2561, %v2579
      %v2590 = vmul.f32 %v2565, %v2575
      %v2591 = vmul.f32 %v2565, %v2579
      %v2592 = vmul.f32 %v2569, %v2575
      %v2593 = vmul.f32 %v2569, %v2579
      %v2594 = vmul.f32 %v2582, %v2539
      %v2595 = vmul.f32 %v2583, %v2533
      %v2596 = vmul.f32 %v2584, %v2540
      %v2597 = vmul.f32 %v2585, %v2534
      %v2598 = vmul.f32 %v2586, %v2541
      %v2599 = vmul.f32 %v2587, %v2535
      %v2600 = vmul.f32 %v2588, %v2542
      %v2601 = vmul.f32 %v2589, %v2536
      %v2602 = vmul.f32 %v2590, %v2543
      %v2603 = vmul.f32 %v2591, %v2537
      %v2604 = vmul.f32 %v2592, %v2544
      %v2605 = vmul.f32 %v2593, %v2538
      %v2606 = vadd.f32 %v2496, %v2594
      %v2607 = vadd.f32 %v2497, %v2595
      %v2608 = vadd.f32 %v2498, %v2596
      %v2609 = vadd.f32 %v2499, %v2597
      %v2610 = vadd.f32 %v2500, %v2598
      %v2611 = vadd.f32 %v2501, %v2599
      %v2612 = vadd.f32 %v2502, %v2600
      %v2613 = vadd.f32 %v2503, %v2601
      %v2614 = vadd.f32 %v2504, %v2602
      %v2615 = vadd.f32 %v2505, %v2603
      %v2616 = vadd.f32 %v2506, %v2604
      %v2617 = vadd.f32 %v2507, %v2605
      %2618 = vrot.lane.b32.xlu0 %v803, 17
      %v2619 = vpop.permute.xlu0 %2618
      %2620 = vrot.lane.b32.xlu0 %v805, 17
      %v2621 = vpop.permute.xlu0 %2620
      %2622 = vrot.lane.b32.xlu0 %v807, 17
      %v2623 = vpop.permute.xlu0 %2622
      %2624 = vrot.lane.b32.xlu0 %v809, 17
      %v2625 = vpop.permute.xlu0 %2624
      %2626 = vrot.lane.b32.xlu0 %v811, 17
      %v2627 = vpop.permute.xlu0 %2626
      %2628 = vrot.lane.b32.xlu0 %v813, 17
      %v2629 = vpop.permute.xlu0 %2628
      %2630 = vrot.lane.b32.xlu0 %v804, 17
      %v2631 = vpop.permute.xlu0 %2630
      %2632 = vrot.lane.b32.xlu0 %v806, 17
      %v2633 = vpop.permute.xlu0 %2632
      %2634 = vrot.lane.b32.xlu0 %v808, 17
      %v2635 = vpop.permute.xlu0 %2634
      %2636 = vrot.lane.b32.xlu0 %v810, 17
      %v2637 = vpop.permute.xlu0 %2636
      %2638 = vrot.lane.b32.xlu0 %v812, 17
      %v2639 = vpop.permute.xlu0 %2638
      %2640 = vrot.lane.b32.xlu0 %v814, 17
      %v2641 = vpop.permute.xlu0 %2640
      %vm2642 = vcmp.lt.s32.totalorder %v882, 17
      %v2643 = vsel %vm2642, %v2619, %v2631
      %v2644 = vsel %vm2642, %v2621, %v2633
      %v2645 = vsel %vm2642, %v2623, %v2635
      %v2646 = vsel %vm2642, %v2625, %v2637
      %v2647 = vsel %vm2642, %v2627, %v2639
      %v2648 = vsel %vm2642, %v2629, %v2641
      %v2649 = vsel %vm2642, %v2631, %v2619
      %v2650 = vsel %vm2642, %v2633, %v2621
      %v2651 = vsel %vm2642, %v2635, %v2623
      %v2652 = vsel %vm2642, %v2637, %v2625
      %v2653 = vsel %vm2642, %v2639, %v2627
      %v2654 = vsel %vm2642, %v2641, %v2629
      %s2655 = scalar_lea.vmem %s7, 32
      %v2656 = vld [vmem:[%s2655] ss:$8 sm:$0x3]
      %2657 = vset.pattern.permute.xlu0 16
      %2658 = vperm.xlu0 %2657, %v797
      %v2659 = vpop.permute.xlu0 %2658
      %2661 = vset.pattern.permute.xlu0 16
      %2662 = vperm.xlu0 %2661, %v798
      %v2663 = vpop.permute.xlu0 %2662
      %2665 = vset.pattern.permute.xlu0 16
      %2666 = vperm.xlu0 %2665, %v799
      %v2667 = vpop.permute.xlu0 %2666
      %2669 = vset.pattern.permute.xlu0 16
      %2670 = vperm.xlu0 %2669, %v800
      %v2671 = vpop.permute.xlu0 %2670
      %2673 = vset.pattern.permute.xlu0 16
      %2674 = vperm.xlu0 %2673, %v801
      %v2675 = vpop.permute.xlu0 %2674
      %2677 = vset.pattern.permute.xlu0 16
      %2678 = vperm.xlu0 %2677, %v802
      %v2679 = vpop.permute.xlu0 %2678
      %v2682 = vlaneseq
      %v2683 = vshrl.u32 %v2682, 7
      %v2684 = vsub.s32 0, %v2683
      %v2685 = vrot.slane %v2656, %v2684
      %v2686 = vlaneseq
      %v2687 = vshrl.u32 %v2686, 7
      %v2688 = vsub.s32 1, %v2687
      %v2689 = vrot.slane %v2656, %v2688
      %v2692 = vmul.f32 %v2659, %v2685
      %v2693 = vmul.f32 %v2659, %v2689
      %v2694 = vmul.f32 %v2663, %v2685
      %v2695 = vmul.f32 %v2663, %v2689
      %v2696 = vmul.f32 %v2667, %v2685
      %v2697 = vmul.f32 %v2667, %v2689
      %v2698 = vmul.f32 %v2671, %v2685
      %v2699 = vmul.f32 %v2671, %v2689
      %v2700 = vmul.f32 %v2675, %v2685
      %v2701 = vmul.f32 %v2675, %v2689
      %v2702 = vmul.f32 %v2679, %v2685
      %v2703 = vmul.f32 %v2679, %v2689
      %v2704 = vmul.f32 %v2692, %v2649
      %v2705 = vmul.f32 %v2693, %v2643
      %v2706 = vmul.f32 %v2694, %v2650
      %v2707 = vmul.f32 %v2695, %v2644
      %v2708 = vmul.f32 %v2696, %v2651
      %v2709 = vmul.f32 %v2697, %v2645
      %v2710 = vmul.f32 %v2698, %v2652
      %v2711 = vmul.f32 %v2699, %v2646
      %v2712 = vmul.f32 %v2700, %v2653
      %v2713 = vmul.f32 %v2701, %v2647
      %v2714 = vmul.f32 %v2702, %v2654
      %v2715 = vmul.f32 %v2703, %v2648
      %v2716 = vadd.f32 %v2606, %v2704
      %v2717 = vadd.f32 %v2607, %v2705
      %v2718 = vadd.f32 %v2608, %v2706
      %v2719 = vadd.f32 %v2609, %v2707
      %v2720 = vadd.f32 %v2610, %v2708
      %v2721 = vadd.f32 %v2611, %v2709
      %v2722 = vadd.f32 %v2612, %v2710
      %v2723 = vadd.f32 %v2613, %v2711
      %v2724 = vadd.f32 %v2614, %v2712
      %v2725 = vadd.f32 %v2615, %v2713
      %v2726 = vadd.f32 %v2616, %v2714
      %v2727 = vadd.f32 %v2617, %v2715
      %2728 = vrot.lane.b32.xlu0 %v803, 16
      %v2729 = vpop.permute.xlu0 %2728
      %2730 = vrot.lane.b32.xlu0 %v805, 16
      %v2731 = vpop.permute.xlu0 %2730
      %2732 = vrot.lane.b32.xlu0 %v807, 16
      %v2733 = vpop.permute.xlu0 %2732
      %2734 = vrot.lane.b32.xlu0 %v809, 16
      %v2735 = vpop.permute.xlu0 %2734
      %2736 = vrot.lane.b32.xlu0 %v811, 16
      %v2737 = vpop.permute.xlu0 %2736
      %2738 = vrot.lane.b32.xlu0 %v813, 16
      %v2739 = vpop.permute.xlu0 %2738
      %2740 = vrot.lane.b32.xlu0 %v804, 16
      %v2741 = vpop.permute.xlu0 %2740
      %2742 = vrot.lane.b32.xlu0 %v806, 16
      %v2743 = vpop.permute.xlu0 %2742
      %2744 = vrot.lane.b32.xlu0 %v808, 16
      %v2745 = vpop.permute.xlu0 %2744
      %2746 = vrot.lane.b32.xlu0 %v810, 16
      %v2747 = vpop.permute.xlu0 %2746
      %2748 = vrot.lane.b32.xlu0 %v812, 16
      %v2749 = vpop.permute.xlu0 %2748
      %2750 = vrot.lane.b32.xlu0 %v814, 16
      %v2751 = vpop.permute.xlu0 %2750
      %vm2752 = vcmp.lt.s32.totalorder %v882, 16
      %v2753 = vsel %vm2752, %v2729, %v2741
      %v2754 = vsel %vm2752, %v2731, %v2743
      %v2755 = vsel %vm2752, %v2733, %v2745
      %v2756 = vsel %vm2752, %v2735, %v2747
      %v2757 = vsel %vm2752, %v2737, %v2749
      %v2758 = vsel %vm2752, %v2739, %v2751
      %v2759 = vsel %vm2752, %v2741, %v2729
      %v2760 = vsel %vm2752, %v2743, %v2731
      %v2761 = vsel %vm2752, %v2745, %v2733
      %v2762 = vsel %vm2752, %v2747, %v2735
      %v2763 = vsel %vm2752, %v2749, %v2737
      %v2764 = vsel %vm2752, %v2751, %v2739
      %s2765 = scalar_lea.vmem %s7, 33
      %v2766 = vld [vmem:[%s2765] ss:$8 sm:$0x3]
      %2767 = vset.pattern.permute.xlu0 17
      %2768 = vperm.xlu0 %2767, %v797
      %v2769 = vpop.permute.xlu0 %2768
      %2771 = vset.pattern.permute.xlu0 17
      %2772 = vperm.xlu0 %2771, %v798
      %v2773 = vpop.permute.xlu0 %2772
      %2775 = vset.pattern.permute.xlu0 17
      %2776 = vperm.xlu0 %2775, %v799
      %v2777 = vpop.permute.xlu0 %2776
      %2779 = vset.pattern.permute.xlu0 17
      %2780 = vperm.xlu0 %2779, %v800
      %v2781 = vpop.permute.xlu0 %2780
      %2783 = vset.pattern.permute.xlu0 17
      %2784 = vperm.xlu0 %2783, %v801
      %v2785 = vpop.permute.xlu0 %2784
      %2787 = vset.pattern.permute.xlu0 17
      %2788 = vperm.xlu0 %2787, %v802
      %v2789 = vpop.permute.xlu0 %2788
      %v2792 = vlaneseq
      %v2793 = vshrl.u32 %v2792, 7
      %v2794 = vsub.s32 0, %v2793
      %v2795 = vrot.slane %v2766, %v2794
      %v2796 = vlaneseq
      %v2797 = vshrl.u32 %v2796, 7
      %v2798 = vsub.s32 1, %v2797
      %v2799 = vrot.slane %v2766, %v2798
      %v2802 = vmul.f32 %v2769, %v2795
      %v2803 = vmul.f32 %v2769, %v2799
      %v2804 = vmul.f32 %v2773, %v2795
      %v2805 = vmul.f32 %v2773, %v2799
      %v2806 = vmul.f32 %v2777, %v2795
      %v2807 = vmul.f32 %v2777, %v2799
      %v2808 = vmul.f32 %v2781, %v2795
      %v2809 = vmul.f32 %v2781, %v2799
      %v2810 = vmul.f32 %v2785, %v2795
      %v2811 = vmul.f32 %v2785, %v2799
      %v2812 = vmul.f32 %v2789, %v2795
      %v2813 = vmul.f32 %v2789, %v2799
      %v2814 = vmul.f32 %v2802, %v2759
      %v2815 = vmul.f32 %v2803, %v2753
      %v2816 = vmul.f32 %v2804, %v2760
      %v2817 = vmul.f32 %v2805, %v2754
      %v2818 = vmul.f32 %v2806, %v2761
      %v2819 = vmul.f32 %v2807, %v2755
      %v2820 = vmul.f32 %v2808, %v2762
      %v2821 = vmul.f32 %v2809, %v2756
      %v2822 = vmul.f32 %v2810, %v2763
      %v2823 = vmul.f32 %v2811, %v2757
      %v2824 = vmul.f32 %v2812, %v2764
      %v2825 = vmul.f32 %v2813, %v2758
      %v2826 = vadd.f32 %v2716, %v2814
      %v2827 = vadd.f32 %v2717, %v2815
      %v2828 = vadd.f32 %v2718, %v2816
      %v2829 = vadd.f32 %v2719, %v2817
      %v2830 = vadd.f32 %v2720, %v2818
      %v2831 = vadd.f32 %v2721, %v2819
      %v2832 = vadd.f32 %v2722, %v2820
      %v2833 = vadd.f32 %v2723, %v2821
      %v2834 = vadd.f32 %v2724, %v2822
      %v2835 = vadd.f32 %v2725, %v2823
      %v2836 = vadd.f32 %v2726, %v2824
      %v2837 = vadd.f32 %v2727, %v2825
      %2838 = vrot.lane.b32.xlu0 %v803, 15
      %v2839 = vpop.permute.xlu0 %2838
      %2840 = vrot.lane.b32.xlu0 %v805, 15
      %v2841 = vpop.permute.xlu0 %2840
      %2842 = vrot.lane.b32.xlu0 %v807, 15
      %v2843 = vpop.permute.xlu0 %2842
      %2844 = vrot.lane.b32.xlu0 %v809, 15
      %v2845 = vpop.permute.xlu0 %2844
      %2846 = vrot.lane.b32.xlu0 %v811, 15
      %v2847 = vpop.permute.xlu0 %2846
      %2848 = vrot.lane.b32.xlu0 %v813, 15
      %v2849 = vpop.permute.xlu0 %2848
      %2850 = vrot.lane.b32.xlu0 %v804, 15
      %v2851 = vpop.permute.xlu0 %2850
      %2852 = vrot.lane.b32.xlu0 %v806, 15
      %v2853 = vpop.permute.xlu0 %2852
      %2854 = vrot.lane.b32.xlu0 %v808, 15
      %v2855 = vpop.permute.xlu0 %2854
      %2856 = vrot.lane.b32.xlu0 %v810, 15
      %v2857 = vpop.permute.xlu0 %2856
      %2858 = vrot.lane.b32.xlu0 %v812, 15
      %v2859 = vpop.permute.xlu0 %2858
      %2860 = vrot.lane.b32.xlu0 %v814, 15
      %v2861 = vpop.permute.xlu0 %2860
      %vm2862 = vcmp.lt.s32.totalorder %v882, 15
      %v2863 = vsel %vm2862, %v2839, %v2851
      %v2864 = vsel %vm2862, %v2841, %v2853
      %v2865 = vsel %vm2862, %v2843, %v2855
      %v2866 = vsel %vm2862, %v2845, %v2857
      %v2867 = vsel %vm2862, %v2847, %v2859
      %v2868 = vsel %vm2862, %v2849, %v2861
      %v2869 = vsel %vm2862, %v2851, %v2839
      %v2870 = vsel %vm2862, %v2853, %v2841
      %v2871 = vsel %vm2862, %v2855, %v2843
      %v2872 = vsel %vm2862, %v2857, %v2845
      %v2873 = vsel %vm2862, %v2859, %v2847
      %v2874 = vsel %vm2862, %v2861, %v2849
      %s2875 = scalar_lea.vmem %s7, 34
      %v2876 = vld [vmem:[%s2875] ss:$8 sm:$0x3]
      %2877 = vset.pattern.permute.xlu0 18
      %2878 = vperm.xlu0 %2877, %v797
      %v2879 = vpop.permute.xlu0 %2878
      %2881 = vset.pattern.permute.xlu0 18
      %2882 = vperm.xlu0 %2881, %v798
      %v2883 = vpop.permute.xlu0 %2882
      %2885 = vset.pattern.permute.xlu0 18
      %2886 = vperm.xlu0 %2885, %v799
      %v2887 = vpop.permute.xlu0 %2886
      %2889 = vset.pattern.permute.xlu0 18
      %2890 = vperm.xlu0 %2889, %v800
      %v2891 = vpop.permute.xlu0 %2890
      %2893 = vset.pattern.permute.xlu0 18
      %2894 = vperm.xlu0 %2893, %v801
      %v2895 = vpop.permute.xlu0 %2894
      %2897 = vset.pattern.permute.xlu0 18
      %2898 = vperm.xlu0 %2897, %v802
      %v2899 = vpop.permute.xlu0 %2898
      %v2902 = vlaneseq
      %v2903 = vshrl.u32 %v2902, 7
      %v2904 = vsub.s32 0, %v2903
      %v2905 = vrot.slane %v2876, %v2904
      %v2906 = vlaneseq
      %v2907 = vshrl.u32 %v2906, 7
      %v2908 = vsub.s32 1, %v2907
      %v2909 = vrot.slane %v2876, %v2908
      %v2912 = vmul.f32 %v2879, %v2905
      %v2913 = vmul.f32 %v2879, %v2909
      %v2914 = vmul.f32 %v2883, %v2905
      %v2915 = vmul.f32 %v2883, %v2909
      %v2916 = vmul.f32 %v2887, %v2905
      %v2917 = vmul.f32 %v2887, %v2909
      %v2918 = vmul.f32 %v2891, %v2905
      %v2919 = vmul.f32 %v2891, %v2909
      %v2920 = vmul.f32 %v2895, %v2905
      %v2921 = vmul.f32 %v2895, %v2909
      %v2922 = vmul.f32 %v2899, %v2905
      %v2923 = vmul.f32 %v2899, %v2909
      %v2924 = vmul.f32 %v2912, %v2869
      %v2925 = vmul.f32 %v2913, %v2863
      %v2926 = vmul.f32 %v2914, %v2870
      %v2927 = vmul.f32 %v2915, %v2864
      %v2928 = vmul.f32 %v2916, %v2871
      %v2929 = vmul.f32 %v2917, %v2865
      %v2930 = vmul.f32 %v2918, %v2872
      %v2931 = vmul.f32 %v2919, %v2866
      %v2932 = vmul.f32 %v2920, %v2873
      %v2933 = vmul.f32 %v2921, %v2867
      %v2934 = vmul.f32 %v2922, %v2874
      %v2935 = vmul.f32 %v2923, %v2868
      %v2936 = vadd.f32 %v2826, %v2924
      %v2937 = vadd.f32 %v2827, %v2925
      %v2938 = vadd.f32 %v2828, %v2926
      %v2939 = vadd.f32 %v2829, %v2927
      %v2940 = vadd.f32 %v2830, %v2928
      %v2941 = vadd.f32 %v2831, %v2929
      %v2942 = vadd.f32 %v2832, %v2930
      %v2943 = vadd.f32 %v2833, %v2931
      %v2944 = vadd.f32 %v2834, %v2932
      %v2945 = vadd.f32 %v2835, %v2933
      %v2946 = vadd.f32 %v2836, %v2934
      %v2947 = vadd.f32 %v2837, %v2935
      %2948 = vrot.lane.b32.xlu0 %v803, 14
      %v2949 = vpop.permute.xlu0 %2948
      %2950 = vrot.lane.b32.xlu0 %v805, 14
      %v2951 = vpop.permute.xlu0 %2950
      %2952 = vrot.lane.b32.xlu0 %v807, 14
      %v2953 = vpop.permute.xlu0 %2952
      %2954 = vrot.lane.b32.xlu0 %v809, 14
      %v2955 = vpop.permute.xlu0 %2954
      %2956 = vrot.lane.b32.xlu0 %v811, 14
      %v2957 = vpop.permute.xlu0 %2956
      %2958 = vrot.lane.b32.xlu0 %v813, 14
      %v2959 = vpop.permute.xlu0 %2958
      %2960 = vrot.lane.b32.xlu0 %v804, 14
      %v2961 = vpop.permute.xlu0 %2960
      %2962 = vrot.lane.b32.xlu0 %v806, 14
      %v2963 = vpop.permute.xlu0 %2962
      %2964 = vrot.lane.b32.xlu0 %v808, 14
      %v2965 = vpop.permute.xlu0 %2964
      %2966 = vrot.lane.b32.xlu0 %v810, 14
      %v2967 = vpop.permute.xlu0 %2966
      %2968 = vrot.lane.b32.xlu0 %v812, 14
      %v2969 = vpop.permute.xlu0 %2968
      %2970 = vrot.lane.b32.xlu0 %v814, 14
      %v2971 = vpop.permute.xlu0 %2970
      %vm2972 = vcmp.lt.s32.totalorder %v882, 14
      %v2973 = vsel %vm2972, %v2949, %v2961
      %v2974 = vsel %vm2972, %v2951, %v2963
      %v2975 = vsel %vm2972, %v2953, %v2965
      %v2976 = vsel %vm2972, %v2955, %v2967
      %v2977 = vsel %vm2972, %v2957, %v2969
      %v2978 = vsel %vm2972, %v2959, %v2971
      %v2979 = vsel %vm2972, %v2961, %v2949
      %v2980 = vsel %vm2972, %v2963, %v2951
      %v2981 = vsel %vm2972, %v2965, %v2953
      %v2982 = vsel %vm2972, %v2967, %v2955
      %v2983 = vsel %vm2972, %v2969, %v2957
      %v2984 = vsel %vm2972, %v2971, %v2959
      %s2985 = scalar_lea.vmem %s7, 35
      %v2986 = vld [vmem:[%s2985] ss:$8 sm:$0x3]
      %2987 = vset.pattern.permute.xlu0 19
      %2988 = vperm.xlu0 %2987, %v797
      %v2989 = vpop.permute.xlu0 %2988
      %2991 = vset.pattern.permute.xlu0 19
      %2992 = vperm.xlu0 %2991, %v798
      %v2993 = vpop.permute.xlu0 %2992
      %2995 = vset.pattern.permute.xlu0 19
      %2996 = vperm.xlu0 %2995, %v799
      %v2997 = vpop.permute.xlu0 %2996
      %2999 = vset.pattern.permute.xlu0 19
      %3000 = vperm.xlu0 %2999, %v800
      %v3001 = vpop.permute.xlu0 %3000
      %3003 = vset.pattern.permute.xlu0 19
      %3004 = vperm.xlu0 %3003, %v801
      %v3005 = vpop.permute.xlu0 %3004
      %3007 = vset.pattern.permute.xlu0 19
      %3008 = vperm.xlu0 %3007, %v802
      %v3009 = vpop.permute.xlu0 %3008
      %v3012 = vlaneseq
      %v3013 = vshrl.u32 %v3012, 7
      %v3014 = vsub.s32 0, %v3013
      %v3015 = vrot.slane %v2986, %v3014
      %v3016 = vlaneseq
      %v3017 = vshrl.u32 %v3016, 7
      %v3018 = vsub.s32 1, %v3017
      %v3019 = vrot.slane %v2986, %v3018
      %v3022 = vmul.f32 %v2989, %v3015
      %v3023 = vmul.f32 %v2989, %v3019
      %v3024 = vmul.f32 %v2993, %v3015
      %v3025 = vmul.f32 %v2993, %v3019
      %v3026 = vmul.f32 %v2997, %v3015
      %v3027 = vmul.f32 %v2997, %v3019
      %v3028 = vmul.f32 %v3001, %v3015
      %v3029 = vmul.f32 %v3001, %v3019
      %v3030 = vmul.f32 %v3005, %v3015
      %v3031 = vmul.f32 %v3005, %v3019
      %v3032 = vmul.f32 %v3009, %v3015
      %v3033 = vmul.f32 %v3009, %v3019
      %v3034 = vmul.f32 %v3022, %v2979
      %v3035 = vmul.f32 %v3023, %v2973
      %v3036 = vmul.f32 %v3024, %v2980
      %v3037 = vmul.f32 %v3025, %v2974
      %v3038 = vmul.f32 %v3026, %v2981
      %v3039 = vmul.f32 %v3027, %v2975
      %v3040 = vmul.f32 %v3028, %v2982
      %v3041 = vmul.f32 %v3029, %v2976
      %v3042 = vmul.f32 %v3030, %v2983
      %v3043 = vmul.f32 %v3031, %v2977
      %v3044 = vmul.f32 %v3032, %v2984
      %v3045 = vmul.f32 %v3033, %v2978
      %v3046 = vadd.f32 %v2936, %v3034
      %v3047 = vadd.f32 %v2937, %v3035
      %v3048 = vadd.f32 %v2938, %v3036
      %v3049 = vadd.f32 %v2939, %v3037
      %v3050 = vadd.f32 %v2940, %v3038
      %v3051 = vadd.f32 %v2941, %v3039
      %v3052 = vadd.f32 %v2942, %v3040
      %v3053 = vadd.f32 %v2943, %v3041
      %v3054 = vadd.f32 %v2944, %v3042
      %v3055 = vadd.f32 %v2945, %v3043
      %v3056 = vadd.f32 %v2946, %v3044
      %v3057 = vadd.f32 %v2947, %v3045
      %3058 = vrot.lane.b32.xlu0 %v803, 13
      %v3059 = vpop.permute.xlu0 %3058
      %3060 = vrot.lane.b32.xlu0 %v805, 13
      %v3061 = vpop.permute.xlu0 %3060
      %3062 = vrot.lane.b32.xlu0 %v807, 13
      %v3063 = vpop.permute.xlu0 %3062
      %3064 = vrot.lane.b32.xlu0 %v809, 13
      %v3065 = vpop.permute.xlu0 %3064
      %3066 = vrot.lane.b32.xlu0 %v811, 13
      %v3067 = vpop.permute.xlu0 %3066
      %3068 = vrot.lane.b32.xlu0 %v813, 13
      %v3069 = vpop.permute.xlu0 %3068
      %3070 = vrot.lane.b32.xlu0 %v804, 13
      %v3071 = vpop.permute.xlu0 %3070
      %3072 = vrot.lane.b32.xlu0 %v806, 13
      %v3073 = vpop.permute.xlu0 %3072
      %3074 = vrot.lane.b32.xlu0 %v808, 13
      %v3075 = vpop.permute.xlu0 %3074
      %3076 = vrot.lane.b32.xlu0 %v810, 13
      %v3077 = vpop.permute.xlu0 %3076
      %3078 = vrot.lane.b32.xlu0 %v812, 13
      %v3079 = vpop.permute.xlu0 %3078
      %3080 = vrot.lane.b32.xlu0 %v814, 13
      %v3081 = vpop.permute.xlu0 %3080
      %vm3082 = vcmp.lt.s32.totalorder %v882, 13
      %v3083 = vsel %vm3082, %v3059, %v3071
      %v3084 = vsel %vm3082, %v3061, %v3073
      %v3085 = vsel %vm3082, %v3063, %v3075
      %v3086 = vsel %vm3082, %v3065, %v3077
      %v3087 = vsel %vm3082, %v3067, %v3079
      %v3088 = vsel %vm3082, %v3069, %v3081
      %v3089 = vsel %vm3082, %v3071, %v3059
      %v3090 = vsel %vm3082, %v3073, %v3061
      %v3091 = vsel %vm3082, %v3075, %v3063
      %v3092 = vsel %vm3082, %v3077, %v3065
      %v3093 = vsel %vm3082, %v3079, %v3067
      %v3094 = vsel %vm3082, %v3081, %v3069
      %s3095 = scalar_lea.vmem %s7, 36
      %v3096 = vld [vmem:[%s3095] ss:$8 sm:$0x3]
      %3097 = vset.pattern.permute.xlu0 20
      %3098 = vperm.xlu0 %3097, %v797
      %v3099 = vpop.permute.xlu0 %3098
      %3101 = vset.pattern.permute.xlu0 20
      %3102 = vperm.xlu0 %3101, %v798
      %v3103 = vpop.permute.xlu0 %3102
      %3105 = vset.pattern.permute.xlu0 20
      %3106 = vperm.xlu0 %3105, %v799
      %v3107 = vpop.permute.xlu0 %3106
      %3109 = vset.pattern.permute.xlu0 20
      %3110 = vperm.xlu0 %3109, %v800
      %v3111 = vpop.permute.xlu0 %3110
      %3113 = vset.pattern.permute.xlu0 20
      %3114 = vperm.xlu0 %3113, %v801
      %v3115 = vpop.permute.xlu0 %3114
      %3117 = vset.pattern.permute.xlu0 20
      %3118 = vperm.xlu0 %3117, %v802
      %v3119 = vpop.permute.xlu0 %3118
      %v3122 = vlaneseq
      %v3123 = vshrl.u32 %v3122, 7
      %v3124 = vsub.s32 0, %v3123
      %v3125 = vrot.slane %v3096, %v3124
      %v3126 = vlaneseq
      %v3127 = vshrl.u32 %v3126, 7
      %v3128 = vsub.s32 1, %v3127
      %v3129 = vrot.slane %v3096, %v3128
      %v3132 = vmul.f32 %v3099, %v3125
      %v3133 = vmul.f32 %v3099, %v3129
      %v3134 = vmul.f32 %v3103, %v3125
      %v3135 = vmul.f32 %v3103, %v3129
      %v3136 = vmul.f32 %v3107, %v3125
      %v3137 = vmul.f32 %v3107, %v3129
      %v3138 = vmul.f32 %v3111, %v3125
      %v3139 = vmul.f32 %v3111, %v3129
      %v3140 = vmul.f32 %v3115, %v3125
      %v3141 = vmul.f32 %v3115, %v3129
      %v3142 = vmul.f32 %v3119, %v3125
      %v3143 = vmul.f32 %v3119, %v3129
      %v3144 = vmul.f32 %v3132, %v3089
      %v3145 = vmul.f32 %v3133, %v3083
      %v3146 = vmul.f32 %v3134, %v3090
      %v3147 = vmul.f32 %v3135, %v3084
      %v3148 = vmul.f32 %v3136, %v3091
      %v3149 = vmul.f32 %v3137, %v3085
      %v3150 = vmul.f32 %v3138, %v3092
      %v3151 = vmul.f32 %v3139, %v3086
      %v3152 = vmul.f32 %v3140, %v3093
      %v3153 = vmul.f32 %v3141, %v3087
      %v3154 = vmul.f32 %v3142, %v3094
      %v3155 = vmul.f32 %v3143, %v3088
      %v3156 = vadd.f32 %v3046, %v3144
      %v3157 = vadd.f32 %v3047, %v3145
      %v3158 = vadd.f32 %v3048, %v3146
      %v3159 = vadd.f32 %v3049, %v3147
      %v3160 = vadd.f32 %v3050, %v3148
      %v3161 = vadd.f32 %v3051, %v3149
      %v3162 = vadd.f32 %v3052, %v3150
      %v3163 = vadd.f32 %v3053, %v3151
      %v3164 = vadd.f32 %v3054, %v3152
      %v3165 = vadd.f32 %v3055, %v3153
      %v3166 = vadd.f32 %v3056, %v3154
      %v3167 = vadd.f32 %v3057, %v3155
      %3168 = vrot.lane.b32.xlu0 %v803, 3
      %v3169 = vpop.permute.xlu0 %3168
      %3170 = vrot.lane.b32.xlu0 %v805, 3
      %v3171 = vpop.permute.xlu0 %3170
      %3172 = vrot.lane.b32.xlu0 %v807, 3
      %v3173 = vpop.permute.xlu0 %3172
      %3174 = vrot.lane.b32.xlu0 %v809, 3
      %v3175 = vpop.permute.xlu0 %3174
      %3176 = vrot.lane.b32.xlu0 %v811, 3
      %v3177 = vpop.permute.xlu0 %3176
      %3178 = vrot.lane.b32.xlu0 %v813, 3
      %v3179 = vpop.permute.xlu0 %3178
      %3180 = vrot.lane.b32.xlu0 %v804, 3
      %v3181 = vpop.permute.xlu0 %3180
      %3182 = vrot.lane.b32.xlu0 %v806, 3
      %v3183 = vpop.permute.xlu0 %3182
      %3184 = vrot.lane.b32.xlu0 %v808, 3
      %v3185 = vpop.permute.xlu0 %3184
      %3186 = vrot.lane.b32.xlu0 %v810, 3
      %v3187 = vpop.permute.xlu0 %3186
      %3188 = vrot.lane.b32.xlu0 %v812, 3
      %v3189 = vpop.permute.xlu0 %3188
      %3190 = vrot.lane.b32.xlu0 %v814, 3
      %v3191 = vpop.permute.xlu0 %3190
      %vm3192 = vcmp.lt.s32.totalorder %v882, 3
      %v3193 = vsel %vm3192, %v3169, %v3181
      %v3194 = vsel %vm3192, %v3171, %v3183
      %v3195 = vsel %vm3192, %v3173, %v3185
      %v3196 = vsel %vm3192, %v3175, %v3187
      %v3197 = vsel %vm3192, %v3177, %v3189
      %v3198 = vsel %vm3192, %v3179, %v3191
      %v3199 = vsel %vm3192, %v3181, %v3169
      %v3200 = vsel %vm3192, %v3183, %v3171
      %v3201 = vsel %vm3192, %v3185, %v3173
      %v3202 = vsel %vm3192, %v3187, %v3175
      %v3203 = vsel %vm3192, %v3189, %v3177
      %v3204 = vsel %vm3192, %v3191, %v3179
      %s3205 = scalar_lea.vmem %s7, 37
      %v3206 = vld [vmem:[%s3205] ss:$8 sm:$0x3]
      %3207 = vset.pattern.permute.xlu0 21
      %3208 = vperm.xlu0 %3207, %v797
      %v3209 = vpop.permute.xlu0 %3208
      %3211 = vset.pattern.permute.xlu0 21
      %3212 = vperm.xlu0 %3211, %v798
      %v3213 = vpop.permute.xlu0 %3212
      %3215 = vset.pattern.permute.xlu0 21
      %3216 = vperm.xlu0 %3215, %v799
      %v3217 = vpop.permute.xlu0 %3216
      %3219 = vset.pattern.permute.xlu0 21
      %3220 = vperm.xlu0 %3219, %v800
      %v3221 = vpop.permute.xlu0 %3220
      %3223 = vset.pattern.permute.xlu0 21
      %3224 = vperm.xlu0 %3223, %v801
      %v3225 = vpop.permute.xlu0 %3224
      %3227 = vset.pattern.permute.xlu0 21
      %3228 = vperm.xlu0 %3227, %v802
      %v3229 = vpop.permute.xlu0 %3228
      %v3232 = vlaneseq
      %v3233 = vshrl.u32 %v3232, 7
      %v3234 = vsub.s32 0, %v3233
      %v3235 = vrot.slane %v3206, %v3234
      %v3236 = vlaneseq
      %v3237 = vshrl.u32 %v3236, 7
      %v3238 = vsub.s32 1, %v3237
      %v3239 = vrot.slane %v3206, %v3238
      %v3242 = vmul.f32 %v3209, %v3235
      %v3243 = vmul.f32 %v3209, %v3239
      %v3244 = vmul.f32 %v3213, %v3235
      %v3245 = vmul.f32 %v3213, %v3239
      %v3246 = vmul.f32 %v3217, %v3235
      %v3247 = vmul.f32 %v3217, %v3239
      %v3248 = vmul.f32 %v3221, %v3235
      %v3249 = vmul.f32 %v3221, %v3239
      %v3250 = vmul.f32 %v3225, %v3235
      %v3251 = vmul.f32 %v3225, %v3239
      %v3252 = vmul.f32 %v3229, %v3235
      %v3253 = vmul.f32 %v3229, %v3239
      %v3254 = vmul.f32 %v3242, %v3199
      %v3255 = vmul.f32 %v3243, %v3193
      %v3256 = vmul.f32 %v3244, %v3200
      %v3257 = vmul.f32 %v3245, %v3194
      %v3258 = vmul.f32 %v3246, %v3201
      %v3259 = vmul.f32 %v3247, %v3195
      %v3260 = vmul.f32 %v3248, %v3202
      %v3261 = vmul.f32 %v3249, %v3196
      %v3262 = vmul.f32 %v3250, %v3203
      %v3263 = vmul.f32 %v3251, %v3197
      %v3264 = vmul.f32 %v3252, %v3204
      %v3265 = vmul.f32 %v3253, %v3198
      %v3266 = vadd.f32 %v3156, %v3254
      %v3267 = vadd.f32 %v3157, %v3255
      %v3268 = vadd.f32 %v3158, %v3256
      %v3269 = vadd.f32 %v3159, %v3257
      %v3270 = vadd.f32 %v3160, %v3258
      %v3271 = vadd.f32 %v3161, %v3259
      %v3272 = vadd.f32 %v3162, %v3260
      %v3273 = vadd.f32 %v3163, %v3261
      %v3274 = vadd.f32 %v3164, %v3262
      %v3275 = vadd.f32 %v3165, %v3263
      %v3276 = vadd.f32 %v3166, %v3264
      %v3277 = vadd.f32 %v3167, %v3265
      %3278 = vrot.lane.b32.xlu0 %v803, 2
      %v3279 = vpop.permute.xlu0 %3278
      %3280 = vrot.lane.b32.xlu0 %v805, 2
      %v3281 = vpop.permute.xlu0 %3280
      %3282 = vrot.lane.b32.xlu0 %v807, 2
      %v3283 = vpop.permute.xlu0 %3282
      %3284 = vrot.lane.b32.xlu0 %v809, 2
      %v3285 = vpop.permute.xlu0 %3284
      %3286 = vrot.lane.b32.xlu0 %v811, 2
      %v3287 = vpop.permute.xlu0 %3286
      %3288 = vrot.lane.b32.xlu0 %v813, 2
      %v3289 = vpop.permute.xlu0 %3288
      %3290 = vrot.lane.b32.xlu0 %v804, 2
      %v3291 = vpop.permute.xlu0 %3290
      %3292 = vrot.lane.b32.xlu0 %v806, 2
      %v3293 = vpop.permute.xlu0 %3292
      %3294 = vrot.lane.b32.xlu0 %v808, 2
      %v3295 = vpop.permute.xlu0 %3294
      %3296 = vrot.lane.b32.xlu0 %v810, 2
      %v3297 = vpop.permute.xlu0 %3296
      %3298 = vrot.lane.b32.xlu0 %v812, 2
      %v3299 = vpop.permute.xlu0 %3298
      %3300 = vrot.lane.b32.xlu0 %v814, 2
      %v3301 = vpop.permute.xlu0 %3300
      %vm3302 = vcmp.lt.s32.totalorder %v882, 2
      %v3303 = vsel %vm3302, %v3279, %v3291
      %v3304 = vsel %vm3302, %v3281, %v3293
      %v3305 = vsel %vm3302, %v3283, %v3295
      %v3306 = vsel %vm3302, %v3285, %v3297
      %v3307 = vsel %vm3302, %v3287, %v3299
      %v3308 = vsel %vm3302, %v3289, %v3301
      %v3309 = vsel %vm3302, %v3291, %v3279
      %v3310 = vsel %vm3302, %v3293, %v3281
      %v3311 = vsel %vm3302, %v3295, %v3283
      %v3312 = vsel %vm3302, %v3297, %v3285
      %v3313 = vsel %vm3302, %v3299, %v3287
      %v3314 = vsel %vm3302, %v3301, %v3289
      %s3315 = scalar_lea.vmem %s7, 38
      %v3316 = vld [vmem:[%s3315] ss:$8 sm:$0x3]
      %3317 = vset.pattern.permute.xlu0 22
      %3318 = vperm.xlu0 %3317, %v797
      %v3319 = vpop.permute.xlu0 %3318
      %3321 = vset.pattern.permute.xlu0 22
      %3322 = vperm.xlu0 %3321, %v798
      %v3323 = vpop.permute.xlu0 %3322
      %3325 = vset.pattern.permute.xlu0 22
      %3326 = vperm.xlu0 %3325, %v799
      %v3327 = vpop.permute.xlu0 %3326
      %3329 = vset.pattern.permute.xlu0 22
      %3330 = vperm.xlu0 %3329, %v800
      %v3331 = vpop.permute.xlu0 %3330
      %3333 = vset.pattern.permute.xlu0 22
      %3334 = vperm.xlu0 %3333, %v801
      %v3335 = vpop.permute.xlu0 %3334
      %3337 = vset.pattern.permute.xlu0 22
      %3338 = vperm.xlu0 %3337, %v802
      %v3339 = vpop.permute.xlu0 %3338
      %v3342 = vlaneseq
      %v3343 = vshrl.u32 %v3342, 7
      %v3344 = vsub.s32 0, %v3343
      %v3345 = vrot.slane %v3316, %v3344
      %v3346 = vlaneseq
      %v3347 = vshrl.u32 %v3346, 7
      %v3348 = vsub.s32 1, %v3347
      %v3349 = vrot.slane %v3316, %v3348
      %v3352 = vmul.f32 %v3319, %v3345
      %v3353 = vmul.f32 %v3319, %v3349
      %v3354 = vmul.f32 %v3323, %v3345
      %v3355 = vmul.f32 %v3323, %v3349
      %v3356 = vmul.f32 %v3327, %v3345
      %v3357 = vmul.f32 %v3327, %v3349
      %v3358 = vmul.f32 %v3331, %v3345
      %v3359 = vmul.f32 %v3331, %v3349
      %v3360 = vmul.f32 %v3335, %v3345
      %v3361 = vmul.f32 %v3335, %v3349
      %v3362 = vmul.f32 %v3339, %v3345
      %v3363 = vmul.f32 %v3339, %v3349
      %v3364 = vmul.f32 %v3352, %v3309
      %v3365 = vmul.f32 %v3353, %v3303
      %v3366 = vmul.f32 %v3354, %v3310
      %v3367 = vmul.f32 %v3355, %v3304
      %v3368 = vmul.f32 %v3356, %v3311
      %v3369 = vmul.f32 %v3357, %v3305
      %v3370 = vmul.f32 %v3358, %v3312
      %v3371 = vmul.f32 %v3359, %v3306
      %v3372 = vmul.f32 %v3360, %v3313
      %v3373 = vmul.f32 %v3361, %v3307
      %v3374 = vmul.f32 %v3362, %v3314
      %v3375 = vmul.f32 %v3363, %v3308
      %v3376 = vadd.f32 %v3266, %v3364
      %v3377 = vadd.f32 %v3267, %v3365
      %v3378 = vadd.f32 %v3268, %v3366
      %v3379 = vadd.f32 %v3269, %v3367
      %v3380 = vadd.f32 %v3270, %v3368
      %v3381 = vadd.f32 %v3271, %v3369
      %v3382 = vadd.f32 %v3272, %v3370
      %v3383 = vadd.f32 %v3273, %v3371
      %v3384 = vadd.f32 %v3274, %v3372
      %v3385 = vadd.f32 %v3275, %v3373
      %v3386 = vadd.f32 %v3276, %v3374
      %v3387 = vadd.f32 %v3277, %v3375
      %3388 = vrot.lane.b32.xlu0 %v803, 1
      %v3389 = vpop.permute.xlu0 %3388
      %3390 = vrot.lane.b32.xlu0 %v805, 1
      %v3391 = vpop.permute.xlu0 %3390
      %3392 = vrot.lane.b32.xlu0 %v807, 1
      %v3393 = vpop.permute.xlu0 %3392
      %3394 = vrot.lane.b32.xlu0 %v809, 1
      %v3395 = vpop.permute.xlu0 %3394
      %3396 = vrot.lane.b32.xlu0 %v811, 1
      %v3397 = vpop.permute.xlu0 %3396
      %3398 = vrot.lane.b32.xlu0 %v813, 1
      %v3399 = vpop.permute.xlu0 %3398
      %3400 = vrot.lane.b32.xlu0 %v804, 1
      %v3401 = vpop.permute.xlu0 %3400
      %3402 = vrot.lane.b32.xlu0 %v806, 1
      %v3403 = vpop.permute.xlu0 %3402
      %3404 = vrot.lane.b32.xlu0 %v808, 1
      %v3405 = vpop.permute.xlu0 %3404
      %3406 = vrot.lane.b32.xlu0 %v810, 1
      %v3407 = vpop.permute.xlu0 %3406
      %3408 = vrot.lane.b32.xlu0 %v812, 1
      %v3409 = vpop.permute.xlu0 %3408
      %3410 = vrot.lane.b32.xlu0 %v814, 1
      %v3411 = vpop.permute.xlu0 %3410
      %vm3412 = vcmp.lt.s32.totalorder %v882, 1
      %v3413 = vsel %vm3412, %v3389, %v3401
      %v3414 = vsel %vm3412, %v3391, %v3403
      %v3415 = vsel %vm3412, %v3393, %v3405
      %v3416 = vsel %vm3412, %v3395, %v3407
      %v3417 = vsel %vm3412, %v3397, %v3409
      %v3418 = vsel %vm3412, %v3399, %v3411
      %v3419 = vsel %vm3412, %v3401, %v3389
      %v3420 = vsel %vm3412, %v3403, %v3391
      %v3421 = vsel %vm3412, %v3405, %v3393
      %v3422 = vsel %vm3412, %v3407, %v3395
      %v3423 = vsel %vm3412, %v3409, %v3397
      %v3424 = vsel %vm3412, %v3411, %v3399
      %s3425 = scalar_lea.vmem %s7, 39
      %v3426 = vld [vmem:[%s3425] ss:$8 sm:$0x3]
      %3427 = vset.pattern.permute.xlu0 23
      %3428 = vperm.xlu0 %3427, %v797
      %v3429 = vpop.permute.xlu0 %3428
      %3431 = vset.pattern.permute.xlu0 23
      %3432 = vperm.xlu0 %3431, %v798
      %v3433 = vpop.permute.xlu0 %3432
      %3435 = vset.pattern.permute.xlu0 23
      %3436 = vperm.xlu0 %3435, %v799
      %v3437 = vpop.permute.xlu0 %3436
      %3439 = vset.pattern.permute.xlu0 23
      %3440 = vperm.xlu0 %3439, %v800
      %v3441 = vpop.permute.xlu0 %3440
      %3443 = vset.pattern.permute.xlu0 23
      %3444 = vperm.xlu0 %3443, %v801
      %v3445 = vpop.permute.xlu0 %3444
      %3447 = vset.pattern.permute.xlu0 23
      %3448 = vperm.xlu0 %3447, %v802
      %v3449 = vpop.permute.xlu0 %3448
      %v3452 = vlaneseq
      %v3453 = vshrl.u32 %v3452, 7
      %v3454 = vsub.s32 0, %v3453
      %v3455 = vrot.slane %v3426, %v3454
      %v3456 = vlaneseq
      %v3457 = vshrl.u32 %v3456, 7
      %v3458 = vsub.s32 1, %v3457
      %v3459 = vrot.slane %v3426, %v3458
      %v3462 = vmul.f32 %v3429, %v3455
      %v3463 = vmul.f32 %v3429, %v3459
      %v3464 = vmul.f32 %v3433, %v3455
      %v3465 = vmul.f32 %v3433, %v3459
      %v3466 = vmul.f32 %v3437, %v3455
      %v3467 = vmul.f32 %v3437, %v3459
      %v3468 = vmul.f32 %v3441, %v3455
      %v3469 = vmul.f32 %v3441, %v3459
      %v3470 = vmul.f32 %v3445, %v3455
      %v3471 = vmul.f32 %v3445, %v3459
      %v3472 = vmul.f32 %v3449, %v3455
      %v3473 = vmul.f32 %v3449, %v3459
      %v3474 = vmul.f32 %v3462, %v3419
      %v3475 = vmul.f32 %v3463, %v3413
      %v3476 = vmul.f32 %v3464, %v3420
      %v3477 = vmul.f32 %v3465, %v3414
      %v3478 = vmul.f32 %v3466, %v3421
      %v3479 = vmul.f32 %v3467, %v3415
      %v3480 = vmul.f32 %v3468, %v3422
      %v3481 = vmul.f32 %v3469, %v3416
      %v3482 = vmul.f32 %v3470, %v3423
      %v3483 = vmul.f32 %v3471, %v3417
      %v3484 = vmul.f32 %v3472, %v3424
      %v3485 = vmul.f32 %v3473, %v3418
      %v3486 = vadd.f32 %v3376, %v3474
      %v3487 = vadd.f32 %v3377, %v3475
      %v3488 = vadd.f32 %v3378, %v3476
      %v3489 = vadd.f32 %v3379, %v3477
      %v3490 = vadd.f32 %v3380, %v3478
      %v3491 = vadd.f32 %v3381, %v3479
      %v3492 = vadd.f32 %v3382, %v3480
      %v3493 = vadd.f32 %v3383, %v3481
      %v3494 = vadd.f32 %v3384, %v3482
      %v3495 = vadd.f32 %v3385, %v3483
      %v3496 = vadd.f32 %v3386, %v3484
      %v3497 = vadd.f32 %v3387, %v3485
      %3498 = vrot.lane.b32.xlu0 %v803, 127
      %v3499 = vpop.permute.xlu0 %3498
      %3500 = vrot.lane.b32.xlu0 %v805, 127
      %v3501 = vpop.permute.xlu0 %3500
      %3502 = vrot.lane.b32.xlu0 %v807, 127
      %v3503 = vpop.permute.xlu0 %3502
      %3504 = vrot.lane.b32.xlu0 %v809, 127
      %v3505 = vpop.permute.xlu0 %3504
      %3506 = vrot.lane.b32.xlu0 %v811, 127
      %v3507 = vpop.permute.xlu0 %3506
      %3508 = vrot.lane.b32.xlu0 %v813, 127
      %v3509 = vpop.permute.xlu0 %3508
      %3510 = vrot.lane.b32.xlu0 %v804, 127
      %v3511 = vpop.permute.xlu0 %3510
      %3512 = vrot.lane.b32.xlu0 %v806, 127
      %v3513 = vpop.permute.xlu0 %3512
      %3514 = vrot.lane.b32.xlu0 %v808, 127
      %v3515 = vpop.permute.xlu0 %3514
      %3516 = vrot.lane.b32.xlu0 %v810, 127
      %v3517 = vpop.permute.xlu0 %3516
      %3518 = vrot.lane.b32.xlu0 %v812, 127
      %v3519 = vpop.permute.xlu0 %3518
      %3520 = vrot.lane.b32.xlu0 %v814, 127
      %v3521 = vpop.permute.xlu0 %3520
      %vm3522 = vcmp.lt.s32.totalorder %v882, 127
      %v3523 = vsel %vm3522, %v3499, %v3511
      %v3524 = vsel %vm3522, %v3501, %v3513
      %v3525 = vsel %vm3522, %v3503, %v3515
      %v3526 = vsel %vm3522, %v3505, %v3517
      %v3527 = vsel %vm3522, %v3507, %v3519
      %v3528 = vsel %vm3522, %v3509, %v3521
      %v3529 = vsel %vm3522, %v3511, %v3499
      %v3530 = vsel %vm3522, %v3513, %v3501
      %v3531 = vsel %vm3522, %v3515, %v3503
      %v3532 = vsel %vm3522, %v3517, %v3505
      %v3533 = vsel %vm3522, %v3519, %v3507
      %v3534 = vsel %vm3522, %v3521, %v3509
      %s3535 = scalar_lea.vmem %s7, 49
      %v3536 = vld [vmem:[%s3535] ss:$8 sm:$0x3]
      %3537 = vset.pattern.permute.xlu0 25
      %3538 = vperm.xlu0 %3537, %v797
      %v3539 = vpop.permute.xlu0 %3538
      %3541 = vset.pattern.permute.xlu0 25
      %3542 = vperm.xlu0 %3541, %v798
      %v3543 = vpop.permute.xlu0 %3542
      %3545 = vset.pattern.permute.xlu0 25
      %3546 = vperm.xlu0 %3545, %v799
      %v3547 = vpop.permute.xlu0 %3546
      %3549 = vset.pattern.permute.xlu0 25
      %3550 = vperm.xlu0 %3549, %v800
      %v3551 = vpop.permute.xlu0 %3550
      %3553 = vset.pattern.permute.xlu0 25
      %3554 = vperm.xlu0 %3553, %v801
      %v3555 = vpop.permute.xlu0 %3554
      %3557 = vset.pattern.permute.xlu0 25
      %3558 = vperm.xlu0 %3557, %v802
      %v3559 = vpop.permute.xlu0 %3558
      %v3562 = vlaneseq
      %v3563 = vshrl.u32 %v3562, 7
      %v3564 = vsub.s32 0, %v3563
      %v3565 = vrot.slane %v3536, %v3564
      %v3566 = vlaneseq
      %v3567 = vshrl.u32 %v3566, 7
      %v3568 = vsub.s32 1, %v3567
      %v3569 = vrot.slane %v3536, %v3568
      %v3572 = vmul.f32 %v3539, %v3565
      %v3573 = vmul.f32 %v3539, %v3569
      %v3574 = vmul.f32 %v3543, %v3565
      %v3575 = vmul.f32 %v3543, %v3569
      %v3576 = vmul.f32 %v3547, %v3565
      %v3577 = vmul.f32 %v3547, %v3569
      %v3578 = vmul.f32 %v3551, %v3565
      %v3579 = vmul.f32 %v3551, %v3569
      %v3580 = vmul.f32 %v3555, %v3565
      %v3581 = vmul.f32 %v3555, %v3569
      %v3582 = vmul.f32 %v3559, %v3565
      %v3583 = vmul.f32 %v3559, %v3569
      %v3584 = vmul.f32 %v3572, %v3523
      %v3585 = vmul.f32 %v3573, %v3529
      %v3586 = vmul.f32 %v3574, %v3524
      %v3587 = vmul.f32 %v3575, %v3530
      %v3588 = vmul.f32 %v3576, %v3525
      %v3589 = vmul.f32 %v3577, %v3531
      %v3590 = vmul.f32 %v3578, %v3526
      %v3591 = vmul.f32 %v3579, %v3532
      %v3592 = vmul.f32 %v3580, %v3527
      %v3593 = vmul.f32 %v3581, %v3533
      %v3594 = vmul.f32 %v3582, %v3528
      %v3595 = vmul.f32 %v3583, %v3534
      %v3596 = vadd.f32 %v3486, %v3584
      %v3597 = vadd.f32 %v3487, %v3585
      %v3598 = vadd.f32 %v3488, %v3586
      %v3599 = vadd.f32 %v3489, %v3587
      %v3600 = vadd.f32 %v3490, %v3588
      %v3601 = vadd.f32 %v3491, %v3589
      %v3602 = vadd.f32 %v3492, %v3590
      %v3603 = vadd.f32 %v3493, %v3591
      %v3604 = vadd.f32 %v3494, %v3592
      %v3605 = vadd.f32 %v3495, %v3593
      %v3606 = vadd.f32 %v3496, %v3594
      %v3607 = vadd.f32 %v3497, %v3595
      %3608 = vrot.lane.b32.xlu0 %v803, 126
      %v3609 = vpop.permute.xlu0 %3608
      %3610 = vrot.lane.b32.xlu0 %v805, 126
      %v3611 = vpop.permute.xlu0 %3610
      %3612 = vrot.lane.b32.xlu0 %v807, 126
      %v3613 = vpop.permute.xlu0 %3612
      %3614 = vrot.lane.b32.xlu0 %v809, 126
      %v3615 = vpop.permute.xlu0 %3614
      %3616 = vrot.lane.b32.xlu0 %v811, 126
      %v3617 = vpop.permute.xlu0 %3616
      %3618 = vrot.lane.b32.xlu0 %v813, 126
      %v3619 = vpop.permute.xlu0 %3618
      %3620 = vrot.lane.b32.xlu0 %v804, 126
      %v3621 = vpop.permute.xlu0 %3620
      %3622 = vrot.lane.b32.xlu0 %v806, 126
      %v3623 = vpop.permute.xlu0 %3622
      %3624 = vrot.lane.b32.xlu0 %v808, 126
      %v3625 = vpop.permute.xlu0 %3624
      %3626 = vrot.lane.b32.xlu0 %v810, 126
      %v3627 = vpop.permute.xlu0 %3626
      %3628 = vrot.lane.b32.xlu0 %v812, 126
      %v3629 = vpop.permute.xlu0 %3628
      %3630 = vrot.lane.b32.xlu0 %v814, 126
      %v3631 = vpop.permute.xlu0 %3630
      %vm3632 = vcmp.lt.s32.totalorder %v882, 126
      %v3633 = vsel %vm3632, %v3609, %v3621
      %v3634 = vsel %vm3632, %v3611, %v3623
      %v3635 = vsel %vm3632, %v3613, %v3625
      %v3636 = vsel %vm3632, %v3615, %v3627
      %v3637 = vsel %vm3632, %v3617, %v3629
      %v3638 = vsel %vm3632, %v3619, %v3631
      %v3639 = vsel %vm3632, %v3621, %v3609
      %v3640 = vsel %vm3632, %v3623, %v3611
      %v3641 = vsel %vm3632, %v3625, %v3613
      %v3642 = vsel %vm3632, %v3627, %v3615
      %v3643 = vsel %vm3632, %v3629, %v3617
      %v3644 = vsel %vm3632, %v3631, %v3619
      %s3645 = scalar_lea.vmem %s7, 50
      %v3646 = vld [vmem:[%s3645] ss:$8 sm:$0x3]
      %3647 = vset.pattern.permute.xlu0 26
      %3648 = vperm.xlu0 %3647, %v797
      %v3649 = vpop.permute.xlu0 %3648
      %3651 = vset.pattern.permute.xlu0 26
      %3652 = vperm.xlu0 %3651, %v798
      %v3653 = vpop.permute.xlu0 %3652
      %3655 = vset.pattern.permute.xlu0 26
      %3656 = vperm.xlu0 %3655, %v799
      %v3657 = vpop.permute.xlu0 %3656
      %3659 = vset.pattern.permute.xlu0 26
      %3660 = vperm.xlu0 %3659, %v800
      %v3661 = vpop.permute.xlu0 %3660
      %3663 = vset.pattern.permute.xlu0 26
      %3664 = vperm.xlu0 %3663, %v801
      %v3665 = vpop.permute.xlu0 %3664
      %3667 = vset.pattern.permute.xlu0 26
      %3668 = vperm.xlu0 %3667, %v802
      %v3669 = vpop.permute.xlu0 %3668
      %v3672 = vlaneseq
      %v3673 = vshrl.u32 %v3672, 7
      %v3674 = vsub.s32 0, %v3673
      %v3675 = vrot.slane %v3646, %v3674
      %v3676 = vlaneseq
      %v3677 = vshrl.u32 %v3676, 7
      %v3678 = vsub.s32 1, %v3677
      %v3679 = vrot.slane %v3646, %v3678
      %v3682 = vmul.f32 %v3649, %v3675
      %v3683 = vmul.f32 %v3649, %v3679
      %v3684 = vmul.f32 %v3653, %v3675
      %v3685 = vmul.f32 %v3653, %v3679
      %v3686 = vmul.f32 %v3657, %v3675
      %v3687 = vmul.f32 %v3657, %v3679
      %v3688 = vmul.f32 %v3661, %v3675
      %v3689 = vmul.f32 %v3661, %v3679
      %v3690 = vmul.f32 %v3665, %v3675
      %v3691 = vmul.f32 %v3665, %v3679
      %v3692 = vmul.f32 %v3669, %v3675
      %v3693 = vmul.f32 %v3669, %v3679
      %v3694 = vmul.f32 %v3682, %v3633
      %v3695 = vmul.f32 %v3683, %v3639
      %v3696 = vmul.f32 %v3684, %v3634
      %v3697 = vmul.f32 %v3685, %v3640
      %v3698 = vmul.f32 %v3686, %v3635
      %v3699 = vmul.f32 %v3687, %v3641
      %v3700 = vmul.f32 %v3688, %v3636
      %v3701 = vmul.f32 %v3689, %v3642
      %v3702 = vmul.f32 %v3690, %v3637
      %v3703 = vmul.f32 %v3691, %v3643
      %v3704 = vmul.f32 %v3692, %v3638
      %v3705 = vmul.f32 %v3693, %v3644
      %v3706 = vadd.f32 %v3596, %v3694
      %v3707 = vadd.f32 %v3597, %v3695
      %v3708 = vadd.f32 %v3598, %v3696
      %v3709 = vadd.f32 %v3599, %v3697
      %v3710 = vadd.f32 %v3600, %v3698
      %v3711 = vadd.f32 %v3601, %v3699
      %v3712 = vadd.f32 %v3602, %v3700
      %v3713 = vadd.f32 %v3603, %v3701
      %v3714 = vadd.f32 %v3604, %v3702
      %v3715 = vadd.f32 %v3605, %v3703
      %v3716 = vadd.f32 %v3606, %v3704
      %v3717 = vadd.f32 %v3607, %v3705
      %3718 = vrot.lane.b32.xlu0 %v803, 125
      %v3719 = vpop.permute.xlu0 %3718
      %3720 = vrot.lane.b32.xlu0 %v805, 125
      %v3721 = vpop.permute.xlu0 %3720
      %3722 = vrot.lane.b32.xlu0 %v807, 125
      %v3723 = vpop.permute.xlu0 %3722
      %3724 = vrot.lane.b32.xlu0 %v809, 125
      %v3725 = vpop.permute.xlu0 %3724
      %3726 = vrot.lane.b32.xlu0 %v811, 125
      %v3727 = vpop.permute.xlu0 %3726
      %3728 = vrot.lane.b32.xlu0 %v813, 125
      %v3729 = vpop.permute.xlu0 %3728
      %3730 = vrot.lane.b32.xlu0 %v804, 125
      %v3731 = vpop.permute.xlu0 %3730
      %3732 = vrot.lane.b32.xlu0 %v806, 125
      %v3733 = vpop.permute.xlu0 %3732
      %3734 = vrot.lane.b32.xlu0 %v808, 125
      %v3735 = vpop.permute.xlu0 %3734
      %3736 = vrot.lane.b32.xlu0 %v810, 125
      %v3737 = vpop.permute.xlu0 %3736
      %3738 = vrot.lane.b32.xlu0 %v812, 125
      %v3739 = vpop.permute.xlu0 %3738
      %3740 = vrot.lane.b32.xlu0 %v814, 125
      %v3741 = vpop.permute.xlu0 %3740
      %vm3742 = vcmp.lt.s32.totalorder %v882, 125
      %v3743 = vsel %vm3742, %v3719, %v3731
      %v3744 = vsel %vm3742, %v3721, %v3733
      %v3745 = vsel %vm3742, %v3723, %v3735
      %v3746 = vsel %vm3742, %v3725, %v3737
      %v3747 = vsel %vm3742, %v3727, %v3739
      %v3748 = vsel %vm3742, %v3729, %v3741
      %v3749 = vsel %vm3742, %v3731, %v3719
      %v3750 = vsel %vm3742, %v3733, %v3721
      %v3751 = vsel %vm3742, %v3735, %v3723
      %v3752 = vsel %vm3742, %v3737, %v3725
      %v3753 = vsel %vm3742, %v3739, %v3727
      %v3754 = vsel %vm3742, %v3741, %v3729
      %s3755 = scalar_lea.vmem %s7, 51
      %v3756 = vld [vmem:[%s3755] ss:$8 sm:$0x3]
      %3757 = vset.pattern.permute.xlu0 27
      %3758 = vperm.xlu0 %3757, %v797
      %v3759 = vpop.permute.xlu0 %3758
      %3761 = vset.pattern.permute.xlu0 27
      %3762 = vperm.xlu0 %3761, %v798
      %v3763 = vpop.permute.xlu0 %3762
      %3765 = vset.pattern.permute.xlu0 27
      %3766 = vperm.xlu0 %3765, %v799
      %v3767 = vpop.permute.xlu0 %3766
      %3769 = vset.pattern.permute.xlu0 27
      %3770 = vperm.xlu0 %3769, %v800
      %v3771 = vpop.permute.xlu0 %3770
      %3773 = vset.pattern.permute.xlu0 27
      %3774 = vperm.xlu0 %3773, %v801
      %v3775 = vpop.permute.xlu0 %3774
      %3777 = vset.pattern.permute.xlu0 27
      %3778 = vperm.xlu0 %3777, %v802
      %v3779 = vpop.permute.xlu0 %3778
      %v3782 = vlaneseq
      %v3783 = vshrl.u32 %v3782, 7
      %v3784 = vsub.s32 0, %v3783
      %v3785 = vrot.slane %v3756, %v3784
      %v3786 = vlaneseq
      %v3787 = vshrl.u32 %v3786, 7
      %v3788 = vsub.s32 1, %v3787
      %v3789 = vrot.slane %v3756, %v3788
      %v3792 = vmul.f32 %v3759, %v3785
      %v3793 = vmul.f32 %v3759, %v3789
      %v3794 = vmul.f32 %v3763, %v3785
      %v3795 = vmul.f32 %v3763, %v3789
      %v3796 = vmul.f32 %v3767, %v3785
      %v3797 = vmul.f32 %v3767, %v3789
      %v3798 = vmul.f32 %v3771, %v3785
      %v3799 = vmul.f32 %v3771, %v3789
      %v3800 = vmul.f32 %v3775, %v3785
      %v3801 = vmul.f32 %v3775, %v3789
      %v3802 = vmul.f32 %v3779, %v3785
      %v3803 = vmul.f32 %v3779, %v3789
      %v3804 = vmul.f32 %v3792, %v3743
      %v3805 = vmul.f32 %v3793, %v3749
      %v3806 = vmul.f32 %v3794, %v3744
      %v3807 = vmul.f32 %v3795, %v3750
      %v3808 = vmul.f32 %v3796, %v3745
      %v3809 = vmul.f32 %v3797, %v3751
      %v3810 = vmul.f32 %v3798, %v3746
      %v3811 = vmul.f32 %v3799, %v3752
      %v3812 = vmul.f32 %v3800, %v3747
      %v3813 = vmul.f32 %v3801, %v3753
      %v3814 = vmul.f32 %v3802, %v3748
      %v3815 = vmul.f32 %v3803, %v3754
      %v3816 = vadd.f32 %v3706, %v3804
      %v3817 = vadd.f32 %v3707, %v3805
      %v3818 = vadd.f32 %v3708, %v3806
      %v3819 = vadd.f32 %v3709, %v3807
      %v3820 = vadd.f32 %v3710, %v3808
      %v3821 = vadd.f32 %v3711, %v3809
      %v3822 = vadd.f32 %v3712, %v3810
      %v3823 = vadd.f32 %v3713, %v3811
      %v3824 = vadd.f32 %v3714, %v3812
      %v3825 = vadd.f32 %v3715, %v3813
      %v3826 = vadd.f32 %v3716, %v3814
      %v3827 = vadd.f32 %v3717, %v3815
      %3828 = vrot.lane.b32.xlu0 %v803, 115
      %v3829 = vpop.permute.xlu0 %3828
      %3830 = vrot.lane.b32.xlu0 %v805, 115
      %v3831 = vpop.permute.xlu0 %3830
      %3832 = vrot.lane.b32.xlu0 %v807, 115
      %v3833 = vpop.permute.xlu0 %3832
      %3834 = vrot.lane.b32.xlu0 %v809, 115
      %v3835 = vpop.permute.xlu0 %3834
      %3836 = vrot.lane.b32.xlu0 %v811, 115
      %v3837 = vpop.permute.xlu0 %3836
      %3838 = vrot.lane.b32.xlu0 %v813, 115
      %v3839 = vpop.permute.xlu0 %3838
      %3840 = vrot.lane.b32.xlu0 %v804, 115
      %v3841 = vpop.permute.xlu0 %3840
      %3842 = vrot.lane.b32.xlu0 %v806, 115
      %v3843 = vpop.permute.xlu0 %3842
      %3844 = vrot.lane.b32.xlu0 %v808, 115
      %v3845 = vpop.permute.xlu0 %3844
      %3846 = vrot.lane.b32.xlu0 %v810, 115
      %v3847 = vpop.permute.xlu0 %3846
      %3848 = vrot.lane.b32.xlu0 %v812, 115
      %v3849 = vpop.permute.xlu0 %3848
      %3850 = vrot.lane.b32.xlu0 %v814, 115
      %v3851 = vpop.permute.xlu0 %3850
      %vm3852 = vcmp.lt.s32.totalorder %v882, 115
      %v3853 = vsel %vm3852, %v3829, %v3841
      %v3854 = vsel %vm3852, %v3831, %v3843
      %v3855 = vsel %vm3852, %v3833, %v3845
      %v3856 = vsel %vm3852, %v3835, %v3847
      %v3857 = vsel %vm3852, %v3837, %v3849
      %v3858 = vsel %vm3852, %v3839, %v3851
      %v3859 = vsel %vm3852, %v3841, %v3829
      %v3860 = vsel %vm3852, %v3843, %v3831
      %v3861 = vsel %vm3852, %v3845, %v3833
      %v3862 = vsel %vm3852, %v3847, %v3835
      %v3863 = vsel %vm3852, %v3849, %v3837
      %v3864 = vsel %vm3852, %v3851, %v3839
      %s3865 = scalar_lea.vmem %s7, 52
      %v3866 = vld [vmem:[%s3865] ss:$8 sm:$0x3]
      %3867 = vset.pattern.permute.xlu0 28
      %3868 = vperm.xlu0 %3867, %v797
      %v3869 = vpop.permute.xlu0 %3868
      %3871 = vset.pattern.permute.xlu0 28
      %3872 = vperm.xlu0 %3871, %v798
      %v3873 = vpop.permute.xlu0 %3872
      %3875 = vset.pattern.permute.xlu0 28
      %3876 = vperm.xlu0 %3875, %v799
      %v3877 = vpop.permute.xlu0 %3876
      %3879 = vset.pattern.permute.xlu0 28
      %3880 = vperm.xlu0 %3879, %v800
      %v3881 = vpop.permute.xlu0 %3880
      %3883 = vset.pattern.permute.xlu0 28
      %3884 = vperm.xlu0 %3883, %v801
      %v3885 = vpop.permute.xlu0 %3884
      %3887 = vset.pattern.permute.xlu0 28
      %3888 = vperm.xlu0 %3887, %v802
      %v3889 = vpop.permute.xlu0 %3888
      %v3892 = vlaneseq
      %v3893 = vshrl.u32 %v3892, 7
      %v3894 = vsub.s32 0, %v3893
      %v3895 = vrot.slane %v3866, %v3894
      %v3896 = vlaneseq
      %v3897 = vshrl.u32 %v3896, 7
      %v3898 = vsub.s32 1, %v3897
      %v3899 = vrot.slane %v3866, %v3898
      %v3902 = vmul.f32 %v3869, %v3895
      %v3903 = vmul.f32 %v3869, %v3899
      %v3904 = vmul.f32 %v3873, %v3895
      %v3905 = vmul.f32 %v3873, %v3899
      %v3906 = vmul.f32 %v3877, %v3895
      %v3907 = vmul.f32 %v3877, %v3899
      %v3908 = vmul.f32 %v3881, %v3895
      %v3909 = vmul.f32 %v3881, %v3899
      %v3910 = vmul.f32 %v3885, %v3895
      %v3911 = vmul.f32 %v3885, %v3899
      %v3912 = vmul.f32 %v3889, %v3895
      %v3913 = vmul.f32 %v3889, %v3899
      %v3914 = vmul.f32 %v3902, %v3853
      %v3915 = vmul.f32 %v3903, %v3859
      %v3916 = vmul.f32 %v3904, %v3854
      %v3917 = vmul.f32 %v3905, %v3860
      %v3918 = vmul.f32 %v3906, %v3855
      %v3919 = vmul.f32 %v3907, %v3861
      %v3920 = vmul.f32 %v3908, %v3856
      %v3921 = vmul.f32 %v3909, %v3862
      %v3922 = vmul.f32 %v3910, %v3857
      %v3923 = vmul.f32 %v3911, %v3863
      %v3924 = vmul.f32 %v3912, %v3858
      %v3925 = vmul.f32 %v3913, %v3864
      %v3926 = vadd.f32 %v3816, %v3914
      %v3927 = vadd.f32 %v3817, %v3915
      %v3928 = vadd.f32 %v3818, %v3916
      %v3929 = vadd.f32 %v3819, %v3917
      %v3930 = vadd.f32 %v3820, %v3918
      %v3931 = vadd.f32 %v3821, %v3919
      %v3932 = vadd.f32 %v3822, %v3920
      %v3933 = vadd.f32 %v3823, %v3921
      %v3934 = vadd.f32 %v3824, %v3922
      %v3935 = vadd.f32 %v3825, %v3923
      %v3936 = vadd.f32 %v3826, %v3924
      %v3937 = vadd.f32 %v3827, %v3925
      %3938 = vrot.lane.b32.xlu0 %v803, 114
      %v3939 = vpop.permute.xlu0 %3938
      %3940 = vrot.lane.b32.xlu0 %v805, 114
      %v3941 = vpop.permute.xlu0 %3940
      %3942 = vrot.lane.b32.xlu0 %v807, 114
      %v3943 = vpop.permute.xlu0 %3942
      %3944 = vrot.lane.b32.xlu0 %v809, 114
      %v3945 = vpop.permute.xlu0 %3944
      %3946 = vrot.lane.b32.xlu0 %v811, 114
      %v3947 = vpop.permute.xlu0 %3946
      %3948 = vrot.lane.b32.xlu0 %v813, 114
      %v3949 = vpop.permute.xlu0 %3948
      %3950 = vrot.lane.b32.xlu0 %v804, 114
      %v3951 = vpop.permute.xlu0 %3950
      %3952 = vrot.lane.b32.xlu0 %v806, 114
      %v3953 = vpop.permute.xlu0 %3952
      %3954 = vrot.lane.b32.xlu0 %v808, 114
      %v3955 = vpop.permute.xlu0 %3954
      %3956 = vrot.lane.b32.xlu0 %v810, 114
      %v3957 = vpop.permute.xlu0 %3956
      %3958 = vrot.lane.b32.xlu0 %v812, 114
      %v3959 = vpop.permute.xlu0 %3958
      %3960 = vrot.lane.b32.xlu0 %v814, 114
      %v3961 = vpop.permute.xlu0 %3960
      %vm3962 = vcmp.lt.s32.totalorder %v882, 114
      %v3963 = vsel %vm3962, %v3939, %v3951
      %v3964 = vsel %vm3962, %v3941, %v3953
      %v3965 = vsel %vm3962, %v3943, %v3955
      %v3966 = vsel %vm3962, %v3945, %v3957
      %v3967 = vsel %vm3962, %v3947, %v3959
      %v3968 = vsel %vm3962, %v3949, %v3961
      %v3969 = vsel %vm3962, %v3951, %v3939
      %v3970 = vsel %vm3962, %v3953, %v3941
      %v3971 = vsel %vm3962, %v3955, %v3943
      %v3972 = vsel %vm3962, %v3957, %v3945
      %v3973 = vsel %vm3962, %v3959, %v3947
      %v3974 = vsel %vm3962, %v3961, %v3949
      %s3975 = scalar_lea.vmem %s7, 53
      %v3976 = vld [vmem:[%s3975] ss:$8 sm:$0x3]
      %3977 = vset.pattern.permute.xlu0 29
      %3978 = vperm.xlu0 %3977, %v797
      %v3979 = vpop.permute.xlu0 %3978
      %3981 = vset.pattern.permute.xlu0 29
      %3982 = vperm.xlu0 %3981, %v798
      %v3983 = vpop.permute.xlu0 %3982
      %3985 = vset.pattern.permute.xlu0 29
      %3986 = vperm.xlu0 %3985, %v799
      %v3987 = vpop.permute.xlu0 %3986
      %3989 = vset.pattern.permute.xlu0 29
      %3990 = vperm.xlu0 %3989, %v800
      %v3991 = vpop.permute.xlu0 %3990
      %3993 = vset.pattern.permute.xlu0 29
      %3994 = vperm.xlu0 %3993, %v801
      %v3995 = vpop.permute.xlu0 %3994
      %3997 = vset.pattern.permute.xlu0 29
      %3998 = vperm.xlu0 %3997, %v802
      %v3999 = vpop.permute.xlu0 %3998
      %v4002 = vlaneseq
      %v4003 = vshrl.u32 %v4002, 7
      %v4004 = vsub.s32 0, %v4003
      %v4005 = vrot.slane %v3976, %v4004
      %v4006 = vlaneseq
      %v4007 = vshrl.u32 %v4006, 7
      %v4008 = vsub.s32 1, %v4007
      %v4009 = vrot.slane %v3976, %v4008
      %v4012 = vmul.f32 %v3979, %v4005
      %v4013 = vmul.f32 %v3979, %v4009
      %v4014 = vmul.f32 %v3983, %v4005
      %v4015 = vmul.f32 %v3983, %v4009
      %v4016 = vmul.f32 %v3987, %v4005
      %v4017 = vmul.f32 %v3987, %v4009
      %v4018 = vmul.f32 %v3991, %v4005
      %v4019 = vmul.f32 %v3991, %v4009
      %v4020 = vmul.f32 %v3995, %v4005
      %v4021 = vmul.f32 %v3995, %v4009
      %v4022 = vmul.f32 %v3999, %v4005
      %v4023 = vmul.f32 %v3999, %v4009
      %v4024 = vmul.f32 %v4012, %v3963
      %v4025 = vmul.f32 %v4013, %v3969
      %v4026 = vmul.f32 %v4014, %v3964
      %v4027 = vmul.f32 %v4015, %v3970
      %v4028 = vmul.f32 %v4016, %v3965
      %v4029 = vmul.f32 %v4017, %v3971
      %v4030 = vmul.f32 %v4018, %v3966
      %v4031 = vmul.f32 %v4019, %v3972
      %v4032 = vmul.f32 %v4020, %v3967
      %v4033 = vmul.f32 %v4021, %v3973
      %v4034 = vmul.f32 %v4022, %v3968
      %v4035 = vmul.f32 %v4023, %v3974
      %v4036 = vadd.f32 %v3926, %v4024
      %v4037 = vadd.f32 %v3927, %v4025
      %v4038 = vadd.f32 %v3928, %v4026
      %v4039 = vadd.f32 %v3929, %v4027
      %v4040 = vadd.f32 %v3930, %v4028
      %v4041 = vadd.f32 %v3931, %v4029
      %v4042 = vadd.f32 %v3932, %v4030
      %v4043 = vadd.f32 %v3933, %v4031
      %v4044 = vadd.f32 %v3934, %v4032
      %v4045 = vadd.f32 %v3935, %v4033
      %v4046 = vadd.f32 %v3936, %v4034
      %v4047 = vadd.f32 %v3937, %v4035
      %4048 = vrot.lane.b32.xlu0 %v803, 113
      %v4049 = vpop.permute.xlu0 %4048
      %4050 = vrot.lane.b32.xlu0 %v805, 113
      %v4051 = vpop.permute.xlu0 %4050
      %4052 = vrot.lane.b32.xlu0 %v807, 113
      %v4053 = vpop.permute.xlu0 %4052
      %4054 = vrot.lane.b32.xlu0 %v809, 113
      %v4055 = vpop.permute.xlu0 %4054
      %4056 = vrot.lane.b32.xlu0 %v811, 113
      %v4057 = vpop.permute.xlu0 %4056
      %4058 = vrot.lane.b32.xlu0 %v813, 113
      %v4059 = vpop.permute.xlu0 %4058
      %4060 = vrot.lane.b32.xlu0 %v804, 113
      %v4061 = vpop.permute.xlu0 %4060
      %4062 = vrot.lane.b32.xlu0 %v806, 113
      %v4063 = vpop.permute.xlu0 %4062
      %4064 = vrot.lane.b32.xlu0 %v808, 113
      %v4065 = vpop.permute.xlu0 %4064
      %4066 = vrot.lane.b32.xlu0 %v810, 113
      %v4067 = vpop.permute.xlu0 %4066
      %4068 = vrot.lane.b32.xlu0 %v812, 113
      %v4069 = vpop.permute.xlu0 %4068
      %4070 = vrot.lane.b32.xlu0 %v814, 113
      %v4071 = vpop.permute.xlu0 %4070
      %vm4072 = vcmp.lt.s32.totalorder %v882, 113
      %v4073 = vsel %vm4072, %v4049, %v4061
      %v4074 = vsel %vm4072, %v4051, %v4063
      %v4075 = vsel %vm4072, %v4053, %v4065
      %v4076 = vsel %vm4072, %v4055, %v4067
      %v4077 = vsel %vm4072, %v4057, %v4069
      %v4078 = vsel %vm4072, %v4059, %v4071
      %v4079 = vsel %vm4072, %v4061, %v4049
      %v4080 = vsel %vm4072, %v4063, %v4051
      %v4081 = vsel %vm4072, %v4065, %v4053
      %v4082 = vsel %vm4072, %v4067, %v4055
      %v4083 = vsel %vm4072, %v4069, %v4057
      %v4084 = vsel %vm4072, %v4071, %v4059
      %s4085 = scalar_lea.vmem %s7, 54
      %v4086 = vld [vmem:[%s4085] ss:$8 sm:$0x3]
      %4087 = vset.pattern.permute.xlu0 30
      %4088 = vperm.xlu0 %4087, %v797
      %v4089 = vpop.permute.xlu0 %4088
      %4091 = vset.pattern.permute.xlu0 30
      %4092 = vperm.xlu0 %4091, %v798
      %v4093 = vpop.permute.xlu0 %4092
      %4095 = vset.pattern.permute.xlu0 30
      %4096 = vperm.xlu0 %4095, %v799
      %v4097 = vpop.permute.xlu0 %4096
      %4099 = vset.pattern.permute.xlu0 30
      %4100 = vperm.xlu0 %4099, %v800
      %v4101 = vpop.permute.xlu0 %4100
      %4103 = vset.pattern.permute.xlu0 30
      %4104 = vperm.xlu0 %4103, %v801
      %v4105 = vpop.permute.xlu0 %4104
      %4107 = vset.pattern.permute.xlu0 30
      %4108 = vperm.xlu0 %4107, %v802
      %v4109 = vpop.permute.xlu0 %4108
      %v4112 = vlaneseq
      %v4113 = vshrl.u32 %v4112, 7
      %v4114 = vsub.s32 0, %v4113
      %v4115 = vrot.slane %v4086, %v4114
      %v4116 = vlaneseq
      %v4117 = vshrl.u32 %v4116, 7
      %v4118 = vsub.s32 1, %v4117
      %v4119 = vrot.slane %v4086, %v4118
      %v4122 = vmul.f32 %v4089, %v4115
      %v4123 = vmul.f32 %v4089, %v4119
      %v4124 = vmul.f32 %v4093, %v4115
      %v4125 = vmul.f32 %v4093, %v4119
      %v4126 = vmul.f32 %v4097, %v4115
      %v4127 = vmul.f32 %v4097, %v4119
      %v4128 = vmul.f32 %v4101, %v4115
      %v4129 = vmul.f32 %v4101, %v4119
      %v4130 = vmul.f32 %v4105, %v4115
      %v4131 = vmul.f32 %v4105, %v4119
      %v4132 = vmul.f32 %v4109, %v4115
      %v4133 = vmul.f32 %v4109, %v4119
      %v4134 = vmul.f32 %v4122, %v4073
      %v4135 = vmul.f32 %v4123, %v4079
      %v4136 = vmul.f32 %v4124, %v4074
      %v4137 = vmul.f32 %v4125, %v4080
      %v4138 = vmul.f32 %v4126, %v4075
      %v4139 = vmul.f32 %v4127, %v4081
      %v4140 = vmul.f32 %v4128, %v4076
      %v4141 = vmul.f32 %v4129, %v4082
      %v4142 = vmul.f32 %v4130, %v4077
      %v4143 = vmul.f32 %v4131, %v4083
      %v4144 = vmul.f32 %v4132, %v4078
      %v4145 = vmul.f32 %v4133, %v4084
      %v4146 = vadd.f32 %v4036, %v4134
      %v4147 = vadd.f32 %v4037, %v4135
      %v4148 = vadd.f32 %v4038, %v4136
      %v4149 = vadd.f32 %v4039, %v4137
      %v4150 = vadd.f32 %v4040, %v4138
      %v4151 = vadd.f32 %v4041, %v4139
      %v4152 = vadd.f32 %v4042, %v4140
      %v4153 = vadd.f32 %v4043, %v4141
      %v4154 = vadd.f32 %v4044, %v4142
      %v4155 = vadd.f32 %v4045, %v4143
      %v4156 = vadd.f32 %v4046, %v4144
      %v4157 = vadd.f32 %v4047, %v4145
      %4158 = vrot.lane.b32.xlu0 %v803, 112
      %v4159 = vpop.permute.xlu0 %4158
      %4160 = vrot.lane.b32.xlu0 %v805, 112
      %v4161 = vpop.permute.xlu0 %4160
      %4162 = vrot.lane.b32.xlu0 %v807, 112
      %v4163 = vpop.permute.xlu0 %4162
      %4164 = vrot.lane.b32.xlu0 %v809, 112
      %v4165 = vpop.permute.xlu0 %4164
      %4166 = vrot.lane.b32.xlu0 %v811, 112
      %v4167 = vpop.permute.xlu0 %4166
      %4168 = vrot.lane.b32.xlu0 %v813, 112
      %v4169 = vpop.permute.xlu0 %4168
      %4170 = vrot.lane.b32.xlu0 %v804, 112
      %v4171 = vpop.permute.xlu0 %4170
      %4172 = vrot.lane.b32.xlu0 %v806, 112
      %v4173 = vpop.permute.xlu0 %4172
      %4174 = vrot.lane.b32.xlu0 %v808, 112
      %v4175 = vpop.permute.xlu0 %4174
      %4176 = vrot.lane.b32.xlu0 %v810, 112
      %v4177 = vpop.permute.xlu0 %4176
      %4178 = vrot.lane.b32.xlu0 %v812, 112
      %v4179 = vpop.permute.xlu0 %4178
      %4180 = vrot.lane.b32.xlu0 %v814, 112
      %v4181 = vpop.permute.xlu0 %4180
      %vm4182 = vcmp.lt.s32.totalorder %v882, 112
      %v4183 = vsel %vm4182, %v4159, %v4171
      %v4184 = vsel %vm4182, %v4161, %v4173
      %v4185 = vsel %vm4182, %v4163, %v4175
      %v4186 = vsel %vm4182, %v4165, %v4177
      %v4187 = vsel %vm4182, %v4167, %v4179
      %v4188 = vsel %vm4182, %v4169, %v4181
      %v4189 = vsel %vm4182, %v4171, %v4159
      %v4190 = vsel %vm4182, %v4173, %v4161
      %v4191 = vsel %vm4182, %v4175, %v4163
      %v4192 = vsel %vm4182, %v4177, %v4165
      %v4193 = vsel %vm4182, %v4179, %v4167
      %v4194 = vsel %vm4182, %v4181, %v4169
      %s4195 = scalar_lea.vmem %s7, 55
      %v4196 = vld [vmem:[%s4195] ss:$8 sm:$0x3]
      %4197 = vset.pattern.permute.xlu0 31
      %4198 = vperm.xlu0 %4197, %v797
      %v4199 = vpop.permute.xlu0 %4198
      %4201 = vset.pattern.permute.xlu0 31
      %4202 = vperm.xlu0 %4201, %v798
      %v4203 = vpop.permute.xlu0 %4202
      %4205 = vset.pattern.permute.xlu0 31
      %4206 = vperm.xlu0 %4205, %v799
      %v4207 = vpop.permute.xlu0 %4206
      %4209 = vset.pattern.permute.xlu0 31
      %4210 = vperm.xlu0 %4209, %v800
      %v4211 = vpop.permute.xlu0 %4210
      %4213 = vset.pattern.permute.xlu0 31
      %4214 = vperm.xlu0 %4213, %v801
      %v4215 = vpop.permute.xlu0 %4214
      %4217 = vset.pattern.permute.xlu0 31
      %4218 = vperm.xlu0 %4217, %v802
      %v4219 = vpop.permute.xlu0 %4218
      %v4222 = vlaneseq
      %v4223 = vshrl.u32 %v4222, 7
      %v4224 = vsub.s32 0, %v4223
      %v4225 = vrot.slane %v4196, %v4224
      %v4226 = vlaneseq
      %v4227 = vshrl.u32 %v4226, 7
      %v4228 = vsub.s32 1, %v4227
      %v4229 = vrot.slane %v4196, %v4228
      %v4232 = vmul.f32 %v4199, %v4225
      %v4233 = vmul.f32 %v4199, %v4229
      %v4234 = vmul.f32 %v4203, %v4225
      %v4235 = vmul.f32 %v4203, %v4229
      %v4236 = vmul.f32 %v4207, %v4225
      %v4237 = vmul.f32 %v4207, %v4229
      %v4238 = vmul.f32 %v4211, %v4225
      %v4239 = vmul.f32 %v4211, %v4229
      %v4240 = vmul.f32 %v4215, %v4225
      %v4241 = vmul.f32 %v4215, %v4229
      %v4242 = vmul.f32 %v4219, %v4225
      %v4243 = vmul.f32 %v4219, %v4229
      %v4244 = vmul.f32 %v4232, %v4183
      %v4245 = vmul.f32 %v4233, %v4189
      %v4246 = vmul.f32 %v4234, %v4184
      %v4247 = vmul.f32 %v4235, %v4190
      %v4248 = vmul.f32 %v4236, %v4185
      %v4249 = vmul.f32 %v4237, %v4191
      %v4250 = vmul.f32 %v4238, %v4186
      %v4251 = vmul.f32 %v4239, %v4192
      %v4252 = vmul.f32 %v4240, %v4187
      %v4253 = vmul.f32 %v4241, %v4193
      %v4254 = vmul.f32 %v4242, %v4188
      %v4255 = vmul.f32 %v4243, %v4194
      %v4256 = vadd.f32 %v4146, %v4244
      %v4257 = vadd.f32 %v4147, %v4245
      %v4258 = vadd.f32 %v4148, %v4246
      %v4259 = vadd.f32 %v4149, %v4247
      %v4260 = vadd.f32 %v4150, %v4248
      %v4261 = vadd.f32 %v4151, %v4249
      %v4262 = vadd.f32 %v4152, %v4250
      %v4263 = vadd.f32 %v4153, %v4251
      %v4264 = vadd.f32 %v4154, %v4252
      %v4265 = vadd.f32 %v4155, %v4253
      %v4266 = vadd.f32 %v4156, %v4254
      %v4267 = vadd.f32 %v4157, %v4255
      %4268 = vrot.lane.b32.xlu0 %v803, 111
      %v4269 = vpop.permute.xlu0 %4268
      %4270 = vrot.lane.b32.xlu0 %v805, 111
      %v4271 = vpop.permute.xlu0 %4270
      %4272 = vrot.lane.b32.xlu0 %v807, 111
      %v4273 = vpop.permute.xlu0 %4272
      %4274 = vrot.lane.b32.xlu0 %v809, 111
      %v4275 = vpop.permute.xlu0 %4274
      %4276 = vrot.lane.b32.xlu0 %v811, 111
      %v4277 = vpop.permute.xlu0 %4276
      %4278 = vrot.lane.b32.xlu0 %v813, 111
      %v4279 = vpop.permute.xlu0 %4278
      %4280 = vrot.lane.b32.xlu0 %v804, 111
      %v4281 = vpop.permute.xlu0 %4280
      %4282 = vrot.lane.b32.xlu0 %v806, 111
      %v4283 = vpop.permute.xlu0 %4282
      %4284 = vrot.lane.b32.xlu0 %v808, 111
      %v4285 = vpop.permute.xlu0 %4284
      %4286 = vrot.lane.b32.xlu0 %v810, 111
      %v4287 = vpop.permute.xlu0 %4286
      %4288 = vrot.lane.b32.xlu0 %v812, 111
      %v4289 = vpop.permute.xlu0 %4288
      %4290 = vrot.lane.b32.xlu0 %v814, 111
      %v4291 = vpop.permute.xlu0 %4290
      %vm4292 = vcmp.lt.s32.totalorder %v882, 111
      %v4293 = vsel %vm4292, %v4269, %v4281
      %v4294 = vsel %vm4292, %v4271, %v4283
      %v4295 = vsel %vm4292, %v4273, %v4285
      %v4296 = vsel %vm4292, %v4275, %v4287
      %v4297 = vsel %vm4292, %v4277, %v4289
      %v4298 = vsel %vm4292, %v4279, %v4291
      %v4299 = vsel %vm4292, %v4281, %v4269
      %v4300 = vsel %vm4292, %v4283, %v4271
      %v4301 = vsel %vm4292, %v4285, %v4273
      %v4302 = vsel %vm4292, %v4287, %v4275
      %v4303 = vsel %vm4292, %v4289, %v4277
      %v4304 = vsel %vm4292, %v4291, %v4279
      %s4305 = scalar_lea.vmem %s7, 64
      %v4306 = vld [vmem:[%s4305] ss:$8 sm:$0x3]
      %4307 = vset.pattern.permute.xlu0 32
      %4308 = vperm.xlu0 %4307, %v797
      %v4309 = vpop.permute.xlu0 %4308
      %4311 = vset.pattern.permute.xlu0 32
      %4312 = vperm.xlu0 %4311, %v798
      %v4313 = vpop.permute.xlu0 %4312
      %4315 = vset.pattern.permute.xlu0 32
      %4316 = vperm.xlu0 %4315, %v799
      %v4317 = vpop.permute.xlu0 %4316
      %4319 = vset.pattern.permute.xlu0 32
      %4320 = vperm.xlu0 %4319, %v800
      %v4321 = vpop.permute.xlu0 %4320
      %4323 = vset.pattern.permute.xlu0 32
      %4324 = vperm.xlu0 %4323, %v801
      %v4325 = vpop.permute.xlu0 %4324
      %4327 = vset.pattern.permute.xlu0 32
      %4328 = vperm.xlu0 %4327, %v802
      %v4329 = vpop.permute.xlu0 %4328
      %v4332 = vlaneseq
      %v4333 = vshrl.u32 %v4332, 7
      %v4334 = vsub.s32 0, %v4333
      %v4335 = vrot.slane %v4306, %v4334
      %v4336 = vlaneseq
      %v4337 = vshrl.u32 %v4336, 7
      %v4338 = vsub.s32 1, %v4337
      %v4339 = vrot.slane %v4306, %v4338
      %v4342 = vmul.f32 %v4309, %v4335
      %v4343 = vmul.f32 %v4309, %v4339
      %v4344 = vmul.f32 %v4313, %v4335
      %v4345 = vmul.f32 %v4313, %v4339
      %v4346 = vmul.f32 %v4317, %v4335
      %v4347 = vmul.f32 %v4317, %v4339
      %v4348 = vmul.f32 %v4321, %v4335
      %v4349 = vmul.f32 %v4321, %v4339
      %v4350 = vmul.f32 %v4325, %v4335
      %v4351 = vmul.f32 %v4325, %v4339
      %v4352 = vmul.f32 %v4329, %v4335
      %v4353 = vmul.f32 %v4329, %v4339
      %v4354 = vmul.f32 %v4342, %v4293
      %v4355 = vmul.f32 %v4343, %v4299
      %v4356 = vmul.f32 %v4344, %v4294
      %v4357 = vmul.f32 %v4345, %v4300
      %v4358 = vmul.f32 %v4346, %v4295
      %v4359 = vmul.f32 %v4347, %v4301
      %v4360 = vmul.f32 %v4348, %v4296
      %v4361 = vmul.f32 %v4349, %v4302
      %v4362 = vmul.f32 %v4350, %v4297
      %v4363 = vmul.f32 %v4351, %v4303
      %v4364 = vmul.f32 %v4352, %v4298
      %v4365 = vmul.f32 %v4353, %v4304
      %v4366 = vadd.f32 %v4256, %v4354
      %v4367 = vadd.f32 %v4257, %v4355
      %v4368 = vadd.f32 %v4258, %v4356
      %v4369 = vadd.f32 %v4259, %v4357
      %v4370 = vadd.f32 %v4260, %v4358
      %v4371 = vadd.f32 %v4261, %v4359
      %v4372 = vadd.f32 %v4262, %v4360
      %v4373 = vadd.f32 %v4263, %v4361
      %v4374 = vadd.f32 %v4264, %v4362
      %v4375 = vadd.f32 %v4265, %v4363
      %v4376 = vadd.f32 %v4266, %v4364
      %v4377 = vadd.f32 %v4267, %v4365
      %4378 = vrot.lane.b32.xlu0 %v803, 110
      %v4379 = vpop.permute.xlu0 %4378
      %4380 = vrot.lane.b32.xlu0 %v805, 110
      %v4381 = vpop.permute.xlu0 %4380
      %4382 = vrot.lane.b32.xlu0 %v807, 110
      %v4383 = vpop.permute.xlu0 %4382
      %4384 = vrot.lane.b32.xlu0 %v809, 110
      %v4385 = vpop.permute.xlu0 %4384
      %4386 = vrot.lane.b32.xlu0 %v811, 110
      %v4387 = vpop.permute.xlu0 %4386
      %4388 = vrot.lane.b32.xlu0 %v813, 110
      %v4389 = vpop.permute.xlu0 %4388
      %4390 = vrot.lane.b32.xlu0 %v804, 110
      %v4391 = vpop.permute.xlu0 %4390
      %4392 = vrot.lane.b32.xlu0 %v806, 110
      %v4393 = vpop.permute.xlu0 %4392
      %4394 = vrot.lane.b32.xlu0 %v808, 110
      %v4395 = vpop.permute.xlu0 %4394
      %4396 = vrot.lane.b32.xlu0 %v810, 110
      %v4397 = vpop.permute.xlu0 %4396
      %4398 = vrot.lane.b32.xlu0 %v812, 110
      %v4399 = vpop.permute.xlu0 %4398
      %4400 = vrot.lane.b32.xlu0 %v814, 110
      %v4401 = vpop.permute.xlu0 %4400
      %vm4402 = vcmp.lt.s32.totalorder %v882, 110
      %v4403 = vsel %vm4402, %v4379, %v4391
      %v4404 = vsel %vm4402, %v4381, %v4393
      %v4405 = vsel %vm4402, %v4383, %v4395
      %v4406 = vsel %vm4402, %v4385, %v4397
      %v4407 = vsel %vm4402, %v4387, %v4399
      %v4408 = vsel %vm4402, %v4389, %v4401
      %v4409 = vsel %vm4402, %v4391, %v4379
      %v4410 = vsel %vm4402, %v4393, %v4381
      %v4411 = vsel %vm4402, %v4395, %v4383
      %v4412 = vsel %vm4402, %v4397, %v4385
      %v4413 = vsel %vm4402, %v4399, %v4387
      %v4414 = vsel %vm4402, %v4401, %v4389
      %s4415 = scalar_lea.vmem %s7, 65
      %v4416 = vld [vmem:[%s4415] ss:$8 sm:$0x3]
      %4417 = vset.pattern.permute.xlu0 33
      %4418 = vperm.xlu0 %4417, %v797
      %v4419 = vpop.permute.xlu0 %4418
      %4421 = vset.pattern.permute.xlu0 33
      %4422 = vperm.xlu0 %4421, %v798
      %v4423 = vpop.permute.xlu0 %4422
      %4425 = vset.pattern.permute.xlu0 33
      %4426 = vperm.xlu0 %4425, %v799
      %v4427 = vpop.permute.xlu0 %4426
      %4429 = vset.pattern.permute.xlu0 33
      %4430 = vperm.xlu0 %4429, %v800
      %v4431 = vpop.permute.xlu0 %4430
      %4433 = vset.pattern.permute.xlu0 33
      %4434 = vperm.xlu0 %4433, %v801
      %v4435 = vpop.permute.xlu0 %4434
      %4437 = vset.pattern.permute.xlu0 33
      %4438 = vperm.xlu0 %4437, %v802
      %v4439 = vpop.permute.xlu0 %4438
      %v4442 = vlaneseq
      %v4443 = vshrl.u32 %v4442, 7
      %v4444 = vsub.s32 0, %v4443
      %v4445 = vrot.slane %v4416, %v4444
      %v4446 = vlaneseq
      %v4447 = vshrl.u32 %v4446, 7
      %v4448 = vsub.s32 1, %v4447
      %v4449 = vrot.slane %v4416, %v4448
      %v4452 = vmul.f32 %v4419, %v4445
      %v4453 = vmul.f32 %v4419, %v4449
      %v4454 = vmul.f32 %v4423, %v4445
      %v4455 = vmul.f32 %v4423, %v4449
      %v4456 = vmul.f32 %v4427, %v4445
      %v4457 = vmul.f32 %v4427, %v4449
      %v4458 = vmul.f32 %v4431, %v4445
      %v4459 = vmul.f32 %v4431, %v4449
      %v4460 = vmul.f32 %v4435, %v4445
      %v4461 = vmul.f32 %v4435, %v4449
      %v4462 = vmul.f32 %v4439, %v4445
      %v4463 = vmul.f32 %v4439, %v4449
      %v4464 = vmul.f32 %v4452, %v4403
      %v4465 = vmul.f32 %v4453, %v4409
      %v4466 = vmul.f32 %v4454, %v4404
      %v4467 = vmul.f32 %v4455, %v4410
      %v4468 = vmul.f32 %v4456, %v4405
      %v4469 = vmul.f32 %v4457, %v4411
      %v4470 = vmul.f32 %v4458, %v4406
      %v4471 = vmul.f32 %v4459, %v4412
      %v4472 = vmul.f32 %v4460, %v4407
      %v4473 = vmul.f32 %v4461, %v4413
      %v4474 = vmul.f32 %v4462, %v4408
      %v4475 = vmul.f32 %v4463, %v4414
      %v4476 = vadd.f32 %v4366, %v4464
      %v4477 = vadd.f32 %v4367, %v4465
      %v4478 = vadd.f32 %v4368, %v4466
      %v4479 = vadd.f32 %v4369, %v4467
      %v4480 = vadd.f32 %v4370, %v4468
      %v4481 = vadd.f32 %v4371, %v4469
      %v4482 = vadd.f32 %v4372, %v4470
      %v4483 = vadd.f32 %v4373, %v4471
      %v4484 = vadd.f32 %v4374, %v4472
      %v4485 = vadd.f32 %v4375, %v4473
      %v4486 = vadd.f32 %v4376, %v4474
      %v4487 = vadd.f32 %v4377, %v4475
      %4488 = vrot.lane.b32.xlu0 %v803, 109
      %v4489 = vpop.permute.xlu0 %4488
      %4490 = vrot.lane.b32.xlu0 %v805, 109
      %v4491 = vpop.permute.xlu0 %4490
      %4492 = vrot.lane.b32.xlu0 %v807, 109
      %v4493 = vpop.permute.xlu0 %4492
      %4494 = vrot.lane.b32.xlu0 %v809, 109
      %v4495 = vpop.permute.xlu0 %4494
      %4496 = vrot.lane.b32.xlu0 %v811, 109
      %v4497 = vpop.permute.xlu0 %4496
      %4498 = vrot.lane.b32.xlu0 %v813, 109
      %v4499 = vpop.permute.xlu0 %4498
      %4500 = vrot.lane.b32.xlu0 %v804, 109
      %v4501 = vpop.permute.xlu0 %4500
      %4502 = vrot.lane.b32.xlu0 %v806, 109
      %v4503 = vpop.permute.xlu0 %4502
      %4504 = vrot.lane.b32.xlu0 %v808, 109
      %v4505 = vpop.permute.xlu0 %4504
      %4506 = vrot.lane.b32.xlu0 %v810, 109
      %v4507 = vpop.permute.xlu0 %4506
      %4508 = vrot.lane.b32.xlu0 %v812, 109
      %v4509 = vpop.permute.xlu0 %4508
      %4510 = vrot.lane.b32.xlu0 %v814, 109
      %v4511 = vpop.permute.xlu0 %4510
      %vm4512 = vcmp.lt.s32.totalorder %v882, 109
      %v4513 = vsel %vm4512, %v4489, %v4501
      %v4514 = vsel %vm4512, %v4491, %v4503
      %v4515 = vsel %vm4512, %v4493, %v4505
      %v4516 = vsel %vm4512, %v4495, %v4507
      %v4517 = vsel %vm4512, %v4497, %v4509
      %v4518 = vsel %vm4512, %v4499, %v4511
      %v4519 = vsel %vm4512, %v4501, %v4489
      %v4520 = vsel %vm4512, %v4503, %v4491
      %v4521 = vsel %vm4512, %v4505, %v4493
      %v4522 = vsel %vm4512, %v4507, %v4495
      %v4523 = vsel %vm4512, %v4509, %v4497
      %v4524 = vsel %vm4512, %v4511, %v4499
      %s4525 = scalar_lea.vmem %s7, 66
      %v4526 = vld [vmem:[%s4525] ss:$8 sm:$0x3]
      %4527 = vset.pattern.permute.xlu0 34
      %4528 = vperm.xlu0 %4527, %v797
      %v4529 = vpop.permute.xlu0 %4528
      %4531 = vset.pattern.permute.xlu0 34
      %4532 = vperm.xlu0 %4531, %v798
      %v4533 = vpop.permute.xlu0 %4532
      %4535 = vset.pattern.permute.xlu0 34
      %4536 = vperm.xlu0 %4535, %v799
      %v4537 = vpop.permute.xlu0 %4536
      %4539 = vset.pattern.permute.xlu0 34
      %4540 = vperm.xlu0 %4539, %v800
      %v4541 = vpop.permute.xlu0 %4540
      %4543 = vset.pattern.permute.xlu0 34
      %4544 = vperm.xlu0 %4543, %v801
      %v4545 = vpop.permute.xlu0 %4544
      %4547 = vset.pattern.permute.xlu0 34
      %4548 = vperm.xlu0 %4547, %v802
      %v4549 = vpop.permute.xlu0 %4548
      %v4552 = vlaneseq
      %v4553 = vshrl.u32 %v4552, 7
      %v4554 = vsub.s32 0, %v4553
      %v4555 = vrot.slane %v4526, %v4554
      %v4556 = vlaneseq
      %v4557 = vshrl.u32 %v4556, 7
      %v4558 = vsub.s32 1, %v4557
      %v4559 = vrot.slane %v4526, %v4558
      %v4562 = vmul.f32 %v4529, %v4555
      %v4563 = vmul.f32 %v4529, %v4559
      %v4564 = vmul.f32 %v4533, %v4555
      %v4565 = vmul.f32 %v4533, %v4559
      %v4566 = vmul.f32 %v4537, %v4555
      %v4567 = vmul.f32 %v4537, %v4559
      %v4568 = vmul.f32 %v4541, %v4555
      %v4569 = vmul.f32 %v4541, %v4559
      %v4570 = vmul.f32 %v4545, %v4555
      %v4571 = vmul.f32 %v4545, %v4559
      %v4572 = vmul.f32 %v4549, %v4555
      %v4573 = vmul.f32 %v4549, %v4559
      %v4574 = vmul.f32 %v4562, %v4513
      %v4575 = vmul.f32 %v4563, %v4519
      %v4576 = vmul.f32 %v4564, %v4514
      %v4577 = vmul.f32 %v4565, %v4520
      %v4578 = vmul.f32 %v4566, %v4515
      %v4579 = vmul.f32 %v4567, %v4521
      %v4580 = vmul.f32 %v4568, %v4516
      %v4581 = vmul.f32 %v4569, %v4522
      %v4582 = vmul.f32 %v4570, %v4517
      %v4583 = vmul.f32 %v4571, %v4523
      %v4584 = vmul.f32 %v4572, %v4518
      %v4585 = vmul.f32 %v4573, %v4524
      %v4586 = vadd.f32 %v4476, %v4574
      %v4587 = vadd.f32 %v4477, %v4575
      %v4588 = vadd.f32 %v4478, %v4576
      %v4589 = vadd.f32 %v4479, %v4577
      %v4590 = vadd.f32 %v4480, %v4578
      %v4591 = vadd.f32 %v4481, %v4579
      %v4592 = vadd.f32 %v4482, %v4580
      %v4593 = vadd.f32 %v4483, %v4581
      %v4594 = vadd.f32 %v4484, %v4582
      %v4595 = vadd.f32 %v4485, %v4583
      %v4596 = vadd.f32 %v4486, %v4584
      %v4597 = vadd.f32 %v4487, %v4585
      %4598 = vrot.lane.b32.xlu0 %v803, 99
      %v4599 = vpop.permute.xlu0 %4598
      %4600 = vrot.lane.b32.xlu0 %v805, 99
      %v4601 = vpop.permute.xlu0 %4600
      %4602 = vrot.lane.b32.xlu0 %v807, 99
      %v4603 = vpop.permute.xlu0 %4602
      %4604 = vrot.lane.b32.xlu0 %v809, 99
      %v4605 = vpop.permute.xlu0 %4604
      %4606 = vrot.lane.b32.xlu0 %v811, 99
      %v4607 = vpop.permute.xlu0 %4606
      %4608 = vrot.lane.b32.xlu0 %v813, 99
      %v4609 = vpop.permute.xlu0 %4608
      %4610 = vrot.lane.b32.xlu0 %v804, 99
      %v4611 = vpop.permute.xlu0 %4610
      %4612 = vrot.lane.b32.xlu0 %v806, 99
      %v4613 = vpop.permute.xlu0 %4612
      %4614 = vrot.lane.b32.xlu0 %v808, 99
      %v4615 = vpop.permute.xlu0 %4614
      %4616 = vrot.lane.b32.xlu0 %v810, 99
      %v4617 = vpop.permute.xlu0 %4616
      %4618 = vrot.lane.b32.xlu0 %v812, 99
      %v4619 = vpop.permute.xlu0 %4618
      %4620 = vrot.lane.b32.xlu0 %v814, 99
      %v4621 = vpop.permute.xlu0 %4620
      %vm4622 = vcmp.lt.s32.totalorder %v882, 99
      %v4623 = vsel %vm4622, %v4599, %v4611
      %v4624 = vsel %vm4622, %v4601, %v4613
      %v4625 = vsel %vm4622, %v4603, %v4615
      %v4626 = vsel %vm4622, %v4605, %v4617
      %v4627 = vsel %vm4622, %v4607, %v4619
      %v4628 = vsel %vm4622, %v4609, %v4621
      %v4629 = vsel %vm4622, %v4611, %v4599
      %v4630 = vsel %vm4622, %v4613, %v4601
      %v4631 = vsel %vm4622, %v4615, %v4603
      %v4632 = vsel %vm4622, %v4617, %v4605
      %v4633 = vsel %vm4622, %v4619, %v4607
      %v4634 = vsel %vm4622, %v4621, %v4609
      %s4635 = scalar_lea.vmem %s7, 67
      %v4636 = vld [vmem:[%s4635] ss:$8 sm:$0x3]
      %4637 = vset.pattern.permute.xlu0 35
      %4638 = vperm.xlu0 %4637, %v797
      %v4639 = vpop.permute.xlu0 %4638
      %4641 = vset.pattern.permute.xlu0 35
      %4642 = vperm.xlu0 %4641, %v798
      %v4643 = vpop.permute.xlu0 %4642
      %4645 = vset.pattern.permute.xlu0 35
      %4646 = vperm.xlu0 %4645, %v799
      %v4647 = vpop.permute.xlu0 %4646
      %4649 = vset.pattern.permute.xlu0 35
      %4650 = vperm.xlu0 %4649, %v800
      %v4651 = vpop.permute.xlu0 %4650
      %4653 = vset.pattern.permute.xlu0 35
      %4654 = vperm.xlu0 %4653, %v801
      %v4655 = vpop.permute.xlu0 %4654
      %4657 = vset.pattern.permute.xlu0 35
      %4658 = vperm.xlu0 %4657, %v802
      %v4659 = vpop.permute.xlu0 %4658
      %v4662 = vlaneseq
      %v4663 = vshrl.u32 %v4662, 7
      %v4664 = vsub.s32 0, %v4663
      %v4665 = vrot.slane %v4636, %v4664
      %v4666 = vlaneseq
      %v4667 = vshrl.u32 %v4666, 7
      %v4668 = vsub.s32 1, %v4667
      %v4669 = vrot.slane %v4636, %v4668
      %v4672 = vmul.f32 %v4639, %v4665
      %v4673 = vmul.f32 %v4639, %v4669
      %v4674 = vmul.f32 %v4643, %v4665
      %v4675 = vmul.f32 %v4643, %v4669
      %v4676 = vmul.f32 %v4647, %v4665
      %v4677 = vmul.f32 %v4647, %v4669
      %v4678 = vmul.f32 %v4651, %v4665
      %v4679 = vmul.f32 %v4651, %v4669
      %v4680 = vmul.f32 %v4655, %v4665
      %v4681 = vmul.f32 %v4655, %v4669
      %v4682 = vmul.f32 %v4659, %v4665
      %v4683 = vmul.f32 %v4659, %v4669
      %v4684 = vmul.f32 %v4672, %v4623
      %v4685 = vmul.f32 %v4673, %v4629
      %v4686 = vmul.f32 %v4674, %v4624
      %v4687 = vmul.f32 %v4675, %v4630
      %v4688 = vmul.f32 %v4676, %v4625
      %v4689 = vmul.f32 %v4677, %v4631
      %v4690 = vmul.f32 %v4678, %v4626
      %v4691 = vmul.f32 %v4679, %v4632
      %v4692 = vmul.f32 %v4680, %v4627
      %v4693 = vmul.f32 %v4681, %v4633
      %v4694 = vmul.f32 %v4682, %v4628
      %v4695 = vmul.f32 %v4683, %v4634
      %v4696 = vadd.f32 %v4586, %v4684
      %v4697 = vadd.f32 %v4587, %v4685
      %v4698 = vadd.f32 %v4588, %v4686
      %v4699 = vadd.f32 %v4589, %v4687
      %v4700 = vadd.f32 %v4590, %v4688
      %v4701 = vadd.f32 %v4591, %v4689
      %v4702 = vadd.f32 %v4592, %v4690
      %v4703 = vadd.f32 %v4593, %v4691
      %v4704 = vadd.f32 %v4594, %v4692
      %v4705 = vadd.f32 %v4595, %v4693
      %v4706 = vadd.f32 %v4596, %v4694
      %v4707 = vadd.f32 %v4597, %v4695
      %4708 = vrot.lane.b32.xlu0 %v803, 98
      %v4709 = vpop.permute.xlu0 %4708
      %4710 = vrot.lane.b32.xlu0 %v805, 98
      %v4711 = vpop.permute.xlu0 %4710
      %4712 = vrot.lane.b32.xlu0 %v807, 98
      %v4713 = vpop.permute.xlu0 %4712
      %4714 = vrot.lane.b32.xlu0 %v809, 98
      %v4715 = vpop.permute.xlu0 %4714
      %4716 = vrot.lane.b32.xlu0 %v811, 98
      %v4717 = vpop.permute.xlu0 %4716
      %4718 = vrot.lane.b32.xlu0 %v813, 98
      %v4719 = vpop.permute.xlu0 %4718
      %4720 = vrot.lane.b32.xlu0 %v804, 98
      %v4721 = vpop.permute.xlu0 %4720
      %4722 = vrot.lane.b32.xlu0 %v806, 98
      %v4723 = vpop.permute.xlu0 %4722
      %4724 = vrot.lane.b32.xlu0 %v808, 98
      %v4725 = vpop.permute.xlu0 %4724
      %4726 = vrot.lane.b32.xlu0 %v810, 98
      %v4727 = vpop.permute.xlu0 %4726
      %4728 = vrot.lane.b32.xlu0 %v812, 98
      %v4729 = vpop.permute.xlu0 %4728
      %4730 = vrot.lane.b32.xlu0 %v814, 98
      %v4731 = vpop.permute.xlu0 %4730
      %vm4732 = vcmp.lt.s32.totalorder %v882, 98
      %v4733 = vsel %vm4732, %v4709, %v4721
      %v4734 = vsel %vm4732, %v4711, %v4723
      %v4735 = vsel %vm4732, %v4713, %v4725
      %v4736 = vsel %vm4732, %v4715, %v4727
      %v4737 = vsel %vm4732, %v4717, %v4729
      %v4738 = vsel %vm4732, %v4719, %v4731
      %v4739 = vsel %vm4732, %v4721, %v4709
      %v4740 = vsel %vm4732, %v4723, %v4711
      %v4741 = vsel %vm4732, %v4725, %v4713
      %v4742 = vsel %vm4732, %v4727, %v4715
      %v4743 = vsel %vm4732, %v4729, %v4717
      %v4744 = vsel %vm4732, %v4731, %v4719
      %s4745 = scalar_lea.vmem %s7, 68
      %v4746 = vld [vmem:[%s4745] ss:$8 sm:$0x3]
      %4747 = vset.pattern.permute.xlu0 36
      %4748 = vperm.xlu0 %4747, %v797
      %v4749 = vpop.permute.xlu0 %4748
      %4751 = vset.pattern.permute.xlu0 36
      %4752 = vperm.xlu0 %4751, %v798
      %v4753 = vpop.permute.xlu0 %4752
      %4755 = vset.pattern.permute.xlu0 36
      %4756 = vperm.xlu0 %4755, %v799
      %v4757 = vpop.permute.xlu0 %4756
      %4759 = vset.pattern.permute.xlu0 36
      %4760 = vperm.xlu0 %4759, %v800
      %v4761 = vpop.permute.xlu0 %4760
      %4763 = vset.pattern.permute.xlu0 36
      %4764 = vperm.xlu0 %4763, %v801
      %v4765 = vpop.permute.xlu0 %4764
      %4767 = vset.pattern.permute.xlu0 36
      %4768 = vperm.xlu0 %4767, %v802
      %v4769 = vpop.permute.xlu0 %4768
      %v4772 = vlaneseq
      %v4773 = vshrl.u32 %v4772, 7
      %v4774 = vsub.s32 0, %v4773
      %v4775 = vrot.slane %v4746, %v4774
      %v4776 = vlaneseq
      %v4777 = vshrl.u32 %v4776, 7
      %v4778 = vsub.s32 1, %v4777
      %v4779 = vrot.slane %v4746, %v4778
      %v4782 = vmul.f32 %v4749, %v4775
      %v4783 = vmul.f32 %v4749, %v4779
      %v4784 = vmul.f32 %v4753, %v4775
      %v4785 = vmul.f32 %v4753, %v4779
      %v4786 = vmul.f32 %v4757, %v4775
      %v4787 = vmul.f32 %v4757, %v4779
      %v4788 = vmul.f32 %v4761, %v4775
      %v4789 = vmul.f32 %v4761, %v4779
      %v4790 = vmul.f32 %v4765, %v4775
      %v4791 = vmul.f32 %v4765, %v4779
      %v4792 = vmul.f32 %v4769, %v4775
      %v4793 = vmul.f32 %v4769, %v4779
      %v4794 = vmul.f32 %v4782, %v4733
      %v4795 = vmul.f32 %v4783, %v4739
      %v4796 = vmul.f32 %v4784, %v4734
      %v4797 = vmul.f32 %v4785, %v4740
      %v4798 = vmul.f32 %v4786, %v4735
      %v4799 = vmul.f32 %v4787, %v4741
      %v4800 = vmul.f32 %v4788, %v4736
      %v4801 = vmul.f32 %v4789, %v4742
      %v4802 = vmul.f32 %v4790, %v4737
      %v4803 = vmul.f32 %v4791, %v4743
      %v4804 = vmul.f32 %v4792, %v4738
      %v4805 = vmul.f32 %v4793, %v4744
      %v4806 = vadd.f32 %v4696, %v4794
      %v4807 = vadd.f32 %v4697, %v4795
      %v4808 = vadd.f32 %v4698, %v4796
      %v4809 = vadd.f32 %v4699, %v4797
      %v4810 = vadd.f32 %v4700, %v4798
      %v4811 = vadd.f32 %v4701, %v4799
      %v4812 = vadd.f32 %v4702, %v4800
      %v4813 = vadd.f32 %v4703, %v4801
      %v4814 = vadd.f32 %v4704, %v4802
      %v4815 = vadd.f32 %v4705, %v4803
      %v4816 = vadd.f32 %v4706, %v4804
      %v4817 = vadd.f32 %v4707, %v4805
      %4818 = vrot.lane.b32.xlu0 %v803, 97
      %v4819 = vpop.permute.xlu0 %4818
      %4820 = vrot.lane.b32.xlu0 %v805, 97
      %v4821 = vpop.permute.xlu0 %4820
      %4822 = vrot.lane.b32.xlu0 %v807, 97
      %v4823 = vpop.permute.xlu0 %4822
      %4824 = vrot.lane.b32.xlu0 %v809, 97
      %v4825 = vpop.permute.xlu0 %4824
      %4826 = vrot.lane.b32.xlu0 %v811, 97
      %v4827 = vpop.permute.xlu0 %4826
      %4828 = vrot.lane.b32.xlu0 %v813, 97
      %v4829 = vpop.permute.xlu0 %4828
      %4830 = vrot.lane.b32.xlu0 %v804, 97
      %v4831 = vpop.permute.xlu0 %4830
      %4832 = vrot.lane.b32.xlu0 %v806, 97
      %v4833 = vpop.permute.xlu0 %4832
      %4834 = vrot.lane.b32.xlu0 %v808, 97
      %v4835 = vpop.permute.xlu0 %4834
      %4836 = vrot.lane.b32.xlu0 %v810, 97
      %v4837 = vpop.permute.xlu0 %4836
      %4838 = vrot.lane.b32.xlu0 %v812, 97
      %v4839 = vpop.permute.xlu0 %4838
      %4840 = vrot.lane.b32.xlu0 %v814, 97
      %v4841 = vpop.permute.xlu0 %4840
      %vm4842 = vcmp.lt.s32.totalorder %v882, 97
      %v4843 = vsel %vm4842, %v4819, %v4831
      %v4844 = vsel %vm4842, %v4821, %v4833
      %v4845 = vsel %vm4842, %v4823, %v4835
      %v4846 = vsel %vm4842, %v4825, %v4837
      %v4847 = vsel %vm4842, %v4827, %v4839
      %v4848 = vsel %vm4842, %v4829, %v4841
      %v4849 = vsel %vm4842, %v4831, %v4819
      %v4850 = vsel %vm4842, %v4833, %v4821
      %v4851 = vsel %vm4842, %v4835, %v4823
      %v4852 = vsel %vm4842, %v4837, %v4825
      %v4853 = vsel %vm4842, %v4839, %v4827
      %v4854 = vsel %vm4842, %v4841, %v4829
      %s4855 = scalar_lea.vmem %s7, 69
      %v4856 = vld [vmem:[%s4855] ss:$8 sm:$0x3]
      %4857 = vset.pattern.permute.xlu0 37
      %4858 = vperm.xlu0 %4857, %v797
      %v4859 = vpop.permute.xlu0 %4858
      %4861 = vset.pattern.permute.xlu0 37
      %4862 = vperm.xlu0 %4861, %v798
      %v4863 = vpop.permute.xlu0 %4862
      %4865 = vset.pattern.permute.xlu0 37
      %4866 = vperm.xlu0 %4865, %v799
      %v4867 = vpop.permute.xlu0 %4866
      %4869 = vset.pattern.permute.xlu0 37
      %4870 = vperm.xlu0 %4869, %v800
      %v4871 = vpop.permute.xlu0 %4870
      %4873 = vset.pattern.permute.xlu0 37
      %4874 = vperm.xlu0 %4873, %v801
      %v4875 = vpop.permute.xlu0 %4874
      %4877 = vset.pattern.permute.xlu0 37
      %4878 = vperm.xlu0 %4877, %v802
      %v4879 = vpop.permute.xlu0 %4878
      %v4882 = vlaneseq
      %v4883 = vshrl.u32 %v4882, 7
      %v4884 = vsub.s32 0, %v4883
      %v4885 = vrot.slane %v4856, %v4884
      %v4886 = vlaneseq
      %v4887 = vshrl.u32 %v4886, 7
      %v4888 = vsub.s32 1, %v4887
      %v4889 = vrot.slane %v4856, %v4888
      %v4892 = vmul.f32 %v4859, %v4885
      %v4893 = vmul.f32 %v4859, %v4889
      %v4894 = vmul.f32 %v4863, %v4885
      %v4895 = vmul.f32 %v4863, %v4889
      %v4896 = vmul.f32 %v4867, %v4885
      %v4897 = vmul.f32 %v4867, %v4889
      %v4898 = vmul.f32 %v4871, %v4885
      %v4899 = vmul.f32 %v4871, %v4889
      %v4900 = vmul.f32 %v4875, %v4885
      %v4901 = vmul.f32 %v4875, %v4889
      %v4902 = vmul.f32 %v4879, %v4885
      %v4903 = vmul.f32 %v4879, %v4889
      %v4904 = vmul.f32 %v4892, %v4843
      %v4905 = vmul.f32 %v4893, %v4849
      %v4906 = vmul.f32 %v4894, %v4844
      %v4907 = vmul.f32 %v4895, %v4850
      %v4908 = vmul.f32 %v4896, %v4845
      %v4909 = vmul.f32 %v4897, %v4851
      %v4910 = vmul.f32 %v4898, %v4846
      %v4911 = vmul.f32 %v4899, %v4852
      %v4912 = vmul.f32 %v4900, %v4847
      %v4913 = vmul.f32 %v4901, %v4853
      %v4914 = vmul.f32 %v4902, %v4848
      %v4915 = vmul.f32 %v4903, %v4854
      %v4916 = vadd.f32 %v4806, %v4904
      %v4917 = vadd.f32 %v4807, %v4905
      %v4918 = vadd.f32 %v4808, %v4906
      %v4919 = vadd.f32 %v4809, %v4907
      %v4920 = vadd.f32 %v4810, %v4908
      %v4921 = vadd.f32 %v4811, %v4909
      %v4922 = vadd.f32 %v4812, %v4910
      %v4923 = vadd.f32 %v4813, %v4911
      %v4924 = vadd.f32 %v4814, %v4912
      %v4925 = vadd.f32 %v4815, %v4913
      %v4926 = vadd.f32 %v4816, %v4914
      %v4927 = vadd.f32 %v4817, %v4915
      %4928 = vrot.lane.b32.xlu0 %v803, 96
      %v4929 = vpop.permute.xlu0 %4928
      %4930 = vrot.lane.b32.xlu0 %v805, 96
      %v4931 = vpop.permute.xlu0 %4930
      %4932 = vrot.lane.b32.xlu0 %v807, 96
      %v4933 = vpop.permute.xlu0 %4932
      %4934 = vrot.lane.b32.xlu0 %v809, 96
      %v4935 = vpop.permute.xlu0 %4934
      %4936 = vrot.lane.b32.xlu0 %v811, 96
      %v4937 = vpop.permute.xlu0 %4936
      %4938 = vrot.lane.b32.xlu0 %v813, 96
      %v4939 = vpop.permute.xlu0 %4938
      %4940 = vrot.lane.b32.xlu0 %v804, 96
      %v4941 = vpop.permute.xlu0 %4940
      %4942 = vrot.lane.b32.xlu0 %v806, 96
      %v4943 = vpop.permute.xlu0 %4942
      %4944 = vrot.lane.b32.xlu0 %v808, 96
      %v4945 = vpop.permute.xlu0 %4944
      %4946 = vrot.lane.b32.xlu0 %v810, 96
      %v4947 = vpop.permute.xlu0 %4946
      %4948 = vrot.lane.b32.xlu0 %v812, 96
      %v4949 = vpop.permute.xlu0 %4948
      %4950 = vrot.lane.b32.xlu0 %v814, 96
      %v4951 = vpop.permute.xlu0 %4950
      %vm4952 = vcmp.lt.s32.totalorder %v882, 96
      %v4953 = vsel %vm4952, %v4929, %v4941
      %v4954 = vsel %vm4952, %v4931, %v4943
      %v4955 = vsel %vm4952, %v4933, %v4945
      %v4956 = vsel %vm4952, %v4935, %v4947
      %v4957 = vsel %vm4952, %v4937, %v4949
      %v4958 = vsel %vm4952, %v4939, %v4951
      %v4959 = vsel %vm4952, %v4941, %v4929
      %v4960 = vsel %vm4952, %v4943, %v4931
      %v4961 = vsel %vm4952, %v4945, %v4933
      %v4962 = vsel %vm4952, %v4947, %v4935
      %v4963 = vsel %vm4952, %v4949, %v4937
      %v4964 = vsel %vm4952, %v4951, %v4939
      %s4965 = scalar_lea.vmem %s7, 70
      %v4966 = vld [vmem:[%s4965] ss:$8 sm:$0x3]
      %4967 = vset.pattern.permute.xlu0 38
      %4968 = vperm.xlu0 %4967, %v797
      %v4969 = vpop.permute.xlu0 %4968
      %4971 = vset.pattern.permute.xlu0 38
      %4972 = vperm.xlu0 %4971, %v798
      %v4973 = vpop.permute.xlu0 %4972
      %4975 = vset.pattern.permute.xlu0 38
      %4976 = vperm.xlu0 %4975, %v799
      %v4977 = vpop.permute.xlu0 %4976
      %4979 = vset.pattern.permute.xlu0 38
      %4980 = vperm.xlu0 %4979, %v800
      %v4981 = vpop.permute.xlu0 %4980
      %4983 = vset.pattern.permute.xlu0 38
      %4984 = vperm.xlu0 %4983, %v801
      %v4985 = vpop.permute.xlu0 %4984
      %4987 = vset.pattern.permute.xlu0 38
      %4988 = vperm.xlu0 %4987, %v802
      %v4989 = vpop.permute.xlu0 %4988
      %v4992 = vlaneseq
      %v4993 = vshrl.u32 %v4992, 7
      %v4994 = vsub.s32 0, %v4993
      %v4995 = vrot.slane %v4966, %v4994
      %v4996 = vlaneseq
      %v4997 = vshrl.u32 %v4996, 7
      %v4998 = vsub.s32 1, %v4997
      %v4999 = vrot.slane %v4966, %v4998
      %v5002 = vmul.f32 %v4969, %v4995
      %v5003 = vmul.f32 %v4969, %v4999
      %v5004 = vmul.f32 %v4973, %v4995
      %v5005 = vmul.f32 %v4973, %v4999
      %v5006 = vmul.f32 %v4977, %v4995
      %v5007 = vmul.f32 %v4977, %v4999
      %v5008 = vmul.f32 %v4981, %v4995
      %v5009 = vmul.f32 %v4981, %v4999
      %v5010 = vmul.f32 %v4985, %v4995
      %v5011 = vmul.f32 %v4985, %v4999
      %v5012 = vmul.f32 %v4989, %v4995
      %v5013 = vmul.f32 %v4989, %v4999
      %v5014 = vmul.f32 %v5002, %v4953
      %v5015 = vmul.f32 %v5003, %v4959
      %v5016 = vmul.f32 %v5004, %v4954
      %v5017 = vmul.f32 %v5005, %v4960
      %v5018 = vmul.f32 %v5006, %v4955
      %v5019 = vmul.f32 %v5007, %v4961
      %v5020 = vmul.f32 %v5008, %v4956
      %v5021 = vmul.f32 %v5009, %v4962
      %v5022 = vmul.f32 %v5010, %v4957
      %v5023 = vmul.f32 %v5011, %v4963
      %v5024 = vmul.f32 %v5012, %v4958
      %v5025 = vmul.f32 %v5013, %v4964
      %v5026 = vadd.f32 %v4916, %v5014
      %v5027 = vadd.f32 %v4917, %v5015
      %v5028 = vadd.f32 %v4918, %v5016
      %v5029 = vadd.f32 %v4919, %v5017
      %v5030 = vadd.f32 %v4920, %v5018
      %v5031 = vadd.f32 %v4921, %v5019
      %v5032 = vadd.f32 %v4922, %v5020
      %v5033 = vadd.f32 %v4923, %v5021
      %v5034 = vadd.f32 %v4924, %v5022
      %v5035 = vadd.f32 %v4925, %v5023
      %v5036 = vadd.f32 %v4926, %v5024
      %v5037 = vadd.f32 %v4927, %v5025
      %5038 = vrot.lane.b32.xlu0 %v803, 95
      %v5039 = vpop.permute.xlu0 %5038
      %5040 = vrot.lane.b32.xlu0 %v805, 95
      %v5041 = vpop.permute.xlu0 %5040
      %5042 = vrot.lane.b32.xlu0 %v807, 95
      %v5043 = vpop.permute.xlu0 %5042
      %5044 = vrot.lane.b32.xlu0 %v809, 95
      %v5045 = vpop.permute.xlu0 %5044
      %5046 = vrot.lane.b32.xlu0 %v811, 95
      %v5047 = vpop.permute.xlu0 %5046
      %5048 = vrot.lane.b32.xlu0 %v813, 95
      %v5049 = vpop.permute.xlu0 %5048
      %5050 = vrot.lane.b32.xlu0 %v804, 95
      %v5051 = vpop.permute.xlu0 %5050
      %5052 = vrot.lane.b32.xlu0 %v806, 95
      %v5053 = vpop.permute.xlu0 %5052
      %5054 = vrot.lane.b32.xlu0 %v808, 95
      %v5055 = vpop.permute.xlu0 %5054
      %5056 = vrot.lane.b32.xlu0 %v810, 95
      %v5057 = vpop.permute.xlu0 %5056
      %5058 = vrot.lane.b32.xlu0 %v812, 95
      %v5059 = vpop.permute.xlu0 %5058
      %5060 = vrot.lane.b32.xlu0 %v814, 95
      %v5061 = vpop.permute.xlu0 %5060
      %vm5062 = vcmp.lt.s32.totalorder %v882, 95
      %v5063 = vsel %vm5062, %v5039, %v5051
      %v5064 = vsel %vm5062, %v5041, %v5053
      %v5065 = vsel %vm5062, %v5043, %v5055
      %v5066 = vsel %vm5062, %v5045, %v5057
      %v5067 = vsel %vm5062, %v5047, %v5059
      %v5068 = vsel %vm5062, %v5049, %v5061
      %v5069 = vsel %vm5062, %v5051, %v5039
      %v5070 = vsel %vm5062, %v5053, %v5041
      %v5071 = vsel %vm5062, %v5055, %v5043
      %v5072 = vsel %vm5062, %v5057, %v5045
      %v5073 = vsel %vm5062, %v5059, %v5047
      %v5074 = vsel %vm5062, %v5061, %v5049
      %s5075 = scalar_lea.vmem %s7, 71
      %v5076 = vld [vmem:[%s5075] ss:$8 sm:$0x3]
      %5077 = vset.pattern.permute.xlu0 39
      %5078 = vperm.xlu0 %5077, %v797
      %v5079 = vpop.permute.xlu0 %5078
      %5081 = vset.pattern.permute.xlu0 39
      %5082 = vperm.xlu0 %5081, %v798
      %v5083 = vpop.permute.xlu0 %5082
      %5085 = vset.pattern.permute.xlu0 39
      %5086 = vperm.xlu0 %5085, %v799
      %v5087 = vpop.permute.xlu0 %5086
      %5089 = vset.pattern.permute.xlu0 39
      %5090 = vperm.xlu0 %5089, %v800
      %v5091 = vpop.permute.xlu0 %5090
      %5093 = vset.pattern.permute.xlu0 39
      %5094 = vperm.xlu0 %5093, %v801
      %v5095 = vpop.permute.xlu0 %5094
      %5097 = vset.pattern.permute.xlu0 39
      %5098 = vperm.xlu0 %5097, %v802
      %v5099 = vpop.permute.xlu0 %5098
      %v5102 = vlaneseq
      %v5103 = vshrl.u32 %v5102, 7
      %v5104 = vsub.s32 0, %v5103
      %v5105 = vrot.slane %v5076, %v5104
      %v5106 = vlaneseq
      %v5107 = vshrl.u32 %v5106, 7
      %v5108 = vsub.s32 1, %v5107
      %v5109 = vrot.slane %v5076, %v5108
      %v5112 = vmul.f32 %v5079, %v5105
      %v5113 = vmul.f32 %v5079, %v5109
      %v5114 = vmul.f32 %v5083, %v5105
      %v5115 = vmul.f32 %v5083, %v5109
      %v5116 = vmul.f32 %v5087, %v5105
      %v5117 = vmul.f32 %v5087, %v5109
      %v5118 = vmul.f32 %v5091, %v5105
      %v5119 = vmul.f32 %v5091, %v5109
      %v5120 = vmul.f32 %v5095, %v5105
      %v5121 = vmul.f32 %v5095, %v5109
      %v5122 = vmul.f32 %v5099, %v5105
      %v5123 = vmul.f32 %v5099, %v5109
      %v5124 = vmul.f32 %v5112, %v5063
      %v5125 = vmul.f32 %v5113, %v5069
      %v5126 = vmul.f32 %v5114, %v5064
      %v5127 = vmul.f32 %v5115, %v5070
      %v5128 = vmul.f32 %v5116, %v5065
      %v5129 = vmul.f32 %v5117, %v5071
      %v5130 = vmul.f32 %v5118, %v5066
      %v5131 = vmul.f32 %v5119, %v5072
      %v5132 = vmul.f32 %v5120, %v5067
      %v5133 = vmul.f32 %v5121, %v5073
      %v5134 = vmul.f32 %v5122, %v5068
      %v5135 = vmul.f32 %v5123, %v5074
      %v5136 = vadd.f32 %v5026, %v5124
      %v5137 = vadd.f32 %v5027, %v5125
      %v5138 = vadd.f32 %v5028, %v5126
      %v5139 = vadd.f32 %v5029, %v5127
      %v5140 = vadd.f32 %v5030, %v5128
      %v5141 = vadd.f32 %v5031, %v5129
      %v5142 = vadd.f32 %v5032, %v5130
      %v5143 = vadd.f32 %v5033, %v5131
      %v5144 = vadd.f32 %v5034, %v5132
      %v5145 = vadd.f32 %v5035, %v5133
      %v5146 = vadd.f32 %v5036, %v5134
      %v5147 = vadd.f32 %v5037, %v5135
      %5148 = vrot.lane.b32.xlu0 %v803, 94
      %v5149 = vpop.permute.xlu0 %5148
      %5150 = vrot.lane.b32.xlu0 %v805, 94
      %v5151 = vpop.permute.xlu0 %5150
      %5152 = vrot.lane.b32.xlu0 %v807, 94
      %v5153 = vpop.permute.xlu0 %5152
      %5154 = vrot.lane.b32.xlu0 %v809, 94
      %v5155 = vpop.permute.xlu0 %5154
      %5156 = vrot.lane.b32.xlu0 %v811, 94
      %v5157 = vpop.permute.xlu0 %5156
      %5158 = vrot.lane.b32.xlu0 %v813, 94
      %v5159 = vpop.permute.xlu0 %5158
      %5160 = vrot.lane.b32.xlu0 %v804, 94
      %v5161 = vpop.permute.xlu0 %5160
      %5162 = vrot.lane.b32.xlu0 %v806, 94
      %v5163 = vpop.permute.xlu0 %5162
      %5164 = vrot.lane.b32.xlu0 %v808, 94
      %v5165 = vpop.permute.xlu0 %5164
      %5166 = vrot.lane.b32.xlu0 %v810, 94
      %v5167 = vpop.permute.xlu0 %5166
      %5168 = vrot.lane.b32.xlu0 %v812, 94
      %v5169 = vpop.permute.xlu0 %5168
      %5170 = vrot.lane.b32.xlu0 %v814, 94
      %v5171 = vpop.permute.xlu0 %5170
      %vm5172 = vcmp.lt.s32.totalorder %v882, 94
      %v5173 = vsel %vm5172, %v5149, %v5161
      %v5174 = vsel %vm5172, %v5151, %v5163
      %v5175 = vsel %vm5172, %v5153, %v5165
      %v5176 = vsel %vm5172, %v5155, %v5167
      %v5177 = vsel %vm5172, %v5157, %v5169
      %v5178 = vsel %vm5172, %v5159, %v5171
      %v5179 = vsel %vm5172, %v5161, %v5149
      %v5180 = vsel %vm5172, %v5163, %v5151
      %v5181 = vsel %vm5172, %v5165, %v5153
      %v5182 = vsel %vm5172, %v5167, %v5155
      %v5183 = vsel %vm5172, %v5169, %v5157
      %v5184 = vsel %vm5172, %v5171, %v5159
      %s5185 = scalar_lea.vmem %s7, 80
      %v5186 = vld [vmem:[%s5185] ss:$8 sm:$0x3]
      %5187 = vset.pattern.permute.xlu0 40
      %5188 = vperm.xlu0 %5187, %v797
      %v5189 = vpop.permute.xlu0 %5188
      %5191 = vset.pattern.permute.xlu0 40
      %5192 = vperm.xlu0 %5191, %v798
      %v5193 = vpop.permute.xlu0 %5192
      %5195 = vset.pattern.permute.xlu0 40
      %5196 = vperm.xlu0 %5195, %v799
      %v5197 = vpop.permute.xlu0 %5196
      %5199 = vset.pattern.permute.xlu0 40
      %5200 = vperm.xlu0 %5199, %v800
      %v5201 = vpop.permute.xlu0 %5200
      %5203 = vset.pattern.permute.xlu0 40
      %5204 = vperm.xlu0 %5203, %v801
      %v5205 = vpop.permute.xlu0 %5204
      %5207 = vset.pattern.permute.xlu0 40
      %5208 = vperm.xlu0 %5207, %v802
      %v5209 = vpop.permute.xlu0 %5208
      %v5212 = vlaneseq
      %v5213 = vshrl.u32 %v5212, 7
      %v5214 = vsub.s32 0, %v5213
      %v5215 = vrot.slane %v5186, %v5214
      %v5216 = vlaneseq
      %v5217 = vshrl.u32 %v5216, 7
      %v5218 = vsub.s32 1, %v5217
      %v5219 = vrot.slane %v5186, %v5218
      %v5222 = vmul.f32 %v5189, %v5215
      %v5223 = vmul.f32 %v5189, %v5219
      %v5224 = vmul.f32 %v5193, %v5215
      %v5225 = vmul.f32 %v5193, %v5219
      %v5226 = vmul.f32 %v5197, %v5215
      %v5227 = vmul.f32 %v5197, %v5219
      %v5228 = vmul.f32 %v5201, %v5215
      %v5229 = vmul.f32 %v5201, %v5219
      %v5230 = vmul.f32 %v5205, %v5215
      %v5231 = vmul.f32 %v5205, %v5219
      %v5232 = vmul.f32 %v5209, %v5215
      %v5233 = vmul.f32 %v5209, %v5219
      %v5234 = vmul.f32 %v5222, %v5173
      %v5235 = vmul.f32 %v5223, %v5179
      %v5236 = vmul.f32 %v5224, %v5174
      %v5237 = vmul.f32 %v5225, %v5180
      %v5238 = vmul.f32 %v5226, %v5175
      %v5239 = vmul.f32 %v5227, %v5181
      %v5240 = vmul.f32 %v5228, %v5176
      %v5241 = vmul.f32 %v5229, %v5182
      %v5242 = vmul.f32 %v5230, %v5177
      %v5243 = vmul.f32 %v5231, %v5183
      %v5244 = vmul.f32 %v5232, %v5178
      %v5245 = vmul.f32 %v5233, %v5184
      %v5246 = vadd.f32 %v5136, %v5234
      %v5247 = vadd.f32 %v5137, %v5235
      %v5248 = vadd.f32 %v5138, %v5236
      %v5249 = vadd.f32 %v5139, %v5237
      %v5250 = vadd.f32 %v5140, %v5238
      %v5251 = vadd.f32 %v5141, %v5239
      %v5252 = vadd.f32 %v5142, %v5240
      %v5253 = vadd.f32 %v5143, %v5241
      %v5254 = vadd.f32 %v5144, %v5242
      %v5255 = vadd.f32 %v5145, %v5243
      %v5256 = vadd.f32 %v5146, %v5244
      %v5257 = vadd.f32 %v5147, %v5245
      %5258 = vrot.lane.b32.xlu0 %v803, 93
      %v5259 = vpop.permute.xlu0 %5258
      %5260 = vrot.lane.b32.xlu0 %v805, 93
      %v5261 = vpop.permute.xlu0 %5260
      %5262 = vrot.lane.b32.xlu0 %v807, 93
      %v5263 = vpop.permute.xlu0 %5262
      %5264 = vrot.lane.b32.xlu0 %v809, 93
      %v5265 = vpop.permute.xlu0 %5264
      %5266 = vrot.lane.b32.xlu0 %v811, 93
      %v5267 = vpop.permute.xlu0 %5266
      %5268 = vrot.lane.b32.xlu0 %v813, 93
      %v5269 = vpop.permute.xlu0 %5268
      %5270 = vrot.lane.b32.xlu0 %v804, 93
      %v5271 = vpop.permute.xlu0 %5270
      %5272 = vrot.lane.b32.xlu0 %v806, 93
      %v5273 = vpop.permute.xlu0 %5272
      %5274 = vrot.lane.b32.xlu0 %v808, 93
      %v5275 = vpop.permute.xlu0 %5274
      %5276 = vrot.lane.b32.xlu0 %v810, 93
      %v5277 = vpop.permute.xlu0 %5276
      %5278 = vrot.lane.b32.xlu0 %v812, 93
      %v5279 = vpop.permute.xlu0 %5278
      %5280 = vrot.lane.b32.xlu0 %v814, 93
      %v5281 = vpop.permute.xlu0 %5280
      %vm5282 = vcmp.lt.s32.totalorder %v882, 93
      %v5283 = vsel %vm5282, %v5259, %v5271
      %v5284 = vsel %vm5282, %v5261, %v5273
      %v5285 = vsel %vm5282, %v5263, %v5275
      %v5286 = vsel %vm5282, %v5265, %v5277
      %v5287 = vsel %vm5282, %v5267, %v5279
      %v5288 = vsel %vm5282, %v5269, %v5281
      %v5289 = vsel %vm5282, %v5271, %v5259
      %v5290 = vsel %vm5282, %v5273, %v5261
      %v5291 = vsel %vm5282, %v5275, %v5263
      %v5292 = vsel %vm5282, %v5277, %v5265
      %v5293 = vsel %vm5282, %v5279, %v5267
      %v5294 = vsel %vm5282, %v5281, %v5269
      %s5295 = scalar_lea.vmem %s7, 81
      %v5296 = vld [vmem:[%s5295] ss:$8 sm:$0x3]
      %5297 = vset.pattern.permute.xlu0 41
      %5298 = vperm.xlu0 %5297, %v797
      %v5299 = vpop.permute.xlu0 %5298
      %5301 = vset.pattern.permute.xlu0 41
      %5302 = vperm.xlu0 %5301, %v798
      %v5303 = vpop.permute.xlu0 %5302
      %5305 = vset.pattern.permute.xlu0 41
      %5306 = vperm.xlu0 %5305, %v799
      %v5307 = vpop.permute.xlu0 %5306
      %5309 = vset.pattern.permute.xlu0 41
      %5310 = vperm.xlu0 %5309, %v800
      %v5311 = vpop.permute.xlu0 %5310
      %5313 = vset.pattern.permute.xlu0 41
      %5314 = vperm.xlu0 %5313, %v801
      %v5315 = vpop.permute.xlu0 %5314
      %5317 = vset.pattern.permute.xlu0 41
      %5318 = vperm.xlu0 %5317, %v802
      %v5319 = vpop.permute.xlu0 %5318
      %v5322 = vlaneseq
      %v5323 = vshrl.u32 %v5322, 7
      %v5324 = vsub.s32 0, %v5323
      %v5325 = vrot.slane %v5296, %v5324
      %v5326 = vlaneseq
      %v5327 = vshrl.u32 %v5326, 7
      %v5328 = vsub.s32 1, %v5327
      %v5329 = vrot.slane %v5296, %v5328
      %v5332 = vmul.f32 %v5299, %v5325
      %v5333 = vmul.f32 %v5299, %v5329
      %v5334 = vmul.f32 %v5303, %v5325
      %v5335 = vmul.f32 %v5303, %v5329
      %v5336 = vmul.f32 %v5307, %v5325
      %v5337 = vmul.f32 %v5307, %v5329
      %v5338 = vmul.f32 %v5311, %v5325
      %v5339 = vmul.f32 %v5311, %v5329
      %v5340 = vmul.f32 %v5315, %v5325
      %v5341 = vmul.f32 %v5315, %v5329
      %v5342 = vmul.f32 %v5319, %v5325
      %v5343 = vmul.f32 %v5319, %v5329
      %v5344 = vmul.f32 %v5332, %v5283
      %v5345 = vmul.f32 %v5333, %v5289
      %v5346 = vmul.f32 %v5334, %v5284
      %v5347 = vmul.f32 %v5335, %v5290
      %v5348 = vmul.f32 %v5336, %v5285
      %v5349 = vmul.f32 %v5337, %v5291
      %v5350 = vmul.f32 %v5338, %v5286
      %v5351 = vmul.f32 %v5339, %v5292
      %v5352 = vmul.f32 %v5340, %v5287
      %v5353 = vmul.f32 %v5341, %v5293
      %v5354 = vmul.f32 %v5342, %v5288
      %v5355 = vmul.f32 %v5343, %v5294
      %v5356 = vadd.f32 %v5246, %v5344
      %v5357 = vadd.f32 %v5247, %v5345
      %v5358 = vadd.f32 %v5248, %v5346
      %v5359 = vadd.f32 %v5249, %v5347
      %v5360 = vadd.f32 %v5250, %v5348
      %v5361 = vadd.f32 %v5251, %v5349
      %v5362 = vadd.f32 %v5252, %v5350
      %v5363 = vadd.f32 %v5253, %v5351
      %v5364 = vadd.f32 %v5254, %v5352
      %v5365 = vadd.f32 %v5255, %v5353
      %v5366 = vadd.f32 %v5256, %v5354
      %v5367 = vadd.f32 %v5257, %v5355
      %5368 = vrot.lane.b32.xlu0 %v803, 83
      %v5369 = vpop.permute.xlu0 %5368
      %5370 = vrot.lane.b32.xlu0 %v805, 83
      %v5371 = vpop.permute.xlu0 %5370
      %5372 = vrot.lane.b32.xlu0 %v807, 83
      %v5373 = vpop.permute.xlu0 %5372
      %5374 = vrot.lane.b32.xlu0 %v809, 83
      %v5375 = vpop.permute.xlu0 %5374
      %5376 = vrot.lane.b32.xlu0 %v811, 83
      %v5377 = vpop.permute.xlu0 %5376
      %5378 = vrot.lane.b32.xlu0 %v813, 83
      %v5379 = vpop.permute.xlu0 %5378
      %5380 = vrot.lane.b32.xlu0 %v804, 83
      %v5381 = vpop.permute.xlu0 %5380
      %5382 = vrot.lane.b32.xlu0 %v806, 83
      %v5383 = vpop.permute.xlu0 %5382
      %5384 = vrot.lane.b32.xlu0 %v808, 83
      %v5385 = vpop.permute.xlu0 %5384
      %5386 = vrot.lane.b32.xlu0 %v810, 83
      %v5387 = vpop.permute.xlu0 %5386
      %5388 = vrot.lane.b32.xlu0 %v812, 83
      %v5389 = vpop.permute.xlu0 %5388
      %5390 = vrot.lane.b32.xlu0 %v814, 83
      %v5391 = vpop.permute.xlu0 %5390
      %vm5392 = vcmp.lt.s32.totalorder %v882, 83
      %v5393 = vsel %vm5392, %v5369, %v5381
      %v5394 = vsel %vm5392, %v5371, %v5383
      %v5395 = vsel %vm5392, %v5373, %v5385
      %v5396 = vsel %vm5392, %v5375, %v5387
      %v5397 = vsel %vm5392, %v5377, %v5389
      %v5398 = vsel %vm5392, %v5379, %v5391
      %v5399 = vsel %vm5392, %v5381, %v5369
      %v5400 = vsel %vm5392, %v5383, %v5371
      %v5401 = vsel %vm5392, %v5385, %v5373
      %v5402 = vsel %vm5392, %v5387, %v5375
      %v5403 = vsel %vm5392, %v5389, %v5377
      %v5404 = vsel %vm5392, %v5391, %v5379
      %s5405 = scalar_lea.vmem %s7, 82
      %v5406 = vld [vmem:[%s5405] ss:$8 sm:$0x3]
      %5407 = vset.pattern.permute.xlu0 42
      %5408 = vperm.xlu0 %5407, %v797
      %v5409 = vpop.permute.xlu0 %5408
      %5411 = vset.pattern.permute.xlu0 42
      %5412 = vperm.xlu0 %5411, %v798
      %v5413 = vpop.permute.xlu0 %5412
      %5415 = vset.pattern.permute.xlu0 42
      %5416 = vperm.xlu0 %5415, %v799
      %v5417 = vpop.permute.xlu0 %5416
      %5419 = vset.pattern.permute.xlu0 42
      %5420 = vperm.xlu0 %5419, %v800
      %v5421 = vpop.permute.xlu0 %5420
      %5423 = vset.pattern.permute.xlu0 42
      %5424 = vperm.xlu0 %5423, %v801
      %v5425 = vpop.permute.xlu0 %5424
      %5427 = vset.pattern.permute.xlu0 42
      %5428 = vperm.xlu0 %5427, %v802
      %v5429 = vpop.permute.xlu0 %5428
      %v5432 = vlaneseq
      %v5433 = vshrl.u32 %v5432, 7
      %v5434 = vsub.s32 0, %v5433
      %v5435 = vrot.slane %v5406, %v5434
      %v5436 = vlaneseq
      %v5437 = vshrl.u32 %v5436, 7
      %v5438 = vsub.s32 1, %v5437
      %v5439 = vrot.slane %v5406, %v5438
      %v5442 = vmul.f32 %v5409, %v5435
      %v5443 = vmul.f32 %v5409, %v5439
      %v5444 = vmul.f32 %v5413, %v5435
      %v5445 = vmul.f32 %v5413, %v5439
      %v5446 = vmul.f32 %v5417, %v5435
      %v5447 = vmul.f32 %v5417, %v5439
      %v5448 = vmul.f32 %v5421, %v5435
      %v5449 = vmul.f32 %v5421, %v5439
      %v5450 = vmul.f32 %v5425, %v5435
      %v5451 = vmul.f32 %v5425, %v5439
      %v5452 = vmul.f32 %v5429, %v5435
      %v5453 = vmul.f32 %v5429, %v5439
      %v5454 = vmul.f32 %v5442, %v5393
      %v5455 = vmul.f32 %v5443, %v5399
      %v5456 = vmul.f32 %v5444, %v5394
      %v5457 = vmul.f32 %v5445, %v5400
      %v5458 = vmul.f32 %v5446, %v5395
      %v5459 = vmul.f32 %v5447, %v5401
      %v5460 = vmul.f32 %v5448, %v5396
      %v5461 = vmul.f32 %v5449, %v5402
      %v5462 = vmul.f32 %v5450, %v5397
      %v5463 = vmul.f32 %v5451, %v5403
      %v5464 = vmul.f32 %v5452, %v5398
      %v5465 = vmul.f32 %v5453, %v5404
      %v5466 = vadd.f32 %v5356, %v5454
      %v5467 = vadd.f32 %v5357, %v5455
      %v5468 = vadd.f32 %v5358, %v5456
      %v5469 = vadd.f32 %v5359, %v5457
      %v5470 = vadd.f32 %v5360, %v5458
      %v5471 = vadd.f32 %v5361, %v5459
      %v5472 = vadd.f32 %v5362, %v5460
      %v5473 = vadd.f32 %v5363, %v5461
      %v5474 = vadd.f32 %v5364, %v5462
      %v5475 = vadd.f32 %v5365, %v5463
      %v5476 = vadd.f32 %v5366, %v5464
      %v5477 = vadd.f32 %v5367, %v5465
      %5478 = vrot.lane.b32.xlu0 %v803, 82
      %v5479 = vpop.permute.xlu0 %5478
      %5480 = vrot.lane.b32.xlu0 %v805, 82
      %v5481 = vpop.permute.xlu0 %5480
      %5482 = vrot.lane.b32.xlu0 %v807, 82
      %v5483 = vpop.permute.xlu0 %5482
      %5484 = vrot.lane.b32.xlu0 %v809, 82
      %v5485 = vpop.permute.xlu0 %5484
      %5486 = vrot.lane.b32.xlu0 %v811, 82
      %v5487 = vpop.permute.xlu0 %5486
      %5488 = vrot.lane.b32.xlu0 %v813, 82
      %v5489 = vpop.permute.xlu0 %5488
      %5490 = vrot.lane.b32.xlu0 %v804, 82
      %v5491 = vpop.permute.xlu0 %5490
      %5492 = vrot.lane.b32.xlu0 %v806, 82
      %v5493 = vpop.permute.xlu0 %5492
      %5494 = vrot.lane.b32.xlu0 %v808, 82
      %v5495 = vpop.permute.xlu0 %5494
      %5496 = vrot.lane.b32.xlu0 %v810, 82
      %v5497 = vpop.permute.xlu0 %5496
      %5498 = vrot.lane.b32.xlu0 %v812, 82
      %v5499 = vpop.permute.xlu0 %5498
      %5500 = vrot.lane.b32.xlu0 %v814, 82
      %v5501 = vpop.permute.xlu0 %5500
      %vm5502 = vcmp.lt.s32.totalorder %v882, 82
      %v5503 = vsel %vm5502, %v5479, %v5491
      %v5504 = vsel %vm5502, %v5481, %v5493
      %v5505 = vsel %vm5502, %v5483, %v5495
      %v5506 = vsel %vm5502, %v5485, %v5497
      %v5507 = vsel %vm5502, %v5487, %v5499
      %v5508 = vsel %vm5502, %v5489, %v5501
      %v5509 = vsel %vm5502, %v5491, %v5479
      %v5510 = vsel %vm5502, %v5493, %v5481
      %v5511 = vsel %vm5502, %v5495, %v5483
      %v5512 = vsel %vm5502, %v5497, %v5485
      %v5513 = vsel %vm5502, %v5499, %v5487
      %v5514 = vsel %vm5502, %v5501, %v5489
      %s5515 = scalar_lea.vmem %s7, 83
      %v5516 = vld [vmem:[%s5515] ss:$8 sm:$0x3]
      %5517 = vset.pattern.permute.xlu0 43
      %5518 = vperm.xlu0 %5517, %v797
      %v5519 = vpop.permute.xlu0 %5518
      %5521 = vset.pattern.permute.xlu0 43
      %5522 = vperm.xlu0 %5521, %v798
      %v5523 = vpop.permute.xlu0 %5522
      %5525 = vset.pattern.permute.xlu0 43
      %5526 = vperm.xlu0 %5525, %v799
      %v5527 = vpop.permute.xlu0 %5526
      %5529 = vset.pattern.permute.xlu0 43
      %5530 = vperm.xlu0 %5529, %v800
      %v5531 = vpop.permute.xlu0 %5530
      %5533 = vset.pattern.permute.xlu0 43
      %5534 = vperm.xlu0 %5533, %v801
      %v5535 = vpop.permute.xlu0 %5534
      %5537 = vset.pattern.permute.xlu0 43
      %5538 = vperm.xlu0 %5537, %v802
      %v5539 = vpop.permute.xlu0 %5538
      %v5542 = vlaneseq
      %v5543 = vshrl.u32 %v5542, 7
      %v5544 = vsub.s32 0, %v5543
      %v5545 = vrot.slane %v5516, %v5544
      %v5546 = vlaneseq
      %v5547 = vshrl.u32 %v5546, 7
      %v5548 = vsub.s32 1, %v5547
      %v5549 = vrot.slane %v5516, %v5548
      %v5552 = vmul.f32 %v5519, %v5545
      %v5553 = vmul.f32 %v5519, %v5549
      %v5554 = vmul.f32 %v5523, %v5545
      %v5555 = vmul.f32 %v5523, %v5549
      %v5556 = vmul.f32 %v5527, %v5545
      %v5557 = vmul.f32 %v5527, %v5549
      %v5558 = vmul.f32 %v5531, %v5545
      %v5559 = vmul.f32 %v5531, %v5549
      %v5560 = vmul.f32 %v5535, %v5545
      %v5561 = vmul.f32 %v5535, %v5549
      %v5562 = vmul.f32 %v5539, %v5545
      %v5563 = vmul.f32 %v5539, %v5549
      %v5564 = vmul.f32 %v5552, %v5503
      %v5565 = vmul.f32 %v5553, %v5509
      %v5566 = vmul.f32 %v5554, %v5504
      %v5567 = vmul.f32 %v5555, %v5510
      %v5568 = vmul.f32 %v5556, %v5505
      %v5569 = vmul.f32 %v5557, %v5511
      %v5570 = vmul.f32 %v5558, %v5506
      %v5571 = vmul.f32 %v5559, %v5512
      %v5572 = vmul.f32 %v5560, %v5507
      %v5573 = vmul.f32 %v5561, %v5513
      %v5574 = vmul.f32 %v5562, %v5508
      %v5575 = vmul.f32 %v5563, %v5514
      %v5576 = vadd.f32 %v5466, %v5564
      %v5577 = vadd.f32 %v5467, %v5565
      %v5578 = vadd.f32 %v5468, %v5566
      %v5579 = vadd.f32 %v5469, %v5567
      %v5580 = vadd.f32 %v5470, %v5568
      %v5581 = vadd.f32 %v5471, %v5569
      %v5582 = vadd.f32 %v5472, %v5570
      %v5583 = vadd.f32 %v5473, %v5571
      %v5584 = vadd.f32 %v5474, %v5572
      %v5585 = vadd.f32 %v5475, %v5573
      %v5586 = vadd.f32 %v5476, %v5574
      %v5587 = vadd.f32 %v5477, %v5575
      %5588 = vrot.lane.b32.xlu0 %v803, 81
      %v5589 = vpop.permute.xlu0 %5588
      %5590 = vrot.lane.b32.xlu0 %v805, 81
      %v5591 = vpop.permute.xlu0 %5590
      %5592 = vrot.lane.b32.xlu0 %v807, 81
      %v5593 = vpop.permute.xlu0 %5592
      %5594 = vrot.lane.b32.xlu0 %v809, 81
      %v5595 = vpop.permute.xlu0 %5594
      %5596 = vrot.lane.b32.xlu0 %v811, 81
      %v5597 = vpop.permute.xlu0 %5596
      %5598 = vrot.lane.b32.xlu0 %v813, 81
      %v5599 = vpop.permute.xlu0 %5598
      %5600 = vrot.lane.b32.xlu0 %v804, 81
      %v5601 = vpop.permute.xlu0 %5600
      %5602 = vrot.lane.b32.xlu0 %v806, 81
      %v5603 = vpop.permute.xlu0 %5602
      %5604 = vrot.lane.b32.xlu0 %v808, 81
      %v5605 = vpop.permute.xlu0 %5604
      %5606 = vrot.lane.b32.xlu0 %v810, 81
      %v5607 = vpop.permute.xlu0 %5606
      %5608 = vrot.lane.b32.xlu0 %v812, 81
      %v5609 = vpop.permute.xlu0 %5608
      %5610 = vrot.lane.b32.xlu0 %v814, 81
      %v5611 = vpop.permute.xlu0 %5610
      %vm5612 = vcmp.lt.s32.totalorder %v882, 81
      %v5613 = vsel %vm5612, %v5589, %v5601
      %v5614 = vsel %vm5612, %v5591, %v5603
      %v5615 = vsel %vm5612, %v5593, %v5605
      %v5616 = vsel %vm5612, %v5595, %v5607
      %v5617 = vsel %vm5612, %v5597, %v5609
      %v5618 = vsel %vm5612, %v5599, %v5611
      %v5619 = vsel %vm5612, %v5601, %v5589
      %v5620 = vsel %vm5612, %v5603, %v5591
      %v5621 = vsel %vm5612, %v5605, %v5593
      %v5622 = vsel %vm5612, %v5607, %v5595
      %v5623 = vsel %vm5612, %v5609, %v5597
      %v5624 = vsel %vm5612, %v5611, %v5599
      %s5625 = scalar_lea.vmem %s7, 84
      %v5626 = vld [vmem:[%s5625] ss:$8 sm:$0x3]
      %5627 = vset.pattern.permute.xlu0 44
      %5628 = vperm.xlu0 %5627, %v797
      %v5629 = vpop.permute.xlu0 %5628
      %5631 = vset.pattern.permute.xlu0 44
      %5632 = vperm.xlu0 %5631, %v798
      %v5633 = vpop.permute.xlu0 %5632
      %5635 = vset.pattern.permute.xlu0 44
      %5636 = vperm.xlu0 %5635, %v799
      %v5637 = vpop.permute.xlu0 %5636
      %5639 = vset.pattern.permute.xlu0 44
      %5640 = vperm.xlu0 %5639, %v800
      %v5641 = vpop.permute.xlu0 %5640
      %5643 = vset.pattern.permute.xlu0 44
      %5644 = vperm.xlu0 %5643, %v801
      %v5645 = vpop.permute.xlu0 %5644
      %5647 = vset.pattern.permute.xlu0 44
      %5648 = vperm.xlu0 %5647, %v802
      %v5649 = vpop.permute.xlu0 %5648
      %v5652 = vlaneseq
      %v5653 = vshrl.u32 %v5652, 7
      %v5654 = vsub.s32 0, %v5653
      %v5655 = vrot.slane %v5626, %v5654
      %v5656 = vlaneseq
      %v5657 = vshrl.u32 %v5656, 7
      %v5658 = vsub.s32 1, %v5657
      %v5659 = vrot.slane %v5626, %v5658
      %v5662 = vmul.f32 %v5629, %v5655
      %v5663 = vmul.f32 %v5629, %v5659
      %v5664 = vmul.f32 %v5633, %v5655
      %v5665 = vmul.f32 %v5633, %v5659
      %v5666 = vmul.f32 %v5637, %v5655
      %v5667 = vmul.f32 %v5637, %v5659
      %v5668 = vmul.f32 %v5641, %v5655
      %v5669 = vmul.f32 %v5641, %v5659
      %v5670 = vmul.f32 %v5645, %v5655
      %v5671 = vmul.f32 %v5645, %v5659
      %v5672 = vmul.f32 %v5649, %v5655
      %v5673 = vmul.f32 %v5649, %v5659
      %v5674 = vmul.f32 %v5662, %v5613
      %v5675 = vmul.f32 %v5663, %v5619
      %v5676 = vmul.f32 %v5664, %v5614
      %v5677 = vmul.f32 %v5665, %v5620
      %v5678 = vmul.f32 %v5666, %v5615
      %v5679 = vmul.f32 %v5667, %v5621
      %v5680 = vmul.f32 %v5668, %v5616
      %v5681 = vmul.f32 %v5669, %v5622
      %v5682 = vmul.f32 %v5670, %v5617
      %v5683 = vmul.f32 %v5671, %v5623
      %v5684 = vmul.f32 %v5672, %v5618
      %v5685 = vmul.f32 %v5673, %v5624
      %v5686 = vadd.f32 %v5576, %v5674
      %v5687 = vadd.f32 %v5577, %v5675
      %v5688 = vadd.f32 %v5578, %v5676
      %v5689 = vadd.f32 %v5579, %v5677
      %v5690 = vadd.f32 %v5580, %v5678
      %v5691 = vadd.f32 %v5581, %v5679
      %v5692 = vadd.f32 %v5582, %v5680
      %v5693 = vadd.f32 %v5583, %v5681
      %v5694 = vadd.f32 %v5584, %v5682
      %v5695 = vadd.f32 %v5585, %v5683
      %v5696 = vadd.f32 %v5586, %v5684
      %v5697 = vadd.f32 %v5587, %v5685
      %5698 = vrot.lane.b32.xlu0 %v803, 80
      %v5699 = vpop.permute.xlu0 %5698
      %5700 = vrot.lane.b32.xlu0 %v805, 80
      %v5701 = vpop.permute.xlu0 %5700
      %5702 = vrot.lane.b32.xlu0 %v807, 80
      %v5703 = vpop.permute.xlu0 %5702
      %5704 = vrot.lane.b32.xlu0 %v809, 80
      %v5705 = vpop.permute.xlu0 %5704
      %5706 = vrot.lane.b32.xlu0 %v811, 80
      %v5707 = vpop.permute.xlu0 %5706
      %5708 = vrot.lane.b32.xlu0 %v813, 80
      %v5709 = vpop.permute.xlu0 %5708
      %5710 = vrot.lane.b32.xlu0 %v804, 80
      %v5711 = vpop.permute.xlu0 %5710
      %5712 = vrot.lane.b32.xlu0 %v806, 80
      %v5713 = vpop.permute.xlu0 %5712
      %5714 = vrot.lane.b32.xlu0 %v808, 80
      %v5715 = vpop.permute.xlu0 %5714
      %5716 = vrot.lane.b32.xlu0 %v810, 80
      %v5717 = vpop.permute.xlu0 %5716
      %5718 = vrot.lane.b32.xlu0 %v812, 80
      %v5719 = vpop.permute.xlu0 %5718
      %5720 = vrot.lane.b32.xlu0 %v814, 80
      %v5721 = vpop.permute.xlu0 %5720
      %vm5722 = vcmp.lt.s32.totalorder %v882, 80
      %v5723 = vsel %vm5722, %v5699, %v5711
      %v5724 = vsel %vm5722, %v5701, %v5713
      %v5725 = vsel %vm5722, %v5703, %v5715
      %v5726 = vsel %vm5722, %v5705, %v5717
      %v5727 = vsel %vm5722, %v5707, %v5719
      %v5728 = vsel %vm5722, %v5709, %v5721
      %v5729 = vsel %vm5722, %v5711, %v5699
      %v5730 = vsel %vm5722, %v5713, %v5701
      %v5731 = vsel %vm5722, %v5715, %v5703
      %v5732 = vsel %vm5722, %v5717, %v5705
      %v5733 = vsel %vm5722, %v5719, %v5707
      %v5734 = vsel %vm5722, %v5721, %v5709
      %s5735 = scalar_lea.vmem %s7, 85
      %v5736 = vld [vmem:[%s5735] ss:$8 sm:$0x3]
      %5737 = vset.pattern.permute.xlu0 45
      %5738 = vperm.xlu0 %5737, %v797
      %v5739 = vpop.permute.xlu0 %5738
      %5741 = vset.pattern.permute.xlu0 45
      %5742 = vperm.xlu0 %5741, %v798
      %v5743 = vpop.permute.xlu0 %5742
      %5745 = vset.pattern.permute.xlu0 45
      %5746 = vperm.xlu0 %5745, %v799
      %v5747 = vpop.permute.xlu0 %5746
      %5749 = vset.pattern.permute.xlu0 45
      %5750 = vperm.xlu0 %5749, %v800
      %v5751 = vpop.permute.xlu0 %5750
      %5753 = vset.pattern.permute.xlu0 45
      %5754 = vperm.xlu0 %5753, %v801
      %v5755 = vpop.permute.xlu0 %5754
      %5757 = vset.pattern.permute.xlu0 45
      %5758 = vperm.xlu0 %5757, %v802
      %v5759 = vpop.permute.xlu0 %5758
      %v5762 = vlaneseq
      %v5763 = vshrl.u32 %v5762, 7
      %v5764 = vsub.s32 0, %v5763
      %v5765 = vrot.slane %v5736, %v5764
      %v5766 = vlaneseq
      %v5767 = vshrl.u32 %v5766, 7
      %v5768 = vsub.s32 1, %v5767
      %v5769 = vrot.slane %v5736, %v5768
      %v5772 = vmul.f32 %v5739, %v5765
      %v5773 = vmul.f32 %v5739, %v5769
      %v5774 = vmul.f32 %v5743, %v5765
      %v5775 = vmul.f32 %v5743, %v5769
      %v5776 = vmul.f32 %v5747, %v5765
      %v5777 = vmul.f32 %v5747, %v5769
      %v5778 = vmul.f32 %v5751, %v5765
      %v5779 = vmul.f32 %v5751, %v5769
      %v5780 = vmul.f32 %v5755, %v5765
      %v5781 = vmul.f32 %v5755, %v5769
      %v5782 = vmul.f32 %v5759, %v5765
      %v5783 = vmul.f32 %v5759, %v5769
      %v5784 = vmul.f32 %v5772, %v5723
      %v5785 = vmul.f32 %v5773, %v5729
      %v5786 = vmul.f32 %v5774, %v5724
      %v5787 = vmul.f32 %v5775, %v5730
      %v5788 = vmul.f32 %v5776, %v5725
      %v5789 = vmul.f32 %v5777, %v5731
      %v5790 = vmul.f32 %v5778, %v5726
      %v5791 = vmul.f32 %v5779, %v5732
      %v5792 = vmul.f32 %v5780, %v5727
      %v5793 = vmul.f32 %v5781, %v5733
      %v5794 = vmul.f32 %v5782, %v5728
      %v5795 = vmul.f32 %v5783, %v5734
      %v5796 = vadd.f32 %v5686, %v5784
      %v5797 = vadd.f32 %v5687, %v5785
      %v5798 = vadd.f32 %v5688, %v5786
      %v5799 = vadd.f32 %v5689, %v5787
      %v5800 = vadd.f32 %v5690, %v5788
      %v5801 = vadd.f32 %v5691, %v5789
      %v5802 = vadd.f32 %v5692, %v5790
      %v5803 = vadd.f32 %v5693, %v5791
      %v5804 = vadd.f32 %v5694, %v5792
      %v5805 = vadd.f32 %v5695, %v5793
      %v5806 = vadd.f32 %v5696, %v5794
      %v5807 = vadd.f32 %v5697, %v5795
      %5808 = vrot.lane.b32.xlu0 %v803, 79
      %v5809 = vpop.permute.xlu0 %5808
      %5810 = vrot.lane.b32.xlu0 %v805, 79
      %v5811 = vpop.permute.xlu0 %5810
      %5812 = vrot.lane.b32.xlu0 %v807, 79
      %v5813 = vpop.permute.xlu0 %5812
      %5814 = vrot.lane.b32.xlu0 %v809, 79
      %v5815 = vpop.permute.xlu0 %5814
      %5816 = vrot.lane.b32.xlu0 %v811, 79
      %v5817 = vpop.permute.xlu0 %5816
      %5818 = vrot.lane.b32.xlu0 %v813, 79
      %v5819 = vpop.permute.xlu0 %5818
      %5820 = vrot.lane.b32.xlu0 %v804, 79
      %v5821 = vpop.permute.xlu0 %5820
      %5822 = vrot.lane.b32.xlu0 %v806, 79
      %v5823 = vpop.permute.xlu0 %5822
      %5824 = vrot.lane.b32.xlu0 %v808, 79
      %v5825 = vpop.permute.xlu0 %5824
      %5826 = vrot.lane.b32.xlu0 %v810, 79
      %v5827 = vpop.permute.xlu0 %5826
      %5828 = vrot.lane.b32.xlu0 %v812, 79
      %v5829 = vpop.permute.xlu0 %5828
      %5830 = vrot.lane.b32.xlu0 %v814, 79
      %v5831 = vpop.permute.xlu0 %5830
      %vm5832 = vcmp.lt.s32.totalorder %v882, 79
      %v5833 = vsel %vm5832, %v5809, %v5821
      %v5834 = vsel %vm5832, %v5811, %v5823
      %v5835 = vsel %vm5832, %v5813, %v5825
      %v5836 = vsel %vm5832, %v5815, %v5827
      %v5837 = vsel %vm5832, %v5817, %v5829
      %v5838 = vsel %vm5832, %v5819, %v5831
      %v5839 = vsel %vm5832, %v5821, %v5809
      %v5840 = vsel %vm5832, %v5823, %v5811
      %v5841 = vsel %vm5832, %v5825, %v5813
      %v5842 = vsel %vm5832, %v5827, %v5815
      %v5843 = vsel %vm5832, %v5829, %v5817
      %v5844 = vsel %vm5832, %v5831, %v5819
      %s5845 = scalar_lea.vmem %s7, 86
      %v5846 = vld [vmem:[%s5845] ss:$8 sm:$0x3]
      %5847 = vset.pattern.permute.xlu0 46
      %5848 = vperm.xlu0 %5847, %v797
      %v5849 = vpop.permute.xlu0 %5848
      %5851 = vset.pattern.permute.xlu0 46
      %5852 = vperm.xlu0 %5851, %v798
      %v5853 = vpop.permute.xlu0 %5852
      %5855 = vset.pattern.permute.xlu0 46
      %5856 = vperm.xlu0 %5855, %v799
      %v5857 = vpop.permute.xlu0 %5856
      %5859 = vset.pattern.permute.xlu0 46
      %5860 = vperm.xlu0 %5859, %v800
      %v5861 = vpop.permute.xlu0 %5860
      %5863 = vset.pattern.permute.xlu0 46
      %5864 = vperm.xlu0 %5863, %v801
      %v5865 = vpop.permute.xlu0 %5864
      %5867 = vset.pattern.permute.xlu0 46
      %5868 = vperm.xlu0 %5867, %v802
      %v5869 = vpop.permute.xlu0 %5868
      %v5872 = vlaneseq
      %v5873 = vshrl.u32 %v5872, 7
      %v5874 = vsub.s32 0, %v5873
      %v5875 = vrot.slane %v5846, %v5874
      %v5876 = vlaneseq
      %v5877 = vshrl.u32 %v5876, 7
      %v5878 = vsub.s32 1, %v5877
      %v5879 = vrot.slane %v5846, %v5878
      %v5882 = vmul.f32 %v5849, %v5875
      %v5883 = vmul.f32 %v5849, %v5879
      %v5884 = vmul.f32 %v5853, %v5875
      %v5885 = vmul.f32 %v5853, %v5879
      %v5886 = vmul.f32 %v5857, %v5875
      %v5887 = vmul.f32 %v5857, %v5879
      %v5888 = vmul.f32 %v5861, %v5875
      %v5889 = vmul.f32 %v5861, %v5879
      %v5890 = vmul.f32 %v5865, %v5875
      %v5891 = vmul.f32 %v5865, %v5879
      %v5892 = vmul.f32 %v5869, %v5875
      %v5893 = vmul.f32 %v5869, %v5879
      %v5894 = vmul.f32 %v5882, %v5833
      %v5895 = vmul.f32 %v5883, %v5839
      %v5896 = vmul.f32 %v5884, %v5834
      %v5897 = vmul.f32 %v5885, %v5840
      %v5898 = vmul.f32 %v5886, %v5835
      %v5899 = vmul.f32 %v5887, %v5841
      %v5900 = vmul.f32 %v5888, %v5836
      %v5901 = vmul.f32 %v5889, %v5842
      %v5902 = vmul.f32 %v5890, %v5837
      %v5903 = vmul.f32 %v5891, %v5843
      %v5904 = vmul.f32 %v5892, %v5838
      %v5905 = vmul.f32 %v5893, %v5844
      %v5906 = vadd.f32 %v5796, %v5894
      %v5907 = vadd.f32 %v5797, %v5895
      %v5908 = vadd.f32 %v5798, %v5896
      %v5909 = vadd.f32 %v5799, %v5897
      %v5910 = vadd.f32 %v5800, %v5898
      %v5911 = vadd.f32 %v5801, %v5899
      %v5912 = vadd.f32 %v5802, %v5900
      %v5913 = vadd.f32 %v5803, %v5901
      %v5914 = vadd.f32 %v5804, %v5902
      %v5915 = vadd.f32 %v5805, %v5903
      %v5916 = vadd.f32 %v5806, %v5904
      %v5917 = vadd.f32 %v5807, %v5905
      %5918 = vrot.lane.b32.xlu0 %v803, 78
      %v5919 = vpop.permute.xlu0 %5918
      %5920 = vrot.lane.b32.xlu0 %v805, 78
      %v5921 = vpop.permute.xlu0 %5920
      %5922 = vrot.lane.b32.xlu0 %v807, 78
      %v5923 = vpop.permute.xlu0 %5922
      %5924 = vrot.lane.b32.xlu0 %v809, 78
      %v5925 = vpop.permute.xlu0 %5924
      %5926 = vrot.lane.b32.xlu0 %v811, 78
      %v5927 = vpop.permute.xlu0 %5926
      %5928 = vrot.lane.b32.xlu0 %v813, 78
      %v5929 = vpop.permute.xlu0 %5928
      %5930 = vrot.lane.b32.xlu0 %v804, 78
      %v5931 = vpop.permute.xlu0 %5930
      %5932 = vrot.lane.b32.xlu0 %v806, 78
      %v5933 = vpop.permute.xlu0 %5932
      %5934 = vrot.lane.b32.xlu0 %v808, 78
      %v5935 = vpop.permute.xlu0 %5934
      %5936 = vrot.lane.b32.xlu0 %v810, 78
      %v5937 = vpop.permute.xlu0 %5936
      %5938 = vrot.lane.b32.xlu0 %v812, 78
      %v5939 = vpop.permute.xlu0 %5938
      %5940 = vrot.lane.b32.xlu0 %v814, 78
      %v5941 = vpop.permute.xlu0 %5940
      %vm5942 = vcmp.lt.s32.totalorder %v882, 78
      %v5943 = vsel %vm5942, %v5919, %v5931
      %v5944 = vsel %vm5942, %v5921, %v5933
      %v5945 = vsel %vm5942, %v5923, %v5935
      %v5946 = vsel %vm5942, %v5925, %v5937
      %v5947 = vsel %vm5942, %v5927, %v5939
      %v5948 = vsel %vm5942, %v5929, %v5941
      %v5949 = vsel %vm5942, %v5931, %v5919
      %v5950 = vsel %vm5942, %v5933, %v5921
      %v5951 = vsel %vm5942, %v5935, %v5923
      %v5952 = vsel %vm5942, %v5937, %v5925
      %v5953 = vsel %vm5942, %v5939, %v5927
      %v5954 = vsel %vm5942, %v5941, %v5929
      %s5955 = scalar_lea.vmem %s7, 87
      %v5956 = vld [vmem:[%s5955] ss:$8 sm:$0x3]
      %5957 = vset.pattern.permute.xlu0 47
      %5958 = vperm.xlu0 %5957, %v797
      %v5959 = vpop.permute.xlu0 %5958
      %5961 = vset.pattern.permute.xlu0 47
      %5962 = vperm.xlu0 %5961, %v798
      %v5963 = vpop.permute.xlu0 %5962
      %5965 = vset.pattern.permute.xlu0 47
      %5966 = vperm.xlu0 %5965, %v799
      %v5967 = vpop.permute.xlu0 %5966
      %5969 = vset.pattern.permute.xlu0 47
      %5970 = vperm.xlu0 %5969, %v800
      %v5971 = vpop.permute.xlu0 %5970
      %5973 = vset.pattern.permute.xlu0 47
      %5974 = vperm.xlu0 %5973, %v801
      %v5975 = vpop.permute.xlu0 %5974
      %5977 = vset.pattern.permute.xlu0 47
      %5978 = vperm.xlu0 %5977, %v802
      %v5979 = vpop.permute.xlu0 %5978
      %v5982 = vlaneseq
      %v5983 = vshrl.u32 %v5982, 7
      %v5984 = vsub.s32 0, %v5983
      %v5985 = vrot.slane %v5956, %v5984
      %v5986 = vlaneseq
      %v5987 = vshrl.u32 %v5986, 7
      %v5988 = vsub.s32 1, %v5987
      %v5989 = vrot.slane %v5956, %v5988
      %v5992 = vmul.f32 %v5959, %v5985
      %v5993 = vmul.f32 %v5959, %v5989
      %v5994 = vmul.f32 %v5963, %v5985
      %v5995 = vmul.f32 %v5963, %v5989
      %v5996 = vmul.f32 %v5967, %v5985
      %v5997 = vmul.f32 %v5967, %v5989
      %v5998 = vmul.f32 %v5971, %v5985
      %v5999 = vmul.f32 %v5971, %v5989
      %v6000 = vmul.f32 %v5975, %v5985
      %v6001 = vmul.f32 %v5975, %v5989
      %v6002 = vmul.f32 %v5979, %v5985
      %v6003 = vmul.f32 %v5979, %v5989
      %v6004 = vmul.f32 %v5992, %v5943
      %v6005 = vmul.f32 %v5993, %v5949
      %v6006 = vmul.f32 %v5994, %v5944
      %v6007 = vmul.f32 %v5995, %v5950
      %v6008 = vmul.f32 %v5996, %v5945
      %v6009 = vmul.f32 %v5997, %v5951
      %v6010 = vmul.f32 %v5998, %v5946
      %v6011 = vmul.f32 %v5999, %v5952
      %v6012 = vmul.f32 %v6000, %v5947
      %v6013 = vmul.f32 %v6001, %v5953
      %v6014 = vmul.f32 %v6002, %v5948
      %v6015 = vmul.f32 %v6003, %v5954
      %v6016 = vadd.f32 %v5906, %v6004
      %v6017 = vadd.f32 %v5907, %v6005
      %v6018 = vadd.f32 %v5908, %v6006
      %v6019 = vadd.f32 %v5909, %v6007
      %v6020 = vadd.f32 %v5910, %v6008
      %v6021 = vadd.f32 %v5911, %v6009
      %v6022 = vadd.f32 %v5912, %v6010
      %v6023 = vadd.f32 %v5913, %v6011
      %v6024 = vadd.f32 %v5914, %v6012
      %v6025 = vadd.f32 %v5915, %v6013
      %v6026 = vadd.f32 %v5916, %v6014
      %v6027 = vadd.f32 %v5917, %v6015
      %6028 = vrot.lane.b32.xlu0 %v803, 77
      %v6029 = vpop.permute.xlu0 %6028
      %6030 = vrot.lane.b32.xlu0 %v805, 77
      %v6031 = vpop.permute.xlu0 %6030
      %6032 = vrot.lane.b32.xlu0 %v807, 77
      %v6033 = vpop.permute.xlu0 %6032
      %6034 = vrot.lane.b32.xlu0 %v809, 77
      %v6035 = vpop.permute.xlu0 %6034
      %6036 = vrot.lane.b32.xlu0 %v811, 77
      %v6037 = vpop.permute.xlu0 %6036
      %6038 = vrot.lane.b32.xlu0 %v813, 77
      %v6039 = vpop.permute.xlu0 %6038
      %6040 = vrot.lane.b32.xlu0 %v804, 77
      %v6041 = vpop.permute.xlu0 %6040
      %6042 = vrot.lane.b32.xlu0 %v806, 77
      %v6043 = vpop.permute.xlu0 %6042
      %6044 = vrot.lane.b32.xlu0 %v808, 77
      %v6045 = vpop.permute.xlu0 %6044
      %6046 = vrot.lane.b32.xlu0 %v810, 77
      %v6047 = vpop.permute.xlu0 %6046
      %6048 = vrot.lane.b32.xlu0 %v812, 77
      %v6049 = vpop.permute.xlu0 %6048
      %6050 = vrot.lane.b32.xlu0 %v814, 77
      %v6051 = vpop.permute.xlu0 %6050
      %vm6052 = vcmp.lt.s32.totalorder %v882, 77
      %v6053 = vsel %vm6052, %v6029, %v6041
      %v6054 = vsel %vm6052, %v6031, %v6043
      %v6055 = vsel %vm6052, %v6033, %v6045
      %v6056 = vsel %vm6052, %v6035, %v6047
      %v6057 = vsel %vm6052, %v6037, %v6049
      %v6058 = vsel %vm6052, %v6039, %v6051
      %v6059 = vsel %vm6052, %v6041, %v6029
      %v6060 = vsel %vm6052, %v6043, %v6031
      %v6061 = vsel %vm6052, %v6045, %v6033
      %v6062 = vsel %vm6052, %v6047, %v6035
      %v6063 = vsel %vm6052, %v6049, %v6037
      %v6064 = vsel %vm6052, %v6051, %v6039
      %s6065 = scalar_lea.vmem %s7, 96
      %v6066 = vld [vmem:[%s6065] ss:$8 sm:$0x3]
      %6067 = vset.pattern.permute.xlu0 48
      %6068 = vperm.xlu0 %6067, %v797
      %v6069 = vpop.permute.xlu0 %6068
      %6071 = vset.pattern.permute.xlu0 48
      %6072 = vperm.xlu0 %6071, %v798
      %v6073 = vpop.permute.xlu0 %6072
      %6075 = vset.pattern.permute.xlu0 48
      %6076 = vperm.xlu0 %6075, %v799
      %v6077 = vpop.permute.xlu0 %6076
      %6079 = vset.pattern.permute.xlu0 48
      %6080 = vperm.xlu0 %6079, %v800
      %v6081 = vpop.permute.xlu0 %6080
      %6083 = vset.pattern.permute.xlu0 48
      %6084 = vperm.xlu0 %6083, %v801
      %v6085 = vpop.permute.xlu0 %6084
      %6087 = vset.pattern.permute.xlu0 48
      %6088 = vperm.xlu0 %6087, %v802
      %v6089 = vpop.permute.xlu0 %6088
      %v6092 = vlaneseq
      %v6093 = vshrl.u32 %v6092, 7
      %v6094 = vsub.s32 0, %v6093
      %v6095 = vrot.slane %v6066, %v6094
      %v6096 = vlaneseq
      %v6097 = vshrl.u32 %v6096, 7
      %v6098 = vsub.s32 1, %v6097
      %v6099 = vrot.slane %v6066, %v6098
      %v6102 = vmul.f32 %v6069, %v6095
      %v6103 = vmul.f32 %v6069, %v6099
      %v6104 = vmul.f32 %v6073, %v6095
      %v6105 = vmul.f32 %v6073, %v6099
      %v6106 = vmul.f32 %v6077, %v6095
      %v6107 = vmul.f32 %v6077, %v6099
      %v6108 = vmul.f32 %v6081, %v6095
      %v6109 = vmul.f32 %v6081, %v6099
      %v6110 = vmul.f32 %v6085, %v6095
      %v6111 = vmul.f32 %v6085, %v6099
      %v6112 = vmul.f32 %v6089, %v6095
      %v6113 = vmul.f32 %v6089, %v6099
      %v6114 = vmul.f32 %v6102, %v6053
      %v6115 = vmul.f32 %v6103, %v6059
      %v6116 = vmul.f32 %v6104, %v6054
      %v6117 = vmul.f32 %v6105, %v6060
      %v6118 = vmul.f32 %v6106, %v6055
      %v6119 = vmul.f32 %v6107, %v6061
      %v6120 = vmul.f32 %v6108, %v6056
      %v6121 = vmul.f32 %v6109, %v6062
      %v6122 = vmul.f32 %v6110, %v6057
      %v6123 = vmul.f32 %v6111, %v6063
      %v6124 = vmul.f32 %v6112, %v6058
      %v6125 = vmul.f32 %v6113, %v6064
      %v6126 = vadd.f32 %v6016, %v6114
      %v6127 = vadd.f32 %v6017, %v6115
      %v6128 = vadd.f32 %v6018, %v6116
      %v6129 = vadd.f32 %v6019, %v6117
      %v6130 = vadd.f32 %v6020, %v6118
      %v6131 = vadd.f32 %v6021, %v6119
      %v6132 = vadd.f32 %v6022, %v6120
      %v6133 = vadd.f32 %v6023, %v6121
      %v6134 = vadd.f32 %v6024, %v6122
      %v6135 = vadd.f32 %v6025, %v6123
      %v6136 = vadd.f32 %v6026, %v6124
      %v6137 = vadd.f32 %v6027, %v6125
      %6138 = vrot.lane.b32.xlu0 %v803, 85
      %v6139 = vpop.permute.xlu0 %6138
      %6140 = vrot.lane.b32.xlu0 %v805, 85
      %v6141 = vpop.permute.xlu0 %6140
      %6142 = vrot.lane.b32.xlu0 %v807, 85
      %v6143 = vpop.permute.xlu0 %6142
      %6144 = vrot.lane.b32.xlu0 %v809, 85
      %v6145 = vpop.permute.xlu0 %6144
      %6146 = vrot.lane.b32.xlu0 %v811, 85
      %v6147 = vpop.permute.xlu0 %6146
      %6148 = vrot.lane.b32.xlu0 %v813, 85
      %v6149 = vpop.permute.xlu0 %6148
      %6150 = vrot.lane.b32.xlu0 %v804, 85
      %v6151 = vpop.permute.xlu0 %6150
      %6152 = vrot.lane.b32.xlu0 %v806, 85
      %v6153 = vpop.permute.xlu0 %6152
      %6154 = vrot.lane.b32.xlu0 %v808, 85
      %v6155 = vpop.permute.xlu0 %6154
      %6156 = vrot.lane.b32.xlu0 %v810, 85
      %v6157 = vpop.permute.xlu0 %6156
      %6158 = vrot.lane.b32.xlu0 %v812, 85
      %v6159 = vpop.permute.xlu0 %6158
      %6160 = vrot.lane.b32.xlu0 %v814, 85
      %v6161 = vpop.permute.xlu0 %6160
      %vm6162 = vcmp.lt.s32.totalorder %v882, 85
      %v6163 = vsel %vm6162, %v6139, %v6151
      %v6164 = vsel %vm6162, %v6141, %v6153
      %v6165 = vsel %vm6162, %v6143, %v6155
      %v6166 = vsel %vm6162, %v6145, %v6157
      %v6167 = vsel %vm6162, %v6147, %v6159
      %v6168 = vsel %vm6162, %v6149, %v6161
      %v6169 = vsel %vm6162, %v6151, %v6139
      %v6170 = vsel %vm6162, %v6153, %v6141
      %v6171 = vsel %vm6162, %v6155, %v6143
      %v6172 = vsel %vm6162, %v6157, %v6145
      %v6173 = vsel %vm6162, %v6159, %v6147
      %v6174 = vsel %vm6162, %v6161, %v6149
      %s6175 = scalar_lea.vmem %s7, 97
      %v6176 = vld [vmem:[%s6175] ss:$8 sm:$0x3]
      %6177 = vset.pattern.permute.xlu0 49
      %6178 = vperm.xlu0 %6177, %v797
      %v6179 = vpop.permute.xlu0 %6178
      %6181 = vset.pattern.permute.xlu0 49
      %6182 = vperm.xlu0 %6181, %v798
      %v6183 = vpop.permute.xlu0 %6182
      %6185 = vset.pattern.permute.xlu0 49
      %6186 = vperm.xlu0 %6185, %v799
      %v6187 = vpop.permute.xlu0 %6186
      %6189 = vset.pattern.permute.xlu0 49
      %6190 = vperm.xlu0 %6189, %v800
      %v6191 = vpop.permute.xlu0 %6190
      %6193 = vset.pattern.permute.xlu0 49
      %6194 = vperm.xlu0 %6193, %v801
      %v6195 = vpop.permute.xlu0 %6194
      %6197 = vset.pattern.permute.xlu0 49
      %6198 = vperm.xlu0 %6197, %v802
      %v6199 = vpop.permute.xlu0 %6198
      %v6202 = vlaneseq
      %v6203 = vshrl.u32 %v6202, 7
      %v6204 = vsub.s32 0, %v6203
      %v6205 = vrot.slane %v6176, %v6204
      %v6206 = vlaneseq
      %v6207 = vshrl.u32 %v6206, 7
      %v6208 = vsub.s32 1, %v6207
      %v6209 = vrot.slane %v6176, %v6208
      %v6212 = vmul.f32 %v6179, %v6205
      %v6213 = vmul.f32 %v6179, %v6209
      %v6214 = vmul.f32 %v6183, %v6205
      %v6215 = vmul.f32 %v6183, %v6209
      %v6216 = vmul.f32 %v6187, %v6205
      %v6217 = vmul.f32 %v6187, %v6209
      %v6218 = vmul.f32 %v6191, %v6205
      %v6219 = vmul.f32 %v6191, %v6209
      %v6220 = vmul.f32 %v6195, %v6205
      %v6221 = vmul.f32 %v6195, %v6209
      %v6222 = vmul.f32 %v6199, %v6205
      %v6223 = vmul.f32 %v6199, %v6209
      %v6224 = vmul.f32 %v6212, %v6169
      %v6225 = vmul.f32 %v6213, %v6163
      %v6226 = vmul.f32 %v6214, %v6170
      %v6227 = vmul.f32 %v6215, %v6164
      %v6228 = vmul.f32 %v6216, %v6171
      %v6229 = vmul.f32 %v6217, %v6165
      %v6230 = vmul.f32 %v6218, %v6172
      %v6231 = vmul.f32 %v6219, %v6166
      %v6232 = vmul.f32 %v6220, %v6173
      %v6233 = vmul.f32 %v6221, %v6167
      %v6234 = vmul.f32 %v6222, %v6174
      %v6235 = vmul.f32 %v6223, %v6168
      %v6236 = vadd.f32 %v6126, %v6224
      %v6237 = vadd.f32 %v6127, %v6225
      %v6238 = vadd.f32 %v6128, %v6226
      %v6239 = vadd.f32 %v6129, %v6227
      %v6240 = vadd.f32 %v6130, %v6228
      %v6241 = vadd.f32 %v6131, %v6229
      %v6242 = vadd.f32 %v6132, %v6230
      %v6243 = vadd.f32 %v6133, %v6231
      %v6244 = vadd.f32 %v6134, %v6232
      %v6245 = vadd.f32 %v6135, %v6233
      %v6246 = vadd.f32 %v6136, %v6234
      %v6247 = vadd.f32 %v6137, %v6235
      %s6248 = scalar_lea.vmem %s7, 98
      %v6249 = vld [vmem:[%s6248] ss:$8 sm:$0x3]
      %6250 = vset.pattern.permute.xlu0 50
      %6251 = vperm.xlu0 %6250, %v797
      %v6252 = vpop.permute.xlu0 %6251
      %6254 = vset.pattern.permute.xlu0 50
      %6255 = vperm.xlu0 %6254, %v798
      %v6256 = vpop.permute.xlu0 %6255
      %6258 = vset.pattern.permute.xlu0 50
      %6259 = vperm.xlu0 %6258, %v799
      %v6260 = vpop.permute.xlu0 %6259
      %6262 = vset.pattern.permute.xlu0 50
      %6263 = vperm.xlu0 %6262, %v800
      %v6264 = vpop.permute.xlu0 %6263
      %6266 = vset.pattern.permute.xlu0 50
      %6267 = vperm.xlu0 %6266, %v801
      %v6268 = vpop.permute.xlu0 %6267
      %6270 = vset.pattern.permute.xlu0 50
      %6271 = vperm.xlu0 %6270, %v802
      %v6272 = vpop.permute.xlu0 %6271
      %v6275 = vlaneseq
      %v6276 = vshrl.u32 %v6275, 7
      %v6277 = vsub.s32 0, %v6276
      %v6278 = vrot.slane %v6249, %v6277
      %v6279 = vlaneseq
      %v6280 = vshrl.u32 %v6279, 7
      %v6281 = vsub.s32 1, %v6280
      %v6282 = vrot.slane %v6249, %v6281
      %v6285 = vmul.f32 %v6252, %v6278
      %v6286 = vmul.f32 %v6252, %v6282
      %v6287 = vmul.f32 %v6256, %v6278
      %v6288 = vmul.f32 %v6256, %v6282
      %v6289 = vmul.f32 %v6260, %v6278
      %v6290 = vmul.f32 %v6260, %v6282
      %v6291 = vmul.f32 %v6264, %v6278
      %v6292 = vmul.f32 %v6264, %v6282
      %v6293 = vmul.f32 %v6268, %v6278
      %v6294 = vmul.f32 %v6268, %v6282
      %v6295 = vmul.f32 %v6272, %v6278
      %v6296 = vmul.f32 %v6272, %v6282
      %v6297 = vmul.f32 %v6285, %v5729
      %v6298 = vmul.f32 %v6286, %v5723
      %v6299 = vmul.f32 %v6287, %v5730
      %v6300 = vmul.f32 %v6288, %v5724
      %v6301 = vmul.f32 %v6289, %v5731
      %v6302 = vmul.f32 %v6290, %v5725
      %v6303 = vmul.f32 %v6291, %v5732
      %v6304 = vmul.f32 %v6292, %v5726
      %v6305 = vmul.f32 %v6293, %v5733
      %v6306 = vmul.f32 %v6294, %v5727
      %v6307 = vmul.f32 %v6295, %v5734
      %v6308 = vmul.f32 %v6296, %v5728
      %v6309 = vadd.f32 %v6236, %v6297
      %v6310 = vadd.f32 %v6237, %v6298
      %v6311 = vadd.f32 %v6238, %v6299
      %v6312 = vadd.f32 %v6239, %v6300
      %v6313 = vadd.f32 %v6240, %v6301
      %v6314 = vadd.f32 %v6241, %v6302
      %v6315 = vadd.f32 %v6242, %v6303
      %v6316 = vadd.f32 %v6243, %v6304
      %v6317 = vadd.f32 %v6244, %v6305
      %v6318 = vadd.f32 %v6245, %v6306
      %v6319 = vadd.f32 %v6246, %v6307
      %v6320 = vadd.f32 %v6247, %v6308
      %6321 = vrot.lane.b32.xlu0 %v803, 75
      %v6322 = vpop.permute.xlu0 %6321
      %6323 = vrot.lane.b32.xlu0 %v805, 75
      %v6324 = vpop.permute.xlu0 %6323
      %6325 = vrot.lane.b32.xlu0 %v807, 75
      %v6326 = vpop.permute.xlu0 %6325
      %6327 = vrot.lane.b32.xlu0 %v809, 75
      %v6328 = vpop.permute.xlu0 %6327
      %6329 = vrot.lane.b32.xlu0 %v811, 75
      %v6330 = vpop.permute.xlu0 %6329
      %6331 = vrot.lane.b32.xlu0 %v813, 75
      %v6332 = vpop.permute.xlu0 %6331
      %6333 = vrot.lane.b32.xlu0 %v804, 75
      %v6334 = vpop.permute.xlu0 %6333
      %6335 = vrot.lane.b32.xlu0 %v806, 75
      %v6336 = vpop.permute.xlu0 %6335
      %6337 = vrot.lane.b32.xlu0 %v808, 75
      %v6338 = vpop.permute.xlu0 %6337
      %6339 = vrot.lane.b32.xlu0 %v810, 75
      %v6340 = vpop.permute.xlu0 %6339
      %6341 = vrot.lane.b32.xlu0 %v812, 75
      %v6342 = vpop.permute.xlu0 %6341
      %6343 = vrot.lane.b32.xlu0 %v814, 75
      %v6344 = vpop.permute.xlu0 %6343
      %vm6345 = vcmp.lt.s32.totalorder %v882, 75
      %v6346 = vsel %vm6345, %v6322, %v6334
      %v6347 = vsel %vm6345, %v6324, %v6336
      %v6348 = vsel %vm6345, %v6326, %v6338
      %v6349 = vsel %vm6345, %v6328, %v6340
      %v6350 = vsel %vm6345, %v6330, %v6342
      %v6351 = vsel %vm6345, %v6332, %v6344
      %v6352 = vsel %vm6345, %v6334, %v6322
      %v6353 = vsel %vm6345, %v6336, %v6324
      %v6354 = vsel %vm6345, %v6338, %v6326
      %v6355 = vsel %vm6345, %v6340, %v6328
      %v6356 = vsel %vm6345, %v6342, %v6330
      %v6357 = vsel %vm6345, %v6344, %v6332
      %s6358 = scalar_lea.vmem %s7, 99
      %v6359 = vld [vmem:[%s6358] ss:$8 sm:$0x3]
      %6360 = vset.pattern.permute.xlu0 51
      %6361 = vperm.xlu0 %6360, %v797
      %v6362 = vpop.permute.xlu0 %6361
      %6364 = vset.pattern.permute.xlu0 51
      %6365 = vperm.xlu0 %6364, %v798
      %v6366 = vpop.permute.xlu0 %6365
      %6368 = vset.pattern.permute.xlu0 51
      %6369 = vperm.xlu0 %6368, %v799
      %v6370 = vpop.permute.xlu0 %6369
      %6372 = vset.pattern.permute.xlu0 51
      %6373 = vperm.xlu0 %6372, %v800
      %v6374 = vpop.permute.xlu0 %6373
      %6376 = vset.pattern.permute.xlu0 51
      %6377 = vperm.xlu0 %6376, %v801
      %v6378 = vpop.permute.xlu0 %6377
      %6380 = vset.pattern.permute.xlu0 51
      %6381 = vperm.xlu0 %6380, %v802
      %v6382 = vpop.permute.xlu0 %6381
      %v6385 = vlaneseq
      %v6386 = vshrl.u32 %v6385, 7
      %v6387 = vsub.s32 0, %v6386
      %v6388 = vrot.slane %v6359, %v6387
      %v6389 = vlaneseq
      %v6390 = vshrl.u32 %v6389, 7
      %v6391 = vsub.s32 1, %v6390
      %v6392 = vrot.slane %v6359, %v6391
      %v6395 = vmul.f32 %v6362, %v6388
      %v6396 = vmul.f32 %v6362, %v6392
      %v6397 = vmul.f32 %v6366, %v6388
      %v6398 = vmul.f32 %v6366, %v6392
      %v6399 = vmul.f32 %v6370, %v6388
      %v6400 = vmul.f32 %v6370, %v6392
      %v6401 = vmul.f32 %v6374, %v6388
      %v6402 = vmul.f32 %v6374, %v6392
      %v6403 = vmul.f32 %v6378, %v6388
      %v6404 = vmul.f32 %v6378, %v6392
      %v6405 = vmul.f32 %v6382, %v6388
      %v6406 = vmul.f32 %v6382, %v6392
      %v6407 = vmul.f32 %v6395, %v6352
      %v6408 = vmul.f32 %v6396, %v6346
      %v6409 = vmul.f32 %v6397, %v6353
      %v6410 = vmul.f32 %v6398, %v6347
      %v6411 = vmul.f32 %v6399, %v6354
      %v6412 = vmul.f32 %v6400, %v6348
      %v6413 = vmul.f32 %v6401, %v6355
      %v6414 = vmul.f32 %v6402, %v6349
      %v6415 = vmul.f32 %v6403, %v6356
      %v6416 = vmul.f32 %v6404, %v6350
      %v6417 = vmul.f32 %v6405, %v6357
      %v6418 = vmul.f32 %v6406, %v6351
      %v6419 = vadd.f32 %v6309, %v6407
      %v6420 = vadd.f32 %v6310, %v6408
      %v6421 = vadd.f32 %v6311, %v6409
      %v6422 = vadd.f32 %v6312, %v6410
      %v6423 = vadd.f32 %v6313, %v6411
      %v6424 = vadd.f32 %v6314, %v6412
      %v6425 = vadd.f32 %v6315, %v6413
      %v6426 = vadd.f32 %v6316, %v6414
      %v6427 = vadd.f32 %v6317, %v6415
      %v6428 = vadd.f32 %v6318, %v6416
      %v6429 = vadd.f32 %v6319, %v6417
      %v6430 = vadd.f32 %v6320, %v6418
      %6431 = vrot.lane.b32.xlu0 %v803, 5
      %v6432 = vpop.permute.xlu0 %6431
      %6433 = vrot.lane.b32.xlu0 %v805, 5
      %v6434 = vpop.permute.xlu0 %6433
      %6435 = vrot.lane.b32.xlu0 %v807, 5
      %v6436 = vpop.permute.xlu0 %6435
      %6437 = vrot.lane.b32.xlu0 %v809, 5
      %v6438 = vpop.permute.xlu0 %6437
      %6439 = vrot.lane.b32.xlu0 %v811, 5
      %v6440 = vpop.permute.xlu0 %6439
      %6441 = vrot.lane.b32.xlu0 %v813, 5
      %v6442 = vpop.permute.xlu0 %6441
      %6443 = vrot.lane.b32.xlu0 %v804, 5
      %v6444 = vpop.permute.xlu0 %6443
      %6445 = vrot.lane.b32.xlu0 %v806, 5
      %v6446 = vpop.permute.xlu0 %6445
      %6447 = vrot.lane.b32.xlu0 %v808, 5
      %v6448 = vpop.permute.xlu0 %6447
      %6449 = vrot.lane.b32.xlu0 %v810, 5
      %v6450 = vpop.permute.xlu0 %6449
      %6451 = vrot.lane.b32.xlu0 %v812, 5
      %v6452 = vpop.permute.xlu0 %6451
      %6453 = vrot.lane.b32.xlu0 %v814, 5
      %v6454 = vpop.permute.xlu0 %6453
      %vm6455 = vcmp.lt.s32.totalorder %v882, 5
      %v6456 = vsel %vm6455, %v6432, %v6444
      %v6457 = vsel %vm6455, %v6434, %v6446
      %v6458 = vsel %vm6455, %v6436, %v6448
      %v6459 = vsel %vm6455, %v6438, %v6450
      %v6460 = vsel %vm6455, %v6440, %v6452
      %v6461 = vsel %vm6455, %v6442, %v6454
      %v6462 = vsel %vm6455, %v6444, %v6432
      %v6463 = vsel %vm6455, %v6446, %v6434
      %v6464 = vsel %vm6455, %v6448, %v6436
      %v6465 = vsel %vm6455, %v6450, %v6438
      %v6466 = vsel %vm6455, %v6452, %v6440
      %v6467 = vsel %vm6455, %v6454, %v6442
      %s6468 = scalar_lea.vmem %s7, 100
      %v6469 = vld [vmem:[%s6468] ss:$8 sm:$0x3]
      %6470 = vset.pattern.permute.xlu0 52
      %6471 = vperm.xlu0 %6470, %v797
      %v6472 = vpop.permute.xlu0 %6471
      %6474 = vset.pattern.permute.xlu0 52
      %6475 = vperm.xlu0 %6474, %v798
      %v6476 = vpop.permute.xlu0 %6475
      %6478 = vset.pattern.permute.xlu0 52
      %6479 = vperm.xlu0 %6478, %v799
      %v6480 = vpop.permute.xlu0 %6479
      %6482 = vset.pattern.permute.xlu0 52
      %6483 = vperm.xlu0 %6482, %v800
      %v6484 = vpop.permute.xlu0 %6483
      %6486 = vset.pattern.permute.xlu0 52
      %6487 = vperm.xlu0 %6486, %v801
      %v6488 = vpop.permute.xlu0 %6487
      %6490 = vset.pattern.permute.xlu0 52
      %6491 = vperm.xlu0 %6490, %v802
      %v6492 = vpop.permute.xlu0 %6491
      %v6495 = vlaneseq
      %v6496 = vshrl.u32 %v6495, 7
      %v6497 = vsub.s32 0, %v6496
      %v6498 = vrot.slane %v6469, %v6497
      %v6499 = vlaneseq
      %v6500 = vshrl.u32 %v6499, 7
      %v6501 = vsub.s32 1, %v6500
      %v6502 = vrot.slane %v6469, %v6501
      %v6505 = vmul.f32 %v6472, %v6498
      %v6506 = vmul.f32 %v6472, %v6502
      %v6507 = vmul.f32 %v6476, %v6498
      %v6508 = vmul.f32 %v6476, %v6502
      %v6509 = vmul.f32 %v6480, %v6498
      %v6510 = vmul.f32 %v6480, %v6502
      %v6511 = vmul.f32 %v6484, %v6498
      %v6512 = vmul.f32 %v6484, %v6502
      %v6513 = vmul.f32 %v6488, %v6498
      %v6514 = vmul.f32 %v6488, %v6502
      %v6515 = vmul.f32 %v6492, %v6498
      %v6516 = vmul.f32 %v6492, %v6502
      %v6517 = vmul.f32 %v6505, %v6462
      %v6518 = vmul.f32 %v6506, %v6456
      %v6519 = vmul.f32 %v6507, %v6463
      %v6520 = vmul.f32 %v6508, %v6457
      %v6521 = vmul.f32 %v6509, %v6464
      %v6522 = vmul.f32 %v6510, %v6458
      %v6523 = vmul.f32 %v6511, %v6465
      %v6524 = vmul.f32 %v6512, %v6459
      %v6525 = vmul.f32 %v6513, %v6466
      %v6526 = vmul.f32 %v6514, %v6460
      %v6527 = vmul.f32 %v6515, %v6467
      %v6528 = vmul.f32 %v6516, %v6461
      %v6529 = vadd.f32 %v6419, %v6517
      %v6530 = vadd.f32 %v6420, %v6518
      %v6531 = vadd.f32 %v6421, %v6519
      %v6532 = vadd.f32 %v6422, %v6520
      %v6533 = vadd.f32 %v6423, %v6521
      %v6534 = vadd.f32 %v6424, %v6522
      %v6535 = vadd.f32 %v6425, %v6523
      %v6536 = vadd.f32 %v6426, %v6524
      %v6537 = vadd.f32 %v6427, %v6525
      %v6538 = vadd.f32 %v6428, %v6526
      %v6539 = vadd.f32 %v6429, %v6527
      %v6540 = vadd.f32 %v6430, %v6528
      %6541 = vrot.lane.b32.xlu0 %v803, 123
      %v6542 = vpop.permute.xlu0 %6541
      %6543 = vrot.lane.b32.xlu0 %v805, 123
      %v6544 = vpop.permute.xlu0 %6543
      %6545 = vrot.lane.b32.xlu0 %v807, 123
      %v6546 = vpop.permute.xlu0 %6545
      %6547 = vrot.lane.b32.xlu0 %v809, 123
      %v6548 = vpop.permute.xlu0 %6547
      %6549 = vrot.lane.b32.xlu0 %v811, 123
      %v6550 = vpop.permute.xlu0 %6549
      %6551 = vrot.lane.b32.xlu0 %v813, 123
      %v6552 = vpop.permute.xlu0 %6551
      %6553 = vrot.lane.b32.xlu0 %v804, 123
      %v6554 = vpop.permute.xlu0 %6553
      %6555 = vrot.lane.b32.xlu0 %v806, 123
      %v6556 = vpop.permute.xlu0 %6555
      %6557 = vrot.lane.b32.xlu0 %v808, 123
      %v6558 = vpop.permute.xlu0 %6557
      %6559 = vrot.lane.b32.xlu0 %v810, 123
      %v6560 = vpop.permute.xlu0 %6559
      %6561 = vrot.lane.b32.xlu0 %v812, 123
      %v6562 = vpop.permute.xlu0 %6561
      %6563 = vrot.lane.b32.xlu0 %v814, 123
      %v6564 = vpop.permute.xlu0 %6563
      %vm6565 = vcmp.lt.s32.totalorder %v882, 123
      %v6566 = vsel %vm6565, %v6542, %v6554
      %v6567 = vsel %vm6565, %v6544, %v6556
      %v6568 = vsel %vm6565, %v6546, %v6558
      %v6569 = vsel %vm6565, %v6548, %v6560
      %v6570 = vsel %vm6565, %v6550, %v6562
      %v6571 = vsel %vm6565, %v6552, %v6564
      %v6572 = vsel %vm6565, %v6554, %v6542
      %v6573 = vsel %vm6565, %v6556, %v6544
      %v6574 = vsel %vm6565, %v6558, %v6546
      %v6575 = vsel %vm6565, %v6560, %v6548
      %v6576 = vsel %vm6565, %v6562, %v6550
      %v6577 = vsel %vm6565, %v6564, %v6552
      %s6578 = scalar_lea.vmem %s7, 101
      %v6579 = vld [vmem:[%s6578] ss:$8 sm:$0x3]
      %6580 = vset.pattern.permute.xlu0 53
      %6581 = vperm.xlu0 %6580, %v797
      %v6582 = vpop.permute.xlu0 %6581
      %6584 = vset.pattern.permute.xlu0 53
      %6585 = vperm.xlu0 %6584, %v798
      %v6586 = vpop.permute.xlu0 %6585
      %6588 = vset.pattern.permute.xlu0 53
      %6589 = vperm.xlu0 %6588, %v799
      %v6590 = vpop.permute.xlu0 %6589
      %6592 = vset.pattern.permute.xlu0 53
      %6593 = vperm.xlu0 %6592, %v800
      %v6594 = vpop.permute.xlu0 %6593
      %6596 = vset.pattern.permute.xlu0 53
      %6597 = vperm.xlu0 %6596, %v801
      %v6598 = vpop.permute.xlu0 %6597
      %6600 = vset.pattern.permute.xlu0 53
      %6601 = vperm.xlu0 %6600, %v802
      %v6602 = vpop.permute.xlu0 %6601
      %v6605 = vlaneseq
      %v6606 = vshrl.u32 %v6605, 7
      %v6607 = vsub.s32 0, %v6606
      %v6608 = vrot.slane %v6579, %v6607
      %v6609 = vlaneseq
      %v6610 = vshrl.u32 %v6609, 7
      %v6611 = vsub.s32 1, %v6610
      %v6612 = vrot.slane %v6579, %v6611
      %v6615 = vmul.f32 %v6582, %v6608
      %v6616 = vmul.f32 %v6582, %v6612
      %v6617 = vmul.f32 %v6586, %v6608
      %v6618 = vmul.f32 %v6586, %v6612
      %v6619 = vmul.f32 %v6590, %v6608
      %v6620 = vmul.f32 %v6590, %v6612
      %v6621 = vmul.f32 %v6594, %v6608
      %v6622 = vmul.f32 %v6594, %v6612
      %v6623 = vmul.f32 %v6598, %v6608
      %v6624 = vmul.f32 %v6598, %v6612
      %v6625 = vmul.f32 %v6602, %v6608
      %v6626 = vmul.f32 %v6602, %v6612
      %v6627 = vmul.f32 %v6615, %v6566
      %v6628 = vmul.f32 %v6616, %v6572
      %v6629 = vmul.f32 %v6617, %v6567
      %v6630 = vmul.f32 %v6618, %v6573
      %v6631 = vmul.f32 %v6619, %v6568
      %v6632 = vmul.f32 %v6620, %v6574
      %v6633 = vmul.f32 %v6621, %v6569
      %v6634 = vmul.f32 %v6622, %v6575
      %v6635 = vmul.f32 %v6623, %v6570
      %v6636 = vmul.f32 %v6624, %v6576
      %v6637 = vmul.f32 %v6625, %v6571
      %v6638 = vmul.f32 %v6626, %v6577
      %v6639 = vadd.f32 %v6529, %v6627
      %v6640 = vadd.f32 %v6530, %v6628
      %v6641 = vadd.f32 %v6531, %v6629
      %v6642 = vadd.f32 %v6532, %v6630
      %v6643 = vadd.f32 %v6533, %v6631
      %v6644 = vadd.f32 %v6534, %v6632
      %v6645 = vadd.f32 %v6535, %v6633
      %v6646 = vadd.f32 %v6536, %v6634
      %v6647 = vadd.f32 %v6537, %v6635
      %v6648 = vadd.f32 %v6538, %v6636
      %v6649 = vadd.f32 %v6539, %v6637
      %v6650 = vadd.f32 %v6540, %v6638
      %6651 = vrot.lane.b32.xlu0 %v803, 53
      %v6652 = vpop.permute.xlu0 %6651
      %6653 = vrot.lane.b32.xlu0 %v805, 53
      %v6654 = vpop.permute.xlu0 %6653
      %6655 = vrot.lane.b32.xlu0 %v807, 53
      %v6656 = vpop.permute.xlu0 %6655
      %6657 = vrot.lane.b32.xlu0 %v809, 53
      %v6658 = vpop.permute.xlu0 %6657
      %6659 = vrot.lane.b32.xlu0 %v811, 53
      %v6660 = vpop.permute.xlu0 %6659
      %6661 = vrot.lane.b32.xlu0 %v813, 53
      %v6662 = vpop.permute.xlu0 %6661
      %6663 = vrot.lane.b32.xlu0 %v804, 53
      %v6664 = vpop.permute.xlu0 %6663
      %6665 = vrot.lane.b32.xlu0 %v806, 53
      %v6666 = vpop.permute.xlu0 %6665
      %6667 = vrot.lane.b32.xlu0 %v808, 53
      %v6668 = vpop.permute.xlu0 %6667
      %6669 = vrot.lane.b32.xlu0 %v810, 53
      %v6670 = vpop.permute.xlu0 %6669
      %6671 = vrot.lane.b32.xlu0 %v812, 53
      %v6672 = vpop.permute.xlu0 %6671
      %6673 = vrot.lane.b32.xlu0 %v814, 53
      %v6674 = vpop.permute.xlu0 %6673
      %vm6675 = vcmp.lt.s32.totalorder %v882, 53
      %v6676 = vsel %vm6675, %v6652, %v6664
      %v6677 = vsel %vm6675, %v6654, %v6666
      %v6678 = vsel %vm6675, %v6656, %v6668
      %v6679 = vsel %vm6675, %v6658, %v6670
      %v6680 = vsel %vm6675, %v6660, %v6672
      %v6681 = vsel %vm6675, %v6662, %v6674
      %v6682 = vsel %vm6675, %v6664, %v6652
      %v6683 = vsel %vm6675, %v6666, %v6654
      %v6684 = vsel %vm6675, %v6668, %v6656
      %v6685 = vsel %vm6675, %v6670, %v6658
      %v6686 = vsel %vm6675, %v6672, %v6660
      %v6687 = vsel %vm6675, %v6674, %v6662
      %s6688 = scalar_lea.vmem %s7, 102
      %v6689 = vld [vmem:[%s6688] ss:$8 sm:$0x3]
      %6690 = vset.pattern.permute.xlu0 54
      %6691 = vperm.xlu0 %6690, %v797
      %v6692 = vpop.permute.xlu0 %6691
      %6694 = vset.pattern.permute.xlu0 54
      %6695 = vperm.xlu0 %6694, %v798
      %v6696 = vpop.permute.xlu0 %6695
      %6698 = vset.pattern.permute.xlu0 54
      %6699 = vperm.xlu0 %6698, %v799
      %v6700 = vpop.permute.xlu0 %6699
      %6702 = vset.pattern.permute.xlu0 54
      %6703 = vperm.xlu0 %6702, %v800
      %v6704 = vpop.permute.xlu0 %6703
      %6706 = vset.pattern.permute.xlu0 54
      %6707 = vperm.xlu0 %6706, %v801
      %v6708 = vpop.permute.xlu0 %6707
      %6710 = vset.pattern.permute.xlu0 54
      %6711 = vperm.xlu0 %6710, %v802
      %v6712 = vpop.permute.xlu0 %6711
      %v6715 = vlaneseq
      %v6716 = vshrl.u32 %v6715, 7
      %v6717 = vsub.s32 0, %v6716
      %v6718 = vrot.slane %v6689, %v6717
      %v6719 = vlaneseq
      %v6720 = vshrl.u32 %v6719, 7
      %v6721 = vsub.s32 1, %v6720
      %v6722 = vrot.slane %v6689, %v6721
      %v6725 = vmul.f32 %v6692, %v6718
      %v6726 = vmul.f32 %v6692, %v6722
      %v6727 = vmul.f32 %v6696, %v6718
      %v6728 = vmul.f32 %v6696, %v6722
      %v6729 = vmul.f32 %v6700, %v6718
      %v6730 = vmul.f32 %v6700, %v6722
      %v6731 = vmul.f32 %v6704, %v6718
      %v6732 = vmul.f32 %v6704, %v6722
      %v6733 = vmul.f32 %v6708, %v6718
      %v6734 = vmul.f32 %v6708, %v6722
      %v6735 = vmul.f32 %v6712, %v6718
      %v6736 = vmul.f32 %v6712, %v6722
      %v6737 = vmul.f32 %v6725, %v6676
      %v6738 = vmul.f32 %v6726, %v6682
      %v6739 = vmul.f32 %v6727, %v6677
      %v6740 = vmul.f32 %v6728, %v6683
      %v6741 = vmul.f32 %v6729, %v6678
      %v6742 = vmul.f32 %v6730, %v6684
      %v6743 = vmul.f32 %v6731, %v6679
      %v6744 = vmul.f32 %v6732, %v6685
      %v6745 = vmul.f32 %v6733, %v6680
      %v6746 = vmul.f32 %v6734, %v6686
      %v6747 = vmul.f32 %v6735, %v6681
      %v6748 = vmul.f32 %v6736, %v6687
      %v6749 = vadd.f32 %v6639, %v6737
      %v6750 = vadd.f32 %v6640, %v6738
      %v6751 = vadd.f32 %v6641, %v6739
      %v6752 = vadd.f32 %v6642, %v6740
      %v6753 = vadd.f32 %v6643, %v6741
      %v6754 = vadd.f32 %v6644, %v6742
      %v6755 = vadd.f32 %v6645, %v6743
      %v6756 = vadd.f32 %v6646, %v6744
      %v6757 = vadd.f32 %v6647, %v6745
      %v6758 = vadd.f32 %v6648, %v6746
      %v6759 = vadd.f32 %v6649, %v6747
      %v6760 = vadd.f32 %v6650, %v6748
      %s6761 = scalar_lea.vmem %s7, 103
      %v6762 = vld [vmem:[%s6761] ss:$8 sm:$0x3]
      %6763 = vset.pattern.permute.xlu0 55
      %6764 = vperm.xlu0 %6763, %v797
      %v6765 = vpop.permute.xlu0 %6764
      %6767 = vset.pattern.permute.xlu0 55
      %6768 = vperm.xlu0 %6767, %v798
      %v6769 = vpop.permute.xlu0 %6768
      %6771 = vset.pattern.permute.xlu0 55
      %6772 = vperm.xlu0 %6771, %v799
      %v6773 = vpop.permute.xlu0 %6772
      %6775 = vset.pattern.permute.xlu0 55
      %6776 = vperm.xlu0 %6775, %v800
      %v6777 = vpop.permute.xlu0 %6776
      %6779 = vset.pattern.permute.xlu0 55
      %6780 = vperm.xlu0 %6779, %v801
      %v6781 = vpop.permute.xlu0 %6780
      %6783 = vset.pattern.permute.xlu0 55
      %6784 = vperm.xlu0 %6783, %v802
      %v6785 = vpop.permute.xlu0 %6784
      %v6788 = vlaneseq
      %v6789 = vshrl.u32 %v6788, 7
      %v6790 = vsub.s32 0, %v6789
      %v6791 = vrot.slane %v6762, %v6790
      %v6792 = vlaneseq
      %v6793 = vshrl.u32 %v6792, 7
      %v6794 = vsub.s32 1, %v6793
      %v6795 = vrot.slane %v6762, %v6794
      %v6798 = vmul.f32 %v6765, %v6791
      %v6799 = vmul.f32 %v6765, %v6795
      %v6800 = vmul.f32 %v6769, %v6791
      %v6801 = vmul.f32 %v6769, %v6795
      %v6802 = vmul.f32 %v6773, %v6791
      %v6803 = vmul.f32 %v6773, %v6795
      %v6804 = vmul.f32 %v6777, %v6791
      %v6805 = vmul.f32 %v6777, %v6795
      %v6806 = vmul.f32 %v6781, %v6791
      %v6807 = vmul.f32 %v6781, %v6795
      %v6808 = vmul.f32 %v6785, %v6791
      %v6809 = vmul.f32 %v6785, %v6795
      %v6810 = vmul.f32 %v6798, %v1213
      %v6811 = vmul.f32 %v6799, %v1219
      %v6812 = vmul.f32 %v6800, %v1214
      %v6813 = vmul.f32 %v6801, %v1220
      %v6814 = vmul.f32 %v6802, %v1215
      %v6815 = vmul.f32 %v6803, %v1221
      %v6816 = vmul.f32 %v6804, %v1216
      %v6817 = vmul.f32 %v6805, %v1222
      %v6818 = vmul.f32 %v6806, %v1217
      %v6819 = vmul.f32 %v6807, %v1223
      %v6820 = vmul.f32 %v6808, %v1218
      %v6821 = vmul.f32 %v6809, %v1224
      %v6822 = vadd.f32 %v6749, %v6810
      %v6823 = vadd.f32 %v6750, %v6811
      %v6824 = vadd.f32 %v6751, %v6812
      %v6825 = vadd.f32 %v6752, %v6813
      %v6826 = vadd.f32 %v6753, %v6814
      %v6827 = vadd.f32 %v6754, %v6815
      %v6828 = vadd.f32 %v6755, %v6816
      %v6829 = vadd.f32 %v6756, %v6817
      %v6830 = vadd.f32 %v6757, %v6818
      %v6831 = vadd.f32 %v6758, %v6819
      %v6832 = vadd.f32 %v6759, %v6820
      %v6833 = vadd.f32 %v6760, %v6821
      %6834 = vrot.lane.b32.xlu0 %v803, 43
      %v6835 = vpop.permute.xlu0 %6834
      %6836 = vrot.lane.b32.xlu0 %v805, 43
      %v6837 = vpop.permute.xlu0 %6836
      %6838 = vrot.lane.b32.xlu0 %v807, 43
      %v6839 = vpop.permute.xlu0 %6838
      %6840 = vrot.lane.b32.xlu0 %v809, 43
      %v6841 = vpop.permute.xlu0 %6840
      %6842 = vrot.lane.b32.xlu0 %v811, 43
      %v6843 = vpop.permute.xlu0 %6842
      %6844 = vrot.lane.b32.xlu0 %v813, 43
      %v6845 = vpop.permute.xlu0 %6844
      %6846 = vrot.lane.b32.xlu0 %v804, 43
      %v6847 = vpop.permute.xlu0 %6846
      %6848 = vrot.lane.b32.xlu0 %v806, 43
      %v6849 = vpop.permute.xlu0 %6848
      %6850 = vrot.lane.b32.xlu0 %v808, 43
      %v6851 = vpop.permute.xlu0 %6850
      %6852 = vrot.lane.b32.xlu0 %v810, 43
      %v6853 = vpop.permute.xlu0 %6852
      %6854 = vrot.lane.b32.xlu0 %v812, 43
      %v6855 = vpop.permute.xlu0 %6854
      %6856 = vrot.lane.b32.xlu0 %v814, 43
      %v6857 = vpop.permute.xlu0 %6856
      %vm6858 = vcmp.lt.s32.totalorder %v882, 43
      %v6859 = vsel %vm6858, %v6835, %v6847
      %v6860 = vsel %vm6858, %v6837, %v6849
      %v6861 = vsel %vm6858, %v6839, %v6851
      %v6862 = vsel %vm6858, %v6841, %v6853
      %v6863 = vsel %vm6858, %v6843, %v6855
      %v6864 = vsel %vm6858, %v6845, %v6857
      %v6865 = vsel %vm6858, %v6847, %v6835
      %v6866 = vsel %vm6858, %v6849, %v6837
      %v6867 = vsel %vm6858, %v6851, %v6839
      %v6868 = vsel %vm6858, %v6853, %v6841
      %v6869 = vsel %vm6858, %v6855, %v6843
      %v6870 = vsel %vm6858, %v6857, %v6845
      %s6871 = scalar_lea.vmem %s7, 112
      %v6872 = vld [vmem:[%s6871] ss:$8 sm:$0x3]
      %6873 = vset.pattern.permute.xlu0 56
      %6874 = vperm.xlu0 %6873, %v797
      %v6875 = vpop.permute.xlu0 %6874
      %6877 = vset.pattern.permute.xlu0 56
      %6878 = vperm.xlu0 %6877, %v798
      %v6879 = vpop.permute.xlu0 %6878
      %6881 = vset.pattern.permute.xlu0 56
      %6882 = vperm.xlu0 %6881, %v799
      %v6883 = vpop.permute.xlu0 %6882
      %6885 = vset.pattern.permute.xlu0 56
      %6886 = vperm.xlu0 %6885, %v800
      %v6887 = vpop.permute.xlu0 %6886
      %6889 = vset.pattern.permute.xlu0 56
      %6890 = vperm.xlu0 %6889, %v801
      %v6891 = vpop.permute.xlu0 %6890
      %6893 = vset.pattern.permute.xlu0 56
      %6894 = vperm.xlu0 %6893, %v802
      %v6895 = vpop.permute.xlu0 %6894
      %v6898 = vlaneseq
      %v6899 = vshrl.u32 %v6898, 7
      %v6900 = vsub.s32 0, %v6899
      %v6901 = vrot.slane %v6872, %v6900
      %v6902 = vlaneseq
      %v6903 = vshrl.u32 %v6902, 7
      %v6904 = vsub.s32 1, %v6903
      %v6905 = vrot.slane %v6872, %v6904
      %v6908 = vmul.f32 %v6875, %v6901
      %v6909 = vmul.f32 %v6875, %v6905
      %v6910 = vmul.f32 %v6879, %v6901
      %v6911 = vmul.f32 %v6879, %v6905
      %v6912 = vmul.f32 %v6883, %v6901
      %v6913 = vmul.f32 %v6883, %v6905
      %v6914 = vmul.f32 %v6887, %v6901
      %v6915 = vmul.f32 %v6887, %v6905
      %v6916 = vmul.f32 %v6891, %v6901
      %v6917 = vmul.f32 %v6891, %v6905
      %v6918 = vmul.f32 %v6895, %v6901
      %v6919 = vmul.f32 %v6895, %v6905
      %v6920 = vmul.f32 %v6908, %v6859
      %v6921 = vmul.f32 %v6909, %v6865
      %v6922 = vmul.f32 %v6910, %v6860
      %v6923 = vmul.f32 %v6911, %v6866
      %v6924 = vmul.f32 %v6912, %v6861
      %v6925 = vmul.f32 %v6913, %v6867
      %v6926 = vmul.f32 %v6914, %v6862
      %v6927 = vmul.f32 %v6915, %v6868
      %v6928 = vmul.f32 %v6916, %v6863
      %v6929 = vmul.f32 %v6917, %v6869
      %v6930 = vmul.f32 %v6918, %v6864
      %v6931 = vmul.f32 %v6919, %v6870
      %v6932 = vadd.f32 %v6822, %v6920
      %v6933 = vadd.f32 %v6823, %v6921
      %v6934 = vadd.f32 %v6824, %v6922
      %v6935 = vadd.f32 %v6825, %v6923
      %v6936 = vadd.f32 %v6826, %v6924
      %v6937 = vadd.f32 %v6827, %v6925
      %v6938 = vadd.f32 %v6828, %v6926
      %v6939 = vadd.f32 %v6829, %v6927
      %v6940 = vadd.f32 %v6830, %v6928
      %v6941 = vadd.f32 %v6831, %v6929
      %v6942 = vadd.f32 %v6832, %v6930
      %v6943 = vadd.f32 %v6833, %v6931
      %6944 = vrot.lane.b32.xlu0 %v803, 119
      %v6945 = vpop.permute.xlu0 %6944
      %6946 = vrot.lane.b32.xlu0 %v805, 119
      %v6947 = vpop.permute.xlu0 %6946
      %6948 = vrot.lane.b32.xlu0 %v807, 119
      %v6949 = vpop.permute.xlu0 %6948
      %6950 = vrot.lane.b32.xlu0 %v809, 119
      %v6951 = vpop.permute.xlu0 %6950
      %6952 = vrot.lane.b32.xlu0 %v811, 119
      %v6953 = vpop.permute.xlu0 %6952
      %6954 = vrot.lane.b32.xlu0 %v813, 119
      %v6955 = vpop.permute.xlu0 %6954
      %6956 = vrot.lane.b32.xlu0 %v804, 119
      %v6957 = vpop.permute.xlu0 %6956
      %6958 = vrot.lane.b32.xlu0 %v806, 119
      %v6959 = vpop.permute.xlu0 %6958
      %6960 = vrot.lane.b32.xlu0 %v808, 119
      %v6961 = vpop.permute.xlu0 %6960
      %6962 = vrot.lane.b32.xlu0 %v810, 119
      %v6963 = vpop.permute.xlu0 %6962
      %6964 = vrot.lane.b32.xlu0 %v812, 119
      %v6965 = vpop.permute.xlu0 %6964
      %6966 = vrot.lane.b32.xlu0 %v814, 119
      %v6967 = vpop.permute.xlu0 %6966
      %vm6968 = vcmp.lt.s32.totalorder %v882, 119
      %v6969 = vsel %vm6968, %v6945, %v6957
      %v6970 = vsel %vm6968, %v6947, %v6959
      %v6971 = vsel %vm6968, %v6949, %v6961
      %v6972 = vsel %vm6968, %v6951, %v6963
      %v6973 = vsel %vm6968, %v6953, %v6965
      %v6974 = vsel %vm6968, %v6955, %v6967
      %v6975 = vsel %vm6968, %v6957, %v6945
      %v6976 = vsel %vm6968, %v6959, %v6947
      %v6977 = vsel %vm6968, %v6961, %v6949
      %v6978 = vsel %vm6968, %v6963, %v6951
      %v6979 = vsel %vm6968, %v6965, %v6953
      %v6980 = vsel %vm6968, %v6967, %v6955
      %s6981 = scalar_lea.vmem %s7, 113
      %v6982 = vld [vmem:[%s6981] ss:$8 sm:$0x3]
      %6983 = vset.pattern.permute.xlu0 57
      %6984 = vperm.xlu0 %6983, %v797
      %v6985 = vpop.permute.xlu0 %6984
      %6987 = vset.pattern.permute.xlu0 57
      %6988 = vperm.xlu0 %6987, %v798
      %v6989 = vpop.permute.xlu0 %6988
      %6991 = vset.pattern.permute.xlu0 57
      %6992 = vperm.xlu0 %6991, %v799
      %v6993 = vpop.permute.xlu0 %6992
      %6995 = vset.pattern.permute.xlu0 57
      %6996 = vperm.xlu0 %6995, %v800
      %v6997 = vpop.permute.xlu0 %6996
      %6999 = vset.pattern.permute.xlu0 57
      %7000 = vperm.xlu0 %6999, %v801
      %v7001 = vpop.permute.xlu0 %7000
      %7003 = vset.pattern.permute.xlu0 57
      %7004 = vperm.xlu0 %7003, %v802
      %v7005 = vpop.permute.xlu0 %7004
      %v7008 = vlaneseq
      %v7009 = vshrl.u32 %v7008, 7
      %v7010 = vsub.s32 0, %v7009
      %v7011 = vrot.slane %v6982, %v7010
      %v7012 = vlaneseq
      %v7013 = vshrl.u32 %v7012, 7
      %v7014 = vsub.s32 1, %v7013
      %v7015 = vrot.slane %v6982, %v7014
      %v7018 = vmul.f32 %v6985, %v7011
      %v7019 = vmul.f32 %v6985, %v7015
      %v7020 = vmul.f32 %v6989, %v7011
      %v7021 = vmul.f32 %v6989, %v7015
      %v7022 = vmul.f32 %v6993, %v7011
      %v7023 = vmul.f32 %v6993, %v7015
      %v7024 = vmul.f32 %v6997, %v7011
      %v7025 = vmul.f32 %v6997, %v7015
      %v7026 = vmul.f32 %v7001, %v7011
      %v7027 = vmul.f32 %v7001, %v7015
      %v7028 = vmul.f32 %v7005, %v7011
      %v7029 = vmul.f32 %v7005, %v7015
      %v7030 = vmul.f32 %v7018, %v6975
      %v7031 = vmul.f32 %v7019, %v6969
      %v7032 = vmul.f32 %v7020, %v6976
      %v7033 = vmul.f32 %v7021, %v6970
      %v7034 = vmul.f32 %v7022, %v6977
      %v7035 = vmul.f32 %v7023, %v6971
      %v7036 = vmul.f32 %v7024, %v6978
      %v7037 = vmul.f32 %v7025, %v6972
      %v7038 = vmul.f32 %v7026, %v6979
      %v7039 = vmul.f32 %v7027, %v6973
      %v7040 = vmul.f32 %v7028, %v6980
      %v7041 = vmul.f32 %v7029, %v6974
      %v7042 = vadd.f32 %v6932, %v7030
      %v7043 = vadd.f32 %v6933, %v7031
      %v7044 = vadd.f32 %v6934, %v7032
      %v7045 = vadd.f32 %v6935, %v7033
      %v7046 = vadd.f32 %v6936, %v7034
      %v7047 = vadd.f32 %v6937, %v7035
      %v7048 = vadd.f32 %v6938, %v7036
      %v7049 = vadd.f32 %v6939, %v7037
      %v7050 = vadd.f32 %v6940, %v7038
      %v7051 = vadd.f32 %v6941, %v7039
      %v7052 = vadd.f32 %v6942, %v7040
      %v7053 = vadd.f32 %v6943, %v7041
      %s7054 = scalar_lea.vmem %s7, 114
      %v7055 = vld [vmem:[%s7054] ss:$8 sm:$0x3]
      %7056 = vset.pattern.permute.xlu0 58
      %7057 = vperm.xlu0 %7056, %v797
      %v7058 = vpop.permute.xlu0 %7057
      %7060 = vset.pattern.permute.xlu0 58
      %7061 = vperm.xlu0 %7060, %v798
      %v7062 = vpop.permute.xlu0 %7061
      %7064 = vset.pattern.permute.xlu0 58
      %7065 = vperm.xlu0 %7064, %v799
      %v7066 = vpop.permute.xlu0 %7065
      %7068 = vset.pattern.permute.xlu0 58
      %7069 = vperm.xlu0 %7068, %v800
      %v7070 = vpop.permute.xlu0 %7069
      %7072 = vset.pattern.permute.xlu0 58
      %7073 = vperm.xlu0 %7072, %v801
      %v7074 = vpop.permute.xlu0 %7073
      %7076 = vset.pattern.permute.xlu0 58
      %7077 = vperm.xlu0 %7076, %v802
      %v7078 = vpop.permute.xlu0 %7077
      %v7081 = vlaneseq
      %v7082 = vshrl.u32 %v7081, 7
      %v7083 = vsub.s32 0, %v7082
      %v7084 = vrot.slane %v7055, %v7083
      %v7085 = vlaneseq
      %v7086 = vshrl.u32 %v7085, 7
      %v7087 = vsub.s32 1, %v7086
      %v7088 = vrot.slane %v7055, %v7087
      %v7091 = vmul.f32 %v7058, %v7084
      %v7092 = vmul.f32 %v7058, %v7088
      %v7093 = vmul.f32 %v7062, %v7084
      %v7094 = vmul.f32 %v7062, %v7088
      %v7095 = vmul.f32 %v7066, %v7084
      %v7096 = vmul.f32 %v7066, %v7088
      %v7097 = vmul.f32 %v7070, %v7084
      %v7098 = vmul.f32 %v7070, %v7088
      %v7099 = vmul.f32 %v7074, %v7084
      %v7100 = vmul.f32 %v7074, %v7088
      %v7101 = vmul.f32 %v7078, %v7084
      %v7102 = vmul.f32 %v7078, %v7088
      %v7103 = vmul.f32 %v7091, %v4189
      %v7104 = vmul.f32 %v7092, %v4183
      %v7105 = vmul.f32 %v7093, %v4190
      %v7106 = vmul.f32 %v7094, %v4184
      %v7107 = vmul.f32 %v7095, %v4191
      %v7108 = vmul.f32 %v7096, %v4185
      %v7109 = vmul.f32 %v7097, %v4192
      %v7110 = vmul.f32 %v7098, %v4186
      %v7111 = vmul.f32 %v7099, %v4193
      %v7112 = vmul.f32 %v7100, %v4187
      %v7113 = vmul.f32 %v7101, %v4194
      %v7114 = vmul.f32 %v7102, %v4188
      %v7115 = vadd.f32 %v7042, %v7103
      %v7116 = vadd.f32 %v7043, %v7104
      %v7117 = vadd.f32 %v7044, %v7105
      %v7118 = vadd.f32 %v7045, %v7106
      %v7119 = vadd.f32 %v7046, %v7107
      %v7120 = vadd.f32 %v7047, %v7108
      %v7121 = vadd.f32 %v7048, %v7109
      %v7122 = vadd.f32 %v7049, %v7110
      %v7123 = vadd.f32 %v7050, %v7111
      %v7124 = vadd.f32 %v7051, %v7112
      %v7125 = vadd.f32 %v7052, %v7113
      %v7126 = vadd.f32 %v7053, %v7114
      %7127 = vrot.lane.b32.xlu0 %v803, 105
      %v7128 = vpop.permute.xlu0 %7127
      %7129 = vrot.lane.b32.xlu0 %v805, 105
      %v7130 = vpop.permute.xlu0 %7129
      %7131 = vrot.lane.b32.xlu0 %v807, 105
      %v7132 = vpop.permute.xlu0 %7131
      %7133 = vrot.lane.b32.xlu0 %v809, 105
      %v7134 = vpop.permute.xlu0 %7133
      %7135 = vrot.lane.b32.xlu0 %v811, 105
      %v7136 = vpop.permute.xlu0 %7135
      %7137 = vrot.lane.b32.xlu0 %v813, 105
      %v7138 = vpop.permute.xlu0 %7137
      %7139 = vrot.lane.b32.xlu0 %v804, 105
      %v7140 = vpop.permute.xlu0 %7139
      %7141 = vrot.lane.b32.xlu0 %v806, 105
      %v7142 = vpop.permute.xlu0 %7141
      %7143 = vrot.lane.b32.xlu0 %v808, 105
      %v7144 = vpop.permute.xlu0 %7143
      %7145 = vrot.lane.b32.xlu0 %v810, 105
      %v7146 = vpop.permute.xlu0 %7145
      %7147 = vrot.lane.b32.xlu0 %v812, 105
      %v7148 = vpop.permute.xlu0 %7147
      %7149 = vrot.lane.b32.xlu0 %v814, 105
      %v7150 = vpop.permute.xlu0 %7149
      %vm7151 = vcmp.lt.s32.totalorder %v882, 105
      %v7152 = vsel %vm7151, %v7128, %v7140
      %v7153 = vsel %vm7151, %v7130, %v7142
      %v7154 = vsel %vm7151, %v7132, %v7144
      %v7155 = vsel %vm7151, %v7134, %v7146
      %v7156 = vsel %vm7151, %v7136, %v7148
      %v7157 = vsel %vm7151, %v7138, %v7150
      %v7158 = vsel %vm7151, %v7140, %v7128
      %v7159 = vsel %vm7151, %v7142, %v7130
      %v7160 = vsel %vm7151, %v7144, %v7132
      %v7161 = vsel %vm7151, %v7146, %v7134
      %v7162 = vsel %vm7151, %v7148, %v7136
      %v7163 = vsel %vm7151, %v7150, %v7138
      %s7164 = scalar_lea.vmem %s7, 115
      %v7165 = vld [vmem:[%s7164] ss:$8 sm:$0x3]
      %7166 = vset.pattern.permute.xlu0 59
      %7167 = vperm.xlu0 %7166, %v797
      %v7168 = vpop.permute.xlu0 %7167
      %7170 = vset.pattern.permute.xlu0 59
      %7171 = vperm.xlu0 %7170, %v798
      %v7172 = vpop.permute.xlu0 %7171
      %7174 = vset.pattern.permute.xlu0 59
      %7175 = vperm.xlu0 %7174, %v799
      %v7176 = vpop.permute.xlu0 %7175
      %7178 = vset.pattern.permute.xlu0 59
      %7179 = vperm.xlu0 %7178, %v800
      %v7180 = vpop.permute.xlu0 %7179
      %7182 = vset.pattern.permute.xlu0 59
      %7183 = vperm.xlu0 %7182, %v801
      %v7184 = vpop.permute.xlu0 %7183
      %7186 = vset.pattern.permute.xlu0 59
      %7187 = vperm.xlu0 %7186, %v802
      %v7188 = vpop.permute.xlu0 %7187
      %v7191 = vlaneseq
      %v7192 = vshrl.u32 %v7191, 7
      %v7193 = vsub.s32 0, %v7192
      %v7194 = vrot.slane %v7165, %v7193
      %v7195 = vlaneseq
      %v7196 = vshrl.u32 %v7195, 7
      %v7197 = vsub.s32 1, %v7196
      %v7198 = vrot.slane %v7165, %v7197
      %v7201 = vmul.f32 %v7168, %v7194
      %v7202 = vmul.f32 %v7168, %v7198
      %v7203 = vmul.f32 %v7172, %v7194
      %v7204 = vmul.f32 %v7172, %v7198
      %v7205 = vmul.f32 %v7176, %v7194
      %v7206 = vmul.f32 %v7176, %v7198
      %v7207 = vmul.f32 %v7180, %v7194
      %v7208 = vmul.f32 %v7180, %v7198
      %v7209 = vmul.f32 %v7184, %v7194
      %v7210 = vmul.f32 %v7184, %v7198
      %v7211 = vmul.f32 %v7188, %v7194
      %v7212 = vmul.f32 %v7188, %v7198
      %v7213 = vmul.f32 %v7201, %v7158
      %v7214 = vmul.f32 %v7202, %v7152
      %v7215 = vmul.f32 %v7203, %v7159
      %v7216 = vmul.f32 %v7204, %v7153
      %v7217 = vmul.f32 %v7205, %v7160
      %v7218 = vmul.f32 %v7206, %v7154
      %v7219 = vmul.f32 %v7207, %v7161
      %v7220 = vmul.f32 %v7208, %v7155
      %v7221 = vmul.f32 %v7209, %v7162
      %v7222 = vmul.f32 %v7210, %v7156
      %v7223 = vmul.f32 %v7211, %v7163
      %v7224 = vmul.f32 %v7212, %v7157
      %v7225 = vadd.f32 %v7115, %v7213
      %v7226 = vadd.f32 %v7116, %v7214
      %v7227 = vadd.f32 %v7117, %v7215
      %v7228 = vadd.f32 %v7118, %v7216
      %v7229 = vadd.f32 %v7119, %v7217
      %v7230 = vadd.f32 %v7120, %v7218
      %v7231 = vadd.f32 %v7121, %v7219
      %v7232 = vadd.f32 %v7122, %v7220
      %v7233 = vadd.f32 %v7123, %v7221
      %v7234 = vadd.f32 %v7124, %v7222
      %v7235 = vadd.f32 %v7125, %v7223
      %v7236 = vadd.f32 %v7126, %v7224
      %7237 = vrot.lane.b32.xlu0 %v803, 7
      %v7238 = vpop.permute.xlu0 %7237
      %7239 = vrot.lane.b32.xlu0 %v805, 7
      %v7240 = vpop.permute.xlu0 %7239
      %7241 = vrot.lane.b32.xlu0 %v807, 7
      %v7242 = vpop.permute.xlu0 %7241
      %7243 = vrot.lane.b32.xlu0 %v809, 7
      %v7244 = vpop.permute.xlu0 %7243
      %7245 = vrot.lane.b32.xlu0 %v811, 7
      %v7246 = vpop.permute.xlu0 %7245
      %7247 = vrot.lane.b32.xlu0 %v813, 7
      %v7248 = vpop.permute.xlu0 %7247
      %7249 = vrot.lane.b32.xlu0 %v804, 7
      %v7250 = vpop.permute.xlu0 %7249
      %7251 = vrot.lane.b32.xlu0 %v806, 7
      %v7252 = vpop.permute.xlu0 %7251
      %7253 = vrot.lane.b32.xlu0 %v808, 7
      %v7254 = vpop.permute.xlu0 %7253
      %7255 = vrot.lane.b32.xlu0 %v810, 7
      %v7256 = vpop.permute.xlu0 %7255
      %7257 = vrot.lane.b32.xlu0 %v812, 7
      %v7258 = vpop.permute.xlu0 %7257
      %7259 = vrot.lane.b32.xlu0 %v814, 7
      %v7260 = vpop.permute.xlu0 %7259
      %vm7261 = vcmp.lt.s32.totalorder %v882, 7
      %v7262 = vsel %vm7261, %v7238, %v7250
      %v7263 = vsel %vm7261, %v7240, %v7252
      %v7264 = vsel %vm7261, %v7242, %v7254
      %v7265 = vsel %vm7261, %v7244, %v7256
      %v7266 = vsel %vm7261, %v7246, %v7258
      %v7267 = vsel %vm7261, %v7248, %v7260
      %v7268 = vsel %vm7261, %v7250, %v7238
      %v7269 = vsel %vm7261, %v7252, %v7240
      %v7270 = vsel %vm7261, %v7254, %v7242
      %v7271 = vsel %vm7261, %v7256, %v7244
      %v7272 = vsel %vm7261, %v7258, %v7246
      %v7273 = vsel %vm7261, %v7260, %v7248
      %s7274 = scalar_lea.vmem %s7, 116
      %v7275 = vld [vmem:[%s7274] ss:$8 sm:$0x3]
      %7276 = vset.pattern.permute.xlu0 60
      %7277 = vperm.xlu0 %7276, %v797
      %v7278 = vpop.permute.xlu0 %7277
      %7280 = vset.pattern.permute.xlu0 60
      %7281 = vperm.xlu0 %7280, %v798
      %v7282 = vpop.permute.xlu0 %7281
      %7284 = vset.pattern.permute.xlu0 60
      %7285 = vperm.xlu0 %7284, %v799
      %v7286 = vpop.permute.xlu0 %7285
      %7288 = vset.pattern.permute.xlu0 60
      %7289 = vperm.xlu0 %7288, %v800
      %v7290 = vpop.permute.xlu0 %7289
      %7292 = vset.pattern.permute.xlu0 60
      %7293 = vperm.xlu0 %7292, %v801
      %v7294 = vpop.permute.xlu0 %7293
      %7296 = vset.pattern.permute.xlu0 60
      %7297 = vperm.xlu0 %7296, %v802
      %v7298 = vpop.permute.xlu0 %7297
      %v7301 = vlaneseq
      %v7302 = vshrl.u32 %v7301, 7
      %v7303 = vsub.s32 0, %v7302
      %v7304 = vrot.slane %v7275, %v7303
      %v7305 = vlaneseq
      %v7306 = vshrl.u32 %v7305, 7
      %v7307 = vsub.s32 1, %v7306
      %v7308 = vrot.slane %v7275, %v7307
      %v7311 = vmul.f32 %v7278, %v7304
      %v7312 = vmul.f32 %v7278, %v7308
      %v7313 = vmul.f32 %v7282, %v7304
      %v7314 = vmul.f32 %v7282, %v7308
      %v7315 = vmul.f32 %v7286, %v7304
      %v7316 = vmul.f32 %v7286, %v7308
      %v7317 = vmul.f32 %v7290, %v7304
      %v7318 = vmul.f32 %v7290, %v7308
      %v7319 = vmul.f32 %v7294, %v7304
      %v7320 = vmul.f32 %v7294, %v7308
      %v7321 = vmul.f32 %v7298, %v7304
      %v7322 = vmul.f32 %v7298, %v7308
      %v7323 = vmul.f32 %v7311, %v7268
      %v7324 = vmul.f32 %v7312, %v7262
      %v7325 = vmul.f32 %v7313, %v7269
      %v7326 = vmul.f32 %v7314, %v7263
      %v7327 = vmul.f32 %v7315, %v7270
      %v7328 = vmul.f32 %v7316, %v7264
      %v7329 = vmul.f32 %v7317, %v7271
      %v7330 = vmul.f32 %v7318, %v7265
      %v7331 = vmul.f32 %v7319, %v7272
      %v7332 = vmul.f32 %v7320, %v7266
      %v7333 = vmul.f32 %v7321, %v7273
      %v7334 = vmul.f32 %v7322, %v7267
      %v7335 = vadd.f32 %v7225, %v7323
      %v7336 = vadd.f32 %v7226, %v7324
      %v7337 = vadd.f32 %v7227, %v7325
      %v7338 = vadd.f32 %v7228, %v7326
      %v7339 = vadd.f32 %v7229, %v7327
      %v7340 = vadd.f32 %v7230, %v7328
      %v7341 = vadd.f32 %v7231, %v7329
      %v7342 = vadd.f32 %v7232, %v7330
      %v7343 = vadd.f32 %v7233, %v7331
      %v7344 = vadd.f32 %v7234, %v7332
      %v7345 = vadd.f32 %v7235, %v7333
      %v7346 = vadd.f32 %v7236, %v7334
      %7347 = vrot.lane.b32.xlu0 %v803, 121
      %v7348 = vpop.permute.xlu0 %7347
      %7349 = vrot.lane.b32.xlu0 %v805, 121
      %v7350 = vpop.permute.xlu0 %7349
      %7351 = vrot.lane.b32.xlu0 %v807, 121
      %v7352 = vpop.permute.xlu0 %7351
      %7353 = vrot.lane.b32.xlu0 %v809, 121
      %v7354 = vpop.permute.xlu0 %7353
      %7355 = vrot.lane.b32.xlu0 %v811, 121
      %v7356 = vpop.permute.xlu0 %7355
      %7357 = vrot.lane.b32.xlu0 %v813, 121
      %v7358 = vpop.permute.xlu0 %7357
      %7359 = vrot.lane.b32.xlu0 %v804, 121
      %v7360 = vpop.permute.xlu0 %7359
      %7361 = vrot.lane.b32.xlu0 %v806, 121
      %v7362 = vpop.permute.xlu0 %7361
      %7363 = vrot.lane.b32.xlu0 %v808, 121
      %v7364 = vpop.permute.xlu0 %7363
      %7365 = vrot.lane.b32.xlu0 %v810, 121
      %v7366 = vpop.permute.xlu0 %7365
      %7367 = vrot.lane.b32.xlu0 %v812, 121
      %v7368 = vpop.permute.xlu0 %7367
      %7369 = vrot.lane.b32.xlu0 %v814, 121
      %v7370 = vpop.permute.xlu0 %7369
      %vm7371 = vcmp.lt.s32.totalorder %v882, 121
      %v7372 = vsel %vm7371, %v7348, %v7360
      %v7373 = vsel %vm7371, %v7350, %v7362
      %v7374 = vsel %vm7371, %v7352, %v7364
      %v7375 = vsel %vm7371, %v7354, %v7366
      %v7376 = vsel %vm7371, %v7356, %v7368
      %v7377 = vsel %vm7371, %v7358, %v7370
      %v7378 = vsel %vm7371, %v7360, %v7348
      %v7379 = vsel %vm7371, %v7362, %v7350
      %v7380 = vsel %vm7371, %v7364, %v7352
      %v7381 = vsel %vm7371, %v7366, %v7354
      %v7382 = vsel %vm7371, %v7368, %v7356
      %v7383 = vsel %vm7371, %v7370, %v7358
      %s7384 = scalar_lea.vmem %s7, 117
      %v7385 = vld [vmem:[%s7384] ss:$8 sm:$0x3]
      %7386 = vset.pattern.permute.xlu0 61
      %7387 = vperm.xlu0 %7386, %v797
      %v7388 = vpop.permute.xlu0 %7387
      %7390 = vset.pattern.permute.xlu0 61
      %7391 = vperm.xlu0 %7390, %v798
      %v7392 = vpop.permute.xlu0 %7391
      %7394 = vset.pattern.permute.xlu0 61
      %7395 = vperm.xlu0 %7394, %v799
      %v7396 = vpop.permute.xlu0 %7395
      %7398 = vset.pattern.permute.xlu0 61
      %7399 = vperm.xlu0 %7398, %v800
      %v7400 = vpop.permute.xlu0 %7399
      %7402 = vset.pattern.permute.xlu0 61
      %7403 = vperm.xlu0 %7402, %v801
      %v7404 = vpop.permute.xlu0 %7403
      %7406 = vset.pattern.permute.xlu0 61
      %7407 = vperm.xlu0 %7406, %v802
      %v7408 = vpop.permute.xlu0 %7407
      %v7411 = vlaneseq
      %v7412 = vshrl.u32 %v7411, 7
      %v7413 = vsub.s32 0, %v7412
      %v7414 = vrot.slane %v7385, %v7413
      %v7415 = vlaneseq
      %v7416 = vshrl.u32 %v7415, 7
      %v7417 = vsub.s32 1, %v7416
      %v7418 = vrot.slane %v7385, %v7417
      %v7421 = vmul.f32 %v7388, %v7414
      %v7422 = vmul.f32 %v7388, %v7418
      %v7423 = vmul.f32 %v7392, %v7414
      %v7424 = vmul.f32 %v7392, %v7418
      %v7425 = vmul.f32 %v7396, %v7414
      %v7426 = vmul.f32 %v7396, %v7418
      %v7427 = vmul.f32 %v7400, %v7414
      %v7428 = vmul.f32 %v7400, %v7418
      %v7429 = vmul.f32 %v7404, %v7414
      %v7430 = vmul.f32 %v7404, %v7418
      %v7431 = vmul.f32 %v7408, %v7414
      %v7432 = vmul.f32 %v7408, %v7418
      %v7433 = vmul.f32 %v7421, %v7372
      %v7434 = vmul.f32 %v7422, %v7378
      %v7435 = vmul.f32 %v7423, %v7373
      %v7436 = vmul.f32 %v7424, %v7379
      %v7437 = vmul.f32 %v7425, %v7374
      %v7438 = vmul.f32 %v7426, %v7380
      %v7439 = vmul.f32 %v7427, %v7375
      %v7440 = vmul.f32 %v7428, %v7381
      %v7441 = vmul.f32 %v7429, %v7376
      %v7442 = vmul.f32 %v7430, %v7382
      %v7443 = vmul.f32 %v7431, %v7377
      %v7444 = vmul.f32 %v7432, %v7383
      %v7445 = vadd.f32 %v7335, %v7433
      %v7446 = vadd.f32 %v7336, %v7434
      %v7447 = vadd.f32 %v7337, %v7435
      %v7448 = vadd.f32 %v7338, %v7436
      %v7449 = vadd.f32 %v7339, %v7437
      %v7450 = vadd.f32 %v7340, %v7438
      %v7451 = vadd.f32 %v7341, %v7439
      %v7452 = vadd.f32 %v7342, %v7440
      %v7453 = vadd.f32 %v7343, %v7441
      %v7454 = vadd.f32 %v7344, %v7442
      %v7455 = vadd.f32 %v7345, %v7443
      %v7456 = vadd.f32 %v7346, %v7444
      %7457 = vrot.lane.b32.xlu0 %v803, 23
      %v7458 = vpop.permute.xlu0 %7457
      %7459 = vrot.lane.b32.xlu0 %v805, 23
      %v7460 = vpop.permute.xlu0 %7459
      %7461 = vrot.lane.b32.xlu0 %v807, 23
      %v7462 = vpop.permute.xlu0 %7461
      %7463 = vrot.lane.b32.xlu0 %v809, 23
      %v7464 = vpop.permute.xlu0 %7463
      %7465 = vrot.lane.b32.xlu0 %v811, 23
      %v7466 = vpop.permute.xlu0 %7465
      %7467 = vrot.lane.b32.xlu0 %v813, 23
      %v7468 = vpop.permute.xlu0 %7467
      %7469 = vrot.lane.b32.xlu0 %v804, 23
      %v7470 = vpop.permute.xlu0 %7469
      %7471 = vrot.lane.b32.xlu0 %v806, 23
      %v7472 = vpop.permute.xlu0 %7471
      %7473 = vrot.lane.b32.xlu0 %v808, 23
      %v7474 = vpop.permute.xlu0 %7473
      %7475 = vrot.lane.b32.xlu0 %v810, 23
      %v7476 = vpop.permute.xlu0 %7475
      %7477 = vrot.lane.b32.xlu0 %v812, 23
      %v7478 = vpop.permute.xlu0 %7477
      %7479 = vrot.lane.b32.xlu0 %v814, 23
      %v7480 = vpop.permute.xlu0 %7479
      %vm7481 = vcmp.lt.s32.totalorder %v882, 23
      %v7482 = vsel %vm7481, %v7458, %v7470
      %v7483 = vsel %vm7481, %v7460, %v7472
      %v7484 = vsel %vm7481, %v7462, %v7474
      %v7485 = vsel %vm7481, %v7464, %v7476
      %v7486 = vsel %vm7481, %v7466, %v7478
      %v7487 = vsel %vm7481, %v7468, %v7480
      %v7488 = vsel %vm7481, %v7470, %v7458
      %v7489 = vsel %vm7481, %v7472, %v7460
      %v7490 = vsel %vm7481, %v7474, %v7462
      %v7491 = vsel %vm7481, %v7476, %v7464
      %v7492 = vsel %vm7481, %v7478, %v7466
      %v7493 = vsel %vm7481, %v7480, %v7468
      %s7494 = scalar_lea.vmem %s7, 118
      %v7495 = vld [vmem:[%s7494] ss:$8 sm:$0x3]
      %7496 = vset.pattern.permute.xlu0 62
      %7497 = vperm.xlu0 %7496, %v797
      %v7498 = vpop.permute.xlu0 %7497
      %7500 = vset.pattern.permute.xlu0 62
      %7501 = vperm.xlu0 %7500, %v798
      %v7502 = vpop.permute.xlu0 %7501
      %7504 = vset.pattern.permute.xlu0 62
      %7505 = vperm.xlu0 %7504, %v799
      %v7506 = vpop.permute.xlu0 %7505
      %7508 = vset.pattern.permute.xlu0 62
      %7509 = vperm.xlu0 %7508, %v800
      %v7510 = vpop.permute.xlu0 %7509
      %7512 = vset.pattern.permute.xlu0 62
      %7513 = vperm.xlu0 %7512, %v801
      %v7514 = vpop.permute.xlu0 %7513
      %7516 = vset.pattern.permute.xlu0 62
      %7517 = vperm.xlu0 %7516, %v802
      %v7518 = vpop.permute.xlu0 %7517
      %v7521 = vlaneseq
      %v7522 = vshrl.u32 %v7521, 7
      %v7523 = vsub.s32 0, %v7522
      %v7524 = vrot.slane %v7495, %v7523
      %v7525 = vlaneseq
      %v7526 = vshrl.u32 %v7525, 7
      %v7527 = vsub.s32 1, %v7526
      %v7528 = vrot.slane %v7495, %v7527
      %v7531 = vmul.f32 %v7498, %v7524
      %v7532 = vmul.f32 %v7498, %v7528
      %v7533 = vmul.f32 %v7502, %v7524
      %v7534 = vmul.f32 %v7502, %v7528
      %v7535 = vmul.f32 %v7506, %v7524
      %v7536 = vmul.f32 %v7506, %v7528
      %v7537 = vmul.f32 %v7510, %v7524
      %v7538 = vmul.f32 %v7510, %v7528
      %v7539 = vmul.f32 %v7514, %v7524
      %v7540 = vmul.f32 %v7514, %v7528
      %v7541 = vmul.f32 %v7518, %v7524
      %v7542 = vmul.f32 %v7518, %v7528
      %v7543 = vmul.f32 %v7531, %v7482
      %v7544 = vmul.f32 %v7532, %v7488
      %v7545 = vmul.f32 %v7533, %v7483
      %v7546 = vmul.f32 %v7534, %v7489
      %v7547 = vmul.f32 %v7535, %v7484
      %v7548 = vmul.f32 %v7536, %v7490
      %v7549 = vmul.f32 %v7537, %v7485
      %v7550 = vmul.f32 %v7538, %v7491
      %v7551 = vmul.f32 %v7539, %v7486
      %v7552 = vmul.f32 %v7540, %v7492
      %v7553 = vmul.f32 %v7541, %v7487
      %v7554 = vmul.f32 %v7542, %v7493
      %v7555 = vadd.f32 %v7445, %v7543
      %v7556 = vadd.f32 %v7446, %v7544
      %v7557 = vadd.f32 %v7447, %v7545
      %v7558 = vadd.f32 %v7448, %v7546
      %v7559 = vadd.f32 %v7449, %v7547
      %v7560 = vadd.f32 %v7450, %v7548
      %v7561 = vadd.f32 %v7451, %v7549
      %v7562 = vadd.f32 %v7452, %v7550
      %v7563 = vadd.f32 %v7453, %v7551
      %v7564 = vadd.f32 %v7454, %v7552
      %v7565 = vadd.f32 %v7455, %v7553
      %v7566 = vadd.f32 %v7456, %v7554
      %s7567 = scalar_lea.vmem %s7, 119
      %v7568 = vld [vmem:[%s7567] ss:$8 sm:$0x3]
      %7569 = vset.pattern.permute.xlu0 63
      %7570 = vperm.xlu0 %7569, %v797
      %v7571 = vpop.permute.xlu0 %7570
      %7573 = vset.pattern.permute.xlu0 63
      %7574 = vperm.xlu0 %7573, %v798
      %v7575 = vpop.permute.xlu0 %7574
      %7577 = vset.pattern.permute.xlu0 63
      %7578 = vperm.xlu0 %7577, %v799
      %v7579 = vpop.permute.xlu0 %7578
      %7581 = vset.pattern.permute.xlu0 63
      %7582 = vperm.xlu0 %7581, %v800
      %v7583 = vpop.permute.xlu0 %7582
      %7585 = vset.pattern.permute.xlu0 63
      %7586 = vperm.xlu0 %7585, %v801
      %v7587 = vpop.permute.xlu0 %7586
      %7589 = vset.pattern.permute.xlu0 63
      %7590 = vperm.xlu0 %7589, %v802
      %v7591 = vpop.permute.xlu0 %7590
      %v7594 = vlaneseq
      %v7595 = vshrl.u32 %v7594, 7
      %v7596 = vsub.s32 0, %v7595
      %v7597 = vrot.slane %v7568, %v7596
      %v7598 = vlaneseq
      %v7599 = vshrl.u32 %v7598, 7
      %v7600 = vsub.s32 1, %v7599
      %v7601 = vrot.slane %v7568, %v7600
      %v7604 = vmul.f32 %v7571, %v7597
      %v7605 = vmul.f32 %v7571, %v7601
      %v7606 = vmul.f32 %v7575, %v7597
      %v7607 = vmul.f32 %v7575, %v7601
      %v7608 = vmul.f32 %v7579, %v7597
      %v7609 = vmul.f32 %v7579, %v7601
      %v7610 = vmul.f32 %v7583, %v7597
      %v7611 = vmul.f32 %v7583, %v7601
      %v7612 = vmul.f32 %v7587, %v7597
      %v7613 = vmul.f32 %v7587, %v7601
      %v7614 = vmul.f32 %v7591, %v7597
      %v7615 = vmul.f32 %v7591, %v7601
      %v7616 = vmul.f32 %v7604, %v2753
      %v7617 = vmul.f32 %v7605, %v2759
      %v7618 = vmul.f32 %v7606, %v2754
      %v7619 = vmul.f32 %v7607, %v2760
      %v7620 = vmul.f32 %v7608, %v2755
      %v7621 = vmul.f32 %v7609, %v2761
      %v7622 = vmul.f32 %v7610, %v2756
      %v7623 = vmul.f32 %v7611, %v2762
      %v7624 = vmul.f32 %v7612, %v2757
      %v7625 = vmul.f32 %v7613, %v2763
      %v7626 = vmul.f32 %v7614, %v2758
      %v7627 = vmul.f32 %v7615, %v2764
      %v7628 = vadd.f32 %v7555, %v7616
      %v7629 = vadd.f32 %v7556, %v7617
      %v7630 = vadd.f32 %v7557, %v7618
      %v7631 = vadd.f32 %v7558, %v7619
      %v7632 = vadd.f32 %v7559, %v7620
      %v7633 = vadd.f32 %v7560, %v7621
      %v7634 = vadd.f32 %v7561, %v7622
      %v7635 = vadd.f32 %v7562, %v7623
      %v7636 = vadd.f32 %v7563, %v7624
      %v7637 = vadd.f32 %v7564, %v7625
      %v7638 = vadd.f32 %v7565, %v7626
      %v7639 = vadd.f32 %v7566, %v7627
      %7640 = vrot.lane.b32.xlu0 %v803, 9
      %v7641 = vpop.permute.xlu0 %7640
      %7642 = vrot.lane.b32.xlu0 %v805, 9
      %v7643 = vpop.permute.xlu0 %7642
      %7644 = vrot.lane.b32.xlu0 %v807, 9
      %v7645 = vpop.permute.xlu0 %7644
      %7646 = vrot.lane.b32.xlu0 %v809, 9
      %v7647 = vpop.permute.xlu0 %7646
      %7648 = vrot.lane.b32.xlu0 %v811, 9
      %v7649 = vpop.permute.xlu0 %7648
      %7650 = vrot.lane.b32.xlu0 %v813, 9
      %v7651 = vpop.permute.xlu0 %7650
      %7652 = vrot.lane.b32.xlu0 %v804, 9
      %v7653 = vpop.permute.xlu0 %7652
      %7654 = vrot.lane.b32.xlu0 %v806, 9
      %v7655 = vpop.permute.xlu0 %7654
      %7656 = vrot.lane.b32.xlu0 %v808, 9
      %v7657 = vpop.permute.xlu0 %7656
      %7658 = vrot.lane.b32.xlu0 %v810, 9
      %v7659 = vpop.permute.xlu0 %7658
      %7660 = vrot.lane.b32.xlu0 %v812, 9
      %v7661 = vpop.permute.xlu0 %7660
      %7662 = vrot.lane.b32.xlu0 %v814, 9
      %v7663 = vpop.permute.xlu0 %7662
      %vm7664 = vcmp.lt.s32.totalorder %v882, 9
      %v7665 = vsel %vm7664, %v7641, %v7653
      %v7666 = vsel %vm7664, %v7643, %v7655
      %v7667 = vsel %vm7664, %v7645, %v7657
      %v7668 = vsel %vm7664, %v7647, %v7659
      %v7669 = vsel %vm7664, %v7649, %v7661
      %v7670 = vsel %vm7664, %v7651, %v7663
      %v7671 = vsel %vm7664, %v7653, %v7641
      %v7672 = vsel %vm7664, %v7655, %v7643
      %v7673 = vsel %vm7664, %v7657, %v7645
      %v7674 = vsel %vm7664, %v7659, %v7647
      %v7675 = vsel %vm7664, %v7661, %v7649
      %v7676 = vsel %vm7664, %v7663, %v7651
      %s7677 = scalar_lea.vmem %s7, 128
      %v7678 = vld [vmem:[%s7677] ss:$8 sm:$0x3]
      %7679 = vset.pattern.permute.xlu0 64
      %7680 = vperm.xlu0 %7679, %v797
      %v7681 = vpop.permute.xlu0 %7680
      %7683 = vset.pattern.permute.xlu0 64
      %7684 = vperm.xlu0 %7683, %v798
      %v7685 = vpop.permute.xlu0 %7684
      %7687 = vset.pattern.permute.xlu0 64
      %7688 = vperm.xlu0 %7687, %v799
      %v7689 = vpop.permute.xlu0 %7688
      %7691 = vset.pattern.permute.xlu0 64
      %7692 = vperm.xlu0 %7691, %v800
      %v7693 = vpop.permute.xlu0 %7692
      %7695 = vset.pattern.permute.xlu0 64
      %7696 = vperm.xlu0 %7695, %v801
      %v7697 = vpop.permute.xlu0 %7696
      %7699 = vset.pattern.permute.xlu0 64
      %7700 = vperm.xlu0 %7699, %v802
      %v7701 = vpop.permute.xlu0 %7700
      %v7704 = vlaneseq
      %v7705 = vshrl.u32 %v7704, 7
      %v7706 = vsub.s32 0, %v7705
      %v7707 = vrot.slane %v7678, %v7706
      %v7708 = vlaneseq
      %v7709 = vshrl.u32 %v7708, 7
      %v7710 = vsub.s32 1, %v7709
      %v7711 = vrot.slane %v7678, %v7710
      %v7714 = vmul.f32 %v7681, %v7707
      %v7715 = vmul.f32 %v7681, %v7711
      %v7716 = vmul.f32 %v7685, %v7707
      %v7717 = vmul.f32 %v7685, %v7711
      %v7718 = vmul.f32 %v7689, %v7707
      %v7719 = vmul.f32 %v7689, %v7711
      %v7720 = vmul.f32 %v7693, %v7707
      %v7721 = vmul.f32 %v7693, %v7711
      %v7722 = vmul.f32 %v7697, %v7707
      %v7723 = vmul.f32 %v7697, %v7711
      %v7724 = vmul.f32 %v7701, %v7707
      %v7725 = vmul.f32 %v7701, %v7711
      %v7726 = vmul.f32 %v7714, %v7665
      %v7727 = vmul.f32 %v7715, %v7671
      %v7728 = vmul.f32 %v7716, %v7666
      %v7729 = vmul.f32 %v7717, %v7672
      %v7730 = vmul.f32 %v7718, %v7667
      %v7731 = vmul.f32 %v7719, %v7673
      %v7732 = vmul.f32 %v7720, %v7668
      %v7733 = vmul.f32 %v7721, %v7674
      %v7734 = vmul.f32 %v7722, %v7669
      %v7735 = vmul.f32 %v7723, %v7675
      %v7736 = vmul.f32 %v7724, %v7670
      %v7737 = vmul.f32 %v7725, %v7676
      %v7738 = vadd.f32 %v7628, %v7726
      %v7739 = vadd.f32 %v7629, %v7727
      %v7740 = vadd.f32 %v7630, %v7728
      %v7741 = vadd.f32 %v7631, %v7729
      %v7742 = vadd.f32 %v7632, %v7730
      %v7743 = vadd.f32 %v7633, %v7731
      %v7744 = vadd.f32 %v7634, %v7732
      %v7745 = vadd.f32 %v7635, %v7733
      %v7746 = vadd.f32 %v7636, %v7734
      %v7747 = vadd.f32 %v7637, %v7735
      %v7748 = vadd.f32 %v7638, %v7736
      %v7749 = vadd.f32 %v7639, %v7737
      %v7750 = vmax.f32 %v7738, 0.0
      %v7751 = vmax.f32 %v7739, 0.0
      %v7752 = vmax.f32 %v7740, 0.0
      %v7753 = vmax.f32 %v7741, 0.0
      %v7754 = vmax.f32 %v7742, 0.0
      %v7755 = vmax.f32 %v7743, 0.0
      %v7756 = vmax.f32 %v7744, 0.0
      %v7757 = vmax.f32 %v7745, 0.0
      %v7758 = vmax.f32 %v7746, 0.0
      %v7759 = vmax.f32 %v7747, 0.0
      %v7760 = vmax.f32 %v7748, 0.0
      %v7761 = vmax.f32 %v7749, 0.0
      %v7762 = vld [vmem:[%s8] sm:$0xff]
      %v7763 = vld [vmem:[%s8 + $0x8] sm:$0xff]
      %v7765 = vsel %vm461, %v7762, 0
      %v7768 = vsel %vm461, %v7763, 0
      %7770 = vmatprep.subr.mxu0 %v7751
      %7771 = vmatpush1.msra.mxu0 %v7750
      %7772 = vmatprep.subr.mxu0 %v7753
      %7773 = vmatpush1.msra.mxu0 %v7752
      %7774 = vmatprep.subr.mxu0 %v7755
      %7775 = vmatpush1.msra.mxu0 %v7754
      %7776 = vmatprep.subr.mxu0 %v7757
      %7777 = vmatpush1.msra.mxu0 %v7756
      %7778 = vmatprep.subr.mxu0 %v7759
      %7779 = vmatpush1.msra.mxu0 %v7758
      %7780 = vmatprep.subr.mxu0 %v7761
      %7781 = vmatpush1.msra.mxu0 %v7760
      %7782 = vmatprep.subr.mxu0 0.0
      %7783 = vmatpush1.msra.mxu0 0.0
      %7784 = vmatprep.subr.mxu0 0.0
      %7785 = vmatpush1.msra.mxu0 0.0
      %7786 = vmatprep.subr.mxu0 0.0
      %7787 = vmatpush1.msra.mxu0 0.0
      %7788 = vmatprep.subr.mxu0 0.0
      %7789 = vmatpush1.msra.mxu0 0.0
      %7790 = vmatprep.subr.mxu0 0.0
      %7791 = vmatpush1.msra.mxu0 0.0
      %7792 = vmatprep.subr.mxu0 0.0
      %7793 = vmatpush1.msra.mxu0 0.0
      %7794 = vmatprep.subr.mxu0 0.0
      %7795 = vmatpush1.msra.mxu0 0.0
      %7796 = vmatprep.subr.mxu0 0.0
      %7797 = vmatpush1.msra.mxu0 0.0
      %7798 = vmatprep.subr.mxu0 0.0
      %7799 = vmatpush1.msra.mxu0 0.0
      %7800 = vmatprep.subr.mxu0 0.0
      %7801 = vmatpush1.msra.mxu0 0.0
      %7802 = vmatprep.subr.mxu0 0.0
      %7803 = vmatpush1.msra.mxu0 0.0
      %7804 = vmatprep.subr.mxu0 0.0
      %7805 = vmatpush1.msra.mxu0 0.0
      %7806 = vmatprep.subr.mxu0 0.0
      %7807 = vmatpush1.msra.mxu0 0.0
      %7808 = vmatprep.subr.mxu0 0.0
      %7809 = vmatpush1.msra.mxu0 0.0
      %7810 = vmatprep.subr.mxu0 0.0
      %7811 = vmatpush1.msra.mxu0 0.0
      %7812 = vmatprep.subr.mxu0 0.0
      %7813 = vmatpush1.msra.mxu0 0.0
      %7814 = vmatprep.subr.mxu0 0.0
      %7815 = vmatpush1.msra.mxu0 0.0
      %7816 = vmatprep.subr.mxu0 0.0
      %7817 = vmatpush1.msra.mxu0 0.0
      %7818 = vmatprep.subr.mxu0 0.0
      %7819 = vmatpush1.msra.mxu0 0.0
      %7820 = vmatprep.subr.mxu0 0.0
      %7821 = vmatpush1.msra.mxu0 0.0
      %7822 = vmatprep.subr.mxu0 0.0
      %7823 = vmatpush1.msra.mxu0 0.0
      %7824 = vmatprep.subr.mxu0 0.0
      %7825 = vmatpush1.msra.mxu0 0.0
      %7826 = vmatprep.subr.mxu0 0.0
      %7827 = vmatpush1.msra.mxu0 0.0
      %7828 = vmatprep.subr.mxu0 0.0
      %7829 = vmatpush1.msra.mxu0 0.0
      %7830 = vmatprep.subr.mxu0 0.0
      %7831 = vmatpush1.msra.mxu0 0.0
      %7832 = vmatprep.subr.mxu0 0.0
      %7833 = vmatpush1.msra.mxu0 0.0
      %7834 = vmatprep.mubr.f32.mxu0 0.0
      %7835 = vmatmul.mubr.f32.gmra.mrb[0].mxu0 %v7765
      %v7836 = vpop.f32.mrb[0].mxu0
      %v7837 = vadd.f32 0.0, %v7836
      %v7838 = vpop.f32.mrb[0].mxu0
      %v7839 = vadd.f32 0.0, %v7838
      %7840 = vmatprep.mubr.f32.mxu0 0.0
      %7841 = vmatmul.mubr.f32.gmra.mrb[0].mxu0 %v7768
      %v7842 = vpop.f32.mrb[0].mxu0
      %v7843 = vadd.f32 0.0, %v7842
      %v7844 = vpop.f32.mrb[0].mxu0
      %v7845 = vadd.f32 0.0, %v7844
      %7846 = vdwg.mxu0
      %v7847 = vadd.f32 %v7837, %v7843
      %v7848 = vrot.slane %v7847, 4
      %v7849 = vadd.f32 %v7847, %v7848
      %v7850 = vrot.slane %v7849, 2
      %v7851 = vadd.f32 %v7849, %v7850
      %v7852 = vrot.slane %v7851, 1
      %v7853 = vadd.f32 %v7851, %v7852
      %v7854 = vadd.f32 %v7839, %v7845
      %v7855 = vrot.slane %v7854, 4
      %v7856 = vadd.f32 %v7854, %v7855
      %v7857 = vrot.slane %v7856, 2
      %v7858 = vadd.f32 %v7856, %v7857
      %v7859 = vrot.slane %v7858, 1
      %v7860 = vadd.f32 %v7858, %v7859
      %v7861 = vrcp.pop 16.0
      %v7862 = vmul.f32 %v7853, %v7861
      %v7863 = vmul.f32 %v7860, %v7861
      %v7864 = vmax.f32 %v7837, %v7843
      %v7865 = vrot.slane %v7864, 4
      %v7866 = vmax.f32 %v7864, %v7865
      %v7867 = vrot.slane %v7866, 2
      %v7868 = vmax.f32 %v7866, %v7867
      %v7869 = vrot.slane %v7868, 1
      %v7870 = vmax.f32 %v7868, %v7869
      %v7871 = vmax.f32 %v7839, %v7845
      %v7872 = vrot.slane %v7871, 4
      %v7873 = vmax.f32 %v7871, %v7872
      %v7874 = vrot.slane %v7873, 2
      %v7875 = vmax.f32 %v7873, %v7874
      %v7876 = vrot.slane %v7875, 1
      %v7877 = vmax.f32 %v7875, %v7876
      %v7878 = vld [vmem:[%s9] sm:$0xff]
      %v7879 = vld [vmem:[%s9 + $0x8] sm:$0xff]
      %v7880 = vld [vmem:[%s9 + $0x10] sm:$0xff]
      %v7881 = vld [vmem:[%s9 + $0x18] sm:$0xff]
      %v7882 = vld [vmem:[%s9 + $0x20] sm:$0xff]
      %v7883 = vld [vmem:[%s9 + $0x28] sm:$0xff]
      %v7884 = vld [vmem:[%s9 + $0x30] sm:$0xff]
      %v7885 = vld [vmem:[%s9 + $0x38] sm:$0xff]
      %v7886 = vld [vmem:[%s9 + $0x40] sm:$0xff]
      %v7887 = vld [vmem:[%s9 + $0x48] sm:$0xff]
      %v7888 = vld [vmem:[%s9 + $0x50] sm:$0xff]
      %v7889 = vld [vmem:[%s9 + $0x58] sm:$0xff]
      %v7890 = vld [vmem:[%s9 + $0x60] sm:$0xff]
      %v7891 = vld [vmem:[%s9 + $0x68] sm:$0xff]
      %v7892 = vld [vmem:[%s9 + $0x70] sm:$0xff]
      %v7893 = vld [vmem:[%s9 + $0x78] sm:$0xff]
      %v7894 = vld [vmem:[%s9 + $0x80] sm:$0xff]
      %v7895 = vld [vmem:[%s9 + $0x88] sm:$0xff]
      %v7896 = vld [vmem:[%s9 + $0x90] sm:$0xff]
      %v7897 = vld [vmem:[%s9 + $0x98] sm:$0xff]
      %v7898 = vld [vmem:[%s9 + $0xa0] sm:$0xff]
      %v7899 = vld [vmem:[%s9 + $0xa8] sm:$0xff]
      %v7900 = vld [vmem:[%s9 + $0xb0] sm:$0xff]
      %v7901 = vld [vmem:[%s9 + $0xb8] sm:$0xff]
      %v7902 = vld [vmem:[%s9 + $0xc0] sm:$0xff]
      %v7903 = vld [vmem:[%s9 + $0xc8] sm:$0xff]
      %v7904 = vld [vmem:[%s9 + $0xd0] sm:$0xff]
      %v7905 = vld [vmem:[%s9 + $0xd8] sm:$0xff]
      %v7906 = vld [vmem:[%s9 + $0xe0] sm:$0xff]
      %v7907 = vld [vmem:[%s9 + $0xe8] sm:$0xff]
      %v7908 = vld [vmem:[%s9 + $0xf0] sm:$0xff]
      %v7909 = vld [vmem:[%s9 + $0xf8] sm:$0xff]
      %v7910 = vld [vmem:[%s9 + $0x100] sm:$0xff]
      %v7911 = vld [vmem:[%s9 + $0x108] sm:$0xff]
      %v7912 = vld [vmem:[%s9 + $0x110] sm:$0xff]
      %v7913 = vld [vmem:[%s9 + $0x118] sm:$0xff]
      %v7914 = vld [vmem:[%s9 + $0x120] sm:$0xff]
      %v7915 = vld [vmem:[%s9 + $0x128] sm:$0xff]
      %v7916 = vld [vmem:[%s9 + $0x130] sm:$0xff]
      %v7917 = vld [vmem:[%s9 + $0x138] sm:$0xff]
      %v7918 = vld [vmem:[%s9 + $0x140] sm:$0xff]
      %v7919 = vld [vmem:[%s9 + $0x148] sm:$0xff]
      %v7920 = vld [vmem:[%s9 + $0x150] sm:$0xff]
      %v7921 = vld [vmem:[%s9 + $0x158] sm:$0xff]
      %v7922 = vld [vmem:[%s9 + $0x160] sm:$0xff]
      %v7923 = vld [vmem:[%s9 + $0x168] sm:$0xff]
      %v7924 = vld [vmem:[%s9 + $0x170] sm:$0xff]
      %v7925 = vld [vmem:[%s9 + $0x178] sm:$0xff]
      %v7926 = vld [vmem:[%s9 + $0x180] sm:$0xff]
      %v7927 = vld [vmem:[%s9 + $0x188] sm:$0xff]
      %v7928 = vld [vmem:[%s9 + $0x190] sm:$0xff]
      %v7929 = vld [vmem:[%s9 + $0x198] sm:$0xff]
      %v7930 = vld [vmem:[%s9 + $0x1a0] sm:$0xff]
      %v7931 = vld [vmem:[%s9 + $0x1a8] sm:$0xff]
      %v7932 = vld [vmem:[%s9 + $0x1b0] sm:$0xff]
      %v7933 = vld [vmem:[%s9 + $0x1b8] sm:$0xff]
      %v7934 = vld [vmem:[%s9 + $0x1c0] sm:$0xff]
      %v7935 = vld [vmem:[%s9 + $0x1c8] sm:$0xff]
      %v7936 = vld [vmem:[%s9 + $0x1d0] sm:$0xff]
      %v7937 = vld [vmem:[%s9 + $0x1d8] sm:$0xff]
      %v7938 = vld [vmem:[%s9 + $0x1e0] sm:$0xff]
      %v7939 = vld [vmem:[%s9 + $0x1e8] sm:$0xff]
      %v7940 = vld [vmem:[%s9 + $0x1f0] sm:$0xff]
      %v7941 = vld [vmem:[%s9 + $0x1f8] sm:$0xff]
      %v7942 = vld [vmem:[%s9 + $0x200] sm:$0xff]
      %v7943 = vld [vmem:[%s9 + $0x208] sm:$0xff]
      %v7944 = vld [vmem:[%s9 + $0x210] sm:$0xff]
      %v7945 = vld [vmem:[%s9 + $0x218] sm:$0xff]
      %v7946 = vld [vmem:[%s9 + $0x220] sm:$0xff]
      %v7947 = vld [vmem:[%s9 + $0x228] sm:$0xff]
      %v7948 = vld [vmem:[%s9 + $0x230] sm:$0xff]
      %v7949 = vld [vmem:[%s9 + $0x238] sm:$0xff]
      %v7950 = vld [vmem:[%s9 + $0x240] sm:$0xff]
      %v7951 = vld [vmem:[%s9 + $0x248] sm:$0xff]
      %v7952 = vld [vmem:[%s9 + $0x250] sm:$0xff]
      %v7953 = vld [vmem:[%s9 + $0x258] sm:$0xff]
      %v7954 = vld [vmem:[%s9 + $0x260] sm:$0xff]
      %v7955 = vld [vmem:[%s9 + $0x268] sm:$0xff]
      %v7956 = vld [vmem:[%s9 + $0x270] sm:$0xff]
      %v7957 = vld [vmem:[%s9 + $0x278] sm:$0xff]
      %v7958 = vld [vmem:[%s9 + $0x280] sm:$0xff]
      %v7959 = vld [vmem:[%s9 + $0x288] sm:$0xff]
      %v7960 = vld [vmem:[%s9 + $0x290] sm:$0xff]
      %v7961 = vld [vmem:[%s9 + $0x298] sm:$0xff]
      %v7962 = vld [vmem:[%s9 + $0x2a0] sm:$0xff]
      %v7963 = vld [vmem:[%s9 + $0x2a8] sm:$0xff]
      %v7964 = vld [vmem:[%s9 + $0x2b0] sm:$0xff]
      %v7965 = vld [vmem:[%s9 + $0x2b8] sm:$0xff]
      %v7966 = vld [vmem:[%s9 + $0x2c0] sm:$0xff]
      %v7967 = vld [vmem:[%s9 + $0x2c8] sm:$0xff]
      %v7968 = vld [vmem:[%s9 + $0x2d0] sm:$0xff]
      %v7969 = vld [vmem:[%s9 + $0x2d8] sm:$0xff]
      %v7970 = vld [vmem:[%s9 + $0x2e0] sm:$0xff]
      %v7971 = vld [vmem:[%s9 + $0x2e8] sm:$0xff]
      %v7972 = vld [vmem:[%s9 + $0x2f0] sm:$0xff]
      %v7973 = vld [vmem:[%s9 + $0x2f8] sm:$0xff]
      %v7974 = vld [vmem:[%s9 + $0x300] sm:$0xff]
      %v7975 = vld [vmem:[%s9 + $0x308] sm:$0xff]
      %v7976 = vld [vmem:[%s9 + $0x310] sm:$0xff]
      %v7977 = vld [vmem:[%s9 + $0x318] sm:$0xff]
      %v7978 = vld [vmem:[%s9 + $0x320] sm:$0xff]
      %v7979 = vld [vmem:[%s9 + $0x328] sm:$0xff]
      %v7980 = vld [vmem:[%s9 + $0x330] sm:$0xff]
      %v7981 = vld [vmem:[%s9 + $0x338] sm:$0xff]
      %v7982 = vld [vmem:[%s9 + $0x340] sm:$0xff]
      %v7983 = vld [vmem:[%s9 + $0x348] sm:$0xff]
      %v7984 = vld [vmem:[%s9 + $0x350] sm:$0xff]
      %v7985 = vld [vmem:[%s9 + $0x358] sm:$0xff]
      %v7986 = vld [vmem:[%s9 + $0x360] sm:$0xff]
      %v7987 = vld [vmem:[%s9 + $0x368] sm:$0xff]
      %v7988 = vld [vmem:[%s9 + $0x370] sm:$0xff]
      %v7989 = vld [vmem:[%s9 + $0x378] sm:$0xff]
      %v7990 = vld [vmem:[%s9 + $0x380] sm:$0xff]
      %v7991 = vld [vmem:[%s9 + $0x388] sm:$0xff]
      %v7992 = vld [vmem:[%s9 + $0x390] sm:$0xff]
      %v7993 = vld [vmem:[%s9 + $0x398] sm:$0xff]
      %v7994 = vld [vmem:[%s9 + $0x3a0] sm:$0xff]
      %v7995 = vld [vmem:[%s9 + $0x3a8] sm:$0xff]
      %v7996 = vld [vmem:[%s9 + $0x3b0] sm:$0xff]
      %v7997 = vld [vmem:[%s9 + $0x3b8] sm:$0xff]
      %v7998 = vld [vmem:[%s9 + $0x3c0] sm:$0xff]
      %v7999 = vld [vmem:[%s9 + $0x3c8] sm:$0xff]
      %v8000 = vld [vmem:[%s9 + $0x3d0] sm:$0xff]
      %v8001 = vld [vmem:[%s9 + $0x3d8] sm:$0xff]
      %v8002 = vld [vmem:[%s9 + $0x3e0] sm:$0xff]
      %v8003 = vld [vmem:[%s9 + $0x3e8] sm:$0xff]
      %v8004 = vld [vmem:[%s9 + $0x3f0] sm:$0xff]
      %v8005 = vld [vmem:[%s9 + $0x3f8] sm:$0xff]
      %8006 = vmatprep.subr.mxu0 %v7879
      %8007 = vmatpush1.msra.mxu0 %v7878
      %8008 = vmatprep.subr.mxu0 %v7881
      %8009 = vmatpush1.msra.mxu0 %v7880
      %8010 = vmatprep.subr.mxu0 %v7883
      %8011 = vmatpush1.msra.mxu0 %v7882
      %8012 = vmatprep.subr.mxu0 %v7885
      %8013 = vmatpush1.msra.mxu0 %v7884
      %8014 = vmatprep.subr.mxu0 %v7887
      %8015 = vmatpush1.msra.mxu0 %v7886
      %8016 = vmatprep.subr.mxu0 %v7889
      %8017 = vmatpush1.msra.mxu0 %v7888
      %8018 = vmatprep.subr.mxu0 %v7891
      %8019 = vmatpush1.msra.mxu0 %v7890
      %8020 = vmatprep.subr.mxu0 %v7893
      %8021 = vmatpush1.msra.mxu0 %v7892
      %8022 = vmatprep.subr.mxu0 %v7895
      %8023 = vmatpush1.msra.mxu0 %v7894
      %8024 = vmatprep.subr.mxu0 %v7897
      %8025 = vmatpush1.msra.mxu0 %v7896
      %8026 = vmatprep.subr.mxu0 %v7899
      %8027 = vmatpush1.msra.mxu0 %v7898
      %8028 = vmatprep.subr.mxu0 %v7901
      %8029 = vmatpush1.msra.mxu0 %v7900
      %8030 = vmatprep.subr.mxu0 %v7903
      %8031 = vmatpush1.msra.mxu0 %v7902
      %8032 = vmatprep.subr.mxu0 %v7905
      %8033 = vmatpush1.msra.mxu0 %v7904
      %8034 = vmatprep.subr.mxu0 %v7907
      %8035 = vmatpush1.msra.mxu0 %v7906
      %8036 = vmatprep.subr.mxu0 %v7909
      %8037 = vmatpush1.msra.mxu0 %v7908
      %8038 = vmatprep.subr.mxu0 %v7911
      %8039 = vmatpush1.msra.mxu0 %v7910
      %8040 = vmatprep.subr.mxu0 %v7913
      %8041 = vmatpush1.msra.mxu0 %v7912
      %8042 = vmatprep.subr.mxu0 %v7915
      %8043 = vmatpush1.msra.mxu0 %v7914
      %8044 = vmatprep.subr.mxu0 %v7917
      %8045 = vmatpush1.msra.mxu0 %v7916
      %8046 = vmatprep.subr.mxu0 %v7919
      %8047 = vmatpush1.msra.mxu0 %v7918
      %8048 = vmatprep.subr.mxu0 %v7921
      %8049 = vmatpush1.msra.mxu0 %v7920
      %8050 = vmatprep.subr.mxu0 %v7923
      %8051 = vmatpush1.msra.mxu0 %v7922
      %8052 = vmatprep.subr.mxu0 %v7925
      %8053 = vmatpush1.msra.mxu0 %v7924
      %8054 = vmatprep.subr.mxu0 %v7927
      %8055 = vmatpush1.msra.mxu0 %v7926
      %8056 = vmatprep.subr.mxu0 %v7929
      %8057 = vmatpush1.msra.mxu0 %v7928
      %8058 = vmatprep.subr.mxu0 %v7931
      %8059 = vmatpush1.msra.mxu0 %v7930
      %8060 = vmatprep.subr.mxu0 %v7933
      %8061 = vmatpush1.msra.mxu0 %v7932
      %8062 = vmatprep.subr.mxu0 %v7935
      %8063 = vmatpush1.msra.mxu0 %v7934
      %8064 = vmatprep.subr.mxu0 %v7937
      %8065 = vmatpush1.msra.mxu0 %v7936
      %8066 = vmatprep.subr.mxu0 %v7939
      %8067 = vmatpush1.msra.mxu0 %v7938
      %8068 = vmatprep.subr.mxu0 %v7941
      %8069 = vmatpush1.msra.mxu0 %v7940
      %8070 = vmatprep.mubr.f32.mxu0 %v7863
      %8071 = vmatmul.mubr.f32.gmra.mrb[0].mxu0 %v7862
      %v8072 = vpop.f32.mrb[0].mxu0
      %v8073 = vadd.f32 0.0, %v8072
      %v8074 = vpop.f32.mrb[0].mxu0
      %v8075 = vadd.f32 0.0, %v8074
      %8076 = vdwg.mxu0
      %8077 = vmatprep.subr.mxu0 %v7943
      %8078 = vmatpush1.msra.mxu0 %v7942
      %8079 = vmatprep.subr.mxu0 %v7945
      %8080 = vmatpush1.msra.mxu0 %v7944
      %8081 = vmatprep.subr.mxu0 %v7947
      %8082 = vmatpush1.msra.mxu0 %v7946
      %8083 = vmatprep.subr.mxu0 %v7949
      %8084 = vmatpush1.msra.mxu0 %v7948
      %8085 = vmatprep.subr.mxu0 %v7951
      %8086 = vmatpush1.msra.mxu0 %v7950
      %8087 = vmatprep.subr.mxu0 %v7953
      %8088 = vmatpush1.msra.mxu0 %v7952
      %8089 = vmatprep.subr.mxu0 %v7955
      %8090 = vmatpush1.msra.mxu0 %v7954
      %8091 = vmatprep.subr.mxu0 %v7957
      %8092 = vmatpush1.msra.mxu0 %v7956
      %8093 = vmatprep.subr.mxu0 %v7959
      %8094 = vmatpush1.msra.mxu0 %v7958
      %8095 = vmatprep.subr.mxu0 %v7961
      %8096 = vmatpush1.msra.mxu0 %v7960
      %8097 = vmatprep.subr.mxu0 %v7963
      %8098 = vmatpush1.msra.mxu0 %v7962
      %8099 = vmatprep.subr.mxu0 %v7965
      %8100 = vmatpush1.msra.mxu0 %v7964
      %8101 = vmatprep.subr.mxu0 %v7967
      %8102 = vmatpush1.msra.mxu0 %v7966
      %8103 = vmatprep.subr.mxu0 %v7969
      %8104 = vmatpush1.msra.mxu0 %v7968
      %8105 = vmatprep.subr.mxu0 %v7971
      %8106 = vmatpush1.msra.mxu0 %v7970
      %8107 = vmatprep.subr.mxu0 %v7973
      %8108 = vmatpush1.msra.mxu0 %v7972
      %8109 = vmatprep.subr.mxu0 %v7975
      %8110 = vmatpush1.msra.mxu0 %v7974
      %8111 = vmatprep.subr.mxu0 %v7977
      %8112 = vmatpush1.msra.mxu0 %v7976
      %8113 = vmatprep.subr.mxu0 %v7979
      %8114 = vmatpush1.msra.mxu0 %v7978
      %8115 = vmatprep.subr.mxu0 %v7981
      %8116 = vmatpush1.msra.mxu0 %v7980
      %8117 = vmatprep.subr.mxu0 %v7983
      %8118 = vmatpush1.msra.mxu0 %v7982
      %8119 = vmatprep.subr.mxu0 %v7985
      %8120 = vmatpush1.msra.mxu0 %v7984
      %8121 = vmatprep.subr.mxu0 %v7987
      %8122 = vmatpush1.msra.mxu0 %v7986
      %8123 = vmatprep.subr.mxu0 %v7989
      %8124 = vmatpush1.msra.mxu0 %v7988
      %8125 = vmatprep.subr.mxu0 %v7991
      %8126 = vmatpush1.msra.mxu0 %v7990
      %8127 = vmatprep.subr.mxu0 %v7993
      %8128 = vmatpush1.msra.mxu0 %v7992
      %8129 = vmatprep.subr.mxu0 %v7995
      %8130 = vmatpush1.msra.mxu0 %v7994
      %8131 = vmatprep.subr.mxu0 %v7997
      %8132 = vmatpush1.msra.mxu0 %v7996
      %8133 = vmatprep.subr.mxu0 %v7999
      %8134 = vmatpush1.msra.mxu0 %v7998
      %8135 = vmatprep.subr.mxu0 %v8001
      %8136 = vmatpush1.msra.mxu0 %v8000
      %8137 = vmatprep.subr.mxu0 %v8003
      %8138 = vmatpush1.msra.mxu0 %v8002
      %8139 = vmatprep.subr.mxu0 %v8005
      %8140 = vmatpush1.msra.mxu0 %v8004
      %8141 = vmatprep.mubr.f32.mxu0 %v7877
      %8142 = vmatmul.mubr.f32.gmra.mrb[0].mxu0 %v7870
      %v8143 = vpop.f32.mrb[0].mxu0
      %v8144 = vadd.f32 %v8073, %v8143
      %v8145 = vpop.f32.mrb[0].mxu0
      %v8146 = vadd.f32 %v8075, %v8145
      %8147 = vdwg.mxu0
      %v8148 = vtanh.pop %v8144
      %v8149 = vtanh.pop %v8146
      %v8150 = vadd.f32 %v8148, 1.0
      %v8151 = vadd.f32 %v8149, 1.0
      %v8152 = vlaneseq
      %v8153 = vshrl.u32 %v8152, 7
      %v8154 = vsub.s32 0, %v8153
      %v8155 = vrot.slane %v8150, %v8154
      %v8156 = vlaneseq
      %v8157 = vshrl.u32 %v8156, 7
      %v8158 = vsub.s32 0, %v8157
      %v8159 = vrot.slane %v8151, %v8158
      %v8160 = vmul.f32 %v8155, %v7837
      %v8161 = vmul.f32 %v8159, %v7839
      %v8162 = vmul.f32 %v8155, %v7843
      %v8163 = vmul.f32 %v8159, %v7845
      %8164 = vst [vmem:[%s379] sm:$0xff] %v8160
      %8165 = vst [vmem:[%s379 + $0x8] sm:$0xff] %v8161
      %8166 = vst [vmem:[%s379 + $0x10] sm:$0xff] %v8162
      %8167 = vst [vmem:[%s379 + $0x18] sm:$0xff] %v8163
      %p8168 = scmp.lt.s32.totalorder %s21, 1
      %s8169 = scalar_select %p8168, %s21, 1
      %s8170 = smul.addr %s8169, 4
      %s8171 = smul.addr %s8170, 8
      %s8172 = scalar_lea.vmem %s10, %s8171
      // Predicated region
      $region61: #{cross_modal_attention_block.1} parent=59 // pred_check
        %p8173 = pneg %p259
      $region62: #{cross_modal_attention_block.1} parent=59 // pred_check_branch
        %8175 = sbr.rel (%p8173) target = $region64
      $region63: #{cross_modal_attention_block.1} parent=59 // pred_region
        _
      $region64: #{cross_modal_attention_block.1} parent=59 // pred_fallthru
        _
    $region60: #{cross_modal_attention_block.1} parent=5 // pred_fallthru
      _
    %p8176 = scmp.le.s32.totalorder 2, %s16
    // Predicated region
    $region65: #{cross_modal_attention_block.1} parent=5 // pred_check
      %p8177 = pneg %p8176
    $region66: #{cross_modal_attention_block.1} parent=5 // pred_check_branch
      %8179 = sbr.rel (%p8177) target = $region68
    $region67: #{cross_modal_attention_block.1} parent=5 // pred_region
      %s8180 = ssub.s32 %s16, 2
      // Predicated region
      $region69: #{cross_modal_attention_block.1} parent=67 // pred_check
        %p8181 = pneg %p265
      $region70: #{cross_modal_attention_block.1} parent=67 // pred_check_branch
        %8183 = sbr.rel (%p8181) target = $region72
      $region71: #{cross_modal_attention_block.1} parent=67 // pred_region
        %p8184 = scmp.lt.s32.totalorder %s22, 1
        %s8185 = scalar_select %p8184, %s22, 1
        %s8186 = smul.addr %s8185, 4
        %s8187 = smul.addr %s8186, 8
        %s8188 = scalar_lea.vmem %s10, %s8187
      $region72: #{cross_modal_attention_block.1} parent=67 // pred_fallthru
        _
    $region68: #{cross_modal_attention_block.1} parent=5 // pred_fallthru
      _
  $region6: #{cross_modal_attention_block.1} parent=0 // loop_footer
    %s20 = sadd.s32 1, %s16
  $region7: #{cross_modal_attention_block.1} parent=0 // loop_footer_branch
    %15 = sbr.rel target = $region3
  $region8: #{cross_modal_attention_block.1} parent=0 // loop_exit
    _

</llo_original>
